<compile_context>
chip_gen: v5e
topology: v5e:2x2
jax: 0.10.0
libtpu: 0.0.40
codegen_flags: <defaults>
</compile_context>

<pallas_src>
import functools

import jax
import jax.numpy as jnp
from jax.experimental import pallas as pl
from jax.experimental.pallas import tpu as pltpu

EPS_BN = 1e-5     # nn.BatchNorm default eps
EPS_COS = 1e-8    # F.cosine_similarity default eps
VMEM_LIMIT = 32 * 1024 * 1024   # safe scoped-VMEM cap on v5e / v6e / v7x


def _round_up(x, m):
    return (x + m - 1) // m * m


# ------------------- fused tiled bf16 matmul + BN statistics -------------------
#
# grid = (N/tn, M/tm, K/tk)  (N-tile outermost so the (1, tn) stats outputs stay
# VMEM-resident across the whole M,K sweep of a given column tile).

def _mm_bn_stats_kernel(a_ref, b_ref, o_ref, sum_ref, sq_ref, acc_ref):
    i = pl.program_id(1)                     # M-tile index
    k = pl.program_id(2)                     # K-tile index
    last_k = pl.num_programs(2) - 1

    @pl.when(k == 0)
    def _():
        acc_ref[...] = jnp.zeros_like(acc_ref)

    acc_ref[...] += jnp.dot(a_ref[...], b_ref[...],
                            preferred_element_type=jnp.float32)

    @pl.when(k == last_k)
    def _():
        o_ref[...] = acc_ref[...]

    @pl.when(jnp.logical_and(k == last_k, i == 0))
    def _():
        y = acc_ref[...]
        sum_ref[...] = jnp.sum(y, axis=0, keepdims=True)
        sq_ref[...] = jnp.sum(y * y, axis=0, keepdims=True)

    @pl.when(jnp.logical_and(k == last_k, i > 0))
    def _():
        y = acc_ref[...]
        sum_ref[...] += jnp.sum(y, axis=0, keepdims=True)
        sq_ref[...] += jnp.sum(y * y, axis=0, keepdims=True)


def matmul_bn_stats(a, b):
    """(M,K) @ (K,N) in bf16 on the MXU with f32 accumulation.

    Returns the *padded* f32 product (Mp, Np) plus per-column sum and sum-of-squares
    (1, Np) computed over the M rows (padding rows are zero so they contribute 0).
    """
    M, K = a.shape
    _, N = b.shape

    tm = 128 if M >= 128 else _round_up(M, 16)          # bf16 sublane packing
    Mp = _round_up(M, tm)
    Np = _round_up(N, 128)
    tn = 256 if Np % 256 == 0 else 128                   # fill v6e/v7x 256-wide MXU
    Kp = _round_up(K, 128)
    tk = 512 if Kp % 512 == 0 else (256 if Kp % 256 == 0 else 128)

    a_p = jnp.pad(a.astype(jnp.bfloat16), ((0, Mp - M), (0, Kp - K)))
    b_p = jnp.pad(b.astype(jnp.bfloat16), ((0, Kp - K), (0, Np - N)))

    out, s, sq = pl.pallas_call(
        _mm_bn_stats_kernel,
        out_shape=(jax.ShapeDtypeStruct((Mp, Np), jnp.float32),
                   jax.ShapeDtypeStruct((1, Np), jnp.float32),
                   jax.ShapeDtypeStruct((1, Np), jnp.float32)),
        grid_spec=pltpu.PrefetchScalarGridSpec(
            num_scalar_prefetch=0,
            grid=(Np // tn, Mp // tm, Kp // tk),
            in_specs=[pl.BlockSpec((tm, tk), lambda j, i, k: (i, k)),
                      pl.BlockSpec((tk, tn), lambda j, i, k: (k, j))],
            out_specs=[pl.BlockSpec((tm, tn), lambda j, i, k: (i, j)),
                       pl.BlockSpec((1, tn), lambda j, i, k: (0, j)),
                       pl.BlockSpec((1, tn), lambda j, i, k: (0, j))],
            scratch_shapes=[pltpu.VMEM((tm, tn), jnp.float32)]),
        compiler_params=pltpu.CompilerParams(
            dimension_semantics=("parallel", "arbitrary", "arbitrary"),
            vmem_limit_bytes=VMEM_LIMIT),
    )(a_p, b_p)
    return out, s, sq


# ------------------------------ BN apply kernels ------------------------------

def _bn_apply_kernel(x_ref, s_ref, sq_ref, o_ref, *, inv_n, relu):
    mean = s_ref[...] * inv_n
    var = sq_ref[...] * inv_n - mean * mean                 # biased batch variance
    y = (x_ref[...] - mean) * jax.lax.rsqrt(var + EPS_BN)   # gamma=1, beta=0
    if relu:
        y = jnp.maximum(y, 0.0)
    o_ref[...] = y.astype(o_ref.dtype)


def _bn_apply_add_relu_kernel(x_ref, s_ref, sq_ref, res_ref, o_ref, *, inv_n):
    mean = s_ref[...] * inv_n
    var = sq_ref[...] * inv_n - mean * mean
    y = (x_ref[...] - mean) * jax.lax.rsqrt(var + EPS_BN) + res_ref[...]
    o_ref[...] = jnp.maximum(y, 0.0)


def _bn_row_tile(Rp):
    for t in (512, 256, 128):
        if Rp % t == 0:
            return t
    return Rp


def bn_apply(out_p, s, sq, n_valid, n_cols, relu, out_dtype):
    """Normalize the padded matmul output (+ optional ReLU) and slice to valid size."""
    Rp, Cp = out_p.shape
    tr = _bn_row_tile(Rp)
    y = pl.pallas_call(
        functools.partial(_bn_apply_kernel, inv_n=1.0 / n_valid, relu=relu),
        out_shape=jax.ShapeDtypeStruct((Rp, Cp), out_dtype),
        grid=(Rp // tr,),
        in_specs=[pl.BlockSpec((tr, Cp), lambda i: (i, 0)),
                  pl.BlockSpec((1, Cp), lambda i: (0, 0)),
                  pl.BlockSpec((1, Cp), lambda i: (0, 0))],
        out_specs=pl.BlockSpec((tr, Cp), lambda i: (i, 0)),
        compiler_params=pltpu.CompilerParams(
            dimension_semantics=("parallel",),
            vmem_limit_bytes=VMEM_LIMIT),
    )(out_p, s, sq)
    return y[:n_valid, :n_cols]


def bn_apply_add_relu(out_p, s, sq, res, n_valid, n_cols):
    """relu(batchnorm(out) + res) on the padded matmul output, sliced to valid size."""
    Rp, Cp = out_p.shape
    R, C = res.shape
    res_p = jnp.pad(res.astype(jnp.float32), ((0, Rp - R), (0, Cp - C)))
    tr = _bn_row_tile(Rp)
    y = pl.pallas_call(
        functools.partial(_bn_apply_add_relu_kernel, inv_n=1.0 / n_valid),
        out_shape=jax.ShapeDtypeStruct((Rp, Cp), jnp.float32),
        grid=(Rp // tr,),
        in_specs=[pl.BlockSpec((tr, Cp), lambda i: (i, 0)),
                  pl.BlockSpec((1, Cp), lambda i: (0, 0)),
                  pl.BlockSpec((1, Cp), lambda i: (0, 0)),
                  pl.BlockSpec((tr, Cp), lambda i: (i, 0))],
        out_specs=pl.BlockSpec((tr, Cp), lambda i: (i, 0)),
        compiler_params=pltpu.CompilerParams(
            dimension_semantics=("parallel",),
            vmem_limit_bytes=VMEM_LIMIT),
    )(out_p, s, sq, res_p)
    return y[:n_valid, :n_cols]


# --------------------------- fused projector / predictor ---------------------------

def _masked_bn(h, n_valid, relu):
    """BatchNorm over the first n_valid rows of h (padded rows excluded from stats)."""
    rows = jax.lax.broadcasted_iota(jnp.int32, (h.shape[0], 1), 0)
    mask = (rows < n_valid).astype(h.dtype)
    inv_n = 1.0 / n_valid
    mean = jnp.sum(h * mask, axis=0, keepdims=True) * inv_n
    d = h - mean
    var = jnp.sum(d * d * mask, axis=0, keepdims=True) * inv_n
    y = d * jax.lax.rsqrt(var + EPS_BN)
    if relu:
        y = jnp.maximum(y, 0.0)
    return y


def _projector_kernel(x_ref, w1_ref, b1_ref, w2_ref, b2_ref, o_ref, *, n_valid):
    h = jnp.dot(x_ref[...], w1_ref[...],
                preferred_element_type=jnp.float32) + b1_ref[...]
    h = _masked_bn(h, n_valid, relu=True)
    h = jnp.dot(h, w2_ref[...],
                preferred_element_type=jnp.float32) + b2_ref[...]
    o_ref[...] = _masked_bn(h, n_valid, relu=False)


def _predictor_kernel(x_ref, w1_ref, b1_ref, w2_ref, b2_ref, o_ref, *, n_valid):
    h = jnp.dot(x_ref[...], w1_ref[...],
                preferred_element_type=jnp.float32) + b1_ref[...]
    h = _masked_bn(h, n_valid, relu=True)
    o_ref[...] = jnp.dot(h, w2_ref[...],
                         preferred_element_type=jnp.float32) + b2_ref[...]


def _fused_mlp(kernel, x, w1, b1, w2, b2):
    N, Din = x.shape
    H = w1.shape[1]
    Dout = w2.shape[1]
    Npad = _round_up(N, 8)
    xp = jnp.pad(x.astype(jnp.float32), ((0, Npad - N), (0, 0)))

    def full(r, c):
        return pl.BlockSpec((r, c), lambda i: (0, 0))

    out = pl.pallas_call(
        functools.partial(kernel, n_valid=N),
        out_shape=jax.ShapeDtypeStruct((Npad, Dout), jnp.float32),
        grid=(1,),
        in_specs=[full(Npad, Din), full(Din, H), full(1, H),
                  full(H, Dout), full(1, Dout)],
        out_specs=full(Npad, Dout),
        compiler_params=pltpu.CompilerParams(vmem_limit_bytes=VMEM_LIMIT),
    )(xp, w1.astype(jnp.float32), b1.reshape(1, H).astype(jnp.float32),
      w2.astype(jnp.float32), b2.reshape(1, Dout).astype(jnp.float32))
    return out[:N]


# ----------------------------- SimSiam cosine loss -----------------------------

def _cos_loss_kernel(p1_ref, z2_ref, p2_ref, z1_ref, o_ref):
    def neg_cos_mean(p, z):
        dot = jnp.sum(p * z, axis=-1, keepdims=True)
        pn = jnp.maximum(jnp.sqrt(jnp.sum(p * p, axis=-1, keepdims=True)), EPS_COS)
        zn = jnp.maximum(jnp.sqrt(jnp.sum(z * z, axis=-1, keepdims=True)), EPS_COS)
        c = dot / (pn * zn)                          # (N, 1)
        return -jnp.mean(c, axis=0, keepdims=True)   # (1, 1)

    o_ref[...] = (0.5 * neg_cos_mean(p1_ref[...], z2_ref[...]) +
                  0.5 * neg_cos_mean(p2_ref[...], z1_ref[...]))


def pallas_simsiam_loss(p1, z2, p2, z1):
    N, D = p1.shape
    spec = pl.BlockSpec((N, D), lambda i: (0, 0))
    out = pl.pallas_call(
        _cos_loss_kernel,
        out_shape=jax.ShapeDtypeStruct((1, 1), jnp.float32),
        grid=(1,),
        in_specs=[spec, spec, spec, spec],
        out_specs=pl.BlockSpec((1, 1), lambda i: (0, 0)),
    )(p1.astype(jnp.float32), z2.astype(jnp.float32),
      p2.astype(jnp.float32), z1.astype(jnp.float32))
    return out[0, 0]


# ----------------------------- glue (JAX) -----------------------------

def im2col(x, kh, kw, stride, pad):
    """x: (N,H,W,C) -> ((N*OH*OW, KH*KW*C), OH, OW); patch order (i*kw+j)*C + c.

    Called on bf16 activations so the patch matrices (the dominant HBM
    intermediates) are half-width; the MXU consumes bf16 directly anyway.
    """
    # TODO(synk): patch extraction still materializes in HBM; an in-kernel im2col
    # (per-row-tile patch generation) would cut the remaining conv HBM traffic.
    xp = jnp.pad(x, ((0, 0), (pad, pad), (pad, pad), (0, 0)))
    N, H, W, C = xp.shape
    oh = (H - kh) // stride + 1
    ow = (W - kw) // stride + 1
    cols = []
    for i in range(kh):
        for j in range(kw):
            cols.append(xp[:, i:i + stride * oh:stride, j:j + stride * ow:stride, :])
    p = jnp.stack(cols, axis=3)                       # (N, oh, ow, kh*kw, C)
    return p.reshape(N * oh * ow, kh * kw * C), oh, ow


def basic_block(x, params, stride):
    """ResNet BasicBlock: relu(bn2(conv2(relu(bn1(conv1(x))))) + identity)."""
    N, H, W, Cin = x.shape
    c1, c2 = params['conv1'], params['conv2']
    planes = c1.shape[-1]

    # conv1 -> BN -> ReLU  (bf16 output: only feeds conv2's im2col)
    p1, oh, ow = im2col(x.astype(jnp.bfloat16), 3, 3, stride, 1)
    o1, s1, q1 = matmul_bn_stats(p1, c1.reshape(-1, planes))
    h1 = bn_apply(o1, s1, q1, n_valid=p1.shape[0], n_cols=planes,
                  relu=True, out_dtype=jnp.bfloat16).reshape(N, oh, ow, planes)

    # conv2 (stats fused; BN applied together with residual add + ReLU below)
    p2, _, _ = im2col(h1, 3, 3, 1, 1)
    o2, s2, q2 = matmul_bn_stats(p2, c2.reshape(-1, planes))

    if 'downsample' in params:
        dsw = params['downsample']                    # (1,1,Cin,planes)
        xs = x[:, ::stride, ::stride, :].reshape(-1, Cin).astype(jnp.bfloat16)
        od, sd, qd = matmul_bn_stats(xs, dsw.reshape(Cin, planes))
        idm = bn_apply(od, sd, qd, n_valid=xs.shape[0], n_cols=planes,
                       relu=False, out_dtype=jnp.float32)
    else:
        idm = x.reshape(-1, Cin).astype(jnp.float32)

    out = bn_apply_add_relu(o2, s2, q2, idm, n_valid=p2.shape[0], n_cols=planes)
    return out.reshape(N, oh, ow, planes)


def backbone_forward(x_nhwc, P):
    N = x_nhwc.shape[0]
    # layer0: conv3x3(1->64, s=2) + BN + ReLU  (bf16 output: only feeds layer1 convs)
    p, oh, ow = im2col(x_nhwc.astype(jnp.bfloat16), 3, 3, 2, 1)
    o0, s0, q0 = matmul_bn_stats(p, P['l0_conv'].reshape(-1, 64))
    out = bn_apply(o0, s0, q0, n_valid=p.shape[0], n_cols=64,
                   relu=True, out_dtype=jnp.bfloat16).reshape(N, oh, ow, 64)
    # layer1 (64, 2 blocks, stride 2)
    out = basic_block(out, P['l1_b1'], stride=2)
    out = basic_block(out, P['l1_b2'], stride=1)
    # layer2 (128, 2 blocks, stride 2)
    out = basic_block(out, P['l2_b1'], stride=2)
    out = basic_block(out, P['l2_b2'], stride=1)
    # AdaptiveAvgPool2d((1,1)) + flatten    # TODO(synk): tiny spatial mean kept in plain JAX
    return jnp.mean(out, axis=(1, 2))                 # (N, 128)


def projector_forward(x, P):
    return _fused_mlp(_projector_kernel, x, P['p_w1'], P['p_b1'], P['p_w2'], P['p_b2'])


def predictor_forward(x, P):
    return _fused_mlp(_predictor_kernel, x, P['q_w1'], P['q_b1'], P['q_w2'], P['q_b2'])


def ssl_forward(x1_nchw, x2_nchw, P):
    x1 = jnp.transpose(x1_nchw, (0, 2, 3, 1))
    x2 = jnp.transpose(x2_nchw, (0, 2, 3, 1))
    z1 = projector_forward(backbone_forward(x1, P), P)
    z2 = projector_forward(backbone_forward(x2, P), P)
    p1 = predictor_forward(z1, P)
    p2 = predictor_forward(z2, P)
    loss = pallas_simsiam_loss(p1, z2, p2, z1)
    return {'loss': loss}


# ----------------------------- deterministic init -----------------------------

def _kaiming_conv(key, kh, kw, cin, cout):
    fan_out = cout * kh * kw
    std = (2.0 / fan_out) ** 0.5
    return std * jax.random.normal(key, (kh, kw, cin, cout), jnp.float32)


def _linear(key, cin, cout):
    k1, k2 = jax.random.split(key)
    bound = 1.0 / (cin ** 0.5)
    w = jax.random.uniform(k1, (cin, cout), jnp.float32, -bound, bound)
    b = jax.random.uniform(k2, (cout,), jnp.float32, -bound, bound)
    return w, b


def init_params(key):
    ks = jax.random.split(key, 16)
    P = {}
    P['l0_conv'] = _kaiming_conv(ks[0], 3, 3, 1, 64)
    P['l1_b1'] = {'conv1': _kaiming_conv(ks[1], 3, 3, 64, 64),
                  'conv2': _kaiming_conv(ks[2], 3, 3, 64, 64),
                  'downsample': _kaiming_conv(ks[3], 1, 1, 64, 64)}
    P['l1_b2'] = {'conv1': _kaiming_conv(ks[4], 3, 3, 64, 64),
                  'conv2': _kaiming_conv(ks[5], 3, 3, 64, 64)}
    P['l2_b1'] = {'conv1': _kaiming_conv(ks[6], 3, 3, 64, 128),
                  'conv2': _kaiming_conv(ks[7], 3, 3, 128, 128),
                  'downsample': _kaiming_conv(ks[8], 1, 1, 64, 128)}
    P['l2_b2'] = {'conv1': _kaiming_conv(ks[9], 3, 3, 128, 128),
                  'conv2': _kaiming_conv(ks[10], 3, 3, 128, 128)}
    # projection_MLP: 128 -> 512 -> 512
    P['p_w1'], P['p_b1'] = _linear(ks[11], 128, 512)
    P['p_w2'], P['p_b2'] = _linear(ks[12], 512, 512)
    # prediction_MLP: 512 -> 128 -> 512
    P['q_w1'], P['q_b1'] = _linear(ks[13], 512, 128)
    P['q_w2'], P['q_b2'] = _linear(ks[14], 128, 512)
    return P


if __name__ == "__main__":
    key = jax.random.PRNGKey(0)
    kp, kx1, kx2 = jax.random.split(key, 3)
    params = init_params(kp)

    x1 = jax.random.normal(kx1, (2, 1, 16, 16), jnp.float32)   # NCHW, like PyTorch
    x2 = jax.random.normal(kx2, (2, 1, 16, 16), jnp.float32)

    fwd = jax.jit(ssl_forward)
    out = fwd(x1, x2, params)
    jax.block_until_ready(out['loss'])
    assert out['loss'].shape == () and bool(jnp.isfinite(out['loss']))
    print("KERNEL_OK")
</pallas_src>

<mosaic_0001>
module attributes {stable_mosaic.version = 11 : i64} {
  func.func @_bn_apply_kernel(%arg0: i32, %arg1: memref<128x128xf32, #tpu.memory_space<vmem>>, %arg2: memref<1x128xf32, #tpu.memory_space<vmem>>, %arg3: memref<1x128xf32, #tpu.memory_space<vmem>>, %arg4: memref<128x128xbf16, #tpu.memory_space<vmem>>) attributes {dimension_semantics = [#tpu.dimension_semantics<parallel>], iteration_bounds = array<i64: 1>, scalar_prefetch = 0 : i64, scratch_operands = 0 : i64, tpu.core_type = #tpu.core_type<tc>, window_params = [{transform_indices = @transform_0, window_bounds = array<i64: 128, 128>}, {pipeline_mode = #tpu.pipeline_mode<synchronous>, transform_indices = @transform_1, window_bounds = array<i64: 1, 128>}, {pipeline_mode = #tpu.pipeline_mode<synchronous>, transform_indices = @transform_2, window_bounds = array<i64: 1, 128>}, {transform_indices = @transform_3, window_bounds = array<i64: 128, 128>}]} {
    %c0 = arith.constant 0 : index
    %c0_0 = arith.constant 0 : index
    %0 = vector.load %arg2[%c0, %c0_0] : memref<1x128xf32, #tpu.memory_space<vmem>>, vector<1x128xf32>
    %cst = arith.constant 7.812500e-03 : f32
    %1 = vector.broadcast %cst : f32 to vector<1x128xf32>
    %2 = arith.mulf %0, %1 : vector<1x128xf32>
    %c0_1 = arith.constant 0 : index
    %c0_2 = arith.constant 0 : index
    %3 = vector.load %arg3[%c0_1, %c0_2] : memref<1x128xf32, #tpu.memory_space<vmem>>, vector<1x128xf32>
    %cst_3 = arith.constant 7.812500e-03 : f32
    %4 = vector.broadcast %cst_3 : f32 to vector<1x128xf32>
    %5 = arith.mulf %3, %4 : vector<1x128xf32>
    %6 = arith.mulf %2, %2 : vector<1x128xf32>
    %7 = arith.subf %5, %6 : vector<1x128xf32>
    %c0_4 = arith.constant 0 : index
    %c0_5 = arith.constant 0 : index
    %8 = vector.load %arg1[%c0_4, %c0_5] : memref<128x128xf32, #tpu.memory_space<vmem>>, vector<128x128xf32>
    %9 = vector.broadcast %2 : vector<1x128xf32> to vector<128x128xf32>
    %10 = arith.subf %8, %9 : vector<128x128xf32>
    %cst_6 = arith.constant 9.99999974E-6 : f32
    %11 = vector.broadcast %cst_6 : f32 to vector<1x128xf32>
    %12 = arith.addf %7, %11 : vector<1x128xf32>
    %13 = math.rsqrt %12 : vector<1x128xf32>
    %14 = vector.broadcast %13 : vector<1x128xf32> to vector<128x128xf32>
    %15 = arith.mulf %10, %14 : vector<128x128xf32>
    %cst_7 = arith.constant 0.000000e+00 : f32
    %16 = vector.broadcast %cst_7 : f32 to vector<128x128xf32>
    %17 = arith.maximumf %15, %16 : vector<128x128xf32>
    %18 = arith.truncf %17 : vector<128x128xf32> to vector<128x128xbf16>
    %c0_8 = arith.constant 0 : index
    %c0_9 = arith.constant 0 : index
    %19 = vector.load %arg4[%c0_8, %c0_9] : memref<128x128xbf16, #tpu.memory_space<vmem>>, vector<128x128xbf16>
    tpu.vector_store %arg4[%c0_8, %c0_9], %18 {strides = array<i32>} : memref<128x128xbf16, #tpu.memory_space<vmem>>, vector<128x128xbf16>,
    return
  }
  func.func @transform_0(%arg0: i32) -> (i32, i32) {
    %c0_i32 = arith.constant 0 : i32
    %c0_i32_0 = arith.constant 0 : i32
    return %arg0, %c0_i32 : i32, i32
  }
  func.func @transform_1(%arg0: i32) -> (i32, i32) {
    %c0_i32 = arith.constant 0 : i32
    %c0_i32_0 = arith.constant 0 : i32
    %c0_i32_1 = arith.constant 0 : i32
    return %c0_i32, %c0_i32_0 : i32, i32
  }
  func.func @transform_2(%arg0: i32) -> (i32, i32) {
    %c0_i32 = arith.constant 0 : i32
    %c0_i32_0 = arith.constant 0 : i32
    %c0_i32_1 = arith.constant 0 : i32
    return %c0_i32, %c0_i32_0 : i32, i32
  }
  func.func @transform_3(%arg0: i32) -> (i32, i32) {
    %c0_i32 = arith.constant 0 : i32
    %c0_i32_0 = arith.constant 0 : i32
    return %arg0, %c0_i32 : i32, i32
  }
}

module attributes {stable_mosaic.version = 11 : i64} {
  func.func @_bn_apply_kernel(%arg0: i32, %arg1: memref<32x128xf32, #tpu.memory_space<vmem>>, %arg2: memref<1x128xf32, #tpu.memory_space<vmem>>, %arg3: memref<1x128xf32, #tpu.memory_space<vmem>>, %arg4: memref<32x128xf32, #tpu.memory_space<vmem>>) attributes {dimension_semantics = [#tpu.dimension_semantics<parallel>], iteration_bounds = array<i64: 1>, scalar_prefetch = 0 : i64, scratch_operands = 0 : i64, tpu.core_type = #tpu.core_type<tc>, window_params = [{transform_indices = @transform_0, window_bounds = array<i64: 32, 128>}, {pipeline_mode = #tpu.pipeline_mode<synchronous>, transform_indices = @transform_1, window_bounds = array<i64: 1, 128>}, {pipeline_mode = #tpu.pipeline_mode<synchronous>, transform_indices = @transform_2, window_bounds = array<i64: 1, 128>}, {transform_indices = @transform_3, window_bounds = array<i64: 32, 128>}]} {
    %c0 = arith.constant 0 : index
    %c0_0 = arith.constant 0 : index
    %0 = vector.load %arg2[%c0, %c0_0] : memref<1x128xf32, #tpu.memory_space<vmem>>, vector<1x128xf32>
    %cst = arith.constant 3.125000e-02 : f32
    %1 = vector.broadcast %cst : f32 to vector<1x128xf32>
    %2 = arith.mulf %0, %1 : vector<1x128xf32>
    %c0_1 = arith.constant 0 : index
    %c0_2 = arith.constant 0 : index
    %3 = vector.load %arg3[%c0_1, %c0_2] : memref<1x128xf32, #tpu.memory_space<vmem>>, vector<1x128xf32>
    %cst_3 = arith.constant 3.125000e-02 : f32
    %4 = vector.broadcast %cst_3 : f32 to vector<1x128xf32>
    %5 = arith.mulf %3, %4 : vector<1x128xf32>
    %6 = arith.mulf %2, %2 : vector<1x128xf32>
    %7 = arith.subf %5, %6 : vector<1x128xf32>
    %c0_4 = arith.constant 0 : index
    %c0_5 = arith.constant 0 : index
    %8 = vector.load %arg1[%c0_4, %c0_5] : memref<32x128xf32, #tpu.memory_space<vmem>>, vector<32x128xf32>
    %9 = vector.broadcast %2 : vector<1x128xf32> to vector<32x128xf32>
    %10 = arith.subf %8, %9 : vector<32x128xf32>
    %cst_6 = arith.constant 9.99999974E-6 : f32
    %11 = vector.broadcast %cst_6 : f32 to vector<1x128xf32>
    %12 = arith.addf %7, %11 : vector<1x128xf32>
    %13 = math.rsqrt %12 : vector<1x128xf32>
    %14 = vector.broadcast %13 : vector<1x128xf32> to vector<32x128xf32>
    %15 = arith.mulf %10, %14 : vector<32x128xf32>
    %c0_7 = arith.constant 0 : index
    %c0_8 = arith.constant 0 : index
    %16 = vector.load %arg4[%c0_7, %c0_8] : memref<32x128xf32, #tpu.memory_space<vmem>>, vector<32x128xf32>
    tpu.vector_store %arg4[%c0_7, %c0_8], %15 {strides = array<i32>} : memref<32x128xf32, #tpu.memory_space<vmem>>, vector<32x128xf32>,
    return
  }
  func.func @transform_0(%arg0: i32) -> (i32, i32) {
    %c0_i32 = arith.constant 0 : i32
    %c0_i32_0 = arith.constant 0 : i32
    return %arg0, %c0_i32 : i32, i32
  }
  func.func @transform_1(%arg0: i32) -> (i32, i32) {
    %c0_i32 = arith.constant 0 : i32
    %c0_i32_0 = arith.constant 0 : i32
    %c0_i32_1 = arith.constant 0 : i32
    return %c0_i32, %c0_i32_0 : i32, i32
  }
  func.func @transform_2(%arg0: i32) -> (i32, i32) {
    %c0_i32 = arith.constant 0 : i32
    %c0_i32_0 = arith.constant 0 : i32
    %c0_i32_1 = arith.constant 0 : i32
    return %c0_i32, %c0_i32_0 : i32, i32
  }
  func.func @transform_3(%arg0: i32) -> (i32, i32) {
    %c0_i32 = arith.constant 0 : i32
    %c0_i32_0 = arith.constant 0 : i32
    return %arg0, %c0_i32 : i32, i32
  }
}

module attributes {stable_mosaic.version = 11 : i64} {
  func.func @_mm_bn_stats_kernel(%arg0: i32, %arg1: i32, %arg2: i32, %arg3: memref<128x128xbf16, #tpu.memory_space<vmem>>, %arg4: memref<128x128xbf16, #tpu.memory_space<vmem>>, %arg5: memref<128x128xf32, #tpu.memory_space<vmem>>, %arg6: memref<1x128xf32, #tpu.memory_space<vmem>>, %arg7: memref<1x128xf32, #tpu.memory_space<vmem>>, %arg8: memref<128x128xf32, #tpu.memory_space<vmem>>) attributes {dimension_semantics = [#tpu.dimension_semantics<parallel>, #tpu.dimension_semantics<arbitrary>, #tpu.dimension_semantics<arbitrary>], iteration_bounds = array<i64: 1, 1, 1>, scalar_prefetch = 0 : i64, scratch_operands = 1 : i64, tpu.core_type = #tpu.core_type<tc>, window_params = [{transform_indices = @transform_0, window_bounds = array<i64: 128, 128>}, {transform_indices = @transform_1, window_bounds = array<i64: 128, 128>}, {transform_indices = @transform_2, window_bounds = array<i64: 128, 128>}, {transform_indices = @transform_3, window_bounds = array<i64: 1, 128>}, {transform_indices = @transform_4, window_bounds = array<i64: 1, 128>}]} {
    %c0_i32 = arith.constant 0 : i32
    %0 = arith.cmpi eq, %arg2, %c0_i32 : i32
    %1 = arith.extui %0 : i1 to i32
    %c0_i32_0 = arith.constant 0 : i32
    %2 = arith.cmpi ne, %1, %c0_i32_0 : i32
    scf.if %2 {
      %cst_16 = arith.constant 0.000000e+00 : f32
      %22 = vector.broadcast %cst_16 : f32 to vector<128x128xf32>
      %c0_17 = arith.constant 0 : index
      %c0_18 = arith.constant 0 : index
      %23 = vector.load %arg8[%c0_17, %c0_18] : memref<128x128xf32, #tpu.memory_space<vmem>>, vector<128x128xf32>
      tpu.vector_store %arg8[%c0_17, %c0_18], %22 {strides = array<i32>} : memref<128x128xf32, #tpu.memory_space<vmem>>, vector<128x128xf32>,
    } else {
    }
    %c0 = arith.constant 0 : index
    %c0_1 = arith.constant 0 : index
    %3 = vector.load %arg8[%c0, %c0_1] : memref<128x128xf32, #tpu.memory_space<vmem>>, vector<128x128xf32>
    %c0_2 = arith.constant 0 : index
    %c0_3 = arith.constant 0 : index
    %4 = vector.load %arg3[%c0_2, %c0_3] : memref<128x128xbf16, #tpu.memory_space<vmem>>, vector<128x128xbf16>
    %c0_4 = arith.constant 0 : index
    %c0_5 = arith.constant 0 : index
    %5 = vector.load %arg4[%c0_4, %c0_5] : memref<128x128xbf16, #tpu.memory_space<vmem>>, vector<128x128xbf16>
    %cst = arith.constant dense<0.000000e+00> : vector<128x128xf32>
    %6 = tpu.matmul %4, %5, %cst {dimension_numbers = #tpu.dot_dimension_numbers<[1], [0], [0], [1], [0, 0, 1, 1], [], []>} : vector<128x128xbf16>, vector<128x128xbf16>, vector<128x128xf32> -> vector<128x128xf32>
    %7 = arith.addf %3, %6 : vector<128x128xf32>
    %c0_6 = arith.constant 0 : index
    %c0_7 = arith.constant 0 : index
    %8 = vector.load %arg8[%c0_6, %c0_7] : memref<128x128xf32, #tpu.memory_space<vmem>>, vector<128x128xf32>
    tpu.vector_store %arg8[%c0_6, %c0_7], %7 {strides = array<i32>} : memref<128x128xf32, #tpu.memory_space<vmem>>, vector<128x128xf32>,
    %c0_i32_8 = arith.constant 0 : i32
    %9 = arith.cmpi eq, %arg2, %c0_i32_8 : i32
    %10 = arith.extui %9 : i1 to i32
    %c0_i32_9 = arith.constant 0 : i32
    %11 = arith.cmpi ne, %10, %c0_i32_9 : i32
    scf.if %11 {
      %c0_16 = arith.constant 0 : index
      %c0_17 = arith.constant 0 : index
      %22 = vector.load %arg8[%c0_16, %c0_17] : memref<128x128xf32, #tpu.memory_space<vmem>>, vector<128x128xf32>
      %c0_18 = arith.constant 0 : index
      %c0_19 = arith.constant 0 : index
      %23 = vector.load %arg5[%c0_18, %c0_19] : memref<128x128xf32, #tpu.memory_space<vmem>>, vector<128x128xf32>
      tpu.vector_store %arg5[%c0_18, %c0_19], %22 {strides = array<i32>} : memref<128x128xf32, #tpu.memory_space<vmem>>, vector<128x128xf32>,
    } else {
    }
    %c0_i32_10 = arith.constant 0 : i32
    %12 = arith.cmpi eq, %arg2, %c0_i32_10 : i32
    %c0_i32_11 = arith.constant 0 : i32
    %13 = arith.cmpi eq, %arg1, %c0_i32_11 : i32
    %14 = arith.andi %12, %13 : i1
    %15 = arith.extui %14 : i1 to i32
    %c0_i32_12 = arith.constant 0 : i32
    %16 = arith.cmpi ne, %15, %c0_i32_12 : i32
    scf.if %16 {
      %c0_16 = arith.constant 0 : index
      %c0_17 = arith.constant 0 : index
      %22 = vector.load %arg8[%c0_16, %c0_17] : memref<128x128xf32, #tpu.memory_space<vmem>>, vector<128x128xf32>
      %cst_18 = arith.constant dense<0.000000e+00> : vector<128xf32>
      %23 = vector.multi_reduction <add>, %22, %cst_18 [0] : vector<128x128xf32> to vector<128xf32>
      %24 = vector.shape_cast %23 : vector<128xf32> to vector<1x128xf32>
      %c0_19 = arith.constant 0 : index
      %c0_20 = arith.constant 0 : index
      %25 = vector.load %arg6[%c0_19, %c0_20] : memref<1x128xf32, #tpu.memory_space<vmem>>, vector<1x128xf32>
      tpu.vector_store %arg6[%c0_19, %c0_20], %24 {strides = array<i32>} : memref<1x128xf32, #tpu.memory_space<vmem>>, vector<1x128xf32>,
      %26 = arith.mulf %22, %22 : vector<128x128xf32>
      %cst_21 = arith.constant dense<0.000000e+00> : vector<128xf32>
      %27 = vector.multi_reduction <add>, %26, %cst_21 [0] : vector<128x128xf32> to vector<128xf32>
      %28 = vector.shape_cast %27 : vector<128xf32> to vector<1x128xf32>
      %c0_22 = arith.constant 0 : index
      %c0_23 = arith.constant 0 : index
      %29 = vector.load %arg7[%c0_22, %c0_23] : memref<1x128xf32, #tpu.memory_space<vmem>>, vector<1x128xf32>
      tpu.vector_store %arg7[%c0_22, %c0_23], %28 {strides = array<i32>} : memref<1x128xf32, #tpu.memory_space<vmem>>, vector<1x128xf32>,
    } else {
    }
    %c0_i32_13 = arith.constant 0 : i32
    %17 = arith.cmpi eq, %arg2, %c0_i32_13 : i32
    %c0_i32_14 = arith.constant 0 : i32
    %18 = arith.cmpi sgt, %arg1, %c0_i32_14 : i32
    %19 = arith.andi %17, %18 : i1
    %20 = arith.extui %19 : i1 to i32
    %c0_i32_15 = arith.constant 0 : i32
    %21 = arith.cmpi ne, %20, %c0_i32_15 : i32
    scf.if %21 {
      %c0_16 = arith.constant 0 : index
      %c0_17 = arith.constant 0 : index
      %22 = vector.load %arg8[%c0_16, %c0_17] : memref<128x128xf32, #tpu.memory_space<vmem>>, vector<128x128xf32>
      %c0_18 = arith.constant 0 : index
      %c0_19 = arith.constant 0 : index
      %23 = vector.load %arg6[%c0_18, %c0_19] : memref<1x128xf32, #tpu.memory_space<vmem>>, vector<1x128xf32>
      %cst_20 = arith.constant dense<0.000000e+00> : vector<128xf32>
      %24 = vector.multi_reduction <add>, %22, %cst_20 [0] : vector<128x128xf32> to vector<128xf32>
      %25 = vector.shape_cast %24 : vector<128xf32> to vector<1x128xf32>
      %26 = arith.addf %23, %25 : vector<1x128xf32>
      %c0_21 = arith.constant 0 : index
      %c0_22 = arith.constant 0 : index
      %27 = vector.load %arg6[%c0_21, %c0_22] : memref<1x128xf32, #tpu.memory_space<vmem>>, vector<1x128xf32>
      tpu.vector_store %arg6[%c0_21, %c0_22], %26 {strides = array<i32>} : memref<1x128xf32, #tpu.memory_space<vmem>>, vector<1x128xf32>,
      %c0_23 = arith.constant 0 : index
      %c0_24 = arith.constant 0 : index
      %28 = vector.load %arg7[%c0_23, %c0_24] : memref<1x128xf32, #tpu.memory_space<vmem>>, vector<1x128xf32>
      %29 = arith.mulf %22, %22 : vector<128x128xf32>
      %cst_25 = arith.constant dense<0.000000e+00> : vector<128xf32>
      %30 = vector.multi_reduction <add>, %29, %cst_25 [0] : vector<128x128xf32> to vector<128xf32>
      %31 = vector.shape_cast %30 : vector<128xf32> to vector<1x128xf32>
      %32 = arith.addf %28, %31 : vector<1x128xf32>
      %c0_26 = arith.constant 0 : index
      %c0_27 = arith.constant 0 : index
      %33 = vector.load %arg7[%c0_26, %c0_27] : memref<1x128xf32, #tpu.memory_space<vmem>>, vector<1x128xf32>
      tpu.vector_store %arg7[%c0_26, %c0_27], %32 {strides = array<i32>} : memref<1x128xf32, #tpu.memory_space<vmem>>, vector<1x128xf32>,
    } else {
    }
    return
  }
  func.func @transform_0(%arg0: i32, %arg1: i32, %arg2: i32) -> (i32, i32) {
    %c0_i32 = arith.constant 0 : i32
    return %arg1, %arg2 : i32, i32
  }
  func.func @transform_1(%arg0: i32, %arg1: i32, %arg2: i32) -> (i32, i32) {
    %c0_i32 = arith.constant 0 : i32
    return %arg2, %arg0 : i32, i32
  }
  func.func @transform_2(%arg0: i32, %arg1: i32, %arg2: i32) -> (i32, i32) {
    %c0_i32 = arith.constant 0 : i32
    return %arg1, %arg0 : i32, i32
  }
  func.func @transform_3(%arg0: i32, %arg1: i32, %arg2: i32) -> (i32, i32) {
    %c0_i32 = arith.constant 0 : i32
    %c0_i32_0 = arith.constant 0 : i32
    return %c0_i32, %arg0 : i32, i32
  }
  func.func @transform_4(%arg0: i32, %arg1: i32, %arg2: i32) -> (i32, i32) {
    %c0_i32 = arith.constant 0 : i32
    %c0_i32_0 = arith.constant 0 : i32
    return %c0_i32, %arg0 : i32, i32
  }
}

module attributes {stable_mosaic.version = 11 : i64} {
  func.func @_mm_bn_stats_kernel(%arg0: i32, %arg1: i32, %arg2: i32, %arg3: memref<32x128xbf16, #tpu.memory_space<vmem>>, %arg4: memref<128x128xbf16, #tpu.memory_space<vmem>>, %arg5: memref<32x128xf32, #tpu.memory_space<vmem>>, %arg6: memref<1x128xf32, #tpu.memory_space<vmem>>, %arg7: memref<1x128xf32, #tpu.memory_space<vmem>>, %arg8: memref<32x128xf32, #tpu.memory_space<vmem>>) attributes {dimension_semantics = [#tpu.dimension_semantics<parallel>, #tpu.dimension_semantics<arbitrary>, #tpu.dimension_semantics<arbitrary>], iteration_bounds = array<i64: 1, 1, 1>, scalar_prefetch = 0 : i64, scratch_operands = 1 : i64, tpu.core_type = #tpu.core_type<tc>, window_params = [{transform_indices = @transform_0, window_bounds = array<i64: 32, 128>}, {transform_indices = @transform_1, window_bounds = array<i64: 128, 128>}, {transform_indices = @transform_2, window_bounds = array<i64: 32, 128>}, {transform_indices = @transform_3, window_bounds = array<i64: 1, 128>}, {transform_indices = @transform_4, window_bounds = array<i64: 1, 128>}]} {
    %c0_i32 = arith.constant 0 : i32
    %0 = arith.cmpi eq, %arg2, %c0_i32 : i32
    %1 = arith.extui %0 : i1 to i32
    %c0_i32_0 = arith.constant 0 : i32
    %2 = arith.cmpi ne, %1, %c0_i32_0 : i32
    scf.if %2 {
      %cst_16 = arith.constant 0.000000e+00 : f32
      %22 = vector.broadcast %cst_16 : f32 to vector<32x128xf32>
      %c0_17 = arith.constant 0 : index
      %c0_18 = arith.constant 0 : index
      %23 = vector.load %arg8[%c0_17, %c0_18] : memref<32x128xf32, #tpu.memory_space<vmem>>, vector<32x128xf32>
      tpu.vector_store %arg8[%c0_17, %c0_18], %22 {strides = array<i32>} : memref<32x128xf32, #tpu.memory_space<vmem>>, vector<32x128xf32>,
    } else {
    }
    %c0 = arith.constant 0 : index
    %c0_1 = arith.constant 0 : index
    %3 = vector.load %arg8[%c0, %c0_1] : memref<32x128xf32, #tpu.memory_space<vmem>>, vector<32x128xf32>
    %c0_2 = arith.constant 0 : index
    %c0_3 = arith.constant 0 : index
    %4 = vector.load %arg3[%c0_2, %c0_3] : memref<32x128xbf16, #tpu.memory_space<vmem>>, vector<32x128xbf16>
    %c0_4 = arith.constant 0 : index
    %c0_5 = arith.constant 0 : index
    %5 = vector.load %arg4[%c0_4, %c0_5] : memref<128x128xbf16, #tpu.memory_space<vmem>>, vector<128x128xbf16>
    %cst = arith.constant dense<0.000000e+00> : vector<32x128xf32>
    %6 = tpu.matmul %4, %5, %cst {dimension_numbers = #tpu.dot_dimension_numbers<[1], [0], [0], [1], [0, 0, 1, 1], [], []>} : vector<32x128xbf16>, vector<128x128xbf16>, vector<32x128xf32> -> vector<32x128xf32>
    %7 = arith.addf %3, %6 : vector<32x128xf32>
    %c0_6 = arith.constant 0 : index
    %c0_7 = arith.constant 0 : index
    %8 = vector.load %arg8[%c0_6, %c0_7] : memref<32x128xf32, #tpu.memory_space<vmem>>, vector<32x128xf32>
    tpu.vector_store %arg8[%c0_6, %c0_7], %7 {strides = array<i32>} : memref<32x128xf32, #tpu.memory_space<vmem>>, vector<32x128xf32>,
    %c0_i32_8 = arith.constant 0 : i32
    %9 = arith.cmpi eq, %arg2, %c0_i32_8 : i32
    %10 = arith.extui %9 : i1 to i32
    %c0_i32_9 = arith.constant 0 : i32
    %11 = arith.cmpi ne, %10, %c0_i32_9 : i32
    scf.if %11 {
      %c0_16 = arith.constant 0 : index
      %c0_17 = arith.constant 0 : index
      %22 = vector.load %arg8[%c0_16, %c0_17] : memref<32x128xf32, #tpu.memory_space<vmem>>, vector<32x128xf32>
      %c0_18 = arith.constant 0 : index
      %c0_19 = arith.constant 0 : index
      %23 = vector.load %arg5[%c0_18, %c0_19] : memref<32x128xf32, #tpu.memory_space<vmem>>, vector<32x128xf32>
      tpu.vector_store %arg5[%c0_18, %c0_19], %22 {strides = array<i32>} : memref<32x128xf32, #tpu.memory_space<vmem>>, vector<32x128xf32>,
    } else {
    }
    %c0_i32_10 = arith.constant 0 : i32
    %12 = arith.cmpi eq, %arg2, %c0_i32_10 : i32
    %c0_i32_11 = arith.constant 0 : i32
    %13 = arith.cmpi eq, %arg1, %c0_i32_11 : i32
    %14 = arith.andi %12, %13 : i1
    %15 = arith.extui %14 : i1 to i32
    %c0_i32_12 = arith.constant 0 : i32
    %16 = arith.cmpi ne, %15, %c0_i32_12 : i32
    scf.if %16 {
      %c0_16 = arith.constant 0 : index
      %c0_17 = arith.constant 0 : index
      %22 = vector.load %arg8[%c0_16, %c0_17] : memref<32x128xf32, #tpu.memory_space<vmem>>, vector<32x128xf32>
      %cst_18 = arith.constant dense<0.000000e+00> : vector<128xf32>
      %23 = vector.multi_reduction <add>, %22, %cst_18 [0] : vector<32x128xf32> to vector<128xf32>
      %24 = vector.shape_cast %23 : vector<128xf32> to vector<1x128xf32>
      %c0_19 = arith.constant 0 : index
      %c0_20 = arith.constant 0 : index
      %25 = vector.load %arg6[%c0_19, %c0_20] : memref<1x128xf32, #tpu.memory_space<vmem>>, vector<1x128xf32>
      tpu.vector_store %arg6[%c0_19, %c0_20], %24 {strides = array<i32>} : memref<1x128xf32, #tpu.memory_space<vmem>>, vector<1x128xf32>,
      %26 = arith.mulf %22, %22 : vector<32x128xf32>
      %cst_21 = arith.constant dense<0.000000e+00> : vector<128xf32>
      %27 = vector.multi_reduction <add>, %26, %cst_21 [0] : vector<32x128xf32> to vector<128xf32>
      %28 = vector.shape_cast %27 : vector<128xf32> to vector<1x128xf32>
      %c0_22 = arith.constant 0 : index
      %c0_23 = arith.constant 0 : index
      %29 = vector.load %arg7[%c0_22, %c0_23] : memref<1x128xf32, #tpu.memory_space<vmem>>, vector<1x128xf32>
      tpu.vector_store %arg7[%c0_22, %c0_23], %28 {strides = array<i32>} : memref<1x128xf32, #tpu.memory_space<vmem>>, vector<1x128xf32>,
    } else {
    }
    %c0_i32_13 = arith.constant 0 : i32
    %17 = arith.cmpi eq, %arg2, %c0_i32_13 : i32
    %c0_i32_14 = arith.constant 0 : i32
    %18 = arith.cmpi sgt, %arg1, %c0_i32_14 : i32
    %19 = arith.andi %17, %18 : i1
    %20 = arith.extui %19 : i1 to i32
    %c0_i32_15 = arith.constant 0 : i32
    %21 = arith.cmpi ne, %20, %c0_i32_15 : i32
    scf.if %21 {
      %c0_16 = arith.constant 0 : index
      %c0_17 = arith.constant 0 : index
      %22 = vector.load %arg8[%c0_16, %c0_17] : memref<32x128xf32, #tpu.memory_space<vmem>>, vector<32x128xf32>
      %c0_18 = arith.constant 0 : index
      %c0_19 = arith.constant 0 : index
      %23 = vector.load %arg6[%c0_18, %c0_19] : memref<1x128xf32, #tpu.memory_space<vmem>>, vector<1x128xf32>
      %cst_20 = arith.constant dense<0.000000e+00> : vector<128xf32>
      %24 = vector.multi_reduction <add>, %22, %cst_20 [0] : vector<32x128xf32> to vector<128xf32>
      %25 = vector.shape_cast %24 : vector<128xf32> to vector<1x128xf32>
      %26 = arith.addf %23, %25 : vector<1x128xf32>
      %c0_21 = arith.constant 0 : index
      %c0_22 = arith.constant 0 : index
      %27 = vector.load %arg6[%c0_21, %c0_22] : memref<1x128xf32, #tpu.memory_space<vmem>>, vector<1x128xf32>
      tpu.vector_store %arg6[%c0_21, %c0_22], %26 {strides = array<i32>} : memref<1x128xf32, #tpu.memory_space<vmem>>, vector<1x128xf32>,
      %c0_23 = arith.constant 0 : index
      %c0_24 = arith.constant 0 : index
      %28 = vector.load %arg7[%c0_23, %c0_24] : memref<1x128xf32, #tpu.memory_space<vmem>>, vector<1x128xf32>
      %29 = arith.mulf %22, %22 : vector<32x128xf32>
      %cst_25 = arith.constant dense<0.000000e+00> : vector<128xf32>
      %30 = vector.multi_reduction <add>, %29, %cst_25 [0] : vector<32x128xf32> to vector<128xf32>
      %31 = vector.shape_cast %30 : vector<128xf32> to vector<1x128xf32>
      %32 = arith.addf %28, %31 : vector<1x128xf32>
      %c0_26 = arith.constant 0 : index
      %c0_27 = arith.constant 0 : index
      %33 = vector.load %arg7[%c0_26, %c0_27] : memref<1x128xf32, #tpu.memory_space<vmem>>, vector<1x128xf32>
      tpu.vector_store %arg7[%c0_26, %c0_27], %32 {strides = array<i32>} : memref<1x128xf32, #tpu.memory_space<vmem>>, vector<1x128xf32>,
    } else {
    }
    return
  }
  func.func @transform_0(%arg0: i32, %arg1: i32, %arg2: i32) -> (i32, i32) {
    %c0_i32 = arith.constant 0 : i32
    return %arg1, %arg2 : i32, i32
  }
  func.func @transform_1(%arg0: i32, %arg1: i32, %arg2: i32) -> (i32, i32) {
    %c0_i32 = arith.constant 0 : i32
    return %arg2, %arg0 : i32, i32
  }
  func.func @transform_2(%arg0: i32, %arg1: i32, %arg2: i32) -> (i32, i32) {
    %c0_i32 = arith.constant 0 : i32
    return %arg1, %arg0 : i32, i32
  }
  func.func @transform_3(%arg0: i32, %arg1: i32, %arg2: i32) -> (i32, i32) {
    %c0_i32 = arith.constant 0 : i32
    %c0_i32_0 = arith.constant 0 : i32
    return %c0_i32, %arg0 : i32, i32
  }
  func.func @transform_4(%arg0: i32, %arg1: i32, %arg2: i32) -> (i32, i32) {
    %c0_i32 = arith.constant 0 : i32
    %c0_i32_0 = arith.constant 0 : i32
    return %c0_i32, %arg0 : i32, i32
  }
}

module attributes {stable_mosaic.version = 11 : i64} {
  func.func @_bn_apply_kernel(%arg0: i32, %arg1: memref<32x128xf32, #tpu.memory_space<vmem>>, %arg2: memref<1x128xf32, #tpu.memory_space<vmem>>, %arg3: memref<1x128xf32, #tpu.memory_space<vmem>>, %arg4: memref<32x128xbf16, #tpu.memory_space<vmem>>) attributes {dimension_semantics = [#tpu.dimension_semantics<parallel>], iteration_bounds = array<i64: 1>, scalar_prefetch = 0 : i64, scratch_operands = 0 : i64, tpu.core_type = #tpu.core_type<tc>, window_params = [{transform_indices = @transform_0, window_bounds = array<i64: 32, 128>}, {pipeline_mode = #tpu.pipeline_mode<synchronous>, transform_indices = @transform_1, window_bounds = array<i64: 1, 128>}, {pipeline_mode = #tpu.pipeline_mode<synchronous>, transform_indices = @transform_2, window_bounds = array<i64: 1, 128>}, {transform_indices = @transform_3, window_bounds = array<i64: 32, 128>}]} {
    %c0 = arith.constant 0 : index
    %c0_0 = arith.constant 0 : index
    %0 = vector.load %arg2[%c0, %c0_0] : memref<1x128xf32, #tpu.memory_space<vmem>>, vector<1x128xf32>
    %cst = arith.constant 3.125000e-02 : f32
    %1 = vector.broadcast %cst : f32 to vector<1x128xf32>
    %2 = arith.mulf %0, %1 : vector<1x128xf32>
    %c0_1 = arith.constant 0 : index
    %c0_2 = arith.constant 0 : index
    %3 = vector.load %arg3[%c0_1, %c0_2] : memref<1x128xf32, #tpu.memory_space<vmem>>, vector<1x128xf32>
    %cst_3 = arith.constant 3.125000e-02 : f32
    %4 = vector.broadcast %cst_3 : f32 to vector<1x128xf32>
    %5 = arith.mulf %3, %4 : vector<1x128xf32>
    %6 = arith.mulf %2, %2 : vector<1x128xf32>
    %7 = arith.subf %5, %6 : vector<1x128xf32>
    %c0_4 = arith.constant 0 : index
    %c0_5 = arith.constant 0 : index
    %8 = vector.load %arg1[%c0_4, %c0_5] : memref<32x128xf32, #tpu.memory_space<vmem>>, vector<32x128xf32>
    %9 = vector.broadcast %2 : vector<1x128xf32> to vector<32x128xf32>
    %10 = arith.subf %8, %9 : vector<32x128xf32>
    %cst_6 = arith.constant 9.99999974E-6 : f32
    %11 = vector.broadcast %cst_6 : f32 to vector<1x128xf32>
    %12 = arith.addf %7, %11 : vector<1x128xf32>
    %13 = math.rsqrt %12 : vector<1x128xf32>
    %14 = vector.broadcast %13 : vector<1x128xf32> to vector<32x128xf32>
    %15 = arith.mulf %10, %14 : vector<32x128xf32>
    %cst_7 = arith.constant 0.000000e+00 : f32
    %16 = vector.broadcast %cst_7 : f32 to vector<32x128xf32>
    %17 = arith.maximumf %15, %16 : vector<32x128xf32>
    %18 = arith.truncf %17 : vector<32x128xf32> to vector<32x128xbf16>
    %c0_8 = arith.constant 0 : index
    %c0_9 = arith.constant 0 : index
    %19 = vector.load %arg4[%c0_8, %c0_9] : memref<32x128xbf16, #tpu.memory_space<vmem>>, vector<32x128xbf16>
    tpu.vector_store %arg4[%c0_8, %c0_9], %18 {strides = array<i32>} : memref<32x128xbf16, #tpu.memory_space<vmem>>, vector<32x128xbf16>,
    return
  }
  func.func @transform_0(%arg0: i32) -> (i32, i32) {
    %c0_i32 = arith.constant 0 : i32
    %c0_i32_0 = arith.constant 0 : i32
    return %arg0, %c0_i32 : i32, i32
  }
  func.func @transform_1(%arg0: i32) -> (i32, i32) {
    %c0_i32 = arith.constant 0 : i32
    %c0_i32_0 = arith.constant 0 : i32
    %c0_i32_1 = arith.constant 0 : i32
    return %c0_i32, %c0_i32_0 : i32, i32
  }
  func.func @transform_2(%arg0: i32) -> (i32, i32) {
    %c0_i32 = arith.constant 0 : i32
    %c0_i32_0 = arith.constant 0 : i32
    %c0_i32_1 = arith.constant 0 : i32
    return %c0_i32, %c0_i32_0 : i32, i32
  }
  func.func @transform_3(%arg0: i32) -> (i32, i32) {
    %c0_i32 = arith.constant 0 : i32
    %c0_i32_0 = arith.constant 0 : i32
    return %arg0, %c0_i32 : i32, i32
  }
}

module attributes {stable_mosaic.version = 11 : i64} {
  func.func @_mm_bn_stats_kernel(%arg0: i32, %arg1: i32, %arg2: i32, %arg3: memref<32x128xbf16, #tpu.memory_space<vmem>>, %arg4: memref<128x128xbf16, #tpu.memory_space<vmem>>, %arg5: memref<32x128xf32, #tpu.memory_space<vmem>>, %arg6: memref<1x128xf32, #tpu.memory_space<vmem>>, %arg7: memref<1x128xf32, #tpu.memory_space<vmem>>, %arg8: memref<32x128xf32, #tpu.memory_space<vmem>>) attributes {dimension_semantics = [#tpu.dimension_semantics<parallel>, #tpu.dimension_semantics<arbitrary>, #tpu.dimension_semantics<arbitrary>], iteration_bounds = array<i64: 1, 1, 5>, scalar_prefetch = 0 : i64, scratch_operands = 1 : i64, tpu.core_type = #tpu.core_type<tc>, window_params = [{transform_indices = @transform_0, window_bounds = array<i64: 32, 128>}, {transform_indices = @transform_1, window_bounds = array<i64: 128, 128>}, {transform_indices = @transform_2, window_bounds = array<i64: 32, 128>}, {transform_indices = @transform_3, window_bounds = array<i64: 1, 128>}, {transform_indices = @transform_4, window_bounds = array<i64: 1, 128>}]} {
    %c0_i32 = arith.constant 0 : i32
    %0 = arith.cmpi eq, %arg2, %c0_i32 : i32
    %1 = arith.extui %0 : i1 to i32
    %c0_i32_0 = arith.constant 0 : i32
    %2 = arith.cmpi ne, %1, %c0_i32_0 : i32
    scf.if %2 {
      %cst_15 = arith.constant 0.000000e+00 : f32
      %22 = vector.broadcast %cst_15 : f32 to vector<32x128xf32>
      %c0_16 = arith.constant 0 : index
      %c0_17 = arith.constant 0 : index
      %23 = vector.load %arg8[%c0_16, %c0_17] : memref<32x128xf32, #tpu.memory_space<vmem>>, vector<32x128xf32>
      tpu.vector_store %arg8[%c0_16, %c0_17], %22 {strides = array<i32>} : memref<32x128xf32, #tpu.memory_space<vmem>>, vector<32x128xf32>,
    } else {
    }
    %c0 = arith.constant 0 : index
    %c0_1 = arith.constant 0 : index
    %3 = vector.load %arg8[%c0, %c0_1] : memref<32x128xf32, #tpu.memory_space<vmem>>, vector<32x128xf32>
    %c0_2 = arith.constant 0 : index
    %c0_3 = arith.constant 0 : index
    %4 = vector.load %arg3[%c0_2, %c0_3] : memref<32x128xbf16, #tpu.memory_space<vmem>>, vector<32x128xbf16>
    %c0_4 = arith.constant 0 : index
    %c0_5 = arith.constant 0 : index
    %5 = vector.load %arg4[%c0_4, %c0_5] : memref<128x128xbf16, #tpu.memory_space<vmem>>, vector<128x128xbf16>
    %cst = arith.constant dense<0.000000e+00> : vector<32x128xf32>
    %6 = tpu.matmul %4, %5, %cst {dimension_numbers = #tpu.dot_dimension_numbers<[1], [0], [0], [1], [0, 0, 1, 1], [], []>} : vector<32x128xbf16>, vector<128x128xbf16>, vector<32x128xf32> -> vector<32x128xf32>
    %7 = arith.addf %3, %6 : vector<32x128xf32>
    %c0_6 = arith.constant 0 : index
    %c0_7 = arith.constant 0 : index
    %8 = vector.load %arg8[%c0_6, %c0_7] : memref<32x128xf32, #tpu.memory_space<vmem>>, vector<32x128xf32>
    tpu.vector_store %arg8[%c0_6, %c0_7], %7 {strides = array<i32>} : memref<32x128xf32, #tpu.memory_space<vmem>>, vector<32x128xf32>,
    %c4_i32 = arith.constant 4 : i32
    %9 = arith.cmpi eq, %arg2, %c4_i32 : i32
    %10 = arith.extui %9 : i1 to i32
    %c0_i32_8 = arith.constant 0 : i32
    %11 = arith.cmpi ne, %10, %c0_i32_8 : i32
    scf.if %11 {
      %c0_15 = arith.constant 0 : index
      %c0_16 = arith.constant 0 : index
      %22 = vector.load %arg8[%c0_15, %c0_16] : memref<32x128xf32, #tpu.memory_space<vmem>>, vector<32x128xf32>
      %c0_17 = arith.constant 0 : index
      %c0_18 = arith.constant 0 : index
      %23 = vector.load %arg5[%c0_17, %c0_18] : memref<32x128xf32, #tpu.memory_space<vmem>>, vector<32x128xf32>
      tpu.vector_store %arg5[%c0_17, %c0_18], %22 {strides = array<i32>} : memref<32x128xf32, #tpu.memory_space<vmem>>, vector<32x128xf32>,
    } else {
    }
    %c4_i32_9 = arith.constant 4 : i32
    %12 = arith.cmpi eq, %arg2, %c4_i32_9 : i32
    %c0_i32_10 = arith.constant 0 : i32
    %13 = arith.cmpi eq, %arg1, %c0_i32_10 : i32
    %14 = arith.andi %12, %13 : i1
    %15 = arith.extui %14 : i1 to i32
    %c0_i32_11 = arith.constant 0 : i32
    %16 = arith.cmpi ne, %15, %c0_i32_11 : i32
    scf.if %16 {
      %c0_15 = arith.constant 0 : index
      %c0_16 = arith.constant 0 : index
      %22 = vector.load %arg8[%c0_15, %c0_16] : memref<32x128xf32, #tpu.memory_space<vmem>>, vector<32x128xf32>
      %cst_17 = arith.constant dense<0.000000e+00> : vector<128xf32>
      %23 = vector.multi_reduction <add>, %22, %cst_17 [0] : vector<32x128xf32> to vector<128xf32>
      %24 = vector.shape_cast %23 : vector<128xf32> to vector<1x128xf32>
      %c0_18 = arith.constant 0 : index
      %c0_19 = arith.constant 0 : index
      %25 = vector.load %arg6[%c0_18, %c0_19] : memref<1x128xf32, #tpu.memory_space<vmem>>, vector<1x128xf32>
      tpu.vector_store %arg6[%c0_18, %c0_19], %24 {strides = array<i32>} : memref<1x128xf32, #tpu.memory_space<vmem>>, vector<1x128xf32>,
      %26 = arith.mulf %22, %22 : vector<32x128xf32>
      %cst_20 = arith.constant dense<0.000000e+00> : vector<128xf32>
      %27 = vector.multi_reduction <add>, %26, %cst_20 [0] : vector<32x128xf32> to vector<128xf32>
      %28 = vector.shape_cast %27 : vector<128xf32> to vector<1x128xf32>
      %c0_21 = arith.constant 0 : index
      %c0_22 = arith.constant 0 : index
      %29 = vector.load %arg7[%c0_21, %c0_22] : memref<1x128xf32, #tpu.memory_space<vmem>>, vector<1x128xf32>
      tpu.vector_store %arg7[%c0_21, %c0_22], %28 {strides = array<i32>} : memref<1x128xf32, #tpu.memory_space<vmem>>, vector<1x128xf32>,
    } else {
    }
    %c4_i32_12 = arith.constant 4 : i32
    %17 = arith.cmpi eq, %arg2, %c4_i32_12 : i32
    %c0_i32_13 = arith.constant 0 : i32
    %18 = arith.cmpi sgt, %arg1, %c0_i32_13 : i32
    %19 = arith.andi %17, %18 : i1
    %20 = arith.extui %19 : i1 to i32
    %c0_i32_14 = arith.constant 0 : i32
    %21 = arith.cmpi ne, %20, %c0_i32_14 : i32
    scf.if %21 {
      %c0_15 = arith.constant 0 : index
      %c0_16 = arith.constant 0 : index
      %22 = vector.load %arg8[%c0_15, %c0_16] : memref<32x128xf32, #tpu.memory_space<vmem>>, vector<32x128xf32>
      %c0_17 = arith.constant 0 : index
      %c0_18 = arith.constant 0 : index
      %23 = vector.load %arg6[%c0_17, %c0_18] : memref<1x128xf32, #tpu.memory_space<vmem>>, vector<1x128xf32>
      %cst_19 = arith.constant dense<0.000000e+00> : vector<128xf32>
      %24 = vector.multi_reduction <add>, %22, %cst_19 [0] : vector<32x128xf32> to vector<128xf32>
      %25 = vector.shape_cast %24 : vector<128xf32> to vector<1x128xf32>
      %26 = arith.addf %23, %25 : vector<1x128xf32>
      %c0_20 = arith.constant 0 : index
      %c0_21 = arith.constant 0 : index
      %27 = vector.load %arg6[%c0_20, %c0_21] : memref<1x128xf32, #tpu.memory_space<vmem>>, vector<1x128xf32>
      tpu.vector_store %arg6[%c0_20, %c0_21], %26 {strides = array<i32>} : memref<1x128xf32, #tpu.memory_space<vmem>>, vector<1x128xf32>,
      %c0_22 = arith.constant 0 : index
      %c0_23 = arith.constant 0 : index
      %28 = vector.load %arg7[%c0_22, %c0_23] : memref<1x128xf32, #tpu.memory_space<vmem>>, vector<1x128xf32>
      %29 = arith.mulf %22, %22 : vector<32x128xf32>
      %cst_24 = arith.constant dense<0.000000e+00> : vector<128xf32>
      %30 = vector.multi_reduction <add>, %29, %cst_24 [0] : vector<32x128xf32> to vector<128xf32>
      %31 = vector.shape_cast %30 : vector<128xf32> to vector<1x128xf32>
      %32 = arith.addf %28, %31 : vector<1x128xf32>
      %c0_25 = arith.constant 0 : index
      %c0_26 = arith.constant 0 : index
      %33 = vector.load %arg7[%c0_25, %c0_26] : memref<1x128xf32, #tpu.memory_space<vmem>>, vector<1x128xf32>
      tpu.vector_store %arg7[%c0_25, %c0_26], %32 {strides = array<i32>} : memref<1x128xf32, #tpu.memory_space<vmem>>, vector<1x128xf32>,
    } else {
    }
    return
  }
  func.func @transform_0(%arg0: i32, %arg1: i32, %arg2: i32) -> (i32, i32) {
    %c0_i32 = arith.constant 0 : i32
    return %arg1, %arg2 : i32, i32
  }
  func.func @transform_1(%arg0: i32, %arg1: i32, %arg2: i32) -> (i32, i32) {
    %c0_i32 = arith.constant 0 : i32
    return %arg2, %arg0 : i32, i32
  }
  func.func @transform_2(%arg0: i32, %arg1: i32, %arg2: i32) -> (i32, i32) {
    %c0_i32 = arith.constant 0 : i32
    return %arg1, %arg0 : i32, i32
  }
  func.func @transform_3(%arg0: i32, %arg1: i32, %arg2: i32) -> (i32, i32) {
    %c0_i32 = arith.constant 0 : i32
    %c0_i32_0 = arith.constant 0 : i32
    return %c0_i32, %arg0 : i32, i32
  }
  func.func @transform_4(%arg0: i32, %arg1: i32, %arg2: i32) -> (i32, i32) {
    %c0_i32 = arith.constant 0 : i32
    %c0_i32_0 = arith.constant 0 : i32
    return %c0_i32, %arg0 : i32, i32
  }
}

module attributes {stable_mosaic.version = 11 : i64} {
  func.func @_bn_apply_add_relu_kernel(%arg0: i32, %arg1: memref<32x128xf32, #tpu.memory_space<vmem>>, %arg2: memref<1x128xf32, #tpu.memory_space<vmem>>, %arg3: memref<1x128xf32, #tpu.memory_space<vmem>>, %arg4: memref<32x128xf32, #tpu.memory_space<vmem>>, %arg5: memref<32x128xf32, #tpu.memory_space<vmem>>) attributes {dimension_semantics = [#tpu.dimension_semantics<parallel>], iteration_bounds = array<i64: 1>, scalar_prefetch = 0 : i64, scratch_operands = 0 : i64, tpu.core_type = #tpu.core_type<tc>, window_params = [{transform_indices = @transform_0, window_bounds = array<i64: 32, 128>}, {pipeline_mode = #tpu.pipeline_mode<synchronous>, transform_indices = @transform_1, window_bounds = array<i64: 1, 128>}, {pipeline_mode = #tpu.pipeline_mode<synchronous>, transform_indices = @transform_2, window_bounds = array<i64: 1, 128>}, {transform_indices = @transform_3, window_bounds = array<i64: 32, 128>}, {transform_indices = @transform_4, window_bounds = array<i64: 32, 128>}]} {
    %c0 = arith.constant 0 : index
    %c0_0 = arith.constant 0 : index
    %0 = vector.load %arg2[%c0, %c0_0] : memref<1x128xf32, #tpu.memory_space<vmem>>, vector<1x128xf32>
    %cst = arith.constant 3.125000e-02 : f32
    %1 = vector.broadcast %cst : f32 to vector<1x128xf32>
    %2 = arith.mulf %0, %1 : vector<1x128xf32>
    %c0_1 = arith.constant 0 : index
    %c0_2 = arith.constant 0 : index
    %3 = vector.load %arg3[%c0_1, %c0_2] : memref<1x128xf32, #tpu.memory_space<vmem>>, vector<1x128xf32>
    %cst_3 = arith.constant 3.125000e-02 : f32
    %4 = vector.broadcast %cst_3 : f32 to vector<1x128xf32>
    %5 = arith.mulf %3, %4 : vector<1x128xf32>
    %6 = arith.mulf %2, %2 : vector<1x128xf32>
    %7 = arith.subf %5, %6 : vector<1x128xf32>
    %c0_4 = arith.constant 0 : index
    %c0_5 = arith.constant 0 : index
    %8 = vector.load %arg1[%c0_4, %c0_5] : memref<32x128xf32, #tpu.memory_space<vmem>>, vector<32x128xf32>
    %9 = vector.broadcast %2 : vector<1x128xf32> to vector<32x128xf32>
    %10 = arith.subf %8, %9 : vector<32x128xf32>
    %cst_6 = arith.constant 9.99999974E-6 : f32
    %11 = vector.broadcast %cst_6 : f32 to vector<1x128xf32>
    %12 = arith.addf %7, %11 : vector<1x128xf32>
    %13 = math.rsqrt %12 : vector<1x128xf32>
    %14 = vector.broadcast %13 : vector<1x128xf32> to vector<32x128xf32>
    %15 = arith.mulf %10, %14 : vector<32x128xf32>
    %c0_7 = arith.constant 0 : index
    %c0_8 = arith.constant 0 : index
    %16 = vector.load %arg4[%c0_7, %c0_8] : memref<32x128xf32, #tpu.memory_space<vmem>>, vector<32x128xf32>
    %17 = arith.addf %15, %16 : vector<32x128xf32>
    %cst_9 = arith.constant 0.000000e+00 : f32
    %18 = vector.broadcast %cst_9 : f32 to vector<32x128xf32>
    %19 = arith.maximumf %17, %18 : vector<32x128xf32>
    %c0_10 = arith.constant 0 : index
    %c0_11 = arith.constant 0 : index
    %20 = vector.load %arg5[%c0_10, %c0_11] : memref<32x128xf32, #tpu.memory_space<vmem>>, vector<32x128xf32>
    tpu.vector_store %arg5[%c0_10, %c0_11], %19 {strides = array<i32>} : memref<32x128xf32, #tpu.memory_space<vmem>>, vector<32x128xf32>,
    return
  }
  func.func @transform_0(%arg0: i32) -> (i32, i32) {
    %c0_i32 = arith.constant 0 : i32
    %c0_i32_0 = arith.constant 0 : i32
    return %arg0, %c0_i32 : i32, i32
  }
  func.func @transform_1(%arg0: i32) -> (i32, i32) {
    %c0_i32 = arith.constant 0 : i32
    %c0_i32_0 = arith.constant 0 : i32
    %c0_i32_1 = arith.constant 0 : i32
    return %c0_i32, %c0_i32_0 : i32, i32
  }
  func.func @transform_2(%arg0: i32) -> (i32, i32) {
    %c0_i32 = arith.constant 0 : i32
    %c0_i32_0 = arith.constant 0 : i32
    %c0_i32_1 = arith.constant 0 : i32
    return %c0_i32, %c0_i32_0 : i32, i32
  }
  func.func @transform_3(%arg0: i32) -> (i32, i32) {
    %c0_i32 = arith.constant 0 : i32
    %c0_i32_0 = arith.constant 0 : i32
    return %arg0, %c0_i32 : i32, i32
  }
  func.func @transform_4(%arg0: i32) -> (i32, i32) {
    %c0_i32 = arith.constant 0 : i32
    %c0_i32_0 = arith.constant 0 : i32
    return %arg0, %c0_i32 : i32, i32
  }
}

module attributes {stable_mosaic.version = 11 : i64} {
  func.func @_bn_apply_kernel(%arg0: i32, %arg1: memref<16x128xf32, #tpu.memory_space<vmem>>, %arg2: memref<1x128xf32, #tpu.memory_space<vmem>>, %arg3: memref<1x128xf32, #tpu.memory_space<vmem>>, %arg4: memref<16x128xf32, #tpu.memory_space<vmem>>) attributes {dimension_semantics = [#tpu.dimension_semantics<parallel>], iteration_bounds = array<i64: 1>, scalar_prefetch = 0 : i64, scratch_operands = 0 : i64, tpu.core_type = #tpu.core_type<tc>, window_params = [{transform_indices = @transform_0, window_bounds = array<i64: 16, 128>}, {pipeline_mode = #tpu.pipeline_mode<synchronous>, transform_indices = @transform_1, window_bounds = array<i64: 1, 128>}, {pipeline_mode = #tpu.pipeline_mode<synchronous>, transform_indices = @transform_2, window_bounds = array<i64: 1, 128>}, {transform_indices = @transform_3, window_bounds = array<i64: 16, 128>}]} {
    %c0 = arith.constant 0 : index
    %c0_0 = arith.constant 0 : index
    %0 = vector.load %arg2[%c0, %c0_0] : memref<1x128xf32, #tpu.memory_space<vmem>>, vector<1x128xf32>
    %cst = arith.constant 1.250000e-01 : f32
    %1 = vector.broadcast %cst : f32 to vector<1x128xf32>
    %2 = arith.mulf %0, %1 : vector<1x128xf32>
    %c0_1 = arith.constant 0 : index
    %c0_2 = arith.constant 0 : index
    %3 = vector.load %arg3[%c0_1, %c0_2] : memref<1x128xf32, #tpu.memory_space<vmem>>, vector<1x128xf32>
    %cst_3 = arith.constant 1.250000e-01 : f32
    %4 = vector.broadcast %cst_3 : f32 to vector<1x128xf32>
    %5 = arith.mulf %3, %4 : vector<1x128xf32>
    %6 = arith.mulf %2, %2 : vector<1x128xf32>
    %7 = arith.subf %5, %6 : vector<1x128xf32>
    %c0_4 = arith.constant 0 : index
    %c0_5 = arith.constant 0 : index
    %8 = vector.load %arg1[%c0_4, %c0_5] : memref<16x128xf32, #tpu.memory_space<vmem>>, vector<16x128xf32>
    %9 = vector.broadcast %2 : vector<1x128xf32> to vector<16x128xf32>
    %10 = arith.subf %8, %9 : vector<16x128xf32>
    %cst_6 = arith.constant 9.99999974E-6 : f32
    %11 = vector.broadcast %cst_6 : f32 to vector<1x128xf32>
    %12 = arith.addf %7, %11 : vector<1x128xf32>
    %13 = math.rsqrt %12 : vector<1x128xf32>
    %14 = vector.broadcast %13 : vector<1x128xf32> to vector<16x128xf32>
    %15 = arith.mulf %10, %14 : vector<16x128xf32>
    %c0_7 = arith.constant 0 : index
    %c0_8 = arith.constant 0 : index
    %16 = vector.load %arg4[%c0_7, %c0_8] : memref<16x128xf32, #tpu.memory_space<vmem>>, vector<16x128xf32>
    tpu.vector_store %arg4[%c0_7, %c0_8], %15 {strides = array<i32>} : memref<16x128xf32, #tpu.memory_space<vmem>>, vector<16x128xf32>,
    return
  }
  func.func @transform_0(%arg0: i32) -> (i32, i32) {
    %c0_i32 = arith.constant 0 : i32
    %c0_i32_0 = arith.constant 0 : i32
    return %arg0, %c0_i32 : i32, i32
  }
  func.func @transform_1(%arg0: i32) -> (i32, i32) {
    %c0_i32 = arith.constant 0 : i32
    %c0_i32_0 = arith.constant 0 : i32
    %c0_i32_1 = arith.constant 0 : i32
    return %c0_i32, %c0_i32_0 : i32, i32
  }
  func.func @transform_2(%arg0: i32) -> (i32, i32) {
    %c0_i32 = arith.constant 0 : i32
    %c0_i32_0 = arith.constant 0 : i32
    %c0_i32_1 = arith.constant 0 : i32
    return %c0_i32, %c0_i32_0 : i32, i32
  }
  func.func @transform_3(%arg0: i32) -> (i32, i32) {
    %c0_i32 = arith.constant 0 : i32
    %c0_i32_0 = arith.constant 0 : i32
    return %arg0, %c0_i32 : i32, i32
  }
}

module attributes {stable_mosaic.version = 11 : i64} {
  func.func @_mm_bn_stats_kernel(%arg0: i32, %arg1: i32, %arg2: i32, %arg3: memref<16x128xbf16, #tpu.memory_space<vmem>>, %arg4: memref<128x128xbf16, #tpu.memory_space<vmem>>, %arg5: memref<16x128xf32, #tpu.memory_space<vmem>>, %arg6: memref<1x128xf32, #tpu.memory_space<vmem>>, %arg7: memref<1x128xf32, #tpu.memory_space<vmem>>, %arg8: memref<16x128xf32, #tpu.memory_space<vmem>>) attributes {dimension_semantics = [#tpu.dimension_semantics<parallel>, #tpu.dimension_semantics<arbitrary>, #tpu.dimension_semantics<arbitrary>], iteration_bounds = array<i64: 1, 1, 1>, scalar_prefetch = 0 : i64, scratch_operands = 1 : i64, tpu.core_type = #tpu.core_type<tc>, window_params = [{transform_indices = @transform_0, window_bounds = array<i64: 16, 128>}, {transform_indices = @transform_1, window_bounds = array<i64: 128, 128>}, {transform_indices = @transform_2, window_bounds = array<i64: 16, 128>}, {transform_indices = @transform_3, window_bounds = array<i64: 1, 128>}, {transform_indices = @transform_4, window_bounds = array<i64: 1, 128>}]} {
    %c0_i32 = arith.constant 0 : i32
    %0 = arith.cmpi eq, %arg2, %c0_i32 : i32
    %1 = arith.extui %0 : i1 to i32
    %c0_i32_0 = arith.constant 0 : i32
    %2 = arith.cmpi ne, %1, %c0_i32_0 : i32
    scf.if %2 {
      %cst_16 = arith.constant 0.000000e+00 : f32
      %22 = vector.broadcast %cst_16 : f32 to vector<16x128xf32>
      %c0_17 = arith.constant 0 : index
      %c0_18 = arith.constant 0 : index
      %23 = vector.load %arg8[%c0_17, %c0_18] : memref<16x128xf32, #tpu.memory_space<vmem>>, vector<16x128xf32>
      tpu.vector_store %arg8[%c0_17, %c0_18], %22 {strides = array<i32>} : memref<16x128xf32, #tpu.memory_space<vmem>>, vector<16x128xf32>,
    } else {
    }
    %c0 = arith.constant 0 : index
    %c0_1 = arith.constant 0 : index
    %3 = vector.load %arg8[%c0, %c0_1] : memref<16x128xf32, #tpu.memory_space<vmem>>, vector<16x128xf32>
    %c0_2 = arith.constant 0 : index
    %c0_3 = arith.constant 0 : index
    %4 = vector.load %arg3[%c0_2, %c0_3] : memref<16x128xbf16, #tpu.memory_space<vmem>>, vector<16x128xbf16>
    %c0_4 = arith.constant 0 : index
    %c0_5 = arith.constant 0 : index
    %5 = vector.load %arg4[%c0_4, %c0_5] : memref<128x128xbf16, #tpu.memory_space<vmem>>, vector<128x128xbf16>
    %cst = arith.constant dense<0.000000e+00> : vector<16x128xf32>
    %6 = tpu.matmul %4, %5, %cst {dimension_numbers = #tpu.dot_dimension_numbers<[1], [0], [0], [1], [0, 0, 1, 1], [], []>} : vector<16x128xbf16>, vector<128x128xbf16>, vector<16x128xf32> -> vector<16x128xf32>
    %7 = arith.addf %3, %6 : vector<16x128xf32>
    %c0_6 = arith.constant 0 : index
    %c0_7 = arith.constant 0 : index
    %8 = vector.load %arg8[%c0_6, %c0_7] : memref<16x128xf32, #tpu.memory_space<vmem>>, vector<16x128xf32>
    tpu.vector_store %arg8[%c0_6, %c0_7], %7 {strides = array<i32>} : memref<16x128xf32, #tpu.memory_space<vmem>>, vector<16x128xf32>,
    %c0_i32_8 = arith.constant 0 : i32
    %9 = arith.cmpi eq, %arg2, %c0_i32_8 : i32
    %10 = arith.extui %9 : i1 to i32
    %c0_i32_9 = arith.constant 0 : i32
    %11 = arith.cmpi ne, %10, %c0_i32_9 : i32
    scf.if %11 {
      %c0_16 = arith.constant 0 : index
      %c0_17 = arith.constant 0 : index
      %22 = vector.load %arg8[%c0_16, %c0_17] : memref<16x128xf32, #tpu.memory_space<vmem>>, vector<16x128xf32>
      %c0_18 = arith.constant 0 : index
      %c0_19 = arith.constant 0 : index
      %23 = vector.load %arg5[%c0_18, %c0_19] : memref<16x128xf32, #tpu.memory_space<vmem>>, vector<16x128xf32>
      tpu.vector_store %arg5[%c0_18, %c0_19], %22 {strides = array<i32>} : memref<16x128xf32, #tpu.memory_space<vmem>>, vector<16x128xf32>,
    } else {
    }
    %c0_i32_10 = arith.constant 0 : i32
    %12 = arith.cmpi eq, %arg2, %c0_i32_10 : i32
    %c0_i32_11 = arith.constant 0 : i32
    %13 = arith.cmpi eq, %arg1, %c0_i32_11 : i32
    %14 = arith.andi %12, %13 : i1
    %15 = arith.extui %14 : i1 to i32
    %c0_i32_12 = arith.constant 0 : i32
    %16 = arith.cmpi ne, %15, %c0_i32_12 : i32
    scf.if %16 {
      %c0_16 = arith.constant 0 : index
      %c0_17 = arith.constant 0 : index
      %22 = vector.load %arg8[%c0_16, %c0_17] : memref<16x128xf32, #tpu.memory_space<vmem>>, vector<16x128xf32>
      %cst_18 = arith.constant dense<0.000000e+00> : vector<128xf32>
      %23 = vector.multi_reduction <add>, %22, %cst_18 [0] : vector<16x128xf32> to vector<128xf32>
      %24 = vector.shape_cast %23 : vector<128xf32> to vector<1x128xf32>
      %c0_19 = arith.constant 0 : index
      %c0_20 = arith.constant 0 : index
      %25 = vector.load %arg6[%c0_19, %c0_20] : memref<1x128xf32, #tpu.memory_space<vmem>>, vector<1x128xf32>
      tpu.vector_store %arg6[%c0_19, %c0_20], %24 {strides = array<i32>} : memref<1x128xf32, #tpu.memory_space<vmem>>, vector<1x128xf32>,
      %26 = arith.mulf %22, %22 : vector<16x128xf32>
      %cst_21 = arith.constant dense<0.000000e+00> : vector<128xf32>
      %27 = vector.multi_reduction <add>, %26, %cst_21 [0] : vector<16x128xf32> to vector<128xf32>
      %28 = vector.shape_cast %27 : vector<128xf32> to vector<1x128xf32>
      %c0_22 = arith.constant 0 : index
      %c0_23 = arith.constant 0 : index
      %29 = vector.load %arg7[%c0_22, %c0_23] : memref<1x128xf32, #tpu.memory_space<vmem>>, vector<1x128xf32>
      tpu.vector_store %arg7[%c0_22, %c0_23], %28 {strides = array<i32>} : memref<1x128xf32, #tpu.memory_space<vmem>>, vector<1x128xf32>,
    } else {
    }
    %c0_i32_13 = arith.constant 0 : i32
    %17 = arith.cmpi eq, %arg2, %c0_i32_13 : i32
    %c0_i32_14 = arith.constant 0 : i32
    %18 = arith.cmpi sgt, %arg1, %c0_i32_14 : i32
    %19 = arith.andi %17, %18 : i1
    %20 = arith.extui %19 : i1 to i32
    %c0_i32_15 = arith.constant 0 : i32
    %21 = arith.cmpi ne, %20, %c0_i32_15 : i32
    scf.if %21 {
      %c0_16 = arith.constant 0 : index
      %c0_17 = arith.constant 0 : index
      %22 = vector.load %arg8[%c0_16, %c0_17] : memref<16x128xf32, #tpu.memory_space<vmem>>, vector<16x128xf32>
      %c0_18 = arith.constant 0 : index
      %c0_19 = arith.constant 0 : index
      %23 = vector.load %arg6[%c0_18, %c0_19] : memref<1x128xf32, #tpu.memory_space<vmem>>, vector<1x128xf32>
      %cst_20 = arith.constant dense<0.000000e+00> : vector<128xf32>
      %24 = vector.multi_reduction <add>, %22, %cst_20 [0] : vector<16x128xf32> to vector<128xf32>
      %25 = vector.shape_cast %24 : vector<128xf32> to vector<1x128xf32>
      %26 = arith.addf %23, %25 : vector<1x128xf32>
      %c0_21 = arith.constant 0 : index
      %c0_22 = arith.constant 0 : index
      %27 = vector.load %arg6[%c0_21, %c0_22] : memref<1x128xf32, #tpu.memory_space<vmem>>, vector<1x128xf32>
      tpu.vector_store %arg6[%c0_21, %c0_22], %26 {strides = array<i32>} : memref<1x128xf32, #tpu.memory_space<vmem>>, vector<1x128xf32>,
      %c0_23 = arith.constant 0 : index
      %c0_24 = arith.constant 0 : index
      %28 = vector.load %arg7[%c0_23, %c0_24] : memref<1x128xf32, #tpu.memory_space<vmem>>, vector<1x128xf32>
      %29 = arith.mulf %22, %22 : vector<16x128xf32>
      %cst_25 = arith.constant dense<0.000000e+00> : vector<128xf32>
      %30 = vector.multi_reduction <add>, %29, %cst_25 [0] : vector<16x128xf32> to vector<128xf32>
      %31 = vector.shape_cast %30 : vector<128xf32> to vector<1x128xf32>
      %32 = arith.addf %28, %31 : vector<1x128xf32>
      %c0_26 = arith.constant 0 : index
      %c0_27 = arith.constant 0 : index
      %33 = vector.load %arg7[%c0_26, %c0_27] : memref<1x128xf32, #tpu.memory_space<vmem>>, vector<1x128xf32>
      tpu.vector_store %arg7[%c0_26, %c0_27], %32 {strides = array<i32>} : memref<1x128xf32, #tpu.memory_space<vmem>>, vector<1x128xf32>,
    } else {
    }
    return
  }
  func.func @transform_0(%arg0: i32, %arg1: i32, %arg2: i32) -> (i32, i32) {
    %c0_i32 = arith.constant 0 : i32
    return %arg1, %arg2 : i32, i32
  }
  func.func @transform_1(%arg0: i32, %arg1: i32, %arg2: i32) -> (i32, i32) {
    %c0_i32 = arith.constant 0 : i32
    return %arg2, %arg0 : i32, i32
  }
  func.func @transform_2(%arg0: i32, %arg1: i32, %arg2: i32) -> (i32, i32) {
    %c0_i32 = arith.constant 0 : i32
    return %arg1, %arg0 : i32, i32
  }
  func.func @transform_3(%arg0: i32, %arg1: i32, %arg2: i32) -> (i32, i32) {
    %c0_i32 = arith.constant 0 : i32
    %c0_i32_0 = arith.constant 0 : i32
    return %c0_i32, %arg0 : i32, i32
  }
  func.func @transform_4(%arg0: i32, %arg1: i32, %arg2: i32) -> (i32, i32) {
    %c0_i32 = arith.constant 0 : i32
    %c0_i32_0 = arith.constant 0 : i32
    return %c0_i32, %arg0 : i32, i32
  }
}

module attributes {stable_mosaic.version = 11 : i64} {
  func.func @_mm_bn_stats_kernel(%arg0: i32, %arg1: i32, %arg2: i32, %arg3: memref<16x128xbf16, #tpu.memory_space<vmem>>, %arg4: memref<128x128xbf16, #tpu.memory_space<vmem>>, %arg5: memref<16x128xf32, #tpu.memory_space<vmem>>, %arg6: memref<1x128xf32, #tpu.memory_space<vmem>>, %arg7: memref<1x128xf32, #tpu.memory_space<vmem>>, %arg8: memref<16x128xf32, #tpu.memory_space<vmem>>) attributes {dimension_semantics = [#tpu.dimension_semantics<parallel>, #tpu.dimension_semantics<arbitrary>, #tpu.dimension_semantics<arbitrary>], iteration_bounds = array<i64: 1, 1, 5>, scalar_prefetch = 0 : i64, scratch_operands = 1 : i64, tpu.core_type = #tpu.core_type<tc>, window_params = [{transform_indices = @transform_0, window_bounds = array<i64: 16, 128>}, {transform_indices = @transform_1, window_bounds = array<i64: 128, 128>}, {transform_indices = @transform_2, window_bounds = array<i64: 16, 128>}, {transform_indices = @transform_3, window_bounds = array<i64: 1, 128>}, {transform_indices = @transform_4, window_bounds = array<i64: 1, 128>}]} {
    %c0_i32 = arith.constant 0 : i32
    %0 = arith.cmpi eq, %arg2, %c0_i32 : i32
    %1 = arith.extui %0 : i1 to i32
    %c0_i32_0 = arith.constant 0 : i32
    %2 = arith.cmpi ne, %1, %c0_i32_0 : i32
    scf.if %2 {
      %cst_15 = arith.constant 0.000000e+00 : f32
      %22 = vector.broadcast %cst_15 : f32 to vector<16x128xf32>
      %c0_16 = arith.constant 0 : index
      %c0_17 = arith.constant 0 : index
      %23 = vector.load %arg8[%c0_16, %c0_17] : memref<16x128xf32, #tpu.memory_space<vmem>>, vector<16x128xf32>
      tpu.vector_store %arg8[%c0_16, %c0_17], %22 {strides = array<i32>} : memref<16x128xf32, #tpu.memory_space<vmem>>, vector<16x128xf32>,
    } else {
    }
    %c0 = arith.constant 0 : index
    %c0_1 = arith.constant 0 : index
    %3 = vector.load %arg8[%c0, %c0_1] : memref<16x128xf32, #tpu.memory_space<vmem>>, vector<16x128xf32>
    %c0_2 = arith.constant 0 : index
    %c0_3 = arith.constant 0 : index
    %4 = vector.load %arg3[%c0_2, %c0_3] : memref<16x128xbf16, #tpu.memory_space<vmem>>, vector<16x128xbf16>
    %c0_4 = arith.constant 0 : index
    %c0_5 = arith.constant 0 : index
    %5 = vector.load %arg4[%c0_4, %c0_5] : memref<128x128xbf16, #tpu.memory_space<vmem>>, vector<128x128xbf16>
    %cst = arith.constant dense<0.000000e+00> : vector<16x128xf32>
    %6 = tpu.matmul %4, %5, %cst {dimension_numbers = #tpu.dot_dimension_numbers<[1], [0], [0], [1], [0, 0, 1, 1], [], []>} : vector<16x128xbf16>, vector<128x128xbf16>, vector<16x128xf32> -> vector<16x128xf32>
    %7 = arith.addf %3, %6 : vector<16x128xf32>
    %c0_6 = arith.constant 0 : index
    %c0_7 = arith.constant 0 : index
    %8 = vector.load %arg8[%c0_6, %c0_7] : memref<16x128xf32, #tpu.memory_space<vmem>>, vector<16x128xf32>
    tpu.vector_store %arg8[%c0_6, %c0_7], %7 {strides = array<i32>} : memref<16x128xf32, #tpu.memory_space<vmem>>, vector<16x128xf32>,
    %c4_i32 = arith.constant 4 : i32
    %9 = arith.cmpi eq, %arg2, %c4_i32 : i32
    %10 = arith.extui %9 : i1 to i32
    %c0_i32_8 = arith.constant 0 : i32
    %11 = arith.cmpi ne, %10, %c0_i32_8 : i32
    scf.if %11 {
      %c0_15 = arith.constant 0 : index
      %c0_16 = arith.constant 0 : index
      %22 = vector.load %arg8[%c0_15, %c0_16] : memref<16x128xf32, #tpu.memory_space<vmem>>, vector<16x128xf32>
      %c0_17 = arith.constant 0 : index
      %c0_18 = arith.constant 0 : index
      %23 = vector.load %arg5[%c0_17, %c0_18] : memref<16x128xf32, #tpu.memory_space<vmem>>, vector<16x128xf32>
      tpu.vector_store %arg5[%c0_17, %c0_18], %22 {strides = array<i32>} : memref<16x128xf32, #tpu.memory_space<vmem>>, vector<16x128xf32>,
    } else {
    }
    %c4_i32_9 = arith.constant 4 : i32
    %12 = arith.cmpi eq, %arg2, %c4_i32_9 : i32
    %c0_i32_10 = arith.constant 0 : i32
    %13 = arith.cmpi eq, %arg1, %c0_i32_10 : i32
    %14 = arith.andi %12, %13 : i1
    %15 = arith.extui %14 : i1 to i32
    %c0_i32_11 = arith.constant 0 : i32
    %16 = arith.cmpi ne, %15, %c0_i32_11 : i32
    scf.if %16 {
      %c0_15 = arith.constant 0 : index
      %c0_16 = arith.constant 0 : index
      %22 = vector.load %arg8[%c0_15, %c0_16] : memref<16x128xf32, #tpu.memory_space<vmem>>, vector<16x128xf32>
      %cst_17 = arith.constant dense<0.000000e+00> : vector<128xf32>
      %23 = vector.multi_reduction <add>, %22, %cst_17 [0] : vector<16x128xf32> to vector<128xf32>
      %24 = vector.shape_cast %23 : vector<128xf32> to vector<1x128xf32>
      %c0_18 = arith.constant 0 : index
      %c0_19 = arith.constant 0 : index
      %25 = vector.load %arg6[%c0_18, %c0_19] : memref<1x128xf32, #tpu.memory_space<vmem>>, vector<1x128xf32>
      tpu.vector_store %arg6[%c0_18, %c0_19], %24 {strides = array<i32>} : memref<1x128xf32, #tpu.memory_space<vmem>>, vector<1x128xf32>,
      %26 = arith.mulf %22, %22 : vector<16x128xf32>
      %cst_20 = arith.constant dense<0.000000e+00> : vector<128xf32>
      %27 = vector.multi_reduction <add>, %26, %cst_20 [0] : vector<16x128xf32> to vector<128xf32>
      %28 = vector.shape_cast %27 : vector<128xf32> to vector<1x128xf32>
      %c0_21 = arith.constant 0 : index
      %c0_22 = arith.constant 0 : index
      %29 = vector.load %arg7[%c0_21, %c0_22] : memref<1x128xf32, #tpu.memory_space<vmem>>, vector<1x128xf32>
      tpu.vector_store %arg7[%c0_21, %c0_22], %28 {strides = array<i32>} : memref<1x128xf32, #tpu.memory_space<vmem>>, vector<1x128xf32>,
    } else {
    }
    %c4_i32_12 = arith.constant 4 : i32
    %17 = arith.cmpi eq, %arg2, %c4_i32_12 : i32
    %c0_i32_13 = arith.constant 0 : i32
    %18 = arith.cmpi sgt, %arg1, %c0_i32_13 : i32
    %19 = arith.andi %17, %18 : i1
    %20 = arith.extui %19 : i1 to i32
    %c0_i32_14 = arith.constant 0 : i32
    %21 = arith.cmpi ne, %20, %c0_i32_14 : i32
    scf.if %21 {
      %c0_15 = arith.constant 0 : index
      %c0_16 = arith.constant 0 : index
      %22 = vector.load %arg8[%c0_15, %c0_16] : memref<16x128xf32, #tpu.memory_space<vmem>>, vector<16x128xf32>
      %c0_17 = arith.constant 0 : index
      %c0_18 = arith.constant 0 : index
      %23 = vector.load %arg6[%c0_17, %c0_18] : memref<1x128xf32, #tpu.memory_space<vmem>>, vector<1x128xf32>
      %cst_19 = arith.constant dense<0.000000e+00> : vector<128xf32>
      %24 = vector.multi_reduction <add>, %22, %cst_19 [0] : vector<16x128xf32> to vector<128xf32>
      %25 = vector.shape_cast %24 : vector<128xf32> to vector<1x128xf32>
      %26 = arith.addf %23, %25 : vector<1x128xf32>
      %c0_20 = arith.constant 0 : index
      %c0_21 = arith.constant 0 : index
      %27 = vector.load %arg6[%c0_20, %c0_21] : memref<1x128xf32, #tpu.memory_space<vmem>>, vector<1x128xf32>
      tpu.vector_store %arg6[%c0_20, %c0_21], %26 {strides = array<i32>} : memref<1x128xf32, #tpu.memory_space<vmem>>, vector<1x128xf32>,
      %c0_22 = arith.constant 0 : index
      %c0_23 = arith.constant 0 : index
      %28 = vector.load %arg7[%c0_22, %c0_23] : memref<1x128xf32, #tpu.memory_space<vmem>>, vector<1x128xf32>
      %29 = arith.mulf %22, %22 : vector<16x128xf32>
      %cst_24 = arith.constant dense<0.000000e+00> : vector<128xf32>
      %30 = vector.multi_reduction <add>, %29, %cst_24 [0] : vector<16x128xf32> to vector<128xf32>
      %31 = vector.shape_cast %30 : vector<128xf32> to vector<1x128xf32>
      %32 = arith.addf %28, %31 : vector<1x128xf32>
      %c0_25 = arith.constant 0 : index
      %c0_26 = arith.constant 0 : index
      %33 = vector.load %arg7[%c0_25, %c0_26] : memref<1x128xf32, #tpu.memory_space<vmem>>, vector<1x128xf32>
      tpu.vector_store %arg7[%c0_25, %c0_26], %32 {strides = array<i32>} : memref<1x128xf32, #tpu.memory_space<vmem>>, vector<1x128xf32>,
    } else {
    }
    return
  }
  func.func @transform_0(%arg0: i32, %arg1: i32, %arg2: i32) -> (i32, i32) {
    %c0_i32 = arith.constant 0 : i32
    return %arg1, %arg2 : i32, i32
  }
  func.func @transform_1(%arg0: i32, %arg1: i32, %arg2: i32) -> (i32, i32) {
    %c0_i32 = arith.constant 0 : i32
    return %arg2, %arg0 : i32, i32
  }
  func.func @transform_2(%arg0: i32, %arg1: i32, %arg2: i32) -> (i32, i32) {
    %c0_i32 = arith.constant 0 : i32
    return %arg1, %arg0 : i32, i32
  }
  func.func @transform_3(%arg0: i32, %arg1: i32, %arg2: i32) -> (i32, i32) {
    %c0_i32 = arith.constant 0 : i32
    %c0_i32_0 = arith.constant 0 : i32
    return %c0_i32, %arg0 : i32, i32
  }
  func.func @transform_4(%arg0: i32, %arg1: i32, %arg2: i32) -> (i32, i32) {
    %c0_i32 = arith.constant 0 : i32
    %c0_i32_0 = arith.constant 0 : i32
    return %c0_i32, %arg0 : i32, i32
  }
}

module attributes {stable_mosaic.version = 11 : i64} {
  func.func @_bn_apply_kernel(%arg0: i32, %arg1: memref<16x128xf32, #tpu.memory_space<vmem>>, %arg2: memref<1x128xf32, #tpu.memory_space<vmem>>, %arg3: memref<1x128xf32, #tpu.memory_space<vmem>>, %arg4: memref<16x128xbf16, #tpu.memory_space<vmem>>) attributes {dimension_semantics = [#tpu.dimension_semantics<parallel>], iteration_bounds = array<i64: 1>, scalar_prefetch = 0 : i64, scratch_operands = 0 : i64, tpu.core_type = #tpu.core_type<tc>, window_params = [{transform_indices = @transform_0, window_bounds = array<i64: 16, 128>}, {pipeline_mode = #tpu.pipeline_mode<synchronous>, transform_indices = @transform_1, window_bounds = array<i64: 1, 128>}, {pipeline_mode = #tpu.pipeline_mode<synchronous>, transform_indices = @transform_2, window_bounds = array<i64: 1, 128>}, {transform_indices = @transform_3, window_bounds = array<i64: 16, 128>}]} {
    %c0 = arith.constant 0 : index
    %c0_0 = arith.constant 0 : index
    %0 = vector.load %arg2[%c0, %c0_0] : memref<1x128xf32, #tpu.memory_space<vmem>>, vector<1x128xf32>
    %cst = arith.constant 1.250000e-01 : f32
    %1 = vector.broadcast %cst : f32 to vector<1x128xf32>
    %2 = arith.mulf %0, %1 : vector<1x128xf32>
    %c0_1 = arith.constant 0 : index
    %c0_2 = arith.constant 0 : index
    %3 = vector.load %arg3[%c0_1, %c0_2] : memref<1x128xf32, #tpu.memory_space<vmem>>, vector<1x128xf32>
    %cst_3 = arith.constant 1.250000e-01 : f32
    %4 = vector.broadcast %cst_3 : f32 to vector<1x128xf32>
    %5 = arith.mulf %3, %4 : vector<1x128xf32>
    %6 = arith.mulf %2, %2 : vector<1x128xf32>
    %7 = arith.subf %5, %6 : vector<1x128xf32>
    %c0_4 = arith.constant 0 : index
    %c0_5 = arith.constant 0 : index
    %8 = vector.load %arg1[%c0_4, %c0_5] : memref<16x128xf32, #tpu.memory_space<vmem>>, vector<16x128xf32>
    %9 = vector.broadcast %2 : vector<1x128xf32> to vector<16x128xf32>
    %10 = arith.subf %8, %9 : vector<16x128xf32>
    %cst_6 = arith.constant 9.99999974E-6 : f32
    %11 = vector.broadcast %cst_6 : f32 to vector<1x128xf32>
    %12 = arith.addf %7, %11 : vector<1x128xf32>
    %13 = math.rsqrt %12 : vector<1x128xf32>
    %14 = vector.broadcast %13 : vector<1x128xf32> to vector<16x128xf32>
    %15 = arith.mulf %10, %14 : vector<16x128xf32>
    %cst_7 = arith.constant 0.000000e+00 : f32
    %16 = vector.broadcast %cst_7 : f32 to vector<16x128xf32>
    %17 = arith.maximumf %15, %16 : vector<16x128xf32>
    %18 = arith.truncf %17 : vector<16x128xf32> to vector<16x128xbf16>
    %c0_8 = arith.constant 0 : index
    %c0_9 = arith.constant 0 : index
    %19 = vector.load %arg4[%c0_8, %c0_9] : memref<16x128xbf16, #tpu.memory_space<vmem>>, vector<16x128xbf16>
    tpu.vector_store %arg4[%c0_8, %c0_9], %18 {strides = array<i32>} : memref<16x128xbf16, #tpu.memory_space<vmem>>, vector<16x128xbf16>,
    return
  }
  func.func @transform_0(%arg0: i32) -> (i32, i32) {
    %c0_i32 = arith.constant 0 : i32
    %c0_i32_0 = arith.constant 0 : i32
    return %arg0, %c0_i32 : i32, i32
  }
  func.func @transform_1(%arg0: i32) -> (i32, i32) {
    %c0_i32 = arith.constant 0 : i32
    %c0_i32_0 = arith.constant 0 : i32
    %c0_i32_1 = arith.constant 0 : i32
    return %c0_i32, %c0_i32_0 : i32, i32
  }
  func.func @transform_2(%arg0: i32) -> (i32, i32) {
    %c0_i32 = arith.constant 0 : i32
    %c0_i32_0 = arith.constant 0 : i32
    %c0_i32_1 = arith.constant 0 : i32
    return %c0_i32, %c0_i32_0 : i32, i32
  }
  func.func @transform_3(%arg0: i32) -> (i32, i32) {
    %c0_i32 = arith.constant 0 : i32
    %c0_i32_0 = arith.constant 0 : i32
    return %arg0, %c0_i32 : i32, i32
  }
}

module attributes {stable_mosaic.version = 11 : i64} {
  func.func @_mm_bn_stats_kernel(%arg0: i32, %arg1: i32, %arg2: i32, %arg3: memref<16x128xbf16, #tpu.memory_space<vmem>>, %arg4: memref<128x128xbf16, #tpu.memory_space<vmem>>, %arg5: memref<16x128xf32, #tpu.memory_space<vmem>>, %arg6: memref<1x128xf32, #tpu.memory_space<vmem>>, %arg7: memref<1x128xf32, #tpu.memory_space<vmem>>, %arg8: memref<16x128xf32, #tpu.memory_space<vmem>>) attributes {dimension_semantics = [#tpu.dimension_semantics<parallel>, #tpu.dimension_semantics<arbitrary>, #tpu.dimension_semantics<arbitrary>], iteration_bounds = array<i64: 1, 1, 9>, scalar_prefetch = 0 : i64, scratch_operands = 1 : i64, tpu.core_type = #tpu.core_type<tc>, window_params = [{transform_indices = @transform_0, window_bounds = array<i64: 16, 128>}, {transform_indices = @transform_1, window_bounds = array<i64: 128, 128>}, {transform_indices = @transform_2, window_bounds = array<i64: 16, 128>}, {transform_indices = @transform_3, window_bounds = array<i64: 1, 128>}, {transform_indices = @transform_4, window_bounds = array<i64: 1, 128>}]} {
    %c0_i32 = arith.constant 0 : i32
    %0 = arith.cmpi eq, %arg2, %c0_i32 : i32
    %1 = arith.extui %0 : i1 to i32
    %c0_i32_0 = arith.constant 0 : i32
    %2 = arith.cmpi ne, %1, %c0_i32_0 : i32
    scf.if %2 {
      %cst_15 = arith.constant 0.000000e+00 : f32
      %22 = vector.broadcast %cst_15 : f32 to vector<16x128xf32>
      %c0_16 = arith.constant 0 : index
      %c0_17 = arith.constant 0 : index
      %23 = vector.load %arg8[%c0_16, %c0_17] : memref<16x128xf32, #tpu.memory_space<vmem>>, vector<16x128xf32>
      tpu.vector_store %arg8[%c0_16, %c0_17], %22 {strides = array<i32>} : memref<16x128xf32, #tpu.memory_space<vmem>>, vector<16x128xf32>,
    } else {
    }
    %c0 = arith.constant 0 : index
    %c0_1 = arith.constant 0 : index
    %3 = vector.load %arg8[%c0, %c0_1] : memref<16x128xf32, #tpu.memory_space<vmem>>, vector<16x128xf32>
    %c0_2 = arith.constant 0 : index
    %c0_3 = arith.constant 0 : index
    %4 = vector.load %arg3[%c0_2, %c0_3] : memref<16x128xbf16, #tpu.memory_space<vmem>>, vector<16x128xbf16>
    %c0_4 = arith.constant 0 : index
    %c0_5 = arith.constant 0 : index
    %5 = vector.load %arg4[%c0_4, %c0_5] : memref<128x128xbf16, #tpu.memory_space<vmem>>, vector<128x128xbf16>
    %cst = arith.constant dense<0.000000e+00> : vector<16x128xf32>
    %6 = tpu.matmul %4, %5, %cst {dimension_numbers = #tpu.dot_dimension_numbers<[1], [0], [0], [1], [0, 0, 1, 1], [], []>} : vector<16x128xbf16>, vector<128x128xbf16>, vector<16x128xf32> -> vector<16x128xf32>
    %7 = arith.addf %3, %6 : vector<16x128xf32>
    %c0_6 = arith.constant 0 : index
    %c0_7 = arith.constant 0 : index
    %8 = vector.load %arg8[%c0_6, %c0_7] : memref<16x128xf32, #tpu.memory_space<vmem>>, vector<16x128xf32>
    tpu.vector_store %arg8[%c0_6, %c0_7], %7 {strides = array<i32>} : memref<16x128xf32, #tpu.memory_space<vmem>>, vector<16x128xf32>,
    %c8_i32 = arith.constant 8 : i32
    %9 = arith.cmpi eq, %arg2, %c8_i32 : i32
    %10 = arith.extui %9 : i1 to i32
    %c0_i32_8 = arith.constant 0 : i32
    %11 = arith.cmpi ne, %10, %c0_i32_8 : i32
    scf.if %11 {
      %c0_15 = arith.constant 0 : index
      %c0_16 = arith.constant 0 : index
      %22 = vector.load %arg8[%c0_15, %c0_16] : memref<16x128xf32, #tpu.memory_space<vmem>>, vector<16x128xf32>
      %c0_17 = arith.constant 0 : index
      %c0_18 = arith.constant 0 : index
      %23 = vector.load %arg5[%c0_17, %c0_18] : memref<16x128xf32, #tpu.memory_space<vmem>>, vector<16x128xf32>
      tpu.vector_store %arg5[%c0_17, %c0_18], %22 {strides = array<i32>} : memref<16x128xf32, #tpu.memory_space<vmem>>, vector<16x128xf32>,
    } else {
    }
    %c8_i32_9 = arith.constant 8 : i32
    %12 = arith.cmpi eq, %arg2, %c8_i32_9 : i32
    %c0_i32_10 = arith.constant 0 : i32
    %13 = arith.cmpi eq, %arg1, %c0_i32_10 : i32
    %14 = arith.andi %12, %13 : i1
    %15 = arith.extui %14 : i1 to i32
    %c0_i32_11 = arith.constant 0 : i32
    %16 = arith.cmpi ne, %15, %c0_i32_11 : i32
    scf.if %16 {
      %c0_15 = arith.constant 0 : index
      %c0_16 = arith.constant 0 : index
      %22 = vector.load %arg8[%c0_15, %c0_16] : memref<16x128xf32, #tpu.memory_space<vmem>>, vector<16x128xf32>
      %cst_17 = arith.constant dense<0.000000e+00> : vector<128xf32>
      %23 = vector.multi_reduction <add>, %22, %cst_17 [0] : vector<16x128xf32> to vector<128xf32>
      %24 = vector.shape_cast %23 : vector<128xf32> to vector<1x128xf32>
      %c0_18 = arith.constant 0 : index
      %c0_19 = arith.constant 0 : index
      %25 = vector.load %arg6[%c0_18, %c0_19] : memref<1x128xf32, #tpu.memory_space<vmem>>, vector<1x128xf32>
      tpu.vector_store %arg6[%c0_18, %c0_19], %24 {strides = array<i32>} : memref<1x128xf32, #tpu.memory_space<vmem>>, vector<1x128xf32>,
      %26 = arith.mulf %22, %22 : vector<16x128xf32>
      %cst_20 = arith.constant dense<0.000000e+00> : vector<128xf32>
      %27 = vector.multi_reduction <add>, %26, %cst_20 [0] : vector<16x128xf32> to vector<128xf32>
      %28 = vector.shape_cast %27 : vector<128xf32> to vector<1x128xf32>
      %c0_21 = arith.constant 0 : index
      %c0_22 = arith.constant 0 : index
      %29 = vector.load %arg7[%c0_21, %c0_22] : memref<1x128xf32, #tpu.memory_space<vmem>>, vector<1x128xf32>
      tpu.vector_store %arg7[%c0_21, %c0_22], %28 {strides = array<i32>} : memref<1x128xf32, #tpu.memory_space<vmem>>, vector<1x128xf32>,
    } else {
    }
    %c8_i32_12 = arith.constant 8 : i32
    %17 = arith.cmpi eq, %arg2, %c8_i32_12 : i32
    %c0_i32_13 = arith.constant 0 : i32
    %18 = arith.cmpi sgt, %arg1, %c0_i32_13 : i32
    %19 = arith.andi %17, %18 : i1
    %20 = arith.extui %19 : i1 to i32
    %c0_i32_14 = arith.constant 0 : i32
    %21 = arith.cmpi ne, %20, %c0_i32_14 : i32
    scf.if %21 {
      %c0_15 = arith.constant 0 : index
      %c0_16 = arith.constant 0 : index
      %22 = vector.load %arg8[%c0_15, %c0_16] : memref<16x128xf32, #tpu.memory_space<vmem>>, vector<16x128xf32>
      %c0_17 = arith.constant 0 : index
      %c0_18 = arith.constant 0 : index
      %23 = vector.load %arg6[%c0_17, %c0_18] : memref<1x128xf32, #tpu.memory_space<vmem>>, vector<1x128xf32>
      %cst_19 = arith.constant dense<0.000000e+00> : vector<128xf32>
      %24 = vector.multi_reduction <add>, %22, %cst_19 [0] : vector<16x128xf32> to vector<128xf32>
      %25 = vector.shape_cast %24 : vector<128xf32> to vector<1x128xf32>
      %26 = arith.addf %23, %25 : vector<1x128xf32>
      %c0_20 = arith.constant 0 : index
      %c0_21 = arith.constant 0 : index
      %27 = vector.load %arg6[%c0_20, %c0_21] : memref<1x128xf32, #tpu.memory_space<vmem>>, vector<1x128xf32>
      tpu.vector_store %arg6[%c0_20, %c0_21], %26 {strides = array<i32>} : memref<1x128xf32, #tpu.memory_space<vmem>>, vector<1x128xf32>,
      %c0_22 = arith.constant 0 : index
      %c0_23 = arith.constant 0 : index
      %28 = vector.load %arg7[%c0_22, %c0_23] : memref<1x128xf32, #tpu.memory_space<vmem>>, vector<1x128xf32>
      %29 = arith.mulf %22, %22 : vector<16x128xf32>
      %cst_24 = arith.constant dense<0.000000e+00> : vector<128xf32>
      %30 = vector.multi_reduction <add>, %29, %cst_24 [0] : vector<16x128xf32> to vector<128xf32>
      %31 = vector.shape_cast %30 : vector<128xf32> to vector<1x128xf32>
      %32 = arith.addf %28, %31 : vector<1x128xf32>
      %c0_25 = arith.constant 0 : index
      %c0_26 = arith.constant 0 : index
      %33 = vector.load %arg7[%c0_25, %c0_26] : memref<1x128xf32, #tpu.memory_space<vmem>>, vector<1x128xf32>
      tpu.vector_store %arg7[%c0_25, %c0_26], %32 {strides = array<i32>} : memref<1x128xf32, #tpu.memory_space<vmem>>, vector<1x128xf32>,
    } else {
    }
    return
  }
  func.func @transform_0(%arg0: i32, %arg1: i32, %arg2: i32) -> (i32, i32) {
    %c0_i32 = arith.constant 0 : i32
    return %arg1, %arg2 : i32, i32
  }
  func.func @transform_1(%arg0: i32, %arg1: i32, %arg2: i32) -> (i32, i32) {
    %c0_i32 = arith.constant 0 : i32
    return %arg2, %arg0 : i32, i32
  }
  func.func @transform_2(%arg0: i32, %arg1: i32, %arg2: i32) -> (i32, i32) {
    %c0_i32 = arith.constant 0 : i32
    return %arg1, %arg0 : i32, i32
  }
  func.func @transform_3(%arg0: i32, %arg1: i32, %arg2: i32) -> (i32, i32) {
    %c0_i32 = arith.constant 0 : i32
    %c0_i32_0 = arith.constant 0 : i32
    return %c0_i32, %arg0 : i32, i32
  }
  func.func @transform_4(%arg0: i32, %arg1: i32, %arg2: i32) -> (i32, i32) {
    %c0_i32 = arith.constant 0 : i32
    %c0_i32_0 = arith.constant 0 : i32
    return %c0_i32, %arg0 : i32, i32
  }
}

module attributes {stable_mosaic.version = 11 : i64} {
  func.func @_bn_apply_add_relu_kernel(%arg0: i32, %arg1: memref<16x128xf32, #tpu.memory_space<vmem>>, %arg2: memref<1x128xf32, #tpu.memory_space<vmem>>, %arg3: memref<1x128xf32, #tpu.memory_space<vmem>>, %arg4: memref<16x128xf32, #tpu.memory_space<vmem>>, %arg5: memref<16x128xf32, #tpu.memory_space<vmem>>) attributes {dimension_semantics = [#tpu.dimension_semantics<parallel>], iteration_bounds = array<i64: 1>, scalar_prefetch = 0 : i64, scratch_operands = 0 : i64, tpu.core_type = #tpu.core_type<tc>, window_params = [{transform_indices = @transform_0, window_bounds = array<i64: 16, 128>}, {pipeline_mode = #tpu.pipeline_mode<synchronous>, transform_indices = @transform_1, window_bounds = array<i64: 1, 128>}, {pipeline_mode = #tpu.pipeline_mode<synchronous>, transform_indices = @transform_2, window_bounds = array<i64: 1, 128>}, {transform_indices = @transform_3, window_bounds = array<i64: 16, 128>}, {transform_indices = @transform_4, window_bounds = array<i64: 16, 128>}]} {
    %c0 = arith.constant 0 : index
    %c0_0 = arith.constant 0 : index
    %0 = vector.load %arg2[%c0, %c0_0] : memref<1x128xf32, #tpu.memory_space<vmem>>, vector<1x128xf32>
    %cst = arith.constant 1.250000e-01 : f32
    %1 = vector.broadcast %cst : f32 to vector<1x128xf32>
    %2 = arith.mulf %0, %1 : vector<1x128xf32>
    %c0_1 = arith.constant 0 : index
    %c0_2 = arith.constant 0 : index
    %3 = vector.load %arg3[%c0_1, %c0_2] : memref<1x128xf32, #tpu.memory_space<vmem>>, vector<1x128xf32>
    %cst_3 = arith.constant 1.250000e-01 : f32
    %4 = vector.broadcast %cst_3 : f32 to vector<1x128xf32>
    %5 = arith.mulf %3, %4 : vector<1x128xf32>
    %6 = arith.mulf %2, %2 : vector<1x128xf32>
    %7 = arith.subf %5, %6 : vector<1x128xf32>
    %c0_4 = arith.constant 0 : index
    %c0_5 = arith.constant 0 : index
    %8 = vector.load %arg1[%c0_4, %c0_5] : memref<16x128xf32, #tpu.memory_space<vmem>>, vector<16x128xf32>
    %9 = vector.broadcast %2 : vector<1x128xf32> to vector<16x128xf32>
    %10 = arith.subf %8, %9 : vector<16x128xf32>
    %cst_6 = arith.constant 9.99999974E-6 : f32
    %11 = vector.broadcast %cst_6 : f32 to vector<1x128xf32>
    %12 = arith.addf %7, %11 : vector<1x128xf32>
    %13 = math.rsqrt %12 : vector<1x128xf32>
    %14 = vector.broadcast %13 : vector<1x128xf32> to vector<16x128xf32>
    %15 = arith.mulf %10, %14 : vector<16x128xf32>
    %c0_7 = arith.constant 0 : index
    %c0_8 = arith.constant 0 : index
    %16 = vector.load %arg4[%c0_7, %c0_8] : memref<16x128xf32, #tpu.memory_space<vmem>>, vector<16x128xf32>
    %17 = arith.addf %15, %16 : vector<16x128xf32>
    %cst_9 = arith.constant 0.000000e+00 : f32
    %18 = vector.broadcast %cst_9 : f32 to vector<16x128xf32>
    %19 = arith.maximumf %17, %18 : vector<16x128xf32>
    %c0_10 = arith.constant 0 : index
    %c0_11 = arith.constant 0 : index
    %20 = vector.load %arg5[%c0_10, %c0_11] : memref<16x128xf32, #tpu.memory_space<vmem>>, vector<16x128xf32>
    tpu.vector_store %arg5[%c0_10, %c0_11], %19 {strides = array<i32>} : memref<16x128xf32, #tpu.memory_space<vmem>>, vector<16x128xf32>,
    return
  }
  func.func @transform_0(%arg0: i32) -> (i32, i32) {
    %c0_i32 = arith.constant 0 : i32
    %c0_i32_0 = arith.constant 0 : i32
    return %arg0, %c0_i32 : i32, i32
  }
  func.func @transform_1(%arg0: i32) -> (i32, i32) {
    %c0_i32 = arith.constant 0 : i32
    %c0_i32_0 = arith.constant 0 : i32
    %c0_i32_1 = arith.constant 0 : i32
    return %c0_i32, %c0_i32_0 : i32, i32
  }
  func.func @transform_2(%arg0: i32) -> (i32, i32) {
    %c0_i32 = arith.constant 0 : i32
    %c0_i32_0 = arith.constant 0 : i32
    %c0_i32_1 = arith.constant 0 : i32
    return %c0_i32, %c0_i32_0 : i32, i32
  }
  func.func @transform_3(%arg0: i32) -> (i32, i32) {
    %c0_i32 = arith.constant 0 : i32
    %c0_i32_0 = arith.constant 0 : i32
    return %arg0, %c0_i32 : i32, i32
  }
  func.func @transform_4(%arg0: i32) -> (i32, i32) {
    %c0_i32 = arith.constant 0 : i32
    %c0_i32_0 = arith.constant 0 : i32
    return %arg0, %c0_i32 : i32, i32
  }
}

module attributes {stable_mosaic.version = 11 : i64} {
  func.func @_projector_kernel(%arg0: i32, %arg1: memref<8x128xf32, #tpu.memory_space<vmem>>, %arg2: memref<128x512xf32, #tpu.memory_space<vmem>>, %arg3: memref<1x512xf32, #tpu.memory_space<vmem>>, %arg4: memref<512x512xf32, #tpu.memory_space<vmem>>, %arg5: memref<1x512xf32, #tpu.memory_space<vmem>>, %arg6: memref<8x512xf32, #tpu.memory_space<vmem>>) attributes {dimension_semantics = [#tpu.dimension_semantics<arbitrary>], iteration_bounds = array<i64: 1>, scalar_prefetch = 0 : i64, scratch_operands = 0 : i64, tpu.core_type = #tpu.core_type<tc>, window_params = [{pipeline_mode = #tpu.pipeline_mode<synchronous>, transform_indices = @transform_0, window_bounds = array<i64: 8, 128>}, {pipeline_mode = #tpu.pipeline_mode<synchronous>, transform_indices = @transform_1, window_bounds = array<i64: 128, 512>}, {pipeline_mode = #tpu.pipeline_mode<synchronous>, transform_indices = @transform_2, window_bounds = array<i64: 1, 512>}, {pipeline_mode = #tpu.pipeline_mode<synchronous>, transform_indices = @transform_3, window_bounds = array<i64: 512, 512>}, {pipeline_mode = #tpu.pipeline_mode<synchronous>, transform_indices = @transform_4, window_bounds = array<i64: 1, 512>}, {pipeline_mode = #tpu.pipeline_mode<synchronous>, transform_indices = @transform_5, window_bounds = array<i64: 8, 512>}]} {
    %c0 = arith.constant 0 : index
    %c0_0 = arith.constant 0 : index
    %0 = vector.load %arg1[%c0, %c0_0] : memref<8x128xf32, #tpu.memory_space<vmem>>, vector<8x128xf32>
    %c0_1 = arith.constant 0 : index
    %c0_2 = arith.constant 0 : index
    %1 = vector.load %arg2[%c0_1, %c0_2] : memref<128x512xf32, #tpu.memory_space<vmem>>, vector<128x512xf32>
    %cst = arith.constant dense<0.000000e+00> : vector<8x512xf32>
    %2 = tpu.matmul %0, %1, %cst {dimension_numbers = #tpu.dot_dimension_numbers<[1], [0], [0], [1], [0, 0, 1, 1], [], []>} : vector<8x128xf32>, vector<128x512xf32>, vector<8x512xf32> -> vector<8x512xf32>
    %c0_3 = arith.constant 0 : index
    %c0_4 = arith.constant 0 : index
    %3 = vector.load %arg3[%c0_3, %c0_4] : memref<1x512xf32, #tpu.memory_space<vmem>>, vector<1x512xf32>
    %4 = vector.broadcast %3 : vector<1x512xf32> to vector<8x512xf32>
    %5 = arith.addf %2, %4 : vector<8x512xf32>
    %6 = tpu.iota {dimensions = array<i32: 0>} : vector<8x1xi32>
    %c2_i32 = arith.constant 2 : i32
    %7 = vector.broadcast %c2_i32 : i32 to vector<8x1xi32>
    %8 = arith.cmpi slt, %6, %7 : vector<8x1xi32>
    %9 = arith.extui %8 : vector<8x1xi1> to vector<8x1xi32>
    %10 = arith.sitofp %9 : vector<8x1xi32> to vector<8x1xf32>
    %11 = vector.broadcast %10 : vector<8x1xf32> to vector<8x512xf32>
    %12 = arith.mulf %5, %11 : vector<8x512xf32>
    %cst_5 = arith.constant dense<0.000000e+00> : vector<512xf32>
    %13 = vector.multi_reduction <add>, %12, %cst_5 [0] : vector<8x512xf32> to vector<512xf32>
    %14 = vector.shape_cast %13 : vector<512xf32> to vector<1x512xf32>
    %cst_6 = arith.constant 5.000000e-01 : f32
    %15 = vector.broadcast %cst_6 : f32 to vector<1x512xf32>
    %16 = arith.mulf %14, %15 : vector<1x512xf32>
    %17 = vector.broadcast %16 : vector<1x512xf32> to vector<8x512xf32>
    %18 = arith.subf %5, %17 : vector<8x512xf32>
    %19 = arith.mulf %18, %18 : vector<8x512xf32>
    %20 = vector.broadcast %10 : vector<8x1xf32> to vector<8x512xf32>
    %21 = arith.mulf %19, %20 : vector<8x512xf32>
    %cst_7 = arith.constant dense<0.000000e+00> : vector<512xf32>
    %22 = vector.multi_reduction <add>, %21, %cst_7 [0] : vector<8x512xf32> to vector<512xf32>
    %23 = vector.shape_cast %22 : vector<512xf32> to vector<1x512xf32>
    %cst_8 = arith.constant 5.000000e-01 : f32
    %24 = vector.broadcast %cst_8 : f32 to vector<1x512xf32>
    %25 = arith.mulf %23, %24 : vector<1x512xf32>
    %cst_9 = arith.constant 9.99999974E-6 : f32
    %26 = vector.broadcast %cst_9 : f32 to vector<1x512xf32>
    %27 = arith.addf %25, %26 : vector<1x512xf32>
    %28 = math.rsqrt %27 : vector<1x512xf32>
    %29 = vector.broadcast %28 : vector<1x512xf32> to vector<8x512xf32>
    %30 = arith.mulf %18, %29 : vector<8x512xf32>
    %cst_10 = arith.constant 0.000000e+00 : f32
    %31 = vector.broadcast %cst_10 : f32 to vector<8x512xf32>
    %32 = arith.maximumf %30, %31 : vector<8x512xf32>
    %c0_11 = arith.constant 0 : index
    %c0_12 = arith.constant 0 : index
    %33 = vector.load %arg4[%c0_11, %c0_12] : memref<512x512xf32, #tpu.memory_space<vmem>>, vector<512x512xf32>
    %cst_13 = arith.constant dense<0.000000e+00> : vector<8x512xf32>
    %34 = tpu.matmul %32, %33, %cst_13 {dimension_numbers = #tpu.dot_dimension_numbers<[1], [0], [0], [1], [0, 0, 1, 1], [], []>} : vector<8x512xf32>, vector<512x512xf32>, vector<8x512xf32> -> vector<8x512xf32>
    %c0_14 = arith.constant 0 : index
    %c0_15 = arith.constant 0 : index
    %35 = vector.load %arg5[%c0_14, %c0_15] : memref<1x512xf32, #tpu.memory_space<vmem>>, vector<1x512xf32>
    %36 = vector.broadcast %35 : vector<1x512xf32> to vector<8x512xf32>
    %37 = arith.addf %34, %36 : vector<8x512xf32>
    %38 = tpu.iota {dimensions = array<i32: 0>} : vector<8x1xi32>
    %c2_i32_16 = arith.constant 2 : i32
    %39 = vector.broadcast %c2_i32_16 : i32 to vector<8x1xi32>
    %40 = arith.cmpi slt, %38, %39 : vector<8x1xi32>
    %41 = arith.extui %40 : vector<8x1xi1> to vector<8x1xi32>
    %42 = arith.sitofp %41 : vector<8x1xi32> to vector<8x1xf32>
    %43 = vector.broadcast %42 : vector<8x1xf32> to vector<8x512xf32>
    %44 = arith.mulf %37, %43 : vector<8x512xf32>
    %cst_17 = arith.constant dense<0.000000e+00> : vector<512xf32>
    %45 = vector.multi_reduction <add>, %44, %cst_17 [0] : vector<8x512xf32> to vector<512xf32>
    %46 = vector.shape_cast %45 : vector<512xf32> to vector<1x512xf32>
    %cst_18 = arith.constant 5.000000e-01 : f32
    %47 = vector.broadcast %cst_18 : f32 to vector<1x512xf32>
    %48 = arith.mulf %46, %47 : vector<1x512xf32>
    %49 = vector.broadcast %48 : vector<1x512xf32> to vector<8x512xf32>
    %50 = arith.subf %37, %49 : vector<8x512xf32>
    %51 = arith.mulf %50, %50 : vector<8x512xf32>
    %52 = vector.broadcast %42 : vector<8x1xf32> to vector<8x512xf32>
    %53 = arith.mulf %51, %52 : vector<8x512xf32>
    %cst_19 = arith.constant dense<0.000000e+00> : vector<512xf32>
    %54 = vector.multi_reduction <add>, %53, %cst_19 [0] : vector<8x512xf32> to vector<512xf32>
    %55 = vector.shape_cast %54 : vector<512xf32> to vector<1x512xf32>
    %cst_20 = arith.constant 5.000000e-01 : f32
    %56 = vector.broadcast %cst_20 : f32 to vector<1x512xf32>
    %57 = arith.mulf %55, %56 : vector<1x512xf32>
    %cst_21 = arith.constant 9.99999974E-6 : f32
    %58 = vector.broadcast %cst_21 : f32 to vector<1x512xf32>
    %59 = arith.addf %57, %58 : vector<1x512xf32>
    %60 = math.rsqrt %59 : vector<1x512xf32>
    %61 = vector.broadcast %60 : vector<1x512xf32> to vector<8x512xf32>
    %62 = arith.mulf %50, %61 : vector<8x512xf32>
    %c0_22 = arith.constant 0 : index
    %c0_23 = arith.constant 0 : index
    %63 = vector.load %arg6[%c0_22, %c0_23] : memref<8x512xf32, #tpu.memory_space<vmem>>, vector<8x512xf32>
    tpu.vector_store %arg6[%c0_22, %c0_23], %62 {strides = array<i32>} : memref<8x512xf32, #tpu.memory_space<vmem>>, vector<8x512xf32>,
    return
  }
  func.func @transform_0(%arg0: i32) -> (i32, i32) {
    %c0_i32 = arith.constant 0 : i32
    %c0_i32_0 = arith.constant 0 : i32
    %c0_i32_1 = arith.constant 0 : i32
    return %c0_i32, %c0_i32_0 : i32, i32
  }
  func.func @transform_1(%arg0: i32) -> (i32, i32) {
    %c0_i32 = arith.constant 0 : i32
    %c0_i32_0 = arith.constant 0 : i32
    %c0_i32_1 = arith.constant 0 : i32
    return %c0_i32, %c0_i32_0 : i32, i32
  }
  func.func @transform_2(%arg0: i32) -> (i32, i32) {
    %c0_i32 = arith.constant 0 : i32
    %c0_i32_0 = arith.constant 0 : i32
    %c0_i32_1 = arith.constant 0 : i32
    return %c0_i32, %c0_i32_0 : i32, i32
  }
  func.func @transform_3(%arg0: i32) -> (i32, i32) {
    %c0_i32 = arith.constant 0 : i32
    %c0_i32_0 = arith.constant 0 : i32
    %c0_i32_1 = arith.constant 0 : i32
    return %c0_i32, %c0_i32_0 : i32, i32
  }
  func.func @transform_4(%arg0: i32) -> (i32, i32) {
    %c0_i32 = arith.constant 0 : i32
    %c0_i32_0 = arith.constant 0 : i32
    %c0_i32_1 = arith.constant 0 : i32
    return %c0_i32, %c0_i32_0 : i32, i32
  }
  func.func @transform_5(%arg0: i32) -> (i32, i32) {
    %c0_i32 = arith.constant 0 : i32
    %c0_i32_0 = arith.constant 0 : i32
    %c0_i32_1 = arith.constant 0 : i32
    return %c0_i32, %c0_i32_0 : i32, i32
  }
}

module attributes {stable_mosaic.version = 11 : i64} {
  func.func @_predictor_kernel(%arg0: i32, %arg1: memref<8x512xf32, #tpu.memory_space<vmem>>, %arg2: memref<512x128xf32, #tpu.memory_space<vmem>>, %arg3: memref<1x128xf32, #tpu.memory_space<vmem>>, %arg4: memref<128x512xf32, #tpu.memory_space<vmem>>, %arg5: memref<1x512xf32, #tpu.memory_space<vmem>>, %arg6: memref<8x512xf32, #tpu.memory_space<vmem>>) attributes {dimension_semantics = [#tpu.dimension_semantics<arbitrary>], iteration_bounds = array<i64: 1>, scalar_prefetch = 0 : i64, scratch_operands = 0 : i64, tpu.core_type = #tpu.core_type<tc>, window_params = [{pipeline_mode = #tpu.pipeline_mode<synchronous>, transform_indices = @transform_0, window_bounds = array<i64: 8, 512>}, {pipeline_mode = #tpu.pipeline_mode<synchronous>, transform_indices = @transform_1, window_bounds = array<i64: 512, 128>}, {pipeline_mode = #tpu.pipeline_mode<synchronous>, transform_indices = @transform_2, window_bounds = array<i64: 1, 128>}, {pipeline_mode = #tpu.pipeline_mode<synchronous>, transform_indices = @transform_3, window_bounds = array<i64: 128, 512>}, {pipeline_mode = #tpu.pipeline_mode<synchronous>, transform_indices = @transform_4, window_bounds = array<i64: 1, 512>}, {pipeline_mode = #tpu.pipeline_mode<synchronous>, transform_indices = @transform_5, window_bounds = array<i64: 8, 512>}]} {
    %c0 = arith.constant 0 : index
    %c0_0 = arith.constant 0 : index
    %0 = vector.load %arg1[%c0, %c0_0] : memref<8x512xf32, #tpu.memory_space<vmem>>, vector<8x512xf32>
    %c0_1 = arith.constant 0 : index
    %c0_2 = arith.constant 0 : index
    %1 = vector.load %arg2[%c0_1, %c0_2] : memref<512x128xf32, #tpu.memory_space<vmem>>, vector<512x128xf32>
    %cst = arith.constant dense<0.000000e+00> : vector<8x128xf32>
    %2 = tpu.matmul %0, %1, %cst {dimension_numbers = #tpu.dot_dimension_numbers<[1], [0], [0], [1], [0, 0, 1, 1], [], []>} : vector<8x512xf32>, vector<512x128xf32>, vector<8x128xf32> -> vector<8x128xf32>
    %c0_3 = arith.constant 0 : index
    %c0_4 = arith.constant 0 : index
    %3 = vector.load %arg3[%c0_3, %c0_4] : memref<1x128xf32, #tpu.memory_space<vmem>>, vector<1x128xf32>
    %4 = vector.broadcast %3 : vector<1x128xf32> to vector<8x128xf32>
    %5 = arith.addf %2, %4 : vector<8x128xf32>
    %6 = tpu.iota {dimensions = array<i32: 0>} : vector<8x1xi32>
    %c2_i32 = arith.constant 2 : i32
    %7 = vector.broadcast %c2_i32 : i32 to vector<8x1xi32>
    %8 = arith.cmpi slt, %6, %7 : vector<8x1xi32>
    %9 = arith.extui %8 : vector<8x1xi1> to vector<8x1xi32>
    %10 = arith.sitofp %9 : vector<8x1xi32> to vector<8x1xf32>
    %11 = vector.broadcast %10 : vector<8x1xf32> to vector<8x128xf32>
    %12 = arith.mulf %5, %11 : vector<8x128xf32>
    %cst_5 = arith.constant dense<0.000000e+00> : vector<128xf32>
    %13 = vector.multi_reduction <add>, %12, %cst_5 [0] : vector<8x128xf32> to vector<128xf32>
    %14 = vector.shape_cast %13 : vector<128xf32> to vector<1x128xf32>
    %cst_6 = arith.constant 5.000000e-01 : f32
    %15 = vector.broadcast %cst_6 : f32 to vector<1x128xf32>
    %16 = arith.mulf %14, %15 : vector<1x128xf32>
    %17 = vector.broadcast %16 : vector<1x128xf32> to vector<8x128xf32>
    %18 = arith.subf %5, %17 : vector<8x128xf32>
    %19 = arith.mulf %18, %18 : vector<8x128xf32>
    %20 = vector.broadcast %10 : vector<8x1xf32> to vector<8x128xf32>
    %21 = arith.mulf %19, %20 : vector<8x128xf32>
    %cst_7 = arith.constant dense<0.000000e+00> : vector<128xf32>
    %22 = vector.multi_reduction <add>, %21, %cst_7 [0] : vector<8x128xf32> to vector<128xf32>
    %23 = vector.shape_cast %22 : vector<128xf32> to vector<1x128xf32>
    %cst_8 = arith.constant 5.000000e-01 : f32
    %24 = vector.broadcast %cst_8 : f32 to vector<1x128xf32>
    %25 = arith.mulf %23, %24 : vector<1x128xf32>
    %cst_9 = arith.constant 9.99999974E-6 : f32
    %26 = vector.broadcast %cst_9 : f32 to vector<1x128xf32>
    %27 = arith.addf %25, %26 : vector<1x128xf32>
    %28 = math.rsqrt %27 : vector<1x128xf32>
    %29 = vector.broadcast %28 : vector<1x128xf32> to vector<8x128xf32>
    %30 = arith.mulf %18, %29 : vector<8x128xf32>
    %cst_10 = arith.constant 0.000000e+00 : f32
    %31 = vector.broadcast %cst_10 : f32 to vector<8x128xf32>
    %32 = arith.maximumf %30, %31 : vector<8x128xf32>
    %c0_11 = arith.constant 0 : index
    %c0_12 = arith.constant 0 : index
    %33 = vector.load %arg4[%c0_11, %c0_12] : memref<128x512xf32, #tpu.memory_space<vmem>>, vector<128x512xf32>
    %cst_13 = arith.constant dense<0.000000e+00> : vector<8x512xf32>
    %34 = tpu.matmul %32, %33, %cst_13 {dimension_numbers = #tpu.dot_dimension_numbers<[1], [0], [0], [1], [0, 0, 1, 1], [], []>} : vector<8x128xf32>, vector<128x512xf32>, vector<8x512xf32> -> vector<8x512xf32>
    %c0_14 = arith.constant 0 : index
    %c0_15 = arith.constant 0 : index
    %35 = vector.load %arg5[%c0_14, %c0_15] : memref<1x512xf32, #tpu.memory_space<vmem>>, vector<1x512xf32>
    %36 = vector.broadcast %35 : vector<1x512xf32> to vector<8x512xf32>
    %37 = arith.addf %34, %36 : vector<8x512xf32>
    %c0_16 = arith.constant 0 : index
    %c0_17 = arith.constant 0 : index
    %38 = vector.load %arg6[%c0_16, %c0_17] : memref<8x512xf32, #tpu.memory_space<vmem>>, vector<8x512xf32>
    tpu.vector_store %arg6[%c0_16, %c0_17], %37 {strides = array<i32>} : memref<8x512xf32, #tpu.memory_space<vmem>>, vector<8x512xf32>,
    return
  }
  func.func @transform_0(%arg0: i32) -> (i32, i32) {
    %c0_i32 = arith.constant 0 : i32
    %c0_i32_0 = arith.constant 0 : i32
    %c0_i32_1 = arith.constant 0 : i32
    return %c0_i32, %c0_i32_0 : i32, i32
  }
  func.func @transform_1(%arg0: i32) -> (i32, i32) {
    %c0_i32 = arith.constant 0 : i32
    %c0_i32_0 = arith.constant 0 : i32
    %c0_i32_1 = arith.constant 0 : i32
    return %c0_i32, %c0_i32_0 : i32, i32
  }
  func.func @transform_2(%arg0: i32) -> (i32, i32) {
    %c0_i32 = arith.constant 0 : i32
    %c0_i32_0 = arith.constant 0 : i32
    %c0_i32_1 = arith.constant 0 : i32
    return %c0_i32, %c0_i32_0 : i32, i32
  }
  func.func @transform_3(%arg0: i32) -> (i32, i32) {
    %c0_i32 = arith.constant 0 : i32
    %c0_i32_0 = arith.constant 0 : i32
    %c0_i32_1 = arith.constant 0 : i32
    return %c0_i32, %c0_i32_0 : i32, i32
  }
  func.func @transform_4(%arg0: i32) -> (i32, i32) {
    %c0_i32 = arith.constant 0 : i32
    %c0_i32_0 = arith.constant 0 : i32
    %c0_i32_1 = arith.constant 0 : i32
    return %c0_i32, %c0_i32_0 : i32, i32
  }
  func.func @transform_5(%arg0: i32) -> (i32, i32) {
    %c0_i32 = arith.constant 0 : i32
    %c0_i32_0 = arith.constant 0 : i32
    %c0_i32_1 = arith.constant 0 : i32
    return %c0_i32, %c0_i32_0 : i32, i32
  }
}

module attributes {stable_mosaic.version = 11 : i64} {
  func.func @_cos_loss_kernel(%arg0: i32, %arg1: memref<2x512xf32, #tpu.memory_space<vmem>>, %arg2: memref<2x512xf32, #tpu.memory_space<vmem>>, %arg3: memref<2x512xf32, #tpu.memory_space<vmem>>, %arg4: memref<2x512xf32, #tpu.memory_space<vmem>>, %arg5: memref<1x1xf32, #tpu.memory_space<vmem>>) attributes {dimension_semantics = [#tpu.dimension_semantics<arbitrary>], iteration_bounds = array<i64: 1>, scalar_prefetch = 0 : i64, scratch_operands = 0 : i64, tpu.core_type = #tpu.core_type<tc>, window_params = [{pipeline_mode = #tpu.pipeline_mode<synchronous>, transform_indices = @transform_0, window_bounds = array<i64: 2, 512>}, {pipeline_mode = #tpu.pipeline_mode<synchronous>, transform_indices = @transform_1, window_bounds = array<i64: 2, 512>}, {pipeline_mode = #tpu.pipeline_mode<synchronous>, transform_indices = @transform_2, window_bounds = array<i64: 2, 512>}, {pipeline_mode = #tpu.pipeline_mode<synchronous>, transform_indices = @transform_3, window_bounds = array<i64: 2, 512>}, {pipeline_mode = #tpu.pipeline_mode<synchronous>, transform_indices = @transform_4, window_bounds = array<i64: 1, 1>}]} {
    %c0 = arith.constant 0 : index
    %c0_0 = arith.constant 0 : index
    %0 = vector.load %arg1[%c0, %c0_0] : memref<2x512xf32, #tpu.memory_space<vmem>>, vector<2x512xf32>
    %c0_1 = arith.constant 0 : index
    %c0_2 = arith.constant 0 : index
    %1 = vector.load %arg2[%c0_1, %c0_2] : memref<2x512xf32, #tpu.memory_space<vmem>>, vector<2x512xf32>
    %2 = arith.mulf %0, %1 : vector<2x512xf32>
    %cst = arith.constant dense<0.000000e+00> : vector<2xf32>
    %3 = vector.multi_reduction <add>, %2, %cst [1] : vector<2x512xf32> to vector<2xf32>
    %4 = vector.shape_cast %3 : vector<2xf32> to vector<2x1xf32>
    %5 = arith.mulf %0, %0 : vector<2x512xf32>
    %cst_3 = arith.constant dense<0.000000e+00> : vector<2xf32>
    %6 = vector.multi_reduction <add>, %5, %cst_3 [1] : vector<2x512xf32> to vector<2xf32>
    %7 = vector.shape_cast %6 : vector<2xf32> to vector<2x1xf32>
    %8 = math.sqrt %7 : vector<2x1xf32>
    %cst_4 = arith.constant 9.99999993E-9 : f32
    %9 = vector.broadcast %cst_4 : f32 to vector<2x1xf32>
    %10 = arith.maximumf %8, %9 : vector<2x1xf32>
    %11 = arith.mulf %1, %1 : vector<2x512xf32>
    %cst_5 = arith.constant dense<0.000000e+00> : vector<2xf32>
    %12 = vector.multi_reduction <add>, %11, %cst_5 [1] : vector<2x512xf32> to vector<2xf32>
    %13 = vector.shape_cast %12 : vector<2xf32> to vector<2x1xf32>
    %14 = math.sqrt %13 : vector<2x1xf32>
    %cst_6 = arith.constant 9.99999993E-9 : f32
    %15 = vector.broadcast %cst_6 : f32 to vector<2x1xf32>
    %16 = arith.maximumf %14, %15 : vector<2x1xf32>
    %17 = arith.mulf %10, %16 : vector<2x1xf32>
    %18 = arith.divf %4, %17 : vector<2x1xf32>
    %cst_7 = arith.constant dense<0.000000e+00> : vector<1xf32>
    %19 = vector.multi_reduction <add>, %18, %cst_7 [0] : vector<2x1xf32> to vector<1xf32>
    %20 = vector.shape_cast %19 : vector<1xf32> to vector<1x1xf32>
    %cst_8 = arith.constant 2.000000e+00 : f32
    %21 = vector.broadcast %cst_8 : f32 to vector<1x1xf32>
    %22 = arith.divf %20, %21 : vector<1x1xf32>
    %cst_9 = arith.constant 0.000000e+00 : f32
    %23 = vector.broadcast %cst_9 : f32 to vector<1x1xf32>
    %24 = arith.subf %23, %22 : vector<1x1xf32>
    %cst_10 = arith.constant 5.000000e-01 : f32
    %25 = vector.broadcast %cst_10 : f32 to vector<1x1xf32>
    %26 = arith.mulf %25, %24 : vector<1x1xf32>
    %c0_11 = arith.constant 0 : index
    %c0_12 = arith.constant 0 : index
    %27 = vector.load %arg3[%c0_11, %c0_12] : memref<2x512xf32, #tpu.memory_space<vmem>>, vector<2x512xf32>
    %c0_13 = arith.constant 0 : index
    %c0_14 = arith.constant 0 : index
    %28 = vector.load %arg4[%c0_13, %c0_14] : memref<2x512xf32, #tpu.memory_space<vmem>>, vector<2x512xf32>
    %29 = arith.mulf %27, %28 : vector<2x512xf32>
    %cst_15 = arith.constant dense<0.000000e+00> : vector<2xf32>
    %30 = vector.multi_reduction <add>, %29, %cst_15 [1] : vector<2x512xf32> to vector<2xf32>
    %31 = vector.shape_cast %30 : vector<2xf32> to vector<2x1xf32>
    %32 = arith.mulf %27, %27 : vector<2x512xf32>
    %cst_16 = arith.constant dense<0.000000e+00> : vector<2xf32>
    %33 = vector.multi_reduction <add>, %32, %cst_16 [1] : vector<2x512xf32> to vector<2xf32>
    %34 = vector.shape_cast %33 : vector<2xf32> to vector<2x1xf32>
    %35 = math.sqrt %34 : vector<2x1xf32>
    %cst_17 = arith.constant 9.99999993E-9 : f32
    %36 = vector.broadcast %cst_17 : f32 to vector<2x1xf32>
    %37 = arith.maximumf %35, %36 : vector<2x1xf32>
    %38 = arith.mulf %28, %28 : vector<2x512xf32>
    %cst_18 = arith.constant dense<0.000000e+00> : vector<2xf32>
    %39 = vector.multi_reduction <add>, %38, %cst_18 [1] : vector<2x512xf32> to vector<2xf32>
    %40 = vector.shape_cast %39 : vector<2xf32> to vector<2x1xf32>
    %41 = math.sqrt %40 : vector<2x1xf32>
    %cst_19 = arith.constant 9.99999993E-9 : f32
    %42 = vector.broadcast %cst_19 : f32 to vector<2x1xf32>
    %43 = arith.maximumf %41, %42 : vector<2x1xf32>
    %44 = arith.mulf %37, %43 : vector<2x1xf32>
    %45 = arith.divf %31, %44 : vector<2x1xf32>
    %cst_20 = arith.constant dense<0.000000e+00> : vector<1xf32>
    %46 = vector.multi_reduction <add>, %45, %cst_20 [0] : vector<2x1xf32> to vector<1xf32>
    %47 = vector.shape_cast %46 : vector<1xf32> to vector<1x1xf32>
    %cst_21 = arith.constant 2.000000e+00 : f32
    %48 = vector.broadcast %cst_21 : f32 to vector<1x1xf32>
    %49 = arith.divf %47, %48 : vector<1x1xf32>
    %cst_22 = arith.constant 0.000000e+00 : f32
    %50 = vector.broadcast %cst_22 : f32 to vector<1x1xf32>
    %51 = arith.subf %50, %49 : vector<1x1xf32>
    %cst_23 = arith.constant 5.000000e-01 : f32
    %52 = vector.broadcast %cst_23 : f32 to vector<1x1xf32>
    %53 = arith.mulf %52, %51 : vector<1x1xf32>
    %54 = arith.addf %26, %53 : vector<1x1xf32>
    %c0_24 = arith.constant 0 : index
    %c0_25 = arith.constant 0 : index
    %55 = vector.load %arg5[%c0_24, %c0_25] : memref<1x1xf32, #tpu.memory_space<vmem>>, vector<1x1xf32>
    tpu.vector_store %arg5[%c0_24, %c0_25], %54 {strides = array<i32>} : memref<1x1xf32, #tpu.memory_space<vmem>>, vector<1x1xf32>,
    return
  }
  func.func @transform_0(%arg0: i32) -> (i32, i32) {
    %c0_i32 = arith.constant 0 : i32
    %c0_i32_0 = arith.constant 0 : i32
    %c0_i32_1 = arith.constant 0 : i32
    return %c0_i32, %c0_i32_0 : i32, i32
  }
  func.func @transform_1(%arg0: i32) -> (i32, i32) {
    %c0_i32 = arith.constant 0 : i32
    %c0_i32_0 = arith.constant 0 : i32
    %c0_i32_1 = arith.constant 0 : i32
    return %c0_i32, %c0_i32_0 : i32, i32
  }
  func.func @transform_2(%arg0: i32) -> (i32, i32) {
    %c0_i32 = arith.constant 0 : i32
    %c0_i32_0 = arith.constant 0 : i32
    %c0_i32_1 = arith.constant 0 : i32
    return %c0_i32, %c0_i32_0 : i32, i32
  }
  func.func @transform_3(%arg0: i32) -> (i32, i32) {
    %c0_i32 = arith.constant 0 : i32
    %c0_i32_0 = arith.constant 0 : i32
    %c0_i32_1 = arith.constant 0 : i32
    return %c0_i32, %c0_i32_0 : i32, i32
  }
  func.func @transform_4(%arg0: i32) -> (i32, i32) {
    %c0_i32 = arith.constant 0 : i32
    %c0_i32_0 = arith.constant 0 : i32
    %c0_i32_1 = arith.constant 0 : i32
    return %c0_i32, %c0_i32_0 : i32, i32
  }
}

</mosaic_0001>

<llo_original>
// kernel: ssl_forward.78
$region0: #{ssl_forward.78}
  #allocation0 [shape = 'u32[]', space=smem, size = 0x4, offset = 0x4, fixed_abs, tag = 'smem constant byte address 0x4 - core index']
  #allocation1 [shape = 'u32[72,128]{1,0:T(1,128)}', space=vmem, size = 0x9000, scoped, tag = 'internal scratch']
  %s0 = inlined_call_operand.vmem [shape: f32[32,128], index: 0, kind: input, shape index: {}]
  %s1 = inlined_call_operand.vmem [shape: f32[1,128], index: 1, kind: input, shape index: {}]
  %s2 = inlined_call_operand.vmem [shape: f32[1,128], index: 2, kind: input, shape index: {}]
  %s3 = inlined_call_operand.vmem [shape: f32[32,128], index: 3, kind: output, shape index: {}]
  %s4 = sld [smem:[#allocation0]]
  $region22: #{ssl_forward.78} parent=0
    _
  %s6 = ssub.s32 1, %s4
  %s7 = scalar_select 0, %s6, %s4
  // Predicated region
  $region2: #{ssl_forward.78} parent=0 // pred_check
    _
  $region3: #{ssl_forward.78} parent=0 // pred_check_branch
    %9 = sbr.rel (0) target = $region5
  $region4: #{ssl_forward.78} parent=0 // pred_region
    _
  $region5: #{ssl_forward.78} parent=0 // pred_fallthru
    _
  // Predicated region
  $region6: #{ssl_forward.78} parent=0 // pred_check
    _
  $region7: #{ssl_forward.78} parent=0 // pred_check_branch
    %11 = sbr.rel (0) target = $region9
  $region8: #{ssl_forward.78} parent=0 // pred_region
    _
  $region9: #{ssl_forward.78} parent=0 // pred_fallthru
    _
  // Predicated region
  $region10: #{ssl_forward.78} parent=0 // pred_check
    _
  $region11: #{ssl_forward.78} parent=0 // pred_check_branch
    %13 = sbr.rel (0) target = $region13
  $region12: #{ssl_forward.78} parent=0 // pred_region
    _
  $region13: #{ssl_forward.78} parent=0 // pred_fallthru
    _
  %v14 = vld [vmem:[%s1] sm:$0x1]
  %v15 = vmul.f32 %v14, 0.03125
  %v16 = vld [vmem:[%s2] sm:$0x1]
  %v17 = vmul.f32 %v16, 0.03125
  %v18 = vmul.f32 %v15, %v15
  %v19 = vsub.f32 %v17, %v18
  %v20 = vld [vmem:[%s0] sm:$0xff]
  %v21 = vld [vmem:[%s0 + $0x8] sm:$0xff]
  %v22 = vld [vmem:[%s0 + $0x10] sm:$0xff]
  %v23 = vld [vmem:[%s0 + $0x18] sm:$0xff]
  %v25 = vperm.slane %v15, 0
  %v27 = vsub.f32 %v20, %v25
  %v28 = vsub.f32 %v21, %v25
  %v29 = vsub.f32 %v22, %v25
  %v30 = vsub.f32 %v23, %v25
  %v31 = vadd.f32 %v19, 1e-05
  %v32 = vrsqrt.pop %v31
  %v33 = vmul.f32 %v32, %v31
  %v34 = vmul.f32 %v33, %v32
  %v35 = vmul.f32 0.5, %v34
  %v36 = vsub.f32 1.5, %v35
  %v37 = vmul.f32 %v32, %v36
  %vm38 = vweird.f32 %v31
  %vm39 = vweird.f32 %v32
  %vm40 = vmor %vm38, %vm39
  %v41 = vsel %vm40, %v32, %v37
  %v43 = vperm.slane %v41, 0
  %v45 = vmul.f32 %v27, %v43
  %v46 = vmul.f32 %v28, %v43
  %v47 = vmul.f32 %v29, %v43
  %v48 = vmul.f32 %v30, %v43
  %49 = vst [vmem:[%s3] sm:$0xff] %v45
  %50 = vst [vmem:[%s3 + $0x8] sm:$0xff] %v46
  %51 = vst [vmem:[%s3 + $0x10] sm:$0xff] %v47
  %52 = vst [vmem:[%s3 + $0x18] sm:$0xff] %v48
  // Predicated region
  $region14: #{ssl_forward.78} parent=0 // pred_check
    _
  $region15: #{ssl_forward.78} parent=0 // pred_check_branch
    %54 = sbr.rel (0) target = $region17
  $region16: #{ssl_forward.78} parent=0 // pred_region
    _
  $region17: #{ssl_forward.78} parent=0 // pred_fallthru
    _
  // Predicated region
  $region18: #{ssl_forward.78} parent=0 // pred_check
    _
  $region19: #{ssl_forward.78} parent=0 // pred_check_branch
    %56 = sbr.rel (0) target = $region21
  $region20: #{ssl_forward.78} parent=0 // pred_region
    _
  $region21: #{ssl_forward.78} parent=0 // pred_fallthru
    _

// kernel: ssl_forward.50
$region0: #{ssl_forward.50}
  #allocation0 [shape = 'u32[]', space=smem, size = 0x4, offset = 0x4, fixed_abs, tag = 'smem constant byte address 0x4 - core index']
  #allocation1 [shape = 'u32[72,128]{1,0:T(1,128)}', space=vmem, size = 0x9000, scoped, tag = 'internal scratch']
  %s0 = inlined_call_operand.vmem [shape: f32[128,128], index: 0, kind: input, shape index: {}]
  %s1 = inlined_call_operand.vmem [shape: f32[1,128], index: 1, kind: input, shape index: {}]
  %s2 = inlined_call_operand.vmem [shape: f32[1,128], index: 2, kind: input, shape index: {}]
  %s3 = inlined_call_operand.vmem [shape: bf16[128,128], index: 3, kind: output, shape index: {}]
  %s4 = sld [smem:[#allocation0]]
  $region22: #{ssl_forward.50} parent=0
    _
  %s6 = ssub.s32 1, %s4
  %s7 = scalar_select 0, %s6, %s4
  // Predicated region
  $region2: #{ssl_forward.50} parent=0 // pred_check
    _
  $region3: #{ssl_forward.50} parent=0 // pred_check_branch
    %9 = sbr.rel (0) target = $region5
  $region4: #{ssl_forward.50} parent=0 // pred_region
    _
  $region5: #{ssl_forward.50} parent=0 // pred_fallthru
    _
  // Predicated region
  $region6: #{ssl_forward.50} parent=0 // pred_check
    _
  $region7: #{ssl_forward.50} parent=0 // pred_check_branch
    %11 = sbr.rel (0) target = $region9
  $region8: #{ssl_forward.50} parent=0 // pred_region
    _
  $region9: #{ssl_forward.50} parent=0 // pred_fallthru
    _
  // Predicated region
  $region10: #{ssl_forward.50} parent=0 // pred_check
    _
  $region11: #{ssl_forward.50} parent=0 // pred_check_branch
    %13 = sbr.rel (0) target = $region13
  $region12: #{ssl_forward.50} parent=0 // pred_region
    _
  $region13: #{ssl_forward.50} parent=0 // pred_fallthru
    _
  %v14 = vld [vmem:[%s1] sm:$0x1]
  %v15 = vmul.f32 %v14, 0.0078125
  %v16 = vld [vmem:[%s2] sm:$0x1]
  %v17 = vmul.f32 %v16, 0.0078125
  %v18 = vmul.f32 %v15, %v15
  %v19 = vsub.f32 %v17, %v18
  %v20 = vld [vmem:[%s0] sm:$0xff]
  %v21 = vld [vmem:[%s0 + $0x8] sm:$0xff]
  %v22 = vld [vmem:[%s0 + $0x10] sm:$0xff]
  %v23 = vld [vmem:[%s0 + $0x18] sm:$0xff]
  %v24 = vld [vmem:[%s0 + $0x20] sm:$0xff]
  %v25 = vld [vmem:[%s0 + $0x28] sm:$0xff]
  %v26 = vld [vmem:[%s0 + $0x30] sm:$0xff]
  %v27 = vld [vmem:[%s0 + $0x38] sm:$0xff]
  %v28 = vld [vmem:[%s0 + $0x40] sm:$0xff]
  %v29 = vld [vmem:[%s0 + $0x48] sm:$0xff]
  %v30 = vld [vmem:[%s0 + $0x50] sm:$0xff]
  %v31 = vld [vmem:[%s0 + $0x58] sm:$0xff]
  %v32 = vld [vmem:[%s0 + $0x60] sm:$0xff]
  %v33 = vld [vmem:[%s0 + $0x68] sm:$0xff]
  %v34 = vld [vmem:[%s0 + $0x70] sm:$0xff]
  %v35 = vld [vmem:[%s0 + $0x78] sm:$0xff]
  %v37 = vperm.slane %v15, 0
  %v39 = vsub.f32 %v20, %v37
  %v40 = vsub.f32 %v21, %v37
  %v41 = vsub.f32 %v22, %v37
  %v42 = vsub.f32 %v23, %v37
  %v43 = vsub.f32 %v24, %v37
  %v44 = vsub.f32 %v25, %v37
  %v45 = vsub.f32 %v26, %v37
  %v46 = vsub.f32 %v27, %v37
  %v47 = vsub.f32 %v28, %v37
  %v48 = vsub.f32 %v29, %v37
  %v49 = vsub.f32 %v30, %v37
  %v50 = vsub.f32 %v31, %v37
  %v51 = vsub.f32 %v32, %v37
  %v52 = vsub.f32 %v33, %v37
  %v53 = vsub.f32 %v34, %v37
  %v54 = vsub.f32 %v35, %v37
  %v55 = vadd.f32 %v19, 1e-05
  %v56 = vrsqrt.pop %v55
  %v57 = vmul.f32 %v56, %v55
  %v58 = vmul.f32 %v57, %v56
  %v59 = vmul.f32 0.5, %v58
  %v60 = vsub.f32 1.5, %v59
  %v61 = vmul.f32 %v56, %v60
  %vm62 = vweird.f32 %v55
  %vm63 = vweird.f32 %v56
  %vm64 = vmor %vm62, %vm63
  %v65 = vsel %vm64, %v56, %v61
  %v67 = vperm.slane %v65, 0
  %v69 = vmul.f32 %v39, %v67
  %v70 = vmul.f32 %v40, %v67
  %v71 = vmul.f32 %v41, %v67
  %v72 = vmul.f32 %v42, %v67
  %v73 = vmul.f32 %v43, %v67
  %v74 = vmul.f32 %v44, %v67
  %v75 = vmul.f32 %v45, %v67
  %v76 = vmul.f32 %v46, %v67
  %v77 = vmul.f32 %v47, %v67
  %v78 = vmul.f32 %v48, %v67
  %v79 = vmul.f32 %v49, %v67
  %v80 = vmul.f32 %v50, %v67
  %v81 = vmul.f32 %v51, %v67
  %v82 = vmul.f32 %v52, %v67
  %v83 = vmul.f32 %v53, %v67
  %v84 = vmul.f32 %v54, %v67
  %v85 = vmax.f32 %v69, 0.0
  %v86 = vmax.f32 %v70, 0.0
  %v87 = vmax.f32 %v71, 0.0
  %v88 = vmax.f32 %v72, 0.0
  %v89 = vmax.f32 %v73, 0.0
  %v90 = vmax.f32 %v74, 0.0
  %v91 = vmax.f32 %v75, 0.0
  %v92 = vmax.f32 %v76, 0.0
  %v93 = vmax.f32 %v77, 0.0
  %v94 = vmax.f32 %v78, 0.0
  %v95 = vmax.f32 %v79, 0.0
  %v96 = vmax.f32 %v80, 0.0
  %v97 = vmax.f32 %v81, 0.0
  %v98 = vmax.f32 %v82, 0.0
  %v99 = vmax.f32 %v83, 0.0
  %v100 = vmax.f32 %v84, 0.0
  %v101 = vpack.c.bf16 %v85, %v85
  %v102 = vpack.c.bf16 %v86, %v86
  %v103 = vpack.c.bf16 %v87, %v87
  %v104 = vpack.c.bf16 %v88, %v88
  %v105 = vpack.c.bf16 %v89, %v89
  %v106 = vpack.c.bf16 %v90, %v90
  %v107 = vpack.c.bf16 %v91, %v91
  %v108 = vpack.c.bf16 %v92, %v92
  %v109 = vpack.c.bf16 %v93, %v93
  %v110 = vpack.c.bf16 %v94, %v94
  %v111 = vpack.c.bf16 %v95, %v95
  %v112 = vpack.c.bf16 %v96, %v96
  %v113 = vpack.c.bf16 %v97, %v97
  %v114 = vpack.c.bf16 %v98, %v98
  %v115 = vpack.c.bf16 %v99, %v99
  %v116 = vpack.c.bf16 %v100, %v100
  %117 = vst [vmem:[%s3] sm:$0xf] %v101
  %118 = vst [vmem:[%s3 + $0x4] sm:$0xf] %v102
  %119 = vst [vmem:[%s3 + $0x8] sm:$0xf] %v103
  %120 = vst [vmem:[%s3 + $0xc] sm:$0xf] %v104
  %121 = vst [vmem:[%s3 + $0x10] sm:$0xf] %v105
  %122 = vst [vmem:[%s3 + $0x14] sm:$0xf] %v106
  %123 = vst [vmem:[%s3 + $0x18] sm:$0xf] %v107
  %124 = vst [vmem:[%s3 + $0x1c] sm:$0xf] %v108
  %125 = vst [vmem:[%s3 + $0x20] sm:$0xf] %v109
  %126 = vst [vmem:[%s3 + $0x24] sm:$0xf] %v110
  %127 = vst [vmem:[%s3 + $0x28] sm:$0xf] %v111
  %128 = vst [vmem:[%s3 + $0x2c] sm:$0xf] %v112
  %129 = vst [vmem:[%s3 + $0x30] sm:$0xf] %v113
  %130 = vst [vmem:[%s3 + $0x34] sm:$0xf] %v114
  %131 = vst [vmem:[%s3 + $0x38] sm:$0xf] %v115
  %132 = vst [vmem:[%s3 + $0x3c] sm:$0xf] %v116
  // Predicated region
  $region14: #{ssl_forward.50} parent=0 // pred_check
    _
  $region15: #{ssl_forward.50} parent=0 // pred_check_branch
    %134 = sbr.rel (0) target = $region17
  $region16: #{ssl_forward.50} parent=0 // pred_region
    _
  $region17: #{ssl_forward.50} parent=0 // pred_fallthru
    _
  // Predicated region
  $region18: #{ssl_forward.50} parent=0 // pred_check
    _
  $region19: #{ssl_forward.50} parent=0 // pred_check_branch
    %136 = sbr.rel (0) target = $region21
  $region20: #{ssl_forward.50} parent=0 // pred_region
    _
  $region21: #{ssl_forward.50} parent=0 // pred_fallthru
    _

// kernel: ssl_forward.54
$region0: #{ssl_forward.54}
  #allocation0 [shape = 'u32[]', space=smem, size = 0x4, offset = 0x4, fixed_abs, tag = 'smem constant byte address 0x4 - core index']
  #allocation1 [shape = 'u32[72,128]{1,0:T(1,128)}', space=vmem, size = 0x9000, scoped, tag = 'internal scratch']
  #allocation2 [shape = 'f32[32,128]{1,0:T(8,128)}', space=vmem, size = 0x4000, scoped, tag = 'scratch operand']
  %s0 = inlined_call_operand.vmem [shape: bf16[32,128], index: 0, kind: input, shape index: {}]
  %s1 = inlined_call_operand.vmem [shape: bf16[128,128], index: 1, kind: input, shape index: {}]
  %s2 = inlined_call_operand.vmem [shape: f32[32,128], index: 2, kind: output, shape index: {0}]
  %s3 = inlined_call_operand.vmem [shape: f32[1,128], index: 3, kind: output, shape index: {1}]
  %s4 = inlined_call_operand.vmem [shape: f32[1,128], index: 4, kind: output, shape index: {2}]
  %5 = xla_tuple %s2, %s3, %s4
  %s6 = sld [smem:[#allocation0]]
  $region50: #{ssl_forward.54} parent=0
    _
  %s8 = ssub.s32 1, %s6
  %s9 = scalar_select 0, %s8, %s6
  // Predicated region
  $region2: #{ssl_forward.54} parent=0 // pred_check
    _
  $region3: #{ssl_forward.54} parent=0 // pred_check_branch
    %11 = sbr.rel (0) target = $region5
  $region4: #{ssl_forward.54} parent=0 // pred_region
    _
  $region5: #{ssl_forward.54} parent=0 // pred_fallthru
    _
  // Predicated region
  $region6: #{ssl_forward.54} parent=0 // pred_check
    _
  $region7: #{ssl_forward.54} parent=0 // pred_check_branch
    %13 = sbr.rel (0) target = $region9
  $region8: #{ssl_forward.54} parent=0 // pred_region
    _
  $region9: #{ssl_forward.54} parent=0 // pred_fallthru
    _
  %p14 = scmp.eq.s32.totalorder 0, 0
  // Predicated region
  $region10: #{ssl_forward.54} parent=0 // pred_check
    %p15 = pneg %p14
  $region11: #{ssl_forward.54} parent=0 // pred_check_branch
    %17 = sbr.rel (%p15) target = $region13
  $region12: #{ssl_forward.54} parent=0 // pred_region
    %18 = vst [vmem:[#allocation2] sm:$0xff] 0.0
    %19 = vst [vmem:[#allocation2 + $0x8] sm:$0xff] 0.0
    %20 = vst [vmem:[#allocation2 + $0x10] sm:$0xff] 0.0
    %21 = vst [vmem:[#allocation2 + $0x18] sm:$0xff] 0.0
  $region13: #{ssl_forward.54} parent=0 // pred_fallthru
    _
  %v22 = vld [vmem:[#allocation2] sm:$0xff]
  %v23 = vld [vmem:[#allocation2 + $0x8] sm:$0xff]
  %v24 = vld [vmem:[#allocation2 + $0x10] sm:$0xff]
  %v25 = vld [vmem:[#allocation2 + $0x18] sm:$0xff]
  %v26 = vld [vmem:[%s0] sm:$0xf]
  %v27 = vld [vmem:[%s0 + $0x4] sm:$0xf]
  %v28 = vld [vmem:[%s0 + $0x8] sm:$0xf]
  %v29 = vld [vmem:[%s0 + $0xc] sm:$0xf]
  %v30 = vld [vmem:[%s1] sm:$0xf]
  %v31 = vld [vmem:[%s1 + $0x4] sm:$0xf]
  %v32 = vld [vmem:[%s1 + $0x8] sm:$0xf]
  %v33 = vld [vmem:[%s1 + $0xc] sm:$0xf]
  %v34 = vld [vmem:[%s1 + $0x10] sm:$0xf]
  %v35 = vld [vmem:[%s1 + $0x14] sm:$0xf]
  %v36 = vld [vmem:[%s1 + $0x18] sm:$0xf]
  %v37 = vld [vmem:[%s1 + $0x1c] sm:$0xf]
  %v38 = vld [vmem:[%s1 + $0x20] sm:$0xf]
  %v39 = vld [vmem:[%s1 + $0x24] sm:$0xf]
  %v40 = vld [vmem:[%s1 + $0x28] sm:$0xf]
  %v41 = vld [vmem:[%s1 + $0x2c] sm:$0xf]
  %v42 = vld [vmem:[%s1 + $0x30] sm:$0xf]
  %v43 = vld [vmem:[%s1 + $0x34] sm:$0xf]
  %v44 = vld [vmem:[%s1 + $0x38] sm:$0xf]
  %v45 = vld [vmem:[%s1 + $0x3c] sm:$0xf]
  %v50 = vunpack.c.l.b16 %v26
  %v51 = vunpack.c.l.b16 %v27
  %v52 = vunpack.c.l.b16 %v28
  %v53 = vunpack.c.l.b16 %v29
  %v54 = vpack.c.b16 %v51, %v50
  %v55 = vpack.c.b16 %v53, %v52
  %v74 = vunpack.c.l.b16 %v30
  %v75 = vunpack.c.l.b16 %v31
  %v76 = vunpack.c.l.b16 %v32
  %v77 = vunpack.c.l.b16 %v33
  %v78 = vunpack.c.l.b16 %v34
  %v79 = vunpack.c.l.b16 %v35
  %v80 = vunpack.c.l.b16 %v36
  %v81 = vunpack.c.l.b16 %v37
  %v82 = vunpack.c.l.b16 %v38
  %v83 = vunpack.c.l.b16 %v39
  %v84 = vunpack.c.l.b16 %v40
  %v85 = vunpack.c.l.b16 %v41
  %v86 = vunpack.c.l.b16 %v42
  %v87 = vunpack.c.l.b16 %v43
  %v88 = vunpack.c.l.b16 %v44
  %v89 = vunpack.c.l.b16 %v45
  %v90 = vpack.c.b16 %v75, %v74
  %v91 = vpack.c.b16 %v77, %v76
  %v92 = vpack.c.b16 %v79, %v78
  %v93 = vpack.c.b16 %v81, %v80
  %v94 = vpack.c.b16 %v83, %v82
  %v95 = vpack.c.b16 %v85, %v84
  %v96 = vpack.c.b16 %v87, %v86
  %v97 = vpack.c.b16 %v89, %v88
  %106 = vmatpush.bf16.msra.mxu0 %v97
  %107 = vmatpush.bf16.msra.mxu0 %v96
  %108 = vmatpush.bf16.msra.mxu0 %v95
  %109 = vmatpush.bf16.msra.mxu0 %v94
  %110 = vmatpush.bf16.msra.mxu0 %v93
  %111 = vmatpush.bf16.msra.mxu0 %v92
  %112 = vmatpush.bf16.msra.mxu0 %v91
  %113 = vmatpush.bf16.msra.mxu0 %v90
  %114 = vmatmul.bf16.gmra.mxu0 %v54
  %v115 = vpop.f32.mrf.mxu0
  %v116 = vadd.f32 0.0, %v115
  %v117 = vpop.f32.mrf.mxu0
  %v118 = vadd.f32 0.0, %v117
  %119 = vmatmul.bf16.gmra.mxu0 %v55
  %v120 = vpop.f32.mrf.mxu0
  %v121 = vadd.f32 0.0, %v120
  %v122 = vpop.f32.mrf.mxu0
  %v123 = vadd.f32 0.0, %v122
  %124 = vdwg.mxu0
  %v125 = vadd.f32 %v22, %v116
  %v126 = vadd.f32 %v23, %v118
  %v127 = vadd.f32 %v24, %v121
  %v128 = vadd.f32 %v25, %v123
  %129 = vst [vmem:[#allocation2] sm:$0xff] %v125
  %130 = vst [vmem:[#allocation2 + $0x8] sm:$0xff] %v126
  %131 = vst [vmem:[#allocation2 + $0x10] sm:$0xff] %v127
  %132 = vst [vmem:[#allocation2 + $0x18] sm:$0xff] %v128
  // Predicated region
  $region14: #{ssl_forward.54} parent=0 // pred_check
    %p133 = pneg %p14
  $region15: #{ssl_forward.54} parent=0 // pred_check_branch
    %135 = sbr.rel (%p133) target = $region17
  $region16: #{ssl_forward.54} parent=0 // pred_region
    %v136 = vld [vmem:[#allocation2] sm:$0xff]
    %v137 = vld [vmem:[#allocation2 + $0x8] sm:$0xff]
    %v138 = vld [vmem:[#allocation2 + $0x10] sm:$0xff]
    %v139 = vld [vmem:[#allocation2 + $0x18] sm:$0xff]
    %140 = vst [vmem:[%s2] sm:$0xff] %v136
    %141 = vst [vmem:[%s2 + $0x8] sm:$0xff] %v137
    %142 = vst [vmem:[%s2 + $0x10] sm:$0xff] %v138
    %143 = vst [vmem:[%s2 + $0x18] sm:$0xff] %v139
  $region17: #{ssl_forward.54} parent=0 // pred_fallthru
    _
  %p144 = scmp.eq.s32.totalorder 0, 0
  %p145 = pnand %p14, %p144
  %p146 = pneg %p145
  // Predicated region
  $region18: #{ssl_forward.54} parent=0 // pred_check
    _
  $region19: #{ssl_forward.54} parent=0 // pred_check_branch
    %148 = sbr.rel (%p145) target = $region21
  $region20: #{ssl_forward.54} parent=0 // pred_region
    %v149 = vld [vmem:[#allocation2] sm:$0xff]
    %v150 = vld [vmem:[#allocation2 + $0x8] sm:$0xff]
    %v151 = vld [vmem:[#allocation2 + $0x10] sm:$0xff]
    %v152 = vld [vmem:[#allocation2 + $0x18] sm:$0xff]
    %v153 = vadd.f32 %v149, %v150
    %v154 = vadd.f32 %v153, %v151
    %v155 = vadd.f32 %v154, %v152
    %v156 = vrot.slane %v155, 4
    %v157 = vadd.f32 %v155, %v156
    %v158 = vrot.slane %v157, 2
    %v159 = vadd.f32 %v157, %v158
    %v160 = vrot.slane %v159, 1
    %v161 = vadd.f32 %v159, %v160
    %162 = vst [vmem:[%s3] sm:$0x1] %v161
    %v163 = vmul.f32 %v149, %v149
    %v164 = vmul.f32 %v150, %v150
    %v165 = vmul.f32 %v151, %v151
    %v166 = vmul.f32 %v152, %v152
    %v167 = vadd.f32 %v163, %v164
    %v168 = vadd.f32 %v167, %v165
    %v169 = vadd.f32 %v168, %v166
    %v170 = vrot.slane %v169, 4
    %v171 = vadd.f32 %v169, %v170
    %v172 = vrot.slane %v171, 2
    %v173 = vadd.f32 %v171, %v172
    %v174 = vrot.slane %v173, 1
    %v175 = vadd.f32 %v173, %v174
    %176 = vst [vmem:[%s4] sm:$0x1] %v175
  $region21: #{ssl_forward.54} parent=0 // pred_fallthru
    _
  %p177 = scmp.gt.s32.totalorder 0, 0
  %p178 = pnand %p14, %p177
  %p179 = pneg %p178
  // Predicated region
  $region22: #{ssl_forward.54} parent=0 // pred_check
    _
  $region23: #{ssl_forward.54} parent=0 // pred_check_branch
    %181 = sbr.rel (%p178) target = $region25
  $region24: #{ssl_forward.54} parent=0 // pred_region
    %v182 = vld [vmem:[#allocation2] sm:$0xff]
    %v183 = vld [vmem:[#allocation2 + $0x8] sm:$0xff]
    %v184 = vld [vmem:[#allocation2 + $0x10] sm:$0xff]
    %v185 = vld [vmem:[#allocation2 + $0x18] sm:$0xff]
    %v186 = vld [vmem:[%s3] sm:$0x1]
    %v187 = vadd.f32 %v182, %v183
    %v188 = vadd.f32 %v187, %v184
    %v189 = vadd.f32 %v188, %v185
    %v190 = vrot.slane %v189, 4
    %v191 = vadd.f32 %v189, %v190
    %v192 = vrot.slane %v191, 2
    %v193 = vadd.f32 %v191, %v192
    %v194 = vrot.slane %v193, 1
    %v195 = vadd.f32 %v193, %v194
    %v196 = vadd.f32 %v186, %v195
    %197 = vst [vmem:[%s3] sm:$0x1] %v196
    %v198 = vld [vmem:[%s4] sm:$0x1]
    %v199 = vmul.f32 %v182, %v182
    %v200 = vmul.f32 %v183, %v183
    %v201 = vmul.f32 %v184, %v184
    %v202 = vmul.f32 %v185, %v185
    %v203 = vadd.f32 %v199, %v200
    %v204 = vadd.f32 %v203, %v201
    %v205 = vadd.f32 %v204, %v202
    %v206 = vrot.slane %v205, 4
    %v207 = vadd.f32 %v205, %v206
    %v208 = vrot.slane %v207, 2
    %v209 = vadd.f32 %v207, %v208
    %v210 = vrot.slane %v209, 1
    %v211 = vadd.f32 %v209, %v210
    %v212 = vadd.f32 %v198, %v211
    %213 = vst [vmem:[%s4] sm:$0x1] %v212
  $region25: #{ssl_forward.54} parent=0 // pred_fallthru
    _
  // Predicated region
  $region26: #{ssl_forward.54} parent=0 // pred_check
    _
  $region27: #{ssl_forward.54} parent=0 // pred_check_branch
    %215 = sbr.rel (0) target = $region29
  $region28: #{ssl_forward.54} parent=0 // pred_region
    _
  $region29: #{ssl_forward.54} parent=0 // pred_fallthru
    _
  // Predicated region
  $region30: #{ssl_forward.54} parent=0 // pred_check
    _
  $region31: #{ssl_forward.54} parent=0 // pred_check_branch
    %217 = sbr.rel (0) target = $region33
  $region32: #{ssl_forward.54} parent=0 // pred_region
    _
  $region33: #{ssl_forward.54} parent=0 // pred_fallthru
    _
  // Predicated region
  $region34: #{ssl_forward.54} parent=0 // pred_check
    _
  $region35: #{ssl_forward.54} parent=0 // pred_check_branch
    %219 = sbr.rel (0) target = $region37
  $region36: #{ssl_forward.54} parent=0 // pred_region
    _
  $region37: #{ssl_forward.54} parent=0 // pred_fallthru
    _
  // Predicated region
  $region38: #{ssl_forward.54} parent=0 // pred_check
    _
  $region39: #{ssl_forward.54} parent=0 // pred_check_branch
    %221 = sbr.rel (0) target = $region41
  $region40: #{ssl_forward.54} parent=0 // pred_region
    _
  $region41: #{ssl_forward.54} parent=0 // pred_fallthru
    _
  // Predicated region
  $region42: #{ssl_forward.54} parent=0 // pred_check
    _
  $region43: #{ssl_forward.54} parent=0 // pred_check_branch
    %223 = sbr.rel (0) target = $region45
  $region44: #{ssl_forward.54} parent=0 // pred_region
    _
  $region45: #{ssl_forward.54} parent=0 // pred_fallthru
    _
  // Predicated region
  $region46: #{ssl_forward.54} parent=0 // pred_check
    _
  $region47: #{ssl_forward.54} parent=0 // pred_check_branch
    %225 = sbr.rel (0) target = $region49
  $region48: #{ssl_forward.54} parent=0 // pred_region
    _
  $region49: #{ssl_forward.54} parent=0 // pred_fallthru
    _

// kernel: ssl_forward.49
$region0: #{ssl_forward.49}
  #allocation0 [shape = 'u32[]', space=smem, size = 0x4, offset = 0x4, fixed_abs, tag = 'smem constant byte address 0x4 - core index']
  #allocation1 [shape = 'u32[72,128]{1,0:T(1,128)}', space=vmem, size = 0x9000, scoped, tag = 'internal scratch']
  #allocation2 [shape = 'f32[128,128]{1,0:T(8,128)}', space=vmem, size = 0x10000, scoped, tag = 'scratch operand']
  %s0 = inlined_call_operand.vmem [shape: bf16[128,128], index: 0, kind: input, shape index: {}]
  %s1 = inlined_call_operand.vmem [shape: bf16[128,128], index: 1, kind: input, shape index: {}]
  %s2 = inlined_call_operand.vmem [shape: f32[128,128], index: 2, kind: output, shape index: {0}]
  %s3 = inlined_call_operand.vmem [shape: f32[1,128], index: 3, kind: output, shape index: {1}]
  %s4 = inlined_call_operand.vmem [shape: f32[1,128], index: 4, kind: output, shape index: {2}]
  %5 = xla_tuple %s2, %s3, %s4
  %s6 = sld [smem:[#allocation0]]
  $region50: #{ssl_forward.49} parent=0
    _
  %s8 = ssub.s32 1, %s6
  %s9 = scalar_select 0, %s8, %s6
  // Predicated region
  $region2: #{ssl_forward.49} parent=0 // pred_check
    _
  $region3: #{ssl_forward.49} parent=0 // pred_check_branch
    %11 = sbr.rel (0) target = $region5
  $region4: #{ssl_forward.49} parent=0 // pred_region
    _
  $region5: #{ssl_forward.49} parent=0 // pred_fallthru
    _
  // Predicated region
  $region6: #{ssl_forward.49} parent=0 // pred_check
    _
  $region7: #{ssl_forward.49} parent=0 // pred_check_branch
    %13 = sbr.rel (0) target = $region9
  $region8: #{ssl_forward.49} parent=0 // pred_region
    _
  $region9: #{ssl_forward.49} parent=0 // pred_fallthru
    _
  %p14 = scmp.eq.s32.totalorder 0, 0
  // Predicated region
  $region10: #{ssl_forward.49} parent=0 // pred_check
    %p15 = pneg %p14
  $region11: #{ssl_forward.49} parent=0 // pred_check_branch
    %17 = sbr.rel (%p15) target = $region13
  $region12: #{ssl_forward.49} parent=0 // pred_region
    %18 = vst [vmem:[#allocation2] sm:$0xff] 0.0
    %19 = vst [vmem:[#allocation2 + $0x8] sm:$0xff] 0.0
    %20 = vst [vmem:[#allocation2 + $0x10] sm:$0xff] 0.0
    %21 = vst [vmem:[#allocation2 + $0x18] sm:$0xff] 0.0
    %22 = vst [vmem:[#allocation2 + $0x20] sm:$0xff] 0.0
    %23 = vst [vmem:[#allocation2 + $0x28] sm:$0xff] 0.0
    %24 = vst [vmem:[#allocation2 + $0x30] sm:$0xff] 0.0
    %25 = vst [vmem:[#allocation2 + $0x38] sm:$0xff] 0.0
    %26 = vst [vmem:[#allocation2 + $0x40] sm:$0xff] 0.0
    %27 = vst [vmem:[#allocation2 + $0x48] sm:$0xff] 0.0
    %28 = vst [vmem:[#allocation2 + $0x50] sm:$0xff] 0.0
    %29 = vst [vmem:[#allocation2 + $0x58] sm:$0xff] 0.0
    %30 = vst [vmem:[#allocation2 + $0x60] sm:$0xff] 0.0
    %31 = vst [vmem:[#allocation2 + $0x68] sm:$0xff] 0.0
    %32 = vst [vmem:[#allocation2 + $0x70] sm:$0xff] 0.0
    %33 = vst [vmem:[#allocation2 + $0x78] sm:$0xff] 0.0
  $region13: #{ssl_forward.49} parent=0 // pred_fallthru
    _
  %v34 = vld [vmem:[#allocation2] sm:$0xff]
  %v35 = vld [vmem:[#allocation2 + $0x8] sm:$0xff]
  %v36 = vld [vmem:[#allocation2 + $0x10] sm:$0xff]
  %v37 = vld [vmem:[#allocation2 + $0x18] sm:$0xff]
  %v38 = vld [vmem:[#allocation2 + $0x20] sm:$0xff]
  %v39 = vld [vmem:[#allocation2 + $0x28] sm:$0xff]
  %v40 = vld [vmem:[#allocation2 + $0x30] sm:$0xff]
  %v41 = vld [vmem:[#allocation2 + $0x38] sm:$0xff]
  %v42 = vld [vmem:[#allocation2 + $0x40] sm:$0xff]
  %v43 = vld [vmem:[#allocation2 + $0x48] sm:$0xff]
  %v44 = vld [vmem:[#allocation2 + $0x50] sm:$0xff]
  %v45 = vld [vmem:[#allocation2 + $0x58] sm:$0xff]
  %v46 = vld [vmem:[#allocation2 + $0x60] sm:$0xff]
  %v47 = vld [vmem:[#allocation2 + $0x68] sm:$0xff]
  %v48 = vld [vmem:[#allocation2 + $0x70] sm:$0xff]
  %v49 = vld [vmem:[#allocation2 + $0x78] sm:$0xff]
  %v50 = vld [vmem:[%s0] sm:$0xf]
  %v51 = vld [vmem:[%s0 + $0x4] sm:$0xf]
  %v52 = vld [vmem:[%s0 + $0x8] sm:$0xf]
  %v53 = vld [vmem:[%s0 + $0xc] sm:$0xf]
  %v54 = vld [vmem:[%s0 + $0x10] sm:$0xf]
  %v55 = vld [vmem:[%s0 + $0x14] sm:$0xf]
  %v56 = vld [vmem:[%s0 + $0x18] sm:$0xf]
  %v57 = vld [vmem:[%s0 + $0x1c] sm:$0xf]
  %v58 = vld [vmem:[%s0 + $0x20] sm:$0xf]
  %v59 = vld [vmem:[%s0 + $0x24] sm:$0xf]
  %v60 = vld [vmem:[%s0 + $0x28] sm:$0xf]
  %v61 = vld [vmem:[%s0 + $0x2c] sm:$0xf]
  %v62 = vld [vmem:[%s0 + $0x30] sm:$0xf]
  %v63 = vld [vmem:[%s0 + $0x34] sm:$0xf]
  %v64 = vld [vmem:[%s0 + $0x38] sm:$0xf]
  %v65 = vld [vmem:[%s0 + $0x3c] sm:$0xf]
  %v66 = vld [vmem:[%s1] sm:$0xf]
  %v67 = vld [vmem:[%s1 + $0x4] sm:$0xf]
  %v68 = vld [vmem:[%s1 + $0x8] sm:$0xf]
  %v69 = vld [vmem:[%s1 + $0xc] sm:$0xf]
  %v70 = vld [vmem:[%s1 + $0x10] sm:$0xf]
  %v71 = vld [vmem:[%s1 + $0x14] sm:$0xf]
  %v72 = vld [vmem:[%s1 + $0x18] sm:$0xf]
  %v73 = vld [vmem:[%s1 + $0x1c] sm:$0xf]
  %v74 = vld [vmem:[%s1 + $0x20] sm:$0xf]
  %v75 = vld [vmem:[%s1 + $0x24] sm:$0xf]
  %v76 = vld [vmem:[%s1 + $0x28] sm:$0xf]
  %v77 = vld [vmem:[%s1 + $0x2c] sm:$0xf]
  %v78 = vld [vmem:[%s1 + $0x30] sm:$0xf]
  %v79 = vld [vmem:[%s1 + $0x34] sm:$0xf]
  %v80 = vld [vmem:[%s1 + $0x38] sm:$0xf]
  %v81 = vld [vmem:[%s1 + $0x3c] sm:$0xf]
  %v98 = vunpack.c.l.b16 %v50
  %v99 = vunpack.c.l.b16 %v51
  %v100 = vunpack.c.l.b16 %v52
  %v101 = vunpack.c.l.b16 %v53
  %v102 = vunpack.c.l.b16 %v54
  %v103 = vunpack.c.l.b16 %v55
  %v104 = vunpack.c.l.b16 %v56
  %v105 = vunpack.c.l.b16 %v57
  %v106 = vunpack.c.l.b16 %v58
  %v107 = vunpack.c.l.b16 %v59
  %v108 = vunpack.c.l.b16 %v60
  %v109 = vunpack.c.l.b16 %v61
  %v110 = vunpack.c.l.b16 %v62
  %v111 = vunpack.c.l.b16 %v63
  %v112 = vunpack.c.l.b16 %v64
  %v113 = vunpack.c.l.b16 %v65
  %v114 = vpack.c.b16 %v99, %v98
  %v115 = vpack.c.b16 %v101, %v100
  %v116 = vpack.c.b16 %v103, %v102
  %v117 = vpack.c.b16 %v105, %v104
  %v118 = vpack.c.b16 %v107, %v106
  %v119 = vpack.c.b16 %v109, %v108
  %v120 = vpack.c.b16 %v111, %v110
  %v121 = vpack.c.b16 %v113, %v112
  %v146 = vunpack.c.l.b16 %v66
  %v147 = vunpack.c.l.b16 %v67
  %v148 = vunpack.c.l.b16 %v68
  %v149 = vunpack.c.l.b16 %v69
  %v150 = vunpack.c.l.b16 %v70
  %v151 = vunpack.c.l.b16 %v71
  %v152 = vunpack.c.l.b16 %v72
  %v153 = vunpack.c.l.b16 %v73
  %v154 = vunpack.c.l.b16 %v74
  %v155 = vunpack.c.l.b16 %v75
  %v156 = vunpack.c.l.b16 %v76
  %v157 = vunpack.c.l.b16 %v77
  %v158 = vunpack.c.l.b16 %v78
  %v159 = vunpack.c.l.b16 %v79
  %v160 = vunpack.c.l.b16 %v80
  %v161 = vunpack.c.l.b16 %v81
  %v162 = vpack.c.b16 %v147, %v146
  %v163 = vpack.c.b16 %v149, %v148
  %v164 = vpack.c.b16 %v151, %v150
  %v165 = vpack.c.b16 %v153, %v152
  %v166 = vpack.c.b16 %v155, %v154
  %v167 = vpack.c.b16 %v157, %v156
  %v168 = vpack.c.b16 %v159, %v158
  %v169 = vpack.c.b16 %v161, %v160
  %178 = vmatpush.bf16.msra.mxu0 %v169
  %179 = vmatpush.bf16.msra.mxu0 %v168
  %180 = vmatpush.bf16.msra.mxu0 %v167
  %181 = vmatpush.bf16.msra.mxu0 %v166
  %182 = vmatpush.bf16.msra.mxu0 %v165
  %183 = vmatpush.bf16.msra.mxu0 %v164
  %184 = vmatpush.bf16.msra.mxu0 %v163
  %185 = vmatpush.bf16.msra.mxu0 %v162
  %186 = vmatmul.bf16.gmra.mxu0 %v114
  %v187 = vpop.f32.mrf.mxu0
  %v188 = vadd.f32 0.0, %v187
  %v189 = vpop.f32.mrf.mxu0
  %v190 = vadd.f32 0.0, %v189
  %191 = vmatmul.bf16.gmra.mxu0 %v115
  %v192 = vpop.f32.mrf.mxu0
  %v193 = vadd.f32 0.0, %v192
  %v194 = vpop.f32.mrf.mxu0
  %v195 = vadd.f32 0.0, %v194
  %196 = vmatmul.bf16.gmra.mxu0 %v116
  %v197 = vpop.f32.mrf.mxu0
  %v198 = vadd.f32 0.0, %v197
  %v199 = vpop.f32.mrf.mxu0
  %v200 = vadd.f32 0.0, %v199
  %201 = vmatmul.bf16.gmra.mxu0 %v117
  %v202 = vpop.f32.mrf.mxu0
  %v203 = vadd.f32 0.0, %v202
  %v204 = vpop.f32.mrf.mxu0
  %v205 = vadd.f32 0.0, %v204
  %206 = vmatmul.bf16.gmra.mxu0 %v118
  %v207 = vpop.f32.mrf.mxu0
  %v208 = vadd.f32 0.0, %v207
  %v209 = vpop.f32.mrf.mxu0
  %v210 = vadd.f32 0.0, %v209
  %211 = vmatmul.bf16.gmra.mxu0 %v119
  %v212 = vpop.f32.mrf.mxu0
  %v213 = vadd.f32 0.0, %v212
  %v214 = vpop.f32.mrf.mxu0
  %v215 = vadd.f32 0.0, %v214
  %216 = vmatmul.bf16.gmra.mxu0 %v120
  %v217 = vpop.f32.mrf.mxu0
  %v218 = vadd.f32 0.0, %v217
  %v219 = vpop.f32.mrf.mxu0
  %v220 = vadd.f32 0.0, %v219
  %221 = vmatmul.bf16.gmra.mxu0 %v121
  %v222 = vpop.f32.mrf.mxu0
  %v223 = vadd.f32 0.0, %v222
  %v224 = vpop.f32.mrf.mxu0
  %v225 = vadd.f32 0.0, %v224
  %226 = vdwg.mxu0
  %v227 = vadd.f32 %v34, %v188
  %v228 = vadd.f32 %v35, %v190
  %v229 = vadd.f32 %v36, %v193
  %v230 = vadd.f32 %v37, %v195
  %v231 = vadd.f32 %v38, %v198
  %v232 = vadd.f32 %v39, %v200
  %v233 = vadd.f32 %v40, %v203
  %v234 = vadd.f32 %v41, %v205
  %v235 = vadd.f32 %v42, %v208
  %v236 = vadd.f32 %v43, %v210
  %v237 = vadd.f32 %v44, %v213
  %v238 = vadd.f32 %v45, %v215
  %v239 = vadd.f32 %v46, %v218
  %v240 = vadd.f32 %v47, %v220
  %v241 = vadd.f32 %v48, %v223
  %v242 = vadd.f32 %v49, %v225
  %243 = vst [vmem:[#allocation2] sm:$0xff] %v227
  %244 = vst [vmem:[#allocation2 + $0x8] sm:$0xff] %v228
  %245 = vst [vmem:[#allocation2 + $0x10] sm:$0xff] %v229
  %246 = vst [vmem:[#allocation2 + $0x18] sm:$0xff] %v230
  %247 = vst [vmem:[#allocation2 + $0x20] sm:$0xff] %v231
  %248 = vst [vmem:[#allocation2 + $0x28] sm:$0xff] %v232
  %249 = vst [vmem:[#allocation2 + $0x30] sm:$0xff] %v233
  %250 = vst [vmem:[#allocation2 + $0x38] sm:$0xff] %v234
  %251 = vst [vmem:[#allocation2 + $0x40] sm:$0xff] %v235
  %252 = vst [vmem:[#allocation2 + $0x48] sm:$0xff] %v236
  %253 = vst [vmem:[#allocation2 + $0x50] sm:$0xff] %v237
  %254 = vst [vmem:[#allocation2 + $0x58] sm:$0xff] %v238
  %255 = vst [vmem:[#allocation2 + $0x60] sm:$0xff] %v239
  %256 = vst [vmem:[#allocation2 + $0x68] sm:$0xff] %v240
  %257 = vst [vmem:[#allocation2 + $0x70] sm:$0xff] %v241
  %258 = vst [vmem:[#allocation2 + $0x78] sm:$0xff] %v242
  // Predicated region
  $region14: #{ssl_forward.49} parent=0 // pred_check
    %p259 = pneg %p14
  $region15: #{ssl_forward.49} parent=0 // pred_check_branch
    %261 = sbr.rel (%p259) target = $region17
  $region16: #{ssl_forward.49} parent=0 // pred_region
    %v262 = vld [vmem:[#allocation2] sm:$0xff]
    %v263 = vld [vmem:[#allocation2 + $0x8] sm:$0xff]
    %v264 = vld [vmem:[#allocation2 + $0x10] sm:$0xff]
    %v265 = vld [vmem:[#allocation2 + $0x18] sm:$0xff]
    %v266 = vld [vmem:[#allocation2 + $0x20] sm:$0xff]
    %v267 = vld [vmem:[#allocation2 + $0x28] sm:$0xff]
    %v268 = vld [vmem:[#allocation2 + $0x30] sm:$0xff]
    %v269 = vld [vmem:[#allocation2 + $0x38] sm:$0xff]
    %v270 = vld [vmem:[#allocation2 + $0x40] sm:$0xff]
    %v271 = vld [vmem:[#allocation2 + $0x48] sm:$0xff]
    %v272 = vld [vmem:[#allocation2 + $0x50] sm:$0xff]
    %v273 = vld [vmem:[#allocation2 + $0x58] sm:$0xff]
    %v274 = vld [vmem:[#allocation2 + $0x60] sm:$0xff]
    %v275 = vld [vmem:[#allocation2 + $0x68] sm:$0xff]
    %v276 = vld [vmem:[#allocation2 + $0x70] sm:$0xff]
    %v277 = vld [vmem:[#allocation2 + $0x78] sm:$0xff]
    %278 = vst [vmem:[%s2] sm:$0xff] %v262
    %279 = vst [vmem:[%s2 + $0x8] sm:$0xff] %v263
    %280 = vst [vmem:[%s2 + $0x10] sm:$0xff] %v264
    %281 = vst [vmem:[%s2 + $0x18] sm:$0xff] %v265
    %282 = vst [vmem:[%s2 + $0x20] sm:$0xff] %v266
    %283 = vst [vmem:[%s2 + $0x28] sm:$0xff] %v267
    %284 = vst [vmem:[%s2 + $0x30] sm:$0xff] %v268
    %285 = vst [vmem:[%s2 + $0x38] sm:$0xff] %v269
    %286 = vst [vmem:[%s2 + $0x40] sm:$0xff] %v270
    %287 = vst [vmem:[%s2 + $0x48] sm:$0xff] %v271
    %288 = vst [vmem:[%s2 + $0x50] sm:$0xff] %v272
    %289 = vst [vmem:[%s2 + $0x58] sm:$0xff] %v273
    %290 = vst [vmem:[%s2 + $0x60] sm:$0xff] %v274
    %291 = vst [vmem:[%s2 + $0x68] sm:$0xff] %v275
    %292 = vst [vmem:[%s2 + $0x70] sm:$0xff] %v276
    %293 = vst [vmem:[%s2 + $0x78] sm:$0xff] %v277
  $region17: #{ssl_forward.49} parent=0 // pred_fallthru
    _
  %p294 = scmp.eq.s32.totalorder 0, 0
  %p295 = pnand %p14, %p294
  %p296 = pneg %p295
  // Predicated region
  $region18: #{ssl_forward.49} parent=0 // pred_check
    _
  $region19: #{ssl_forward.49} parent=0 // pred_check_branch
    %298 = sbr.rel (%p295) target = $region21
  $region20: #{ssl_forward.49} parent=0 // pred_region
    %v299 = vld [vmem:[#allocation2] sm:$0xff]
    %v300 = vld [vmem:[#allocation2 + $0x8] sm:$0xff]
    %v301 = vld [vmem:[#allocation2 + $0x10] sm:$0xff]
    %v302 = vld [vmem:[#allocation2 + $0x18] sm:$0xff]
    %v303 = vld [vmem:[#allocation2 + $0x20] sm:$0xff]
    %v304 = vld [vmem:[#allocation2 + $0x28] sm:$0xff]
    %v305 = vld [vmem:[#allocation2 + $0x30] sm:$0xff]
    %v306 = vld [vmem:[#allocation2 + $0x38] sm:$0xff]
    %v307 = vld [vmem:[#allocation2 + $0x40] sm:$0xff]
    %v308 = vld [vmem:[#allocation2 + $0x48] sm:$0xff]
    %v309 = vld [vmem:[#allocation2 + $0x50] sm:$0xff]
    %v310 = vld [vmem:[#allocation2 + $0x58] sm:$0xff]
    %v311 = vld [vmem:[#allocation2 + $0x60] sm:$0xff]
    %v312 = vld [vmem:[#allocation2 + $0x68] sm:$0xff]
    %v313 = vld [vmem:[#allocation2 + $0x70] sm:$0xff]
    %v314 = vld [vmem:[#allocation2 + $0x78] sm:$0xff]
    %v315 = vadd.f32 %v299, %v300
    %v316 = vadd.f32 %v315, %v301
    %v317 = vadd.f32 %v316, %v302
    %v318 = vadd.f32 %v317, %v303
    %v319 = vadd.f32 %v318, %v304
    %v320 = vadd.f32 %v319, %v305
    %v321 = vadd.f32 %v320, %v306
    %v322 = vadd.f32 %v321, %v307
    %v323 = vadd.f32 %v322, %v308
    %v324 = vadd.f32 %v323, %v309
    %v325 = vadd.f32 %v324, %v310
    %v326 = vadd.f32 %v325, %v311
    %v327 = vadd.f32 %v326, %v312
    %v328 = vadd.f32 %v327, %v313
    %v329 = vadd.f32 %v328, %v314
    %v330 = vrot.slane %v329, 4
    %v331 = vadd.f32 %v329, %v330
    %v332 = vrot.slane %v331, 2
    %v333 = vadd.f32 %v331, %v332
    %v334 = vrot.slane %v333, 1
    %v335 = vadd.f32 %v333, %v334
    %336 = vst [vmem:[%s3] sm:$0x1] %v335
    %v337 = vmul.f32 %v299, %v299
    %v338 = vmul.f32 %v300, %v300
    %v339 = vmul.f32 %v301, %v301
    %v340 = vmul.f32 %v302, %v302
    %v341 = vmul.f32 %v303, %v303
    %v342 = vmul.f32 %v304, %v304
    %v343 = vmul.f32 %v305, %v305
    %v344 = vmul.f32 %v306, %v306
    %v345 = vmul.f32 %v307, %v307
    %v346 = vmul.f32 %v308, %v308
    %v347 = vmul.f32 %v309, %v309
    %v348 = vmul.f32 %v310, %v310
    %v349 = vmul.f32 %v311, %v311
    %v350 = vmul.f32 %v312, %v312
    %v351 = vmul.f32 %v313, %v313
    %v352 = vmul.f32 %v314, %v314
    %v353 = vadd.f32 %v337, %v338
    %v354 = vadd.f32 %v353, %v339
    %v355 = vadd.f32 %v354, %v340
    %v356 = vadd.f32 %v355, %v341
    %v357 = vadd.f32 %v356, %v342
    %v358 = vadd.f32 %v357, %v343
    %v359 = vadd.f32 %v358, %v344
    %v360 = vadd.f32 %v359, %v345
    %v361 = vadd.f32 %v360, %v346
    %v362 = vadd.f32 %v361, %v347
    %v363 = vadd.f32 %v362, %v348
    %v364 = vadd.f32 %v363, %v349
    %v365 = vadd.f32 %v364, %v350
    %v366 = vadd.f32 %v365, %v351
    %v367 = vadd.f32 %v366, %v352
    %v368 = vrot.slane %v367, 4
    %v369 = vadd.f32 %v367, %v368
    %v370 = vrot.slane %v369, 2
    %v371 = vadd.f32 %v369, %v370
    %v372 = vrot.slane %v371, 1
    %v373 = vadd.f32 %v371, %v372
    %374 = vst [vmem:[%s4] sm:$0x1] %v373
  $region21: #{ssl_forward.49} parent=0 // pred_fallthru
    _
  %p375 = scmp.gt.s32.totalorder 0, 0
  %p376 = pnand %p14, %p375
  %p377 = pneg %p376
  // Predicated region
  $region22: #{ssl_forward.49} parent=0 // pred_check
    _
  $region23: #{ssl_forward.49} parent=0 // pred_check_branch
    %379 = sbr.rel (%p376) target = $region25
  $region24: #{ssl_forward.49} parent=0 // pred_region
    %v380 = vld [vmem:[#allocation2] sm:$0xff]
    %v381 = vld [vmem:[#allocation2 + $0x8] sm:$0xff]
    %v382 = vld [vmem:[#allocation2 + $0x10] sm:$0xff]
    %v383 = vld [vmem:[#allocation2 + $0x18] sm:$0xff]
    %v384 = vld [vmem:[#allocation2 + $0x20] sm:$0xff]
    %v385 = vld [vmem:[#allocation2 + $0x28] sm:$0xff]
    %v386 = vld [vmem:[#allocation2 + $0x30] sm:$0xff]
    %v387 = vld [vmem:[#allocation2 + $0x38] sm:$0xff]
    %v388 = vld [vmem:[#allocation2 + $0x40] sm:$0xff]
    %v389 = vld [vmem:[#allocation2 + $0x48] sm:$0xff]
    %v390 = vld [vmem:[#allocation2 + $0x50] sm:$0xff]
    %v391 = vld [vmem:[#allocation2 + $0x58] sm:$0xff]
    %v392 = vld [vmem:[#allocation2 + $0x60] sm:$0xff]
    %v393 = vld [vmem:[#allocation2 + $0x68] sm:$0xff]
    %v394 = vld [vmem:[#allocation2 + $0x70] sm:$0xff]
    %v395 = vld [vmem:[#allocation2 + $0x78] sm:$0xff]
    %v396 = vld [vmem:[%s3] sm:$0x1]
    %v397 = vadd.f32 %v380, %v381
    %v398 = vadd.f32 %v397, %v382
    %v399 = vadd.f32 %v398, %v383
    %v400 = vadd.f32 %v399, %v384
    %v401 = vadd.f32 %v400, %v385
    %v402 = vadd.f32 %v401, %v386
    %v403 = vadd.f32 %v402, %v387
    %v404 = vadd.f32 %v403, %v388
    %v405 = vadd.f32 %v404, %v389
    %v406 = vadd.f32 %v405, %v390
    %v407 = vadd.f32 %v406, %v391
    %v408 = vadd.f32 %v407, %v392
    %v409 = vadd.f32 %v408, %v393
    %v410 = vadd.f32 %v409, %v394
    %v411 = vadd.f32 %v410, %v395
    %v412 = vrot.slane %v411, 4
    %v413 = vadd.f32 %v411, %v412
    %v414 = vrot.slane %v413, 2
    %v415 = vadd.f32 %v413, %v414
    %v416 = vrot.slane %v415, 1
    %v417 = vadd.f32 %v415, %v416
    %v418 = vadd.f32 %v396, %v417
    %419 = vst [vmem:[%s3] sm:$0x1] %v418
    %v420 = vld [vmem:[%s4] sm:$0x1]
    %v421 = vmul.f32 %v380, %v380
    %v422 = vmul.f32 %v381, %v381
    %v423 = vmul.f32 %v382, %v382
    %v424 = vmul.f32 %v383, %v383
    %v425 = vmul.f32 %v384, %v384
    %v426 = vmul.f32 %v385, %v385
    %v427 = vmul.f32 %v386, %v386
    %v428 = vmul.f32 %v387, %v387
    %v429 = vmul.f32 %v388, %v388
    %v430 = vmul.f32 %v389, %v389
    %v431 = vmul.f32 %v390, %v390
    %v432 = vmul.f32 %v391, %v391
    %v433 = vmul.f32 %v392, %v392
    %v434 = vmul.f32 %v393, %v393
    %v435 = vmul.f32 %v394, %v394
    %v436 = vmul.f32 %v395, %v395
    %v437 = vadd.f32 %v421, %v422
    %v438 = vadd.f32 %v437, %v423
    %v439 = vadd.f32 %v438, %v424
    %v440 = vadd.f32 %v439, %v425
    %v441 = vadd.f32 %v440, %v426
    %v442 = vadd.f32 %v441, %v427
    %v443 = vadd.f32 %v442, %v428
    %v444 = vadd.f32 %v443, %v429
    %v445 = vadd.f32 %v444, %v430
    %v446 = vadd.f32 %v445, %v431
    %v447 = vadd.f32 %v446, %v432
    %v448 = vadd.f32 %v447, %v433
    %v449 = vadd.f32 %v448, %v434
    %v450 = vadd.f32 %v449, %v435
    %v451 = vadd.f32 %v450, %v436
    %v452 = vrot.slane %v451, 4
    %v453 = vadd.f32 %v451, %v452
    %v454 = vrot.slane %v453, 2
    %v455 = vadd.f32 %v453, %v454
    %v456 = vrot.slane %v455, 1
    %v457 = vadd.f32 %v455, %v456
    %v458 = vadd.f32 %v420, %v457
    %459 = vst [vmem:[%s4] sm:$0x1] %v458
  $region25: #{ssl_forward.49} parent=0 // pred_fallthru
    _
  // Predicated region
  $region26: #{ssl_forward.49} parent=0 // pred_check
    _
  $region27: #{ssl_forward.49} parent=0 // pred_check_branch
    %461 = sbr.rel (0) target = $region29
  $region28: #{ssl_forward.49} parent=0 // pred_region
    _
  $region29: #{ssl_forward.49} parent=0 // pred_fallthru
    _
  // Predicated region
  $region30: #{ssl_forward.49} parent=0 // pred_check
    _
  $region31: #{ssl_forward.49} parent=0 // pred_check_branch
    %463 = sbr.rel (0) target = $region33
  $region32: #{ssl_forward.49} parent=0 // pred_region
    _
  $region33: #{ssl_forward.49} parent=0 // pred_fallthru
    _
  // Predicated region
  $region34: #{ssl_forward.49} parent=0 // pred_check
    _
  $region35: #{ssl_forward.49} parent=0 // pred_check_branch
    %465 = sbr.rel (0) target = $region37
  $region36: #{ssl_forward.49} parent=0 // pred_region
    _
  $region37: #{ssl_forward.49} parent=0 // pred_fallthru
    _
  // Predicated region
  $region38: #{ssl_forward.49} parent=0 // pred_check
    _
  $region39: #{ssl_forward.49} parent=0 // pred_check_branch
    %467 = sbr.rel (0) target = $region41
  $region40: #{ssl_forward.49} parent=0 // pred_region
    _
  $region41: #{ssl_forward.49} parent=0 // pred_fallthru
    _
  // Predicated region
  $region42: #{ssl_forward.49} parent=0 // pred_check
    _
  $region43: #{ssl_forward.49} parent=0 // pred_check_branch
    %469 = sbr.rel (0) target = $region45
  $region44: #{ssl_forward.49} parent=0 // pred_region
    _
  $region45: #{ssl_forward.49} parent=0 // pred_fallthru
    _
  // Predicated region
  $region46: #{ssl_forward.49} parent=0 // pred_check
    _
  $region47: #{ssl_forward.49} parent=0 // pred_check_branch
    %471 = sbr.rel (0) target = $region49
  $region48: #{ssl_forward.49} parent=0 // pred_region
    _
  $region49: #{ssl_forward.49} parent=0 // pred_fallthru
    _

// kernel: ssl_forward.52
$region0: #{ssl_forward.52}
  #allocation0 [shape = 'u32[]', space=smem, size = 0x4, offset = 0x4, fixed_abs, tag = 'smem constant byte address 0x4 - core index']
  #allocation1 [shape = 'u32[72,128]{1,0:T(1,128)}', space=vmem, size = 0x9000, scoped, tag = 'internal scratch']
  %s0 = inlined_call_operand.vmem [shape: f32[32,128], index: 0, kind: input, shape index: {}]
  %s1 = inlined_call_operand.vmem [shape: f32[1,128], index: 1, kind: input, shape index: {}]
  %s2 = inlined_call_operand.vmem [shape: f32[1,128], index: 2, kind: input, shape index: {}]
  %s3 = inlined_call_operand.vmem [shape: bf16[32,128], index: 3, kind: output, shape index: {}]
  %s4 = sld [smem:[#allocation0]]
  $region22: #{ssl_forward.52} parent=0
    _
  %s6 = ssub.s32 1, %s4
  %s7 = scalar_select 0, %s6, %s4
  // Predicated region
  $region2: #{ssl_forward.52} parent=0 // pred_check
    _
  $region3: #{ssl_forward.52} parent=0 // pred_check_branch
    %9 = sbr.rel (0) target = $region5
  $region4: #{ssl_forward.52} parent=0 // pred_region
    _
  $region5: #{ssl_forward.52} parent=0 // pred_fallthru
    _
  // Predicated region
  $region6: #{ssl_forward.52} parent=0 // pred_check
    _
  $region7: #{ssl_forward.52} parent=0 // pred_check_branch
    %11 = sbr.rel (0) target = $region9
  $region8: #{ssl_forward.52} parent=0 // pred_region
    _
  $region9: #{ssl_forward.52} parent=0 // pred_fallthru
    _
  // Predicated region
  $region10: #{ssl_forward.52} parent=0 // pred_check
    _
  $region11: #{ssl_forward.52} parent=0 // pred_check_branch
    %13 = sbr.rel (0) target = $region13
  $region12: #{ssl_forward.52} parent=0 // pred_region
    _
  $region13: #{ssl_forward.52} parent=0 // pred_fallthru
    _
  %v14 = vld [vmem:[%s1] sm:$0x1]
  %v15 = vmul.f32 %v14, 0.03125
  %v16 = vld [vmem:[%s2] sm:$0x1]
  %v17 = vmul.f32 %v16, 0.03125
  %v18 = vmul.f32 %v15, %v15
  %v19 = vsub.f32 %v17, %v18
  %v20 = vld [vmem:[%s0] sm:$0xff]
  %v21 = vld [vmem:[%s0 + $0x8] sm:$0xff]
  %v22 = vld [vmem:[%s0 + $0x10] sm:$0xff]
  %v23 = vld [vmem:[%s0 + $0x18] sm:$0xff]
  %v25 = vperm.slane %v15, 0
  %v27 = vsub.f32 %v20, %v25
  %v28 = vsub.f32 %v21, %v25
  %v29 = vsub.f32 %v22, %v25
  %v30 = vsub.f32 %v23, %v25
  %v31 = vadd.f32 %v19, 1e-05
  %v32 = vrsqrt.pop %v31
  %v33 = vmul.f32 %v32, %v31
  %v34 = vmul.f32 %v33, %v32
  %v35 = vmul.f32 0.5, %v34
  %v36 = vsub.f32 1.5, %v35
  %v37 = vmul.f32 %v32, %v36
  %vm38 = vweird.f32 %v31
  %vm39 = vweird.f32 %v32
  %vm40 = vmor %vm38, %vm39
  %v41 = vsel %vm40, %v32, %v37
  %v43 = vperm.slane %v41, 0
  %v45 = vmul.f32 %v27, %v43
  %v46 = vmul.f32 %v28, %v43
  %v47 = vmul.f32 %v29, %v43
  %v48 = vmul.f32 %v30, %v43
  %v49 = vmax.f32 %v45, 0.0
  %v50 = vmax.f32 %v46, 0.0
  %v51 = vmax.f32 %v47, 0.0
  %v52 = vmax.f32 %v48, 0.0
  %v53 = vpack.c.bf16 %v49, %v49
  %v54 = vpack.c.bf16 %v50, %v50
  %v55 = vpack.c.bf16 %v51, %v51
  %v56 = vpack.c.bf16 %v52, %v52
  %57 = vst [vmem:[%s3] sm:$0xf] %v53
  %58 = vst [vmem:[%s3 + $0x4] sm:$0xf] %v54
  %59 = vst [vmem:[%s3 + $0x8] sm:$0xf] %v55
  %60 = vst [vmem:[%s3 + $0xc] sm:$0xf] %v56
  // Predicated region
  $region14: #{ssl_forward.52} parent=0 // pred_check
    _
  $region15: #{ssl_forward.52} parent=0 // pred_check_branch
    %62 = sbr.rel (0) target = $region17
  $region16: #{ssl_forward.52} parent=0 // pred_region
    _
  $region17: #{ssl_forward.52} parent=0 // pred_fallthru
    _
  // Predicated region
  $region18: #{ssl_forward.52} parent=0 // pred_check
    _
  $region19: #{ssl_forward.52} parent=0 // pred_check_branch
    %64 = sbr.rel (0) target = $region21
  $region20: #{ssl_forward.52} parent=0 // pred_region
    _
  $region21: #{ssl_forward.52} parent=0 // pred_fallthru
    _

// kernel: ssl_forward.74
$region0: #{ssl_forward.74}
  #allocation0 [shape = 'u32[]', space=smem, size = 0x4, offset = 0x4, fixed_abs, tag = 'smem constant byte address 0x4 - core index']
  #allocation1 [shape = 'u32[72,128]{1,0:T(1,128)}', space=vmem, size = 0x9000, scoped, tag = 'internal scratch']
  #allocation2 [shape = 'f32[32,128]{1,0:T(8,128)}', space=vmem, size = 0x4000, scoped, tag = 'scratch operand']
  %s0 = inlined_call_operand.vmem [shape: bf16[32,640], index: 0, kind: input, shape index: {}]
  %s1 = inlined_call_operand.vmem [shape: bf16[640,128], index: 1, kind: input, shape index: {}]
  %s2 = inlined_call_operand.vmem [shape: f32[32,128], index: 2, kind: output, shape index: {0}]
  %s3 = inlined_call_operand.vmem [shape: f32[1,128], index: 3, kind: output, shape index: {1}]
  %s4 = inlined_call_operand.vmem [shape: f32[1,128], index: 4, kind: output, shape index: {2}]
  %5 = xla_tuple %s2, %s3, %s4
  %s6 = sld [smem:[#allocation0]]
  $region114: #{ssl_forward.74} parent=0
    _
  %s8 = ssub.s32 1, %s6
  %s9 = scalar_select 0, %s8, %s6
  $region1: #{ssl_forward.74} parent=0
    #allocation3 [shape = 'u8[16384]{0}', space=vmem, size = 0x4000, scoped, tag = 'input window, operand 0']
    loop: start=0, step=1, limit=7
    $region2: #{ssl_forward.74} parent=1 // loop_pre_header
      _
    $region3: #{ssl_forward.74} parent=1 // loop_header
      %s11 = sphi 0, %s15
      %p12 = scmp.ge.s32.totalorder %s11, 7
      %s18 = sphi 0, %s37
      %s19 = sphi 0, %s33
      %s20 = sphi 0, %s29
      %s21 = sphi 0, %s18
      %s22 = sphi 0, %s19
      %s23 = sphi 0, %s20
      %s24 = sphi 0, %s21
      %s25 = sphi 0, %s22
      %s26 = sphi 0, %s23
      %s42 = sphi 0, %s44
      %s45 = sphi 0, %s42
      %s46 = sphi 0, %s45
      %s62 = sphi 0, %s46
      %s70 = sphi 0, %s72
      %s73 = sphi 0, %s70
      %s74 = sphi 0, %s73
      %s90 = sphi 0, %s74
      %s98 = sphi 0, %s100
      %s101 = sphi 0, %s98
      %s102 = sphi 0, %s101
      %s118 = sphi 0, %s102
      %s124 = sphi 0, %s126
      %s127 = sphi 0, %s124
      %s128 = sphi 0, %s127
      %s144 = sphi 0, %s128
      %s150 = sphi 0, %s152
      %s153 = sphi 0, %s150
      %s154 = sphi 0, %s153
      %s170 = sphi 0, %s154
    $region4: #{ssl_forward.74} parent=1 // loop_header_branch
      %14 = sbr.rel (%p12) target = $region8
    $region5: #{ssl_forward.74} parent=1 // loop_body
      %s16 = ssub.s32 %s11, 1
      %s17 = ssub.s32 %s11, 2
      %s27 = sadd.s32 1, %s20
      %p28 = scmp.ge.s32.totalorder %s27, 5
      %s29 = scalar_select %p28, 0, %s27
      %s30 = sadd.s32 1, %s19
      %s31 = scalar_select %p28, %s30, %s19
      %p32 = scmp.ge.s32.totalorder %s31, 1
      %s33 = scalar_select %p32, 0, %s31
      %s34 = sadd.s32 1, %s18
      %s35 = scalar_select %p32, %s34, %s18
      %p36 = scmp.ge.s32.totalorder %s35, 1
      %s37 = scalar_select %p36, 0, %s35
      %s38 = ssub.s32 %s19, %s33
      %s39 = ssub.s32 %s20, %s29
      %s40 = sor.u32 %s38, %s39
      %p41 = scmp.eq.s32.totalorder %s40, 0
      %s43 = sadd.s32 %s42, 1
      %s44 = scalar_select %p41, %s42, %s43
      %p47 = pneg %p41
      %p48 = scmp.eq.s32.totalorder %s11, 4
      %p49 = por %p47, %p48
      %p50 = scmp.ne.s32.totalorder %s42, %s45
      %p51 = scmp.eq.s32.totalorder %s11, 0
      %p52 = por %p50, %p51
      %p53 = scmp.ne.s32.totalorder %s42, %s45
      %p54 = scmp.eq.s32.totalorder %s16, 4
      %p55 = por %p53, %p54
      %p56 = scmp.ne.s32.totalorder %s45, %s46
      %p57 = scmp.eq.s32.totalorder %s16, 0
      %p58 = por %p56, %p57
      %p59 = scmp.ne.s32.totalorder %s45, %s46
      %p60 = scmp.eq.s32.totalorder %s17, 4
      %p61 = por %p59, %p60
      %p63 = scmp.ne.s32.totalorder %s46, %s62
      %p64 = scmp.eq.s32.totalorder %s17, 0
      %p65 = por %p63, %p64
      %s66 = ssub.s32 %s20, %s29
      %s67 = ssub.s32 %s18, %s37
      %s68 = sor.u32 %s66, %s67
      %p69 = scmp.eq.s32.totalorder %s68, 0
      %s71 = sadd.s32 %s70, 1
      %s72 = scalar_select %p69, %s70, %s71
      %p75 = pneg %p69
      %p76 = scmp.eq.s32.totalorder %s11, 4
      %p77 = por %p75, %p76
      %p78 = scmp.ne.s32.totalorder %s70, %s73
      %p79 = scmp.eq.s32.totalorder %s11, 0
      %p80 = por %p78, %p79
      %p81 = scmp.ne.s32.totalorder %s70, %s73
      %p82 = scmp.eq.s32.totalorder %s16, 4
      %p83 = por %p81, %p82
      %p84 = scmp.ne.s32.totalorder %s73, %s74
      %p85 = scmp.eq.s32.totalorder %s16, 0
      %p86 = por %p84, %p85
      %p87 = scmp.ne.s32.totalorder %s73, %s74
      %p88 = scmp.eq.s32.totalorder %s17, 4
      %p89 = por %p87, %p88
      %p91 = scmp.ne.s32.totalorder %s74, %s90
      %p92 = scmp.eq.s32.totalorder %s17, 0
      %p93 = por %p91, %p92
      %s94 = ssub.s32 %s19, %s33
      %s95 = ssub.s32 %s18, %s37
      %s96 = sor.u32 %s94, %s95
      %p97 = scmp.eq.s32.totalorder %s96, 0
      %s99 = sadd.s32 %s98, 1
      %s100 = scalar_select %p97, %s98, %s99
      %p103 = pneg %p97
      %p104 = scmp.eq.s32.totalorder %s11, 4
      %p105 = por %p103, %p104
      %p106 = scmp.ne.s32.totalorder %s98, %s101
      %p107 = scmp.eq.s32.totalorder %s11, 0
      %p108 = por %p106, %p107
      %p109 = scmp.ne.s32.totalorder %s98, %s101
      %p110 = scmp.eq.s32.totalorder %s16, 4
      %p111 = por %p109, %p110
      %p112 = scmp.ne.s32.totalorder %s101, %s102
      %p113 = scmp.eq.s32.totalorder %s16, 0
      %p114 = por %p112, %p113
      %p115 = scmp.ne.s32.totalorder %s101, %s102
      %p116 = scmp.eq.s32.totalorder %s17, 4
      %p117 = por %p115, %p116
      %p119 = scmp.ne.s32.totalorder %s102, %s118
      %p120 = scmp.eq.s32.totalorder %s17, 0
      %p121 = por %p119, %p120
      %s122 = ssub.s32 %s18, %s37
      %p123 = scmp.eq.s32.totalorder %s122, 0
      %s125 = sadd.s32 %s124, 1
      %s126 = scalar_select %p123, %s124, %s125
      %p129 = pneg %p123
      %p130 = scmp.eq.s32.totalorder %s11, 4
      %p131 = por %p129, %p130
      %p132 = scmp.ne.s32.totalorder %s124, %s127
      %p133 = scmp.eq.s32.totalorder %s11, 0
      %p134 = por %p132, %p133
      %p135 = scmp.ne.s32.totalorder %s124, %s127
      %p136 = scmp.eq.s32.totalorder %s16, 4
      %p137 = por %p135, %p136
      %p138 = scmp.ne.s32.totalorder %s127, %s128
      %p139 = scmp.eq.s32.totalorder %s16, 0
      %p140 = por %p138, %p139
      %p141 = scmp.ne.s32.totalorder %s127, %s128
      %p142 = scmp.eq.s32.totalorder %s17, 4
      %p143 = por %p141, %p142
      %p145 = scmp.ne.s32.totalorder %s128, %s144
      %p146 = scmp.eq.s32.totalorder %s17, 0
      %p147 = por %p145, %p146
      %s148 = ssub.s32 %s18, %s37
      %p149 = scmp.eq.s32.totalorder %s148, 0
      %s151 = sadd.s32 %s150, 1
      %s152 = scalar_select %p149, %s150, %s151
      %p155 = pneg %p149
      %p156 = scmp.eq.s32.totalorder %s11, 4
      %p157 = por %p155, %p156
      %p158 = scmp.ne.s32.totalorder %s150, %s153
      %p159 = scmp.eq.s32.totalorder %s11, 0
      %p160 = por %p158, %p159
      %p161 = scmp.ne.s32.totalorder %s150, %s153
      %p162 = scmp.eq.s32.totalorder %s16, 4
      %p163 = por %p161, %p162
      %p164 = scmp.ne.s32.totalorder %s153, %s154
      %p165 = scmp.eq.s32.totalorder %s16, 0
      %p166 = por %p164, %p165
      %p167 = scmp.ne.s32.totalorder %s153, %s154
      %p168 = scmp.eq.s32.totalorder %s17, 4
      %p169 = por %p167, %p168
      %p171 = scmp.ne.s32.totalorder %s154, %s170
      %p172 = scmp.eq.s32.totalorder %s17, 0
      %p173 = por %p171, %p172
      %p174 = scmp.le.s32.totalorder 1, %s11
      %p175 = scmp.lt.s32.totalorder %s11, 6
      %p176 = pnand %p174, %p175
      %p177 = pneg %p176
      // Predicated region
      $region9: #{ssl_forward.74} parent=5 // pred_check
        _
      $region10: #{ssl_forward.74} parent=5 // pred_check_branch
        %179 = sbr.rel (%p176) target = $region12
      $region11: #{ssl_forward.74} parent=5 // pred_region
        %s180 = ssub.s32 %s11, 1
      $region12: #{ssl_forward.74} parent=5 // pred_fallthru
        _
      %p181 = scmp.lt.s32.totalorder %s11, 5
      // Predicated region
      $region13: #{ssl_forward.74} parent=5 // pred_check
        %p182 = pneg %p181
      $region14: #{ssl_forward.74} parent=5 // pred_check_branch
        %184 = sbr.rel (%p182) target = $region16
      $region15: #{ssl_forward.74} parent=5 // pred_region
        // Predicated region
        $region17: #{ssl_forward.74} parent=15 // pred_check
          %p185 = pneg %p52
        $region18: #{ssl_forward.74} parent=15 // pred_check_branch
          %187 = sbr.rel (%p185) target = $region20
        $region19: #{ssl_forward.74} parent=15 // pred_region
          %s188 = sand.u32 %s42, 1
          %s189 = sand.u32 %s42, 1
          %s190 = smul.addr %s189, 16
          %s191 = scalar_lea.vmem [#allocation3], %s190
          %s192 = smul.u32 4, %s19
          %s193 = smul.addr %s192, 5
          %s194 = sadd.s32 %s20, %s193
          %s195 = smul.addr %s194, 4
          %s196 = scalar_lea.vmem %s0, %s195
          // Predicated region
          $region21: #{ssl_forward.74} parent=19 // pred_check
            _
          $region22: #{ssl_forward.74} parent=19 // pred_check_branch
            %198 = sbr.rel (0) target = $region24
          $region23: #{ssl_forward.74} parent=19 // pred_region
            // Predicated region
            $region25: #{ssl_forward.74} parent=23 // pred_check
              _
            $region26: #{ssl_forward.74} parent=23 // pred_check_branch
              %200 = sbr.rel target = $region28
            $region27: #{ssl_forward.74} parent=23 // pred_region
              // Predicated region
              $region40: #{ssl_forward.74} parent=27 // pred_check
                _
              $region41: #{ssl_forward.74} parent=27 // pred_check_branch
                %222 = sbr.rel (0) target = $region43
              $region42: #{ssl_forward.74} parent=27 // pred_region
                loop: start=0, step=1, limit=1
                $region44: #{ssl_forward.74} parent=42 // loop_pre_header
                  _
                $region45: #{ssl_forward.74} parent=42 // loop_header
                  %s224 = sphi 0, %s228
                  %p225 = scmp.ge.s32.totalorder %s224, 1
                  %s229 = sphi %s196, %s196
                  %s230 = sphi %s191, %s191
                $region46: #{ssl_forward.74} parent=42 // loop_header_branch
                  %227 = sbr.rel (%p225) target = $region50
                $region47: #{ssl_forward.74} parent=42 // loop_body
                  _
                $region48: #{ssl_forward.74} parent=42 // loop_footer
                  %s228 = sadd.s32 1, %s224
                $region49: #{ssl_forward.74} parent=42 // loop_footer_branch
                  %223 = sbr.rel target = $region45
                $region50: #{ssl_forward.74} parent=42 // loop_exit
                  _
                %s232 = ssub.s32 16, 1
                loop: start=0, step=1, limit=1
                $region51: #{ssl_forward.74} parent=42 // loop_pre_header
                  _
                $region52: #{ssl_forward.74} parent=42 // loop_header
                  %s234 = sphi 0, %s238
                  %p235 = scmp.ge.s32.totalorder %s234, 1
                  %s239 = sphi %s196, %s196
                  %s240 = sphi %s191, %s191
                $region53: #{ssl_forward.74} parent=42 // loop_header_branch
                  %237 = sbr.rel (%p235) target = $region57
                $region54: #{ssl_forward.74} parent=42 // loop_body
                  %v241 = vld [vmem:[%s239] sm:%s232]
                  %242 = vst [vmem:[%s240] sm:%s232] %v241
                  %v243 = vld [vmem:[%s239 + $0x14] sm:%s232]
                  %244 = vst [vmem:[%s240 + $0x4] sm:%s232] %v243
                  %v245 = vld [vmem:[%s239 + $0x28] sm:%s232]
                  %246 = vst [vmem:[%s240 + $0x8] sm:%s232] %v245
                  %v247 = vld [vmem:[%s239 + $0x3c] sm:%s232]
                  %248 = vst [vmem:[%s240 + $0xc] sm:%s232] %v247
                $region55: #{ssl_forward.74} parent=42 // loop_footer
                  %s238 = sadd.s32 1, %s234
                $region56: #{ssl_forward.74} parent=42 // loop_footer_branch
                  %233 = sbr.rel target = $region52
                $region57: #{ssl_forward.74} parent=42 // loop_exit
                  _
              $region43: #{ssl_forward.74} parent=27 // pred_fallthru
                _
            $region28: #{ssl_forward.74} parent=23 // pred_fallthru
              _
            // Predicated region
            $region29: #{ssl_forward.74} parent=23 // pred_check
              _
            $region30: #{ssl_forward.74} parent=23 // pred_check_branch
              %202 = sbr.rel (0) target = $region32
            $region31: #{ssl_forward.74} parent=23 // pred_region
              %s204 = ssub.s32 16, 1
              loop: start=0, step=1, limit=1
              $region33: #{ssl_forward.74} parent=31 // loop_pre_header
                _
              $region34: #{ssl_forward.74} parent=31 // loop_header
                %s206 = sphi 0, %s210
                %p207 = scmp.ge.s32.totalorder %s206, 1
                %s211 = sphi %s196, %s196
                %s212 = sphi %s191, %s191
              $region35: #{ssl_forward.74} parent=31 // loop_header_branch
                %209 = sbr.rel (%p207) target = $region39
              $region36: #{ssl_forward.74} parent=31 // loop_body
                %v213 = vld [vmem:[%s211] sm:%s204]
                %214 = vst [vmem:[%s212] sm:%s204] %v213
                %v215 = vld [vmem:[%s211 + $0x14] sm:%s204]
                %216 = vst [vmem:[%s212 + $0x4] sm:%s204] %v215
                %v217 = vld [vmem:[%s211 + $0x28] sm:%s204]
                %218 = vst [vmem:[%s212 + $0x8] sm:%s204] %v217
                %v219 = vld [vmem:[%s211 + $0x3c] sm:%s204]
                %220 = vst [vmem:[%s212 + $0xc] sm:%s204] %v219
              $region37: #{ssl_forward.74} parent=31 // loop_footer
                %s210 = sadd.s32 1, %s206
              $region38: #{ssl_forward.74} parent=31 // loop_footer_branch
                %205 = sbr.rel target = $region34
              $region39: #{ssl_forward.74} parent=31 // loop_exit
                _
            $region32: #{ssl_forward.74} parent=23 // pred_fallthru
              _
          $region24: #{ssl_forward.74} parent=19 // pred_fallthru
            _
          %249 = vnop
        $region20: #{ssl_forward.74} parent=15 // pred_fallthru
          _
        // Predicated region
        $region58: #{ssl_forward.74} parent=15 // pred_check
          %p250 = pneg %p80
        $region59: #{ssl_forward.74} parent=15 // pred_check_branch
          %252 = sbr.rel (%p250) target = $region61
        $region60: #{ssl_forward.74} parent=15 // pred_region
          %s253 = smul.u32 16, %s20
          %p254 = scmp.lt.s32.totalorder %s253, 79
          %s255 = scalar_select %p254, %s253, 79
          %p256 = scmp.lt.s32.totalorder %s18, 0
          %s257 = scalar_select %p256, %s18, 0
          %s258 = sadd.s32 %s257, %s255
          %s259 = smul.addr %s258, 4
          %s260 = scalar_lea.vmem %s1, %s259
          %s261 = smul.u32 16, %s20
        $region61: #{ssl_forward.74} parent=15 // pred_fallthru
          _
      $region16: #{ssl_forward.74} parent=5 // pred_fallthru
        _
      %p262 = scmp.le.s32.totalorder 1, %s11
      %p263 = scmp.lt.s32.totalorder %s11, 6
      %p264 = pnand %p262, %p263
      %p265 = pneg %p264
      // Predicated region
      $region62: #{ssl_forward.74} parent=5 // pred_check
        _
      $region63: #{ssl_forward.74} parent=5 // pred_check_branch
        %267 = sbr.rel (%p264) target = $region65
      $region64: #{ssl_forward.74} parent=5 // pred_region
        %s268 = ssub.s32 %s11, 1
        %s269 = sand.u32 %s45, 1
        %s270 = sand.u32 %s45, 1
        %s271 = smul.addr %s270, 16
        %s272 = scalar_lea.vmem [#allocation3], %s271
        // Predicated region
        $region66: #{ssl_forward.74} parent=64 // pred_check
          %p273 = pneg %p58
        $region67: #{ssl_forward.74} parent=64 // pred_check_branch
          %275 = sbr.rel (%p273) target = $region69
        $region68: #{ssl_forward.74} parent=64 // pred_region
          _
        $region69: #{ssl_forward.74} parent=64 // pred_fallthru
          _
        %s276 = sand.u32 %s45, 1
        %s277 = sand.u32 %s45, 1
        %s278 = smul.addr %s277, 16
        %s279 = scalar_lea.vmem [#allocation3], %s278
        %p280 = pneg %p58
        %p281 = pneg %p55
        %s282 = smul.u32 16, %s23
        %p283 = scmp.lt.s32.totalorder %s282, 79
        %s284 = scalar_select %p283, %s282, 79
        %p285 = scmp.lt.s32.totalorder %s21, 0
        %s286 = scalar_select %p285, %s21, 0
        %s287 = sadd.s32 %s286, %s284
        %s288 = smul.addr %s287, 4
        %s289 = scalar_lea.vmem %s1, %s288
        %p290 = pneg %p86
        %p291 = pneg %p83
        %p292 = pneg %p114
        %p293 = pneg %p111
        %s294 = smul.u32 4, %s22
        %p295 = scmp.lt.s32.totalorder %s294, 3
        %s296 = scalar_select %p295, %s294, 3
        %p297 = scmp.lt.s32.totalorder %s21, 0
        %s298 = scalar_select %p297, %s21, 0
        %s299 = sadd.s32 %s298, %s296
        %s300 = smul.addr %s299, 8
        %s301 = scalar_lea.vmem %s2, %s300
        %p302 = pneg %p140
        %p303 = pneg %p137
        %p304 = scmp.lt.s32.totalorder %s21, 0
        %s305 = scalar_select %p304, %s21, 0
        %s306 = scalar_lea.vmem %s3, %s305
        %p307 = pneg %p166
        %p308 = pneg %p163
        %p309 = scmp.lt.s32.totalorder %s21, 0
        %s310 = scalar_select %p309, %s21, 0
        %s311 = scalar_lea.vmem %s4, %s310
        %s312 = smul.u32 4, %s22
        %s313 = smul.u32 16, %s23
        %p314 = scmp.lt.s32.totalorder %s313, 79
        %s315 = scalar_select %p314, %s313, 79
        %p316 = scmp.lt.s32.totalorder %s21, 0
        %s317 = scalar_select %p316, %s21, 0
        %s318 = sadd.s32 %s317, %s315
        %s319 = smul.addr %s318, 4
        %s320 = scalar_lea.vmem %s1, %s319
        %s321 = smul.u32 16, %s23
        %s322 = smul.u32 4, %s22
        %p323 = scmp.lt.s32.totalorder %s322, 3
        %s324 = scalar_select %p323, %s322, 3
        %p325 = scmp.lt.s32.totalorder %s21, 0
        %s326 = scalar_select %p325, %s21, 0
        %s327 = sadd.s32 %s326, %s324
        %s328 = smul.addr %s327, 8
        %s329 = scalar_lea.vmem %s2, %s328
        %s330 = smul.u32 4, %s22
        %p331 = scmp.lt.s32.totalorder %s21, 0
        %s332 = scalar_select %p331, %s21, 0
        %s333 = scalar_lea.vmem %s3, %s332
        %p334 = scmp.lt.s32.totalorder %s21, 0
        %s335 = scalar_select %p334, %s21, 0
        %s336 = scalar_lea.vmem %s4, %s335
        %p337 = scmp.eq.s32.totalorder %s23, 0
        // Predicated region
        $region70: #{ssl_forward.74} parent=64 // pred_check
          %p338 = pneg %p337
        $region71: #{ssl_forward.74} parent=64 // pred_check_branch
          %340 = sbr.rel (%p338) target = $region73
        $region72: #{ssl_forward.74} parent=64 // pred_region
          %341 = vst [vmem:[#allocation2] sm:$0xff] 0.0
          %342 = vst [vmem:[#allocation2 + $0x8] sm:$0xff] 0.0
          %343 = vst [vmem:[#allocation2 + $0x10] sm:$0xff] 0.0
          %344 = vst [vmem:[#allocation2 + $0x18] sm:$0xff] 0.0
        $region73: #{ssl_forward.74} parent=64 // pred_fallthru
          _
        %v345 = vld [vmem:[#allocation2] sm:$0xff]
        %v346 = vld [vmem:[#allocation2 + $0x8] sm:$0xff]
        %v347 = vld [vmem:[#allocation2 + $0x10] sm:$0xff]
        %v348 = vld [vmem:[#allocation2 + $0x18] sm:$0xff]
        %v349 = vld [vmem:[%s272] sm:$0xf]
        %v350 = vld [vmem:[%s272 + $0x4] sm:$0xf]
        %v351 = vld [vmem:[%s272 + $0x8] sm:$0xf]
        %v352 = vld [vmem:[%s272 + $0xc] sm:$0xf]
        %v353 = vld [vmem:[%s320] sm:$0xf]
        %v354 = vld [vmem:[%s320 + $0x4] sm:$0xf]
        %v355 = vld [vmem:[%s320 + $0x8] sm:$0xf]
        %v356 = vld [vmem:[%s320 + $0xc] sm:$0xf]
        %v357 = vld [vmem:[%s320 + $0x10] sm:$0xf]
        %v358 = vld [vmem:[%s320 + $0x14] sm:$0xf]
        %v359 = vld [vmem:[%s320 + $0x18] sm:$0xf]
        %v360 = vld [vmem:[%s320 + $0x1c] sm:$0xf]
        %v361 = vld [vmem:[%s320 + $0x20] sm:$0xf]
        %v362 = vld [vmem:[%s320 + $0x24] sm:$0xf]
        %v363 = vld [vmem:[%s320 + $0x28] sm:$0xf]
        %v364 = vld [vmem:[%s320 + $0x2c] sm:$0xf]
        %v365 = vld [vmem:[%s320 + $0x30] sm:$0xf]
        %v366 = vld [vmem:[%s320 + $0x34] sm:$0xf]
        %v367 = vld [vmem:[%s320 + $0x38] sm:$0xf]
        %v368 = vld [vmem:[%s320 + $0x3c] sm:$0xf]
        %v373 = vunpack.c.l.b16 %v349
        %v374 = vunpack.c.l.b16 %v350
        %v375 = vunpack.c.l.b16 %v351
        %v376 = vunpack.c.l.b16 %v352
        %v377 = vpack.c.b16 %v374, %v373
        %v378 = vpack.c.b16 %v376, %v375
        %v397 = vunpack.c.l.b16 %v353
        %v398 = vunpack.c.l.b16 %v354
        %v399 = vunpack.c.l.b16 %v355
        %v400 = vunpack.c.l.b16 %v356
        %v401 = vunpack.c.l.b16 %v357
        %v402 = vunpack.c.l.b16 %v358
        %v403 = vunpack.c.l.b16 %v359
        %v404 = vunpack.c.l.b16 %v360
        %v405 = vunpack.c.l.b16 %v361
        %v406 = vunpack.c.l.b16 %v362
        %v407 = vunpack.c.l.b16 %v363
        %v408 = vunpack.c.l.b16 %v364
        %v409 = vunpack.c.l.b16 %v365
        %v410 = vunpack.c.l.b16 %v366
        %v411 = vunpack.c.l.b16 %v367
        %v412 = vunpack.c.l.b16 %v368
        %v413 = vpack.c.b16 %v398, %v397
        %v414 = vpack.c.b16 %v400, %v399
        %v415 = vpack.c.b16 %v402, %v401
        %v416 = vpack.c.b16 %v404, %v403
        %v417 = vpack.c.b16 %v406, %v405
        %v418 = vpack.c.b16 %v408, %v407
        %v419 = vpack.c.b16 %v410, %v409
        %v420 = vpack.c.b16 %v412, %v411
        %429 = vmatpush.bf16.msra.mxu0 %v420
        %430 = vmatpush.bf16.msra.mxu0 %v419
        %431 = vmatpush.bf16.msra.mxu0 %v418
        %432 = vmatpush.bf16.msra.mxu0 %v417
        %433 = vmatpush.bf16.msra.mxu0 %v416
        %434 = vmatpush.bf16.msra.mxu0 %v415
        %435 = vmatpush.bf16.msra.mxu0 %v414
        %436 = vmatpush.bf16.msra.mxu0 %v413
        %437 = vmatmul.bf16.gmra.mxu0 %v377
        %v438 = vpop.f32.mrf.mxu0
        %v439 = vadd.f32 0.0, %v438
        %v440 = vpop.f32.mrf.mxu0
        %v441 = vadd.f32 0.0, %v440
        %442 = vmatmul.bf16.gmra.mxu0 %v378
        %v443 = vpop.f32.mrf.mxu0
        %v444 = vadd.f32 0.0, %v443
        %v445 = vpop.f32.mrf.mxu0
        %v446 = vadd.f32 0.0, %v445
        %447 = vdwg.mxu0
        %v448 = vadd.f32 %v345, %v439
        %v449 = vadd.f32 %v346, %v441
        %v450 = vadd.f32 %v347, %v444
        %v451 = vadd.f32 %v348, %v446
        %452 = vst [vmem:[#allocation2] sm:$0xff] %v448
        %453 = vst [vmem:[#allocation2 + $0x8] sm:$0xff] %v449
        %454 = vst [vmem:[#allocation2 + $0x10] sm:$0xff] %v450
        %455 = vst [vmem:[#allocation2 + $0x18] sm:$0xff] %v451
        %p456 = scmp.eq.s32.totalorder %s23, 4
        // Predicated region
        $region74: #{ssl_forward.74} parent=64 // pred_check
          %p457 = pneg %p456
        $region75: #{ssl_forward.74} parent=64 // pred_check_branch
          %459 = sbr.rel (%p457) target = $region77
        $region76: #{ssl_forward.74} parent=64 // pred_region
          %v460 = vld [vmem:[#allocation2] sm:$0xff]
          %v461 = vld [vmem:[#allocation2 + $0x8] sm:$0xff]
          %v462 = vld [vmem:[#allocation2 + $0x10] sm:$0xff]
          %v463 = vld [vmem:[#allocation2 + $0x18] sm:$0xff]
          %464 = vst [vmem:[%s329] sm:$0xff] %v460
          %465 = vst [vmem:[%s329 + $0x8] sm:$0xff] %v461
          %466 = vst [vmem:[%s329 + $0x10] sm:$0xff] %v462
          %467 = vst [vmem:[%s329 + $0x18] sm:$0xff] %v463
        $region77: #{ssl_forward.74} parent=64 // pred_fallthru
          _
        %p468 = scmp.eq.s32.totalorder %s22, 0
        %p469 = pnand %p456, %p468
        %p470 = pneg %p469
        // Predicated region
        $region78: #{ssl_forward.74} parent=64 // pred_check
          _
        $region79: #{ssl_forward.74} parent=64 // pred_check_branch
          %472 = sbr.rel (%p469) target = $region81
        $region80: #{ssl_forward.74} parent=64 // pred_region
          %v473 = vld [vmem:[#allocation2] sm:$0xff]
          %v474 = vld [vmem:[#allocation2 + $0x8] sm:$0xff]
          %v475 = vld [vmem:[#allocation2 + $0x10] sm:$0xff]
          %v476 = vld [vmem:[#allocation2 + $0x18] sm:$0xff]
          %v477 = vadd.f32 %v473, %v474
          %v478 = vadd.f32 %v477, %v475
          %v479 = vadd.f32 %v478, %v476
          %v480 = vrot.slane %v479, 4
          %v481 = vadd.f32 %v479, %v480
          %v482 = vrot.slane %v481, 2
          %v483 = vadd.f32 %v481, %v482
          %v484 = vrot.slane %v483, 1
          %v485 = vadd.f32 %v483, %v484
          %486 = vst [vmem:[%s333] sm:$0x1] %v485
          %v487 = vmul.f32 %v473, %v473
          %v488 = vmul.f32 %v474, %v474
          %v489 = vmul.f32 %v475, %v475
          %v490 = vmul.f32 %v476, %v476
          %v491 = vadd.f32 %v487, %v488
          %v492 = vadd.f32 %v491, %v489
          %v493 = vadd.f32 %v492, %v490
          %v494 = vrot.slane %v493, 4
          %v495 = vadd.f32 %v493, %v494
          %v496 = vrot.slane %v495, 2
          %v497 = vadd.f32 %v495, %v496
          %v498 = vrot.slane %v497, 1
          %v499 = vadd.f32 %v497, %v498
          %500 = vst [vmem:[%s336] sm:$0x1] %v499
        $region81: #{ssl_forward.74} parent=64 // pred_fallthru
          _
        %p501 = scmp.gt.s32.totalorder %s22, 0
        %p502 = pnand %p456, %p501
        %p503 = pneg %p502
        // Predicated region
        $region82: #{ssl_forward.74} parent=64 // pred_check
          _
        $region83: #{ssl_forward.74} parent=64 // pred_check_branch
          %505 = sbr.rel (%p502) target = $region85
        $region84: #{ssl_forward.74} parent=64 // pred_region
          %v506 = vld [vmem:[#allocation2] sm:$0xff]
          %v507 = vld [vmem:[#allocation2 + $0x8] sm:$0xff]
          %v508 = vld [vmem:[#allocation2 + $0x10] sm:$0xff]
          %v509 = vld [vmem:[#allocation2 + $0x18] sm:$0xff]
          %v510 = vld [vmem:[%s333] sm:$0x1]
          %v511 = vadd.f32 %v506, %v507
          %v512 = vadd.f32 %v511, %v508
          %v513 = vadd.f32 %v512, %v509
          %v514 = vrot.slane %v513, 4
          %v515 = vadd.f32 %v513, %v514
          %v516 = vrot.slane %v515, 2
          %v517 = vadd.f32 %v515, %v516
          %v518 = vrot.slane %v517, 1
          %v519 = vadd.f32 %v517, %v518
          %v520 = vadd.f32 %v510, %v519
          %521 = vst [vmem:[%s333] sm:$0x1] %v520
          %v522 = vld [vmem:[%s336] sm:$0x1]
          %v523 = vmul.f32 %v506, %v506
          %v524 = vmul.f32 %v507, %v507
          %v525 = vmul.f32 %v508, %v508
          %v526 = vmul.f32 %v509, %v509
          %v527 = vadd.f32 %v523, %v524
          %v528 = vadd.f32 %v527, %v525
          %v529 = vadd.f32 %v528, %v526
          %v530 = vrot.slane %v529, 4
          %v531 = vadd.f32 %v529, %v530
          %v532 = vrot.slane %v531, 2
          %v533 = vadd.f32 %v531, %v532
          %v534 = vrot.slane %v533, 1
          %v535 = vadd.f32 %v533, %v534
          %v536 = vadd.f32 %v522, %v535
          %537 = vst [vmem:[%s336] sm:$0x1] %v536
        $region85: #{ssl_forward.74} parent=64 // pred_fallthru
          _
        %s538 = smul.u32 4, %s22
        %p539 = scmp.lt.s32.totalorder %s538, 3
        %s540 = scalar_select %p539, %s538, 3
        %p541 = scmp.lt.s32.totalorder %s21, 0
        %s542 = scalar_select %p541, %s21, 0
        %s543 = sadd.s32 %s542, %s540
        %s544 = smul.addr %s543, 8
        %s545 = scalar_lea.vmem %s2, %s544
        %p546 = scmp.lt.s32.totalorder %s21, 0
        %s547 = scalar_select %p546, %s21, 0
        %s548 = scalar_lea.vmem %s3, %s547
        %p549 = scmp.lt.s32.totalorder %s21, 0
        %s550 = scalar_select %p549, %s21, 0
        %s551 = scalar_lea.vmem %s4, %s550
        // Predicated region
        $region86: #{ssl_forward.74} parent=64 // pred_check
          %p552 = pneg %p111
        $region87: #{ssl_forward.74} parent=64 // pred_check_branch
          %554 = sbr.rel (%p552) target = $region89
        $region88: #{ssl_forward.74} parent=64 // pred_region
          %s555 = smul.u32 4, %s22
        $region89: #{ssl_forward.74} parent=64 // pred_fallthru
          _
        // Predicated region
        $region90: #{ssl_forward.74} parent=64 // pred_check
          %p556 = pneg %p137
        $region91: #{ssl_forward.74} parent=64 // pred_check_branch
          %558 = sbr.rel (%p556) target = $region93
        $region92: #{ssl_forward.74} parent=64 // pred_region
          _
        $region93: #{ssl_forward.74} parent=64 // pred_fallthru
          _
        // Predicated region
        $region94: #{ssl_forward.74} parent=64 // pred_check
          %p559 = pneg %p163
        $region95: #{ssl_forward.74} parent=64 // pred_check_branch
          %561 = sbr.rel (%p559) target = $region97
        $region96: #{ssl_forward.74} parent=64 // pred_region
          _
        $region97: #{ssl_forward.74} parent=64 // pred_fallthru
          _
        // Predicated region
        $region98: #{ssl_forward.74} parent=64 // pred_check
          %p562 = pneg %p111
        $region99: #{ssl_forward.74} parent=64 // pred_check_branch
          %564 = sbr.rel (%p562) target = $region101
        $region100: #{ssl_forward.74} parent=64 // pred_region
          %s565 = smul.u32 4, %s22
          %p566 = scmp.lt.s32.totalorder %s565, 3
          %s567 = scalar_select %p566, %s565, 3
          %p568 = scmp.lt.s32.totalorder %s21, 0
          %s569 = scalar_select %p568, %s21, 0
          %s570 = sadd.s32 %s569, %s567
          %s571 = smul.addr %s570, 8
          %s572 = scalar_lea.vmem %s2, %s571
        $region101: #{ssl_forward.74} parent=64 // pred_fallthru
          _
        // Predicated region
        $region102: #{ssl_forward.74} parent=64 // pred_check
          %p573 = pneg %p137
        $region103: #{ssl_forward.74} parent=64 // pred_check_branch
          %575 = sbr.rel (%p573) target = $region105
        $region104: #{ssl_forward.74} parent=64 // pred_region
          %p576 = scmp.lt.s32.totalorder %s21, 0
          %s577 = scalar_select %p576, %s21, 0
          %s578 = scalar_lea.vmem %s3, %s577
        $region105: #{ssl_forward.74} parent=64 // pred_fallthru
          _
        // Predicated region
        $region106: #{ssl_forward.74} parent=64 // pred_check
          %p579 = pneg %p163
        $region107: #{ssl_forward.74} parent=64 // pred_check_branch
          %581 = sbr.rel (%p579) target = $region109
        $region108: #{ssl_forward.74} parent=64 // pred_region
          %p582 = scmp.lt.s32.totalorder %s21, 0
          %s583 = scalar_select %p582, %s21, 0
          %s584 = scalar_lea.vmem %s4, %s583
        $region109: #{ssl_forward.74} parent=64 // pred_fallthru
          _
      $region65: #{ssl_forward.74} parent=5 // pred_fallthru
        _
      %p585 = scmp.le.s32.totalorder 2, %s11
      // Predicated region
      $region110: #{ssl_forward.74} parent=5 // pred_check
        %p586 = pneg %p585
      $region111: #{ssl_forward.74} parent=5 // pred_check_branch
        %588 = sbr.rel (%p586) target = $region113
      $region112: #{ssl_forward.74} parent=5 // pred_region
        %s589 = ssub.s32 %s11, 2
      $region113: #{ssl_forward.74} parent=5 // pred_fallthru
        _
    $region6: #{ssl_forward.74} parent=1 // loop_footer
      %s15 = sadd.s32 1, %s11
    $region7: #{ssl_forward.74} parent=1 // loop_footer_branch
      %10 = sbr.rel target = $region3
    $region8: #{ssl_forward.74} parent=1 // loop_exit
      _

// kernel: ssl_forward.56
$region0: #{ssl_forward.56}
  #allocation0 [shape = 'u32[]', space=smem, size = 0x4, offset = 0x4, fixed_abs, tag = 'smem constant byte address 0x4 - core index']
  #allocation1 [shape = 'u32[72,128]{1,0:T(1,128)}', space=vmem, size = 0x9000, scoped, tag = 'internal scratch']
  %s0 = inlined_call_operand.vmem [shape: f32[32,128], index: 0, kind: input, shape index: {}]
  %s1 = inlined_call_operand.vmem [shape: f32[1,128], index: 1, kind: input, shape index: {}]
  %s2 = inlined_call_operand.vmem [shape: f32[1,128], index: 2, kind: input, shape index: {}]
  %s3 = inlined_call_operand.vmem [shape: f32[32,128], index: 3, kind: input, shape index: {}]
  %s4 = inlined_call_operand.vmem [shape: f32[32,128], index: 4, kind: output, shape index: {}]
  %s5 = sld [smem:[#allocation0]]
  $region26: #{ssl_forward.56} parent=0
    _
  %s7 = ssub.s32 1, %s5
  %s8 = scalar_select 0, %s7, %s5
  // Predicated region
  $region2: #{ssl_forward.56} parent=0 // pred_check
    _
  $region3: #{ssl_forward.56} parent=0 // pred_check_branch
    %10 = sbr.rel (0) target = $region5
  $region4: #{ssl_forward.56} parent=0 // pred_region
    _
  $region5: #{ssl_forward.56} parent=0 // pred_fallthru
    _
  // Predicated region
  $region6: #{ssl_forward.56} parent=0 // pred_check
    _
  $region7: #{ssl_forward.56} parent=0 // pred_check_branch
    %12 = sbr.rel (0) target = $region9
  $region8: #{ssl_forward.56} parent=0 // pred_region
    _
  $region9: #{ssl_forward.56} parent=0 // pred_fallthru
    _
  // Predicated region
  $region10: #{ssl_forward.56} parent=0 // pred_check
    _
  $region11: #{ssl_forward.56} parent=0 // pred_check_branch
    %14 = sbr.rel (0) target = $region13
  $region12: #{ssl_forward.56} parent=0 // pred_region
    _
  $region13: #{ssl_forward.56} parent=0 // pred_fallthru
    _
  // Predicated region
  $region14: #{ssl_forward.56} parent=0 // pred_check
    _
  $region15: #{ssl_forward.56} parent=0 // pred_check_branch
    %16 = sbr.rel (0) target = $region17
  $region16: #{ssl_forward.56} parent=0 // pred_region
    _
  $region17: #{ssl_forward.56} parent=0 // pred_fallthru
    _
  %v17 = vld [vmem:[%s1] sm:$0x1]
  %v18 = vmul.f32 %v17, 0.03125
  %v19 = vld [vmem:[%s2] sm:$0x1]
  %v20 = vmul.f32 %v19, 0.03125
  %v21 = vmul.f32 %v18, %v18
  %v22 = vsub.f32 %v20, %v21
  %v23 = vld [vmem:[%s0] sm:$0xff]
  %v24 = vld [vmem:[%s0 + $0x8] sm:$0xff]
  %v25 = vld [vmem:[%s0 + $0x10] sm:$0xff]
  %v26 = vld [vmem:[%s0 + $0x18] sm:$0xff]
  %v28 = vperm.slane %v18, 0
  %v30 = vsub.f32 %v23, %v28
  %v31 = vsub.f32 %v24, %v28
  %v32 = vsub.f32 %v25, %v28
  %v33 = vsub.f32 %v26, %v28
  %v34 = vadd.f32 %v22, 1e-05
  %v35 = vrsqrt.pop %v34
  %v36 = vmul.f32 %v35, %v34
  %v37 = vmul.f32 %v36, %v35
  %v38 = vmul.f32 0.5, %v37
  %v39 = vsub.f32 1.5, %v38
  %v40 = vmul.f32 %v35, %v39
  %vm41 = vweird.f32 %v34
  %vm42 = vweird.f32 %v35
  %vm43 = vmor %vm41, %vm42
  %v44 = vsel %vm43, %v35, %v40
  %v46 = vperm.slane %v44, 0
  %v48 = vmul.f32 %v30, %v46
  %v49 = vmul.f32 %v31, %v46
  %v50 = vmul.f32 %v32, %v46
  %v51 = vmul.f32 %v33, %v46
  %v52 = vld [vmem:[%s3] sm:$0xff]
  %v53 = vld [vmem:[%s3 + $0x8] sm:$0xff]
  %v54 = vld [vmem:[%s3 + $0x10] sm:$0xff]
  %v55 = vld [vmem:[%s3 + $0x18] sm:$0xff]
  %v56 = vadd.f32 %v48, %v52
  %v57 = vadd.f32 %v49, %v53
  %v58 = vadd.f32 %v50, %v54
  %v59 = vadd.f32 %v51, %v55
  %v60 = vmax.f32 %v56, 0.0
  %v61 = vmax.f32 %v57, 0.0
  %v62 = vmax.f32 %v58, 0.0
  %v63 = vmax.f32 %v59, 0.0
  %64 = vst [vmem:[%s4] sm:$0xff] %v60
  %65 = vst [vmem:[%s4 + $0x8] sm:$0xff] %v61
  %66 = vst [vmem:[%s4 + $0x10] sm:$0xff] %v62
  %67 = vst [vmem:[%s4 + $0x18] sm:$0xff] %v63
  // Predicated region
  $region18: #{ssl_forward.56} parent=0 // pred_check
    _
  $region19: #{ssl_forward.56} parent=0 // pred_check_branch
    %69 = sbr.rel (0) target = $region21
  $region20: #{ssl_forward.56} parent=0 // pred_region
    _
  $region21: #{ssl_forward.56} parent=0 // pred_fallthru
    _
  // Predicated region
  $region22: #{ssl_forward.56} parent=0 // pred_check
    _
  $region23: #{ssl_forward.56} parent=0 // pred_check_branch
    %71 = sbr.rel (0) target = $region25
  $region24: #{ssl_forward.56} parent=0 // pred_region
    _
  $region25: #{ssl_forward.56} parent=0 // pred_fallthru
    _

// kernel: ssl_forward.88
$region0: #{ssl_forward.88}
  #allocation0 [shape = 'u32[]', space=smem, size = 0x4, offset = 0x4, fixed_abs, tag = 'smem constant byte address 0x4 - core index']
  #allocation1 [shape = 'u32[72,128]{1,0:T(1,128)}', space=vmem, size = 0x9000, scoped, tag = 'internal scratch']
  %s0 = inlined_call_operand.vmem [shape: f32[16,128], index: 0, kind: input, shape index: {}]
  %s1 = inlined_call_operand.vmem [shape: f32[1,128], index: 1, kind: input, shape index: {}]
  %s2 = inlined_call_operand.vmem [shape: f32[1,128], index: 2, kind: input, shape index: {}]
  %s3 = inlined_call_operand.vmem [shape: f32[16,128], index: 3, kind: output, shape index: {}]
  %s4 = sld [smem:[#allocation0]]
  $region22: #{ssl_forward.88} parent=0
    _
  %s6 = ssub.s32 1, %s4
  %s7 = scalar_select 0, %s6, %s4
  // Predicated region
  $region2: #{ssl_forward.88} parent=0 // pred_check
    _
  $region3: #{ssl_forward.88} parent=0 // pred_check_branch
    %9 = sbr.rel (0) target = $region5
  $region4: #{ssl_forward.88} parent=0 // pred_region
    _
  $region5: #{ssl_forward.88} parent=0 // pred_fallthru
    _
  // Predicated region
  $region6: #{ssl_forward.88} parent=0 // pred_check
    _
  $region7: #{ssl_forward.88} parent=0 // pred_check_branch
    %11 = sbr.rel (0) target = $region9
  $region8: #{ssl_forward.88} parent=0 // pred_region
    _
  $region9: #{ssl_forward.88} parent=0 // pred_fallthru
    _
  // Predicated region
  $region10: #{ssl_forward.88} parent=0 // pred_check
    _
  $region11: #{ssl_forward.88} parent=0 // pred_check_branch
    %13 = sbr.rel (0) target = $region13
  $region12: #{ssl_forward.88} parent=0 // pred_region
    _
  $region13: #{ssl_forward.88} parent=0 // pred_fallthru
    _
  %v14 = vld [vmem:[%s1] sm:$0x1]
  %v15 = vmul.f32 %v14, 0.125
  %v16 = vld [vmem:[%s2] sm:$0x1]
  %v17 = vmul.f32 %v16, 0.125
  %v18 = vmul.f32 %v15, %v15
  %v19 = vsub.f32 %v17, %v18
  %v20 = vld [vmem:[%s0] sm:$0xff]
  %v21 = vld [vmem:[%s0 + $0x8] sm:$0xff]
  %v23 = vperm.slane %v15, 0
  %v25 = vsub.f32 %v20, %v23
  %v26 = vsub.f32 %v21, %v23
  %v27 = vadd.f32 %v19, 1e-05
  %v28 = vrsqrt.pop %v27
  %v29 = vmul.f32 %v28, %v27
  %v30 = vmul.f32 %v29, %v28
  %v31 = vmul.f32 0.5, %v30
  %v32 = vsub.f32 1.5, %v31
  %v33 = vmul.f32 %v28, %v32
  %vm34 = vweird.f32 %v27
  %vm35 = vweird.f32 %v28
  %vm36 = vmor %vm34, %vm35
  %v37 = vsel %vm36, %v28, %v33
  %v39 = vperm.slane %v37, 0
  %v41 = vmul.f32 %v25, %v39
  %v42 = vmul.f32 %v26, %v39
  %43 = vst [vmem:[%s3] sm:$0xff] %v41
  %44 = vst [vmem:[%s3 + $0x8] sm:$0xff] %v42
  // Predicated region
  $region14: #{ssl_forward.88} parent=0 // pred_check
    _
  $region15: #{ssl_forward.88} parent=0 // pred_check_branch
    %46 = sbr.rel (0) target = $region17
  $region16: #{ssl_forward.88} parent=0 // pred_region
    _
  $region17: #{ssl_forward.88} parent=0 // pred_fallthru
    _
  // Predicated region
  $region18: #{ssl_forward.88} parent=0 // pred_check
    _
  $region19: #{ssl_forward.88} parent=0 // pred_check_branch
    %48 = sbr.rel (0) target = $region21
  $region20: #{ssl_forward.88} parent=0 // pred_region
    _
  $region21: #{ssl_forward.88} parent=0 // pred_fallthru
    _

// kernel: ssl_forward.64
$region0: #{ssl_forward.64}
  #allocation0 [shape = 'u32[]', space=smem, size = 0x4, offset = 0x4, fixed_abs, tag = 'smem constant byte address 0x4 - core index']
  #allocation1 [shape = 'u32[72,128]{1,0:T(1,128)}', space=vmem, size = 0x9000, scoped, tag = 'internal scratch']
  #allocation2 [shape = 'f32[16,128]{1,0:T(8,128)}', space=vmem, size = 0x2000, scoped, tag = 'scratch operand']
  %s0 = inlined_call_operand.vmem [shape: bf16[16,128], index: 0, kind: input, shape index: {}]
  %s1 = inlined_call_operand.vmem [shape: bf16[128,128], index: 1, kind: input, shape index: {}]
  %s2 = inlined_call_operand.vmem [shape: f32[16,128], index: 2, kind: output, shape index: {0}]
  %s3 = inlined_call_operand.vmem [shape: f32[1,128], index: 3, kind: output, shape index: {1}]
  %s4 = inlined_call_operand.vmem [shape: f32[1,128], index: 4, kind: output, shape index: {2}]
  %5 = xla_tuple %s2, %s3, %s4
  %s6 = sld [smem:[#allocation0]]
  $region50: #{ssl_forward.64} parent=0
    _
  %s8 = ssub.s32 1, %s6
  %s9 = scalar_select 0, %s8, %s6
  // Predicated region
  $region2: #{ssl_forward.64} parent=0 // pred_check
    _
  $region3: #{ssl_forward.64} parent=0 // pred_check_branch
    %11 = sbr.rel (0) target = $region5
  $region4: #{ssl_forward.64} parent=0 // pred_region
    _
  $region5: #{ssl_forward.64} parent=0 // pred_fallthru
    _
  // Predicated region
  $region6: #{ssl_forward.64} parent=0 // pred_check
    _
  $region7: #{ssl_forward.64} parent=0 // pred_check_branch
    %13 = sbr.rel (0) target = $region9
  $region8: #{ssl_forward.64} parent=0 // pred_region
    _
  $region9: #{ssl_forward.64} parent=0 // pred_fallthru
    _
  %p14 = scmp.eq.s32.totalorder 0, 0
  // Predicated region
  $region10: #{ssl_forward.64} parent=0 // pred_check
    %p15 = pneg %p14
  $region11: #{ssl_forward.64} parent=0 // pred_check_branch
    %17 = sbr.rel (%p15) target = $region13
  $region12: #{ssl_forward.64} parent=0 // pred_region
    %18 = vst [vmem:[#allocation2] sm:$0xff] 0.0
    %19 = vst [vmem:[#allocation2 + $0x8] sm:$0xff] 0.0
  $region13: #{ssl_forward.64} parent=0 // pred_fallthru
    _
  %v20 = vld [vmem:[#allocation2] sm:$0xff]
  %v21 = vld [vmem:[#allocation2 + $0x8] sm:$0xff]
  %v22 = vld [vmem:[%s0] sm:$0xf]
  %v23 = vld [vmem:[%s0 + $0x4] sm:$0xf]
  %v24 = vld [vmem:[%s1] sm:$0xf]
  %v25 = vld [vmem:[%s1 + $0x4] sm:$0xf]
  %v26 = vld [vmem:[%s1 + $0x8] sm:$0xf]
  %v27 = vld [vmem:[%s1 + $0xc] sm:$0xf]
  %v28 = vld [vmem:[%s1 + $0x10] sm:$0xf]
  %v29 = vld [vmem:[%s1 + $0x14] sm:$0xf]
  %v30 = vld [vmem:[%s1 + $0x18] sm:$0xf]
  %v31 = vld [vmem:[%s1 + $0x1c] sm:$0xf]
  %v32 = vld [vmem:[%s1 + $0x20] sm:$0xf]
  %v33 = vld [vmem:[%s1 + $0x24] sm:$0xf]
  %v34 = vld [vmem:[%s1 + $0x28] sm:$0xf]
  %v35 = vld [vmem:[%s1 + $0x2c] sm:$0xf]
  %v36 = vld [vmem:[%s1 + $0x30] sm:$0xf]
  %v37 = vld [vmem:[%s1 + $0x34] sm:$0xf]
  %v38 = vld [vmem:[%s1 + $0x38] sm:$0xf]
  %v39 = vld [vmem:[%s1 + $0x3c] sm:$0xf]
  %v42 = vunpack.c.l.b16 %v22
  %v43 = vunpack.c.l.b16 %v23
  %v44 = vpack.c.b16 %v43, %v42
  %v62 = vunpack.c.l.b16 %v24
  %v63 = vunpack.c.l.b16 %v25
  %v64 = vunpack.c.l.b16 %v26
  %v65 = vunpack.c.l.b16 %v27
  %v66 = vunpack.c.l.b16 %v28
  %v67 = vunpack.c.l.b16 %v29
  %v68 = vunpack.c.l.b16 %v30
  %v69 = vunpack.c.l.b16 %v31
  %v70 = vunpack.c.l.b16 %v32
  %v71 = vunpack.c.l.b16 %v33
  %v72 = vunpack.c.l.b16 %v34
  %v73 = vunpack.c.l.b16 %v35
  %v74 = vunpack.c.l.b16 %v36
  %v75 = vunpack.c.l.b16 %v37
  %v76 = vunpack.c.l.b16 %v38
  %v77 = vunpack.c.l.b16 %v39
  %v78 = vpack.c.b16 %v63, %v62
  %v79 = vpack.c.b16 %v65, %v64
  %v80 = vpack.c.b16 %v67, %v66
  %v81 = vpack.c.b16 %v69, %v68
  %v82 = vpack.c.b16 %v71, %v70
  %v83 = vpack.c.b16 %v73, %v72
  %v84 = vpack.c.b16 %v75, %v74
  %v85 = vpack.c.b16 %v77, %v76
  %94 = vmatpush.bf16.msra.mxu0 %v85
  %95 = vmatpush.bf16.msra.mxu0 %v84
  %96 = vmatpush.bf16.msra.mxu0 %v83
  %97 = vmatpush.bf16.msra.mxu0 %v82
  %98 = vmatpush.bf16.msra.mxu0 %v81
  %99 = vmatpush.bf16.msra.mxu0 %v80
  %100 = vmatpush.bf16.msra.mxu0 %v79
  %101 = vmatpush.bf16.msra.mxu0 %v78
  %102 = vmatmul.bf16.gmra.mxu0 %v44
  %v103 = vpop.f32.mrf.mxu0
  %v104 = vadd.f32 0.0, %v103
  %v105 = vpop.f32.mrf.mxu0
  %v106 = vadd.f32 0.0, %v105
  %107 = vdwg.mxu0
  %v108 = vadd.f32 %v20, %v104
  %v109 = vadd.f32 %v21, %v106
  %110 = vst [vmem:[#allocation2] sm:$0xff] %v108
  %111 = vst [vmem:[#allocation2 + $0x8] sm:$0xff] %v109
  // Predicated region
  $region14: #{ssl_forward.64} parent=0 // pred_check
    %p112 = pneg %p14
  $region15: #{ssl_forward.64} parent=0 // pred_check_branch
    %114 = sbr.rel (%p112) target = $region17
  $region16: #{ssl_forward.64} parent=0 // pred_region
    %v115 = vld [vmem:[#allocation2] sm:$0xff]
    %v116 = vld [vmem:[#allocation2 + $0x8] sm:$0xff]
    %117 = vst [vmem:[%s2] sm:$0xff] %v115
    %118 = vst [vmem:[%s2 + $0x8] sm:$0xff] %v116
  $region17: #{ssl_forward.64} parent=0 // pred_fallthru
    _
  %p119 = scmp.eq.s32.totalorder 0, 0
  %p120 = pnand %p14, %p119
  %p121 = pneg %p120
  // Predicated region
  $region18: #{ssl_forward.64} parent=0 // pred_check
    _
  $region19: #{ssl_forward.64} parent=0 // pred_check_branch
    %123 = sbr.rel (%p120) target = $region21
  $region20: #{ssl_forward.64} parent=0 // pred_region
    %v124 = vld [vmem:[#allocation2] sm:$0xff]
    %v125 = vld [vmem:[#allocation2 + $0x8] sm:$0xff]
    %v126 = vadd.f32 %v124, %v125
    %v127 = vrot.slane %v126, 4
    %v128 = vadd.f32 %v126, %v127
    %v129 = vrot.slane %v128, 2
    %v130 = vadd.f32 %v128, %v129
    %v131 = vrot.slane %v130, 1
    %v132 = vadd.f32 %v130, %v131
    %133 = vst [vmem:[%s3] sm:$0x1] %v132
    %v134 = vmul.f32 %v124, %v124
    %v135 = vmul.f32 %v125, %v125
    %v136 = vadd.f32 %v134, %v135
    %v137 = vrot.slane %v136, 4
    %v138 = vadd.f32 %v136, %v137
    %v139 = vrot.slane %v138, 2
    %v140 = vadd.f32 %v138, %v139
    %v141 = vrot.slane %v140, 1
    %v142 = vadd.f32 %v140, %v141
    %143 = vst [vmem:[%s4] sm:$0x1] %v142
  $region21: #{ssl_forward.64} parent=0 // pred_fallthru
    _
  %p144 = scmp.gt.s32.totalorder 0, 0
  %p145 = pnand %p14, %p144
  %p146 = pneg %p145
  // Predicated region
  $region22: #{ssl_forward.64} parent=0 // pred_check
    _
  $region23: #{ssl_forward.64} parent=0 // pred_check_branch
    %148 = sbr.rel (%p145) target = $region25
  $region24: #{ssl_forward.64} parent=0 // pred_region
    %v149 = vld [vmem:[#allocation2] sm:$0xff]
    %v150 = vld [vmem:[#allocation2 + $0x8] sm:$0xff]
    %v151 = vld [vmem:[%s3] sm:$0x1]
    %v152 = vadd.f32 %v149, %v150
    %v153 = vrot.slane %v152, 4
    %v154 = vadd.f32 %v152, %v153
    %v155 = vrot.slane %v154, 2
    %v156 = vadd.f32 %v154, %v155
    %v157 = vrot.slane %v156, 1
    %v158 = vadd.f32 %v156, %v157
    %v159 = vadd.f32 %v151, %v158
    %160 = vst [vmem:[%s3] sm:$0x1] %v159
    %v161 = vld [vmem:[%s4] sm:$0x1]
    %v162 = vmul.f32 %v149, %v149
    %v163 = vmul.f32 %v150, %v150
    %v164 = vadd.f32 %v162, %v163
    %v165 = vrot.slane %v164, 4
    %v166 = vadd.f32 %v164, %v165
    %v167 = vrot.slane %v166, 2
    %v168 = vadd.f32 %v166, %v167
    %v169 = vrot.slane %v168, 1
    %v170 = vadd.f32 %v168, %v169
    %v171 = vadd.f32 %v161, %v170
    %172 = vst [vmem:[%s4] sm:$0x1] %v171
  $region25: #{ssl_forward.64} parent=0 // pred_fallthru
    _
  // Predicated region
  $region26: #{ssl_forward.64} parent=0 // pred_check
    _
  $region27: #{ssl_forward.64} parent=0 // pred_check_branch
    %174 = sbr.rel (0) target = $region29
  $region28: #{ssl_forward.64} parent=0 // pred_region
    _
  $region29: #{ssl_forward.64} parent=0 // pred_fallthru
    _
  // Predicated region
  $region30: #{ssl_forward.64} parent=0 // pred_check
    _
  $region31: #{ssl_forward.64} parent=0 // pred_check_branch
    %176 = sbr.rel (0) target = $region33
  $region32: #{ssl_forward.64} parent=0 // pred_region
    _
  $region33: #{ssl_forward.64} parent=0 // pred_fallthru
    _
  // Predicated region
  $region34: #{ssl_forward.64} parent=0 // pred_check
    _
  $region35: #{ssl_forward.64} parent=0 // pred_check_branch
    %178 = sbr.rel (0) target = $region37
  $region36: #{ssl_forward.64} parent=0 // pred_region
    _
  $region37: #{ssl_forward.64} parent=0 // pred_fallthru
    _
  // Predicated region
  $region38: #{ssl_forward.64} parent=0 // pred_check
    _
  $region39: #{ssl_forward.64} parent=0 // pred_check_branch
    %180 = sbr.rel (0) target = $region41
  $region40: #{ssl_forward.64} parent=0 // pred_region
    _
  $region41: #{ssl_forward.64} parent=0 // pred_fallthru
    _
  // Predicated region
  $region42: #{ssl_forward.64} parent=0 // pred_check
    _
  $region43: #{ssl_forward.64} parent=0 // pred_check_branch
    %182 = sbr.rel (0) target = $region45
  $region44: #{ssl_forward.64} parent=0 // pred_region
    _
  $region45: #{ssl_forward.64} parent=0 // pred_fallthru
    _
  // Predicated region
  $region46: #{ssl_forward.64} parent=0 // pred_check
    _
  $region47: #{ssl_forward.64} parent=0 // pred_check_branch
    %184 = sbr.rel (0) target = $region49
  $region48: #{ssl_forward.64} parent=0 // pred_region
    _
  $region49: #{ssl_forward.64} parent=0 // pred_fallthru
    _

// kernel: ssl_forward.62
$region0: #{ssl_forward.62}
  #allocation0 [shape = 'u32[]', space=smem, size = 0x4, offset = 0x4, fixed_abs, tag = 'smem constant byte address 0x4 - core index']
  #allocation1 [shape = 'u32[72,128]{1,0:T(1,128)}', space=vmem, size = 0x9000, scoped, tag = 'internal scratch']
  %s0 = inlined_call_operand.vmem [shape: f32[16,128], index: 0, kind: input, shape index: {}]
  %s1 = inlined_call_operand.vmem [shape: f32[1,128], index: 1, kind: input, shape index: {}]
  %s2 = inlined_call_operand.vmem [shape: f32[1,128], index: 2, kind: input, shape index: {}]
  %s3 = inlined_call_operand.vmem [shape: bf16[16,128], index: 3, kind: output, shape index: {}]
  %s4 = sld [smem:[#allocation0]]
  $region22: #{ssl_forward.62} parent=0
    _
  %s6 = ssub.s32 1, %s4
  %s7 = scalar_select 0, %s6, %s4
  // Predicated region
  $region2: #{ssl_forward.62} parent=0 // pred_check
    _
  $region3: #{ssl_forward.62} parent=0 // pred_check_branch
    %9 = sbr.rel (0) target = $region5
  $region4: #{ssl_forward.62} parent=0 // pred_region
    _
  $region5: #{ssl_forward.62} parent=0 // pred_fallthru
    _
  // Predicated region
  $region6: #{ssl_forward.62} parent=0 // pred_check
    _
  $region7: #{ssl_forward.62} parent=0 // pred_check_branch
    %11 = sbr.rel (0) target = $region9
  $region8: #{ssl_forward.62} parent=0 // pred_region
    _
  $region9: #{ssl_forward.62} parent=0 // pred_fallthru
    _
  // Predicated region
  $region10: #{ssl_forward.62} parent=0 // pred_check
    _
  $region11: #{ssl_forward.62} parent=0 // pred_check_branch
    %13 = sbr.rel (0) target = $region13
  $region12: #{ssl_forward.62} parent=0 // pred_region
    _
  $region13: #{ssl_forward.62} parent=0 // pred_fallthru
    _
  %v14 = vld [vmem:[%s1] sm:$0x1]
  %v15 = vmul.f32 %v14, 0.125
  %v16 = vld [vmem:[%s2] sm:$0x1]
  %v17 = vmul.f32 %v16, 0.125
  %v18 = vmul.f32 %v15, %v15
  %v19 = vsub.f32 %v17, %v18
  %v20 = vld [vmem:[%s0] sm:$0xff]
  %v21 = vld [vmem:[%s0 + $0x8] sm:$0xff]
  %v23 = vperm.slane %v15, 0
  %v25 = vsub.f32 %v20, %v23
  %v26 = vsub.f32 %v21, %v23
  %v27 = vadd.f32 %v19, 1e-05
  %v28 = vrsqrt.pop %v27
  %v29 = vmul.f32 %v28, %v27
  %v30 = vmul.f32 %v29, %v28
  %v31 = vmul.f32 0.5, %v30
  %v32 = vsub.f32 1.5, %v31
  %v33 = vmul.f32 %v28, %v32
  %vm34 = vweird.f32 %v27
  %vm35 = vweird.f32 %v28
  %vm36 = vmor %vm34, %vm35
  %v37 = vsel %vm36, %v28, %v33
  %v39 = vperm.slane %v37, 0
  %v41 = vmul.f32 %v25, %v39
  %v42 = vmul.f32 %v26, %v39
  %v43 = vmax.f32 %v41, 0.0
  %v44 = vmax.f32 %v42, 0.0
  %v45 = vpack.c.bf16 %v43, %v43
  %v46 = vpack.c.bf16 %v44, %v44
  %47 = vst [vmem:[%s3] sm:$0xf] %v45
  %48 = vst [vmem:[%s3 + $0x4] sm:$0xf] %v46
  // Predicated region
  $region14: #{ssl_forward.62} parent=0 // pred_check
    _
  $region15: #{ssl_forward.62} parent=0 // pred_check_branch
    %50 = sbr.rel (0) target = $region17
  $region16: #{ssl_forward.62} parent=0 // pred_region
    _
  $region17: #{ssl_forward.62} parent=0 // pred_fallthru
    _
  // Predicated region
  $region18: #{ssl_forward.62} parent=0 // pred_check
    _
  $region19: #{ssl_forward.62} parent=0 // pred_check_branch
    %52 = sbr.rel (0) target = $region21
  $region20: #{ssl_forward.62} parent=0 // pred_region
    _
  $region21: #{ssl_forward.62} parent=0 // pred_fallthru
    _

// kernel: ssl_forward.84
$region0: #{ssl_forward.84}
  #allocation0 [shape = 'u32[]', space=smem, size = 0x4, offset = 0x4, fixed_abs, tag = 'smem constant byte address 0x4 - core index']
  #allocation1 [shape = 'u32[72,128]{1,0:T(1,128)}', space=vmem, size = 0x9000, scoped, tag = 'internal scratch']
  #allocation2 [shape = 'f32[16,128]{1,0:T(8,128)}', space=vmem, size = 0x2000, scoped, tag = 'scratch operand']
  %s0 = inlined_call_operand.vmem [shape: bf16[16,640], index: 0, kind: input, shape index: {}]
  %s1 = inlined_call_operand.vmem [shape: bf16[640,128], index: 1, kind: input, shape index: {}]
  %s2 = inlined_call_operand.vmem [shape: f32[16,128], index: 2, kind: output, shape index: {0}]
  %s3 = inlined_call_operand.vmem [shape: f32[1,128], index: 3, kind: output, shape index: {1}]
  %s4 = inlined_call_operand.vmem [shape: f32[1,128], index: 4, kind: output, shape index: {2}]
  %5 = xla_tuple %s2, %s3, %s4
  %s6 = sld [smem:[#allocation0]]
  $region114: #{ssl_forward.84} parent=0
    _
  %s8 = ssub.s32 1, %s6
  %s9 = scalar_select 0, %s8, %s6
  $region1: #{ssl_forward.84} parent=0
    #allocation3 [shape = 'u8[8192]{0}', space=vmem, size = 0x2000, scoped, tag = 'input window, operand 0']
    loop: start=0, step=1, limit=7
    $region2: #{ssl_forward.84} parent=1 // loop_pre_header
      _
    $region3: #{ssl_forward.84} parent=1 // loop_header
      %s11 = sphi 0, %s15
      %p12 = scmp.ge.s32.totalorder %s11, 7
      %s18 = sphi 0, %s37
      %s19 = sphi 0, %s33
      %s20 = sphi 0, %s29
      %s21 = sphi 0, %s18
      %s22 = sphi 0, %s19
      %s23 = sphi 0, %s20
      %s24 = sphi 0, %s21
      %s25 = sphi 0, %s22
      %s26 = sphi 0, %s23
      %s42 = sphi 0, %s44
      %s45 = sphi 0, %s42
      %s46 = sphi 0, %s45
      %s62 = sphi 0, %s46
      %s70 = sphi 0, %s72
      %s73 = sphi 0, %s70
      %s74 = sphi 0, %s73
      %s90 = sphi 0, %s74
      %s98 = sphi 0, %s100
      %s101 = sphi 0, %s98
      %s102 = sphi 0, %s101
      %s118 = sphi 0, %s102
      %s124 = sphi 0, %s126
      %s127 = sphi 0, %s124
      %s128 = sphi 0, %s127
      %s144 = sphi 0, %s128
      %s150 = sphi 0, %s152
      %s153 = sphi 0, %s150
      %s154 = sphi 0, %s153
      %s170 = sphi 0, %s154
    $region4: #{ssl_forward.84} parent=1 // loop_header_branch
      %14 = sbr.rel (%p12) target = $region8
    $region5: #{ssl_forward.84} parent=1 // loop_body
      %s16 = ssub.s32 %s11, 1
      %s17 = ssub.s32 %s11, 2
      %s27 = sadd.s32 1, %s20
      %p28 = scmp.ge.s32.totalorder %s27, 5
      %s29 = scalar_select %p28, 0, %s27
      %s30 = sadd.s32 1, %s19
      %s31 = scalar_select %p28, %s30, %s19
      %p32 = scmp.ge.s32.totalorder %s31, 1
      %s33 = scalar_select %p32, 0, %s31
      %s34 = sadd.s32 1, %s18
      %s35 = scalar_select %p32, %s34, %s18
      %p36 = scmp.ge.s32.totalorder %s35, 1
      %s37 = scalar_select %p36, 0, %s35
      %s38 = ssub.s32 %s19, %s33
      %s39 = ssub.s32 %s20, %s29
      %s40 = sor.u32 %s38, %s39
      %p41 = scmp.eq.s32.totalorder %s40, 0
      %s43 = sadd.s32 %s42, 1
      %s44 = scalar_select %p41, %s42, %s43
      %p47 = pneg %p41
      %p48 = scmp.eq.s32.totalorder %s11, 4
      %p49 = por %p47, %p48
      %p50 = scmp.ne.s32.totalorder %s42, %s45
      %p51 = scmp.eq.s32.totalorder %s11, 0
      %p52 = por %p50, %p51
      %p53 = scmp.ne.s32.totalorder %s42, %s45
      %p54 = scmp.eq.s32.totalorder %s16, 4
      %p55 = por %p53, %p54
      %p56 = scmp.ne.s32.totalorder %s45, %s46
      %p57 = scmp.eq.s32.totalorder %s16, 0
      %p58 = por %p56, %p57
      %p59 = scmp.ne.s32.totalorder %s45, %s46
      %p60 = scmp.eq.s32.totalorder %s17, 4
      %p61 = por %p59, %p60
      %p63 = scmp.ne.s32.totalorder %s46, %s62
      %p64 = scmp.eq.s32.totalorder %s17, 0
      %p65 = por %p63, %p64
      %s66 = ssub.s32 %s20, %s29
      %s67 = ssub.s32 %s18, %s37
      %s68 = sor.u32 %s66, %s67
      %p69 = scmp.eq.s32.totalorder %s68, 0
      %s71 = sadd.s32 %s70, 1
      %s72 = scalar_select %p69, %s70, %s71
      %p75 = pneg %p69
      %p76 = scmp.eq.s32.totalorder %s11, 4
      %p77 = por %p75, %p76
      %p78 = scmp.ne.s32.totalorder %s70, %s73
      %p79 = scmp.eq.s32.totalorder %s11, 0
      %p80 = por %p78, %p79
      %p81 = scmp.ne.s32.totalorder %s70, %s73
      %p82 = scmp.eq.s32.totalorder %s16, 4
      %p83 = por %p81, %p82
      %p84 = scmp.ne.s32.totalorder %s73, %s74
      %p85 = scmp.eq.s32.totalorder %s16, 0
      %p86 = por %p84, %p85
      %p87 = scmp.ne.s32.totalorder %s73, %s74
      %p88 = scmp.eq.s32.totalorder %s17, 4
      %p89 = por %p87, %p88
      %p91 = scmp.ne.s32.totalorder %s74, %s90
      %p92 = scmp.eq.s32.totalorder %s17, 0
      %p93 = por %p91, %p92
      %s94 = ssub.s32 %s19, %s33
      %s95 = ssub.s32 %s18, %s37
      %s96 = sor.u32 %s94, %s95
      %p97 = scmp.eq.s32.totalorder %s96, 0
      %s99 = sadd.s32 %s98, 1
      %s100 = scalar_select %p97, %s98, %s99
      %p103 = pneg %p97
      %p104 = scmp.eq.s32.totalorder %s11, 4
      %p105 = por %p103, %p104
      %p106 = scmp.ne.s32.totalorder %s98, %s101
      %p107 = scmp.eq.s32.totalorder %s11, 0
      %p108 = por %p106, %p107
      %p109 = scmp.ne.s32.totalorder %s98, %s101
      %p110 = scmp.eq.s32.totalorder %s16, 4
      %p111 = por %p109, %p110
      %p112 = scmp.ne.s32.totalorder %s101, %s102
      %p113 = scmp.eq.s32.totalorder %s16, 0
      %p114 = por %p112, %p113
      %p115 = scmp.ne.s32.totalorder %s101, %s102
      %p116 = scmp.eq.s32.totalorder %s17, 4
      %p117 = por %p115, %p116
      %p119 = scmp.ne.s32.totalorder %s102, %s118
      %p120 = scmp.eq.s32.totalorder %s17, 0
      %p121 = por %p119, %p120
      %s122 = ssub.s32 %s18, %s37
      %p123 = scmp.eq.s32.totalorder %s122, 0
      %s125 = sadd.s32 %s124, 1
      %s126 = scalar_select %p123, %s124, %s125
      %p129 = pneg %p123
      %p130 = scmp.eq.s32.totalorder %s11, 4
      %p131 = por %p129, %p130
      %p132 = scmp.ne.s32.totalorder %s124, %s127
      %p133 = scmp.eq.s32.totalorder %s11, 0
      %p134 = por %p132, %p133
      %p135 = scmp.ne.s32.totalorder %s124, %s127
      %p136 = scmp.eq.s32.totalorder %s16, 4
      %p137 = por %p135, %p136
      %p138 = scmp.ne.s32.totalorder %s127, %s128
      %p139 = scmp.eq.s32.totalorder %s16, 0
      %p140 = por %p138, %p139
      %p141 = scmp.ne.s32.totalorder %s127, %s128
      %p142 = scmp.eq.s32.totalorder %s17, 4
      %p143 = por %p141, %p142
      %p145 = scmp.ne.s32.totalorder %s128, %s144
      %p146 = scmp.eq.s32.totalorder %s17, 0
      %p147 = por %p145, %p146
      %s148 = ssub.s32 %s18, %s37
      %p149 = scmp.eq.s32.totalorder %s148, 0
      %s151 = sadd.s32 %s150, 1
      %s152 = scalar_select %p149, %s150, %s151
      %p155 = pneg %p149
      %p156 = scmp.eq.s32.totalorder %s11, 4
      %p157 = por %p155, %p156
      %p158 = scmp.ne.s32.totalorder %s150, %s153
      %p159 = scmp.eq.s32.totalorder %s11, 0
      %p160 = por %p158, %p159
      %p161 = scmp.ne.s32.totalorder %s150, %s153
      %p162 = scmp.eq.s32.totalorder %s16, 4
      %p163 = por %p161, %p162
      %p164 = scmp.ne.s32.totalorder %s153, %s154
      %p165 = scmp.eq.s32.totalorder %s16, 0
      %p166 = por %p164, %p165
      %p167 = scmp.ne.s32.totalorder %s153, %s154
      %p168 = scmp.eq.s32.totalorder %s17, 4
      %p169 = por %p167, %p168
      %p171 = scmp.ne.s32.totalorder %s154, %s170
      %p172 = scmp.eq.s32.totalorder %s17, 0
      %p173 = por %p171, %p172
      %p174 = scmp.le.s32.totalorder 1, %s11
      %p175 = scmp.lt.s32.totalorder %s11, 6
      %p176 = pnand %p174, %p175
      %p177 = pneg %p176
      // Predicated region
      $region9: #{ssl_forward.84} parent=5 // pred_check
        _
      $region10: #{ssl_forward.84} parent=5 // pred_check_branch
        %179 = sbr.rel (%p176) target = $region12
      $region11: #{ssl_forward.84} parent=5 // pred_region
        %s180 = ssub.s32 %s11, 1
      $region12: #{ssl_forward.84} parent=5 // pred_fallthru
        _
      %p181 = scmp.lt.s32.totalorder %s11, 5
      // Predicated region
      $region13: #{ssl_forward.84} parent=5 // pred_check
        %p182 = pneg %p181
      $region14: #{ssl_forward.84} parent=5 // pred_check_branch
        %184 = sbr.rel (%p182) target = $region16
      $region15: #{ssl_forward.84} parent=5 // pred_region
        // Predicated region
        $region17: #{ssl_forward.84} parent=15 // pred_check
          %p185 = pneg %p52
        $region18: #{ssl_forward.84} parent=15 // pred_check_branch
          %187 = sbr.rel (%p185) target = $region20
        $region19: #{ssl_forward.84} parent=15 // pred_region
          %s188 = sand.u32 %s42, 1
          %s189 = sand.u32 %s42, 1
          %s190 = smul.addr %s189, 8
          %s191 = scalar_lea.vmem [#allocation3], %s190
          %s192 = smul.u32 2, %s19
          %s193 = smul.addr %s192, 5
          %s194 = sadd.s32 %s20, %s193
          %s195 = smul.addr %s194, 4
          %s196 = scalar_lea.vmem %s0, %s195
          // Predicated region
          $region21: #{ssl_forward.84} parent=19 // pred_check
            _
          $region22: #{ssl_forward.84} parent=19 // pred_check_branch
            %198 = sbr.rel (0) target = $region24
          $region23: #{ssl_forward.84} parent=19 // pred_region
            // Predicated region
            $region25: #{ssl_forward.84} parent=23 // pred_check
              _
            $region26: #{ssl_forward.84} parent=23 // pred_check_branch
              %200 = sbr.rel target = $region28
            $region27: #{ssl_forward.84} parent=23 // pred_region
              // Predicated region
              $region40: #{ssl_forward.84} parent=27 // pred_check
                _
              $region41: #{ssl_forward.84} parent=27 // pred_check_branch
                %218 = sbr.rel (0) target = $region43
              $region42: #{ssl_forward.84} parent=27 // pred_region
                loop: start=0, step=1, limit=1
                $region44: #{ssl_forward.84} parent=42 // loop_pre_header
                  _
                $region45: #{ssl_forward.84} parent=42 // loop_header
                  %s220 = sphi 0, %s224
                  %p221 = scmp.ge.s32.totalorder %s220, 1
                  %s225 = sphi %s196, %s196
                  %s226 = sphi %s191, %s191
                $region46: #{ssl_forward.84} parent=42 // loop_header_branch
                  %223 = sbr.rel (%p221) target = $region50
                $region47: #{ssl_forward.84} parent=42 // loop_body
                  _
                $region48: #{ssl_forward.84} parent=42 // loop_footer
                  %s224 = sadd.s32 1, %s220
                $region49: #{ssl_forward.84} parent=42 // loop_footer_branch
                  %219 = sbr.rel target = $region45
                $region50: #{ssl_forward.84} parent=42 // loop_exit
                  _
                %s228 = ssub.s32 16, 1
                loop: start=0, step=1, limit=1
                $region51: #{ssl_forward.84} parent=42 // loop_pre_header
                  _
                $region52: #{ssl_forward.84} parent=42 // loop_header
                  %s230 = sphi 0, %s234
                  %p231 = scmp.ge.s32.totalorder %s230, 1
                  %s235 = sphi %s196, %s196
                  %s236 = sphi %s191, %s191
                $region53: #{ssl_forward.84} parent=42 // loop_header_branch
                  %233 = sbr.rel (%p231) target = $region57
                $region54: #{ssl_forward.84} parent=42 // loop_body
                  %v237 = vld [vmem:[%s235] sm:%s228]
                  %238 = vst [vmem:[%s236] sm:%s228] %v237
                  %v239 = vld [vmem:[%s235 + $0x14] sm:%s228]
                  %240 = vst [vmem:[%s236 + $0x4] sm:%s228] %v239
                $region55: #{ssl_forward.84} parent=42 // loop_footer
                  %s234 = sadd.s32 1, %s230
                $region56: #{ssl_forward.84} parent=42 // loop_footer_branch
                  %229 = sbr.rel target = $region52
                $region57: #{ssl_forward.84} parent=42 // loop_exit
                  _
              $region43: #{ssl_forward.84} parent=27 // pred_fallthru
                _
            $region28: #{ssl_forward.84} parent=23 // pred_fallthru
              _
            // Predicated region
            $region29: #{ssl_forward.84} parent=23 // pred_check
              _
            $region30: #{ssl_forward.84} parent=23 // pred_check_branch
              %202 = sbr.rel (0) target = $region32
            $region31: #{ssl_forward.84} parent=23 // pred_region
              %s204 = ssub.s32 16, 1
              loop: start=0, step=1, limit=1
              $region33: #{ssl_forward.84} parent=31 // loop_pre_header
                _
              $region34: #{ssl_forward.84} parent=31 // loop_header
                %s206 = sphi 0, %s210
                %p207 = scmp.ge.s32.totalorder %s206, 1
                %s211 = sphi %s196, %s196
                %s212 = sphi %s191, %s191
              $region35: #{ssl_forward.84} parent=31 // loop_header_branch
                %209 = sbr.rel (%p207) target = $region39
              $region36: #{ssl_forward.84} parent=31 // loop_body
                %v213 = vld [vmem:[%s211] sm:%s204]
                %214 = vst [vmem:[%s212] sm:%s204] %v213
                %v215 = vld [vmem:[%s211 + $0x14] sm:%s204]
                %216 = vst [vmem:[%s212 + $0x4] sm:%s204] %v215
              $region37: #{ssl_forward.84} parent=31 // loop_footer
                %s210 = sadd.s32 1, %s206
              $region38: #{ssl_forward.84} parent=31 // loop_footer_branch
                %205 = sbr.rel target = $region34
              $region39: #{ssl_forward.84} parent=31 // loop_exit
                _
            $region32: #{ssl_forward.84} parent=23 // pred_fallthru
              _
          $region24: #{ssl_forward.84} parent=19 // pred_fallthru
            _
          %241 = vnop
        $region20: #{ssl_forward.84} parent=15 // pred_fallthru
          _
        // Predicated region
        $region58: #{ssl_forward.84} parent=15 // pred_check
          %p242 = pneg %p80
        $region59: #{ssl_forward.84} parent=15 // pred_check_branch
          %244 = sbr.rel (%p242) target = $region61
        $region60: #{ssl_forward.84} parent=15 // pred_region
          %s245 = smul.u32 16, %s20
          %p246 = scmp.lt.s32.totalorder %s245, 79
          %s247 = scalar_select %p246, %s245, 79
          %p248 = scmp.lt.s32.totalorder %s18, 0
          %s249 = scalar_select %p248, %s18, 0
          %s250 = sadd.s32 %s249, %s247
          %s251 = smul.addr %s250, 4
          %s252 = scalar_lea.vmem %s1, %s251
          %s253 = smul.u32 16, %s20
        $region61: #{ssl_forward.84} parent=15 // pred_fallthru
          _
      $region16: #{ssl_forward.84} parent=5 // pred_fallthru
        _
      %p254 = scmp.le.s32.totalorder 1, %s11
      %p255 = scmp.lt.s32.totalorder %s11, 6
      %p256 = pnand %p254, %p255
      %p257 = pneg %p256
      // Predicated region
      $region62: #{ssl_forward.84} parent=5 // pred_check
        _
      $region63: #{ssl_forward.84} parent=5 // pred_check_branch
        %259 = sbr.rel (%p256) target = $region65
      $region64: #{ssl_forward.84} parent=5 // pred_region
        %s260 = ssub.s32 %s11, 1
        %s261 = sand.u32 %s45, 1
        %s262 = sand.u32 %s45, 1
        %s263 = smul.addr %s262, 8
        %s264 = scalar_lea.vmem [#allocation3], %s263
        // Predicated region
        $region66: #{ssl_forward.84} parent=64 // pred_check
          %p265 = pneg %p58
        $region67: #{ssl_forward.84} parent=64 // pred_check_branch
          %267 = sbr.rel (%p265) target = $region69
        $region68: #{ssl_forward.84} parent=64 // pred_region
          _
        $region69: #{ssl_forward.84} parent=64 // pred_fallthru
          _
        %s268 = sand.u32 %s45, 1
        %s269 = sand.u32 %s45, 1
        %s270 = smul.addr %s269, 8
        %s271 = scalar_lea.vmem [#allocation3], %s270
        %p272 = pneg %p58
        %p273 = pneg %p55
        %s274 = smul.u32 16, %s23
        %p275 = scmp.lt.s32.totalorder %s274, 79
        %s276 = scalar_select %p275, %s274, 79
        %p277 = scmp.lt.s32.totalorder %s21, 0
        %s278 = scalar_select %p277, %s21, 0
        %s279 = sadd.s32 %s278, %s276
        %s280 = smul.addr %s279, 4
        %s281 = scalar_lea.vmem %s1, %s280
        %p282 = pneg %p86
        %p283 = pneg %p83
        %p284 = pneg %p114
        %p285 = pneg %p111
        %s286 = smul.u32 2, %s22
        %p287 = scmp.lt.s32.totalorder %s286, 1
        %s288 = scalar_select %p287, %s286, 1
        %p289 = scmp.lt.s32.totalorder %s21, 0
        %s290 = scalar_select %p289, %s21, 0
        %s291 = sadd.s32 %s290, %s288
        %s292 = smul.addr %s291, 8
        %s293 = scalar_lea.vmem %s2, %s292
        %p294 = pneg %p140
        %p295 = pneg %p137
        %p296 = scmp.lt.s32.totalorder %s21, 0
        %s297 = scalar_select %p296, %s21, 0
        %s298 = scalar_lea.vmem %s3, %s297
        %p299 = pneg %p166
        %p300 = pneg %p163
        %p301 = scmp.lt.s32.totalorder %s21, 0
        %s302 = scalar_select %p301, %s21, 0
        %s303 = scalar_lea.vmem %s4, %s302
        %s304 = smul.u32 2, %s22
        %s305 = smul.u32 16, %s23
        %p306 = scmp.lt.s32.totalorder %s305, 79
        %s307 = scalar_select %p306, %s305, 79
        %p308 = scmp.lt.s32.totalorder %s21, 0
        %s309 = scalar_select %p308, %s21, 0
        %s310 = sadd.s32 %s309, %s307
        %s311 = smul.addr %s310, 4
        %s312 = scalar_lea.vmem %s1, %s311
        %s313 = smul.u32 16, %s23
        %s314 = smul.u32 2, %s22
        %p315 = scmp.lt.s32.totalorder %s314, 1
        %s316 = scalar_select %p315, %s314, 1
        %p317 = scmp.lt.s32.totalorder %s21, 0
        %s318 = scalar_select %p317, %s21, 0
        %s319 = sadd.s32 %s318, %s316
        %s320 = smul.addr %s319, 8
        %s321 = scalar_lea.vmem %s2, %s320
        %s322 = smul.u32 2, %s22
        %p323 = scmp.lt.s32.totalorder %s21, 0
        %s324 = scalar_select %p323, %s21, 0
        %s325 = scalar_lea.vmem %s3, %s324
        %p326 = scmp.lt.s32.totalorder %s21, 0
        %s327 = scalar_select %p326, %s21, 0
        %s328 = scalar_lea.vmem %s4, %s327
        %p329 = scmp.eq.s32.totalorder %s23, 0
        // Predicated region
        $region70: #{ssl_forward.84} parent=64 // pred_check
          %p330 = pneg %p329
        $region71: #{ssl_forward.84} parent=64 // pred_check_branch
          %332 = sbr.rel (%p330) target = $region73
        $region72: #{ssl_forward.84} parent=64 // pred_region
          %333 = vst [vmem:[#allocation2] sm:$0xff] 0.0
          %334 = vst [vmem:[#allocation2 + $0x8] sm:$0xff] 0.0
        $region73: #{ssl_forward.84} parent=64 // pred_fallthru
          _
        %v335 = vld [vmem:[#allocation2] sm:$0xff]
        %v336 = vld [vmem:[#allocation2 + $0x8] sm:$0xff]
        %v337 = vld [vmem:[%s264] sm:$0xf]
        %v338 = vld [vmem:[%s264 + $0x4] sm:$0xf]
        %v339 = vld [vmem:[%s312] sm:$0xf]
        %v340 = vld [vmem:[%s312 + $0x4] sm:$0xf]
        %v341 = vld [vmem:[%s312 + $0x8] sm:$0xf]
        %v342 = vld [vmem:[%s312 + $0xc] sm:$0xf]
        %v343 = vld [vmem:[%s312 + $0x10] sm:$0xf]
        %v344 = vld [vmem:[%s312 + $0x14] sm:$0xf]
        %v345 = vld [vmem:[%s312 + $0x18] sm:$0xf]
        %v346 = vld [vmem:[%s312 + $0x1c] sm:$0xf]
        %v347 = vld [vmem:[%s312 + $0x20] sm:$0xf]
        %v348 = vld [vmem:[%s312 + $0x24] sm:$0xf]
        %v349 = vld [vmem:[%s312 + $0x28] sm:$0xf]
        %v350 = vld [vmem:[%s312 + $0x2c] sm:$0xf]
        %v351 = vld [vmem:[%s312 + $0x30] sm:$0xf]
        %v352 = vld [vmem:[%s312 + $0x34] sm:$0xf]
        %v353 = vld [vmem:[%s312 + $0x38] sm:$0xf]
        %v354 = vld [vmem:[%s312 + $0x3c] sm:$0xf]
        %v357 = vunpack.c.l.b16 %v337
        %v358 = vunpack.c.l.b16 %v338
        %v359 = vpack.c.b16 %v358, %v357
        %v377 = vunpack.c.l.b16 %v339
        %v378 = vunpack.c.l.b16 %v340
        %v379 = vunpack.c.l.b16 %v341
        %v380 = vunpack.c.l.b16 %v342
        %v381 = vunpack.c.l.b16 %v343
        %v382 = vunpack.c.l.b16 %v344
        %v383 = vunpack.c.l.b16 %v345
        %v384 = vunpack.c.l.b16 %v346
        %v385 = vunpack.c.l.b16 %v347
        %v386 = vunpack.c.l.b16 %v348
        %v387 = vunpack.c.l.b16 %v349
        %v388 = vunpack.c.l.b16 %v350
        %v389 = vunpack.c.l.b16 %v351
        %v390 = vunpack.c.l.b16 %v352
        %v391 = vunpack.c.l.b16 %v353
        %v392 = vunpack.c.l.b16 %v354
        %v393 = vpack.c.b16 %v378, %v377
        %v394 = vpack.c.b16 %v380, %v379
        %v395 = vpack.c.b16 %v382, %v381
        %v396 = vpack.c.b16 %v384, %v383
        %v397 = vpack.c.b16 %v386, %v385
        %v398 = vpack.c.b16 %v388, %v387
        %v399 = vpack.c.b16 %v390, %v389
        %v400 = vpack.c.b16 %v392, %v391
        %409 = vmatpush.bf16.msra.mxu0 %v400
        %410 = vmatpush.bf16.msra.mxu0 %v399
        %411 = vmatpush.bf16.msra.mxu0 %v398
        %412 = vmatpush.bf16.msra.mxu0 %v397
        %413 = vmatpush.bf16.msra.mxu0 %v396
        %414 = vmatpush.bf16.msra.mxu0 %v395
        %415 = vmatpush.bf16.msra.mxu0 %v394
        %416 = vmatpush.bf16.msra.mxu0 %v393
        %417 = vmatmul.bf16.gmra.mxu0 %v359
        %v418 = vpop.f32.mrf.mxu0
        %v419 = vadd.f32 0.0, %v418
        %v420 = vpop.f32.mrf.mxu0
        %v421 = vadd.f32 0.0, %v420
        %422 = vdwg.mxu0
        %v423 = vadd.f32 %v335, %v419
        %v424 = vadd.f32 %v336, %v421
        %425 = vst [vmem:[#allocation2] sm:$0xff] %v423
        %426 = vst [vmem:[#allocation2 + $0x8] sm:$0xff] %v424
        %p427 = scmp.eq.s32.totalorder %s23, 4
        // Predicated region
        $region74: #{ssl_forward.84} parent=64 // pred_check
          %p428 = pneg %p427
        $region75: #{ssl_forward.84} parent=64 // pred_check_branch
          %430 = sbr.rel (%p428) target = $region77
        $region76: #{ssl_forward.84} parent=64 // pred_region
          %v431 = vld [vmem:[#allocation2] sm:$0xff]
          %v432 = vld [vmem:[#allocation2 + $0x8] sm:$0xff]
          %433 = vst [vmem:[%s321] sm:$0xff] %v431
          %434 = vst [vmem:[%s321 + $0x8] sm:$0xff] %v432
        $region77: #{ssl_forward.84} parent=64 // pred_fallthru
          _
        %p435 = scmp.eq.s32.totalorder %s22, 0
        %p436 = pnand %p427, %p435
        %p437 = pneg %p436
        // Predicated region
        $region78: #{ssl_forward.84} parent=64 // pred_check
          _
        $region79: #{ssl_forward.84} parent=64 // pred_check_branch
          %439 = sbr.rel (%p436) target = $region81
        $region80: #{ssl_forward.84} parent=64 // pred_region
          %v440 = vld [vmem:[#allocation2] sm:$0xff]
          %v441 = vld [vmem:[#allocation2 + $0x8] sm:$0xff]
          %v442 = vadd.f32 %v440, %v441
          %v443 = vrot.slane %v442, 4
          %v444 = vadd.f32 %v442, %v443
          %v445 = vrot.slane %v444, 2
          %v446 = vadd.f32 %v444, %v445
          %v447 = vrot.slane %v446, 1
          %v448 = vadd.f32 %v446, %v447
          %449 = vst [vmem:[%s325] sm:$0x1] %v448
          %v450 = vmul.f32 %v440, %v440
          %v451 = vmul.f32 %v441, %v441
          %v452 = vadd.f32 %v450, %v451
          %v453 = vrot.slane %v452, 4
          %v454 = vadd.f32 %v452, %v453
          %v455 = vrot.slane %v454, 2
          %v456 = vadd.f32 %v454, %v455
          %v457 = vrot.slane %v456, 1
          %v458 = vadd.f32 %v456, %v457
          %459 = vst [vmem:[%s328] sm:$0x1] %v458
        $region81: #{ssl_forward.84} parent=64 // pred_fallthru
          _
        %p460 = scmp.gt.s32.totalorder %s22, 0
        %p461 = pnand %p427, %p460
        %p462 = pneg %p461
        // Predicated region
        $region82: #{ssl_forward.84} parent=64 // pred_check
          _
        $region83: #{ssl_forward.84} parent=64 // pred_check_branch
          %464 = sbr.rel (%p461) target = $region85
        $region84: #{ssl_forward.84} parent=64 // pred_region
          %v465 = vld [vmem:[#allocation2] sm:$0xff]
          %v466 = vld [vmem:[#allocation2 + $0x8] sm:$0xff]
          %v467 = vld [vmem:[%s325] sm:$0x1]
          %v468 = vadd.f32 %v465, %v466
          %v469 = vrot.slane %v468, 4
          %v470 = vadd.f32 %v468, %v469
          %v471 = vrot.slane %v470, 2
          %v472 = vadd.f32 %v470, %v471
          %v473 = vrot.slane %v472, 1
          %v474 = vadd.f32 %v472, %v473
          %v475 = vadd.f32 %v467, %v474
          %476 = vst [vmem:[%s325] sm:$0x1] %v475
          %v477 = vld [vmem:[%s328] sm:$0x1]
          %v478 = vmul.f32 %v465, %v465
          %v479 = vmul.f32 %v466, %v466
          %v480 = vadd.f32 %v478, %v479
          %v481 = vrot.slane %v480, 4
          %v482 = vadd.f32 %v480, %v481
          %v483 = vrot.slane %v482, 2
          %v484 = vadd.f32 %v482, %v483
          %v485 = vrot.slane %v484, 1
          %v486 = vadd.f32 %v484, %v485
          %v487 = vadd.f32 %v477, %v486
          %488 = vst [vmem:[%s328] sm:$0x1] %v487
        $region85: #{ssl_forward.84} parent=64 // pred_fallthru
          _
        %s489 = smul.u32 2, %s22
        %p490 = scmp.lt.s32.totalorder %s489, 1
        %s491 = scalar_select %p490, %s489, 1
        %p492 = scmp.lt.s32.totalorder %s21, 0
        %s493 = scalar_select %p492, %s21, 0
        %s494 = sadd.s32 %s493, %s491
        %s495 = smul.addr %s494, 8
        %s496 = scalar_lea.vmem %s2, %s495
        %p497 = scmp.lt.s32.totalorder %s21, 0
        %s498 = scalar_select %p497, %s21, 0
        %s499 = scalar_lea.vmem %s3, %s498
        %p500 = scmp.lt.s32.totalorder %s21, 0
        %s501 = scalar_select %p500, %s21, 0
        %s502 = scalar_lea.vmem %s4, %s501
        // Predicated region
        $region86: #{ssl_forward.84} parent=64 // pred_check
          %p503 = pneg %p111
        $region87: #{ssl_forward.84} parent=64 // pred_check_branch
          %505 = sbr.rel (%p503) target = $region89
        $region88: #{ssl_forward.84} parent=64 // pred_region
          %s506 = smul.u32 2, %s22
        $region89: #{ssl_forward.84} parent=64 // pred_fallthru
          _
        // Predicated region
        $region90: #{ssl_forward.84} parent=64 // pred_check
          %p507 = pneg %p137
        $region91: #{ssl_forward.84} parent=64 // pred_check_branch
          %509 = sbr.rel (%p507) target = $region93
        $region92: #{ssl_forward.84} parent=64 // pred_region
          _
        $region93: #{ssl_forward.84} parent=64 // pred_fallthru
          _
        // Predicated region
        $region94: #{ssl_forward.84} parent=64 // pred_check
          %p510 = pneg %p163
        $region95: #{ssl_forward.84} parent=64 // pred_check_branch
          %512 = sbr.rel (%p510) target = $region97
        $region96: #{ssl_forward.84} parent=64 // pred_region
          _
        $region97: #{ssl_forward.84} parent=64 // pred_fallthru
          _
        // Predicated region
        $region98: #{ssl_forward.84} parent=64 // pred_check
          %p513 = pneg %p111
        $region99: #{ssl_forward.84} parent=64 // pred_check_branch
          %515 = sbr.rel (%p513) target = $region101
        $region100: #{ssl_forward.84} parent=64 // pred_region
          %s516 = smul.u32 2, %s22
          %p517 = scmp.lt.s32.totalorder %s516, 1
          %s518 = scalar_select %p517, %s516, 1
          %p519 = scmp.lt.s32.totalorder %s21, 0
          %s520 = scalar_select %p519, %s21, 0
          %s521 = sadd.s32 %s520, %s518
          %s522 = smul.addr %s521, 8
          %s523 = scalar_lea.vmem %s2, %s522
        $region101: #{ssl_forward.84} parent=64 // pred_fallthru
          _
        // Predicated region
        $region102: #{ssl_forward.84} parent=64 // pred_check
          %p524 = pneg %p137
        $region103: #{ssl_forward.84} parent=64 // pred_check_branch
          %526 = sbr.rel (%p524) target = $region105
        $region104: #{ssl_forward.84} parent=64 // pred_region
          %p527 = scmp.lt.s32.totalorder %s21, 0
          %s528 = scalar_select %p527, %s21, 0
          %s529 = scalar_lea.vmem %s3, %s528
        $region105: #{ssl_forward.84} parent=64 // pred_fallthru
          _
        // Predicated region
        $region106: #{ssl_forward.84} parent=64 // pred_check
          %p530 = pneg %p163
        $region107: #{ssl_forward.84} parent=64 // pred_check_branch
          %532 = sbr.rel (%p530) target = $region109
        $region108: #{ssl_forward.84} parent=64 // pred_region
          %p533 = scmp.lt.s32.totalorder %s21, 0
          %s534 = scalar_select %p533, %s21, 0
          %s535 = scalar_lea.vmem %s4, %s534
        $region109: #{ssl_forward.84} parent=64 // pred_fallthru
          _
      $region65: #{ssl_forward.84} parent=5 // pred_fallthru
        _
      %p536 = scmp.le.s32.totalorder 2, %s11
      // Predicated region
      $region110: #{ssl_forward.84} parent=5 // pred_check
        %p537 = pneg %p536
      $region111: #{ssl_forward.84} parent=5 // pred_check_branch
        %539 = sbr.rel (%p537) target = $region113
      $region112: #{ssl_forward.84} parent=5 // pred_region
        %s540 = ssub.s32 %s11, 2
      $region113: #{ssl_forward.84} parent=5 // pred_fallthru
        _
    $region6: #{ssl_forward.84} parent=1 // loop_footer
      %s15 = sadd.s32 1, %s11
    $region7: #{ssl_forward.84} parent=1 // loop_footer_branch
      %10 = sbr.rel target = $region3
    $region8: #{ssl_forward.84} parent=1 // loop_exit
      _

// kernel: ssl_forward.86
$region0: #{ssl_forward.86}
  #allocation0 [shape = 'u32[]', space=smem, size = 0x4, offset = 0x4, fixed_abs, tag = 'smem constant byte address 0x4 - core index']
  #allocation1 [shape = 'u32[72,128]{1,0:T(1,128)}', space=vmem, size = 0x9000, scoped, tag = 'internal scratch']
  #allocation2 [shape = 'f32[16,128]{1,0:T(8,128)}', space=vmem, size = 0x2000, scoped, tag = 'scratch operand']
  %s0 = inlined_call_operand.vmem [shape: bf16[16,1152], index: 0, kind: input, shape index: {}]
  %s1 = inlined_call_operand.vmem [shape: bf16[1152,128], index: 1, kind: input, shape index: {}]
  %s2 = inlined_call_operand.vmem [shape: f32[16,128], index: 2, kind: output, shape index: {0}]
  %s3 = inlined_call_operand.vmem [shape: f32[1,128], index: 3, kind: output, shape index: {1}]
  %s4 = inlined_call_operand.vmem [shape: f32[1,128], index: 4, kind: output, shape index: {2}]
  %5 = xla_tuple %s2, %s3, %s4
  %s6 = sld [smem:[#allocation0]]
  $region114: #{ssl_forward.86} parent=0
    _
  %s8 = ssub.s32 1, %s6
  %s9 = scalar_select 0, %s8, %s6
  $region1: #{ssl_forward.86} parent=0
    #allocation3 [shape = 'u8[8192]{0}', space=vmem, size = 0x2000, scoped, tag = 'input window, operand 0']
    loop: start=0, step=1, limit=11
    $region2: #{ssl_forward.86} parent=1 // loop_pre_header
      _
    $region3: #{ssl_forward.86} parent=1 // loop_header
      %s11 = sphi 0, %s15
      %p12 = scmp.ge.s32.totalorder %s11, 11
      %s18 = sphi 0, %s37
      %s19 = sphi 0, %s33
      %s20 = sphi 0, %s29
      %s21 = sphi 0, %s18
      %s22 = sphi 0, %s19
      %s23 = sphi 0, %s20
      %s24 = sphi 0, %s21
      %s25 = sphi 0, %s22
      %s26 = sphi 0, %s23
      %s42 = sphi 0, %s44
      %s45 = sphi 0, %s42
      %s46 = sphi 0, %s45
      %s62 = sphi 0, %s46
      %s70 = sphi 0, %s72
      %s73 = sphi 0, %s70
      %s74 = sphi 0, %s73
      %s90 = sphi 0, %s74
      %s98 = sphi 0, %s100
      %s101 = sphi 0, %s98
      %s102 = sphi 0, %s101
      %s118 = sphi 0, %s102
      %s124 = sphi 0, %s126
      %s127 = sphi 0, %s124
      %s128 = sphi 0, %s127
      %s144 = sphi 0, %s128
      %s150 = sphi 0, %s152
      %s153 = sphi 0, %s150
      %s154 = sphi 0, %s153
      %s170 = sphi 0, %s154
    $region4: #{ssl_forward.86} parent=1 // loop_header_branch
      %14 = sbr.rel (%p12) target = $region8
    $region5: #{ssl_forward.86} parent=1 // loop_body
      %s16 = ssub.s32 %s11, 1
      %s17 = ssub.s32 %s11, 2
      %s27 = sadd.s32 1, %s20
      %p28 = scmp.ge.s32.totalorder %s27, 9
      %s29 = scalar_select %p28, 0, %s27
      %s30 = sadd.s32 1, %s19
      %s31 = scalar_select %p28, %s30, %s19
      %p32 = scmp.ge.s32.totalorder %s31, 1
      %s33 = scalar_select %p32, 0, %s31
      %s34 = sadd.s32 1, %s18
      %s35 = scalar_select %p32, %s34, %s18
      %p36 = scmp.ge.s32.totalorder %s35, 1
      %s37 = scalar_select %p36, 0, %s35
      %s38 = ssub.s32 %s19, %s33
      %s39 = ssub.s32 %s20, %s29
      %s40 = sor.u32 %s38, %s39
      %p41 = scmp.eq.s32.totalorder %s40, 0
      %s43 = sadd.s32 %s42, 1
      %s44 = scalar_select %p41, %s42, %s43
      %p47 = pneg %p41
      %p48 = scmp.eq.s32.totalorder %s11, 8
      %p49 = por %p47, %p48
      %p50 = scmp.ne.s32.totalorder %s42, %s45
      %p51 = scmp.eq.s32.totalorder %s11, 0
      %p52 = por %p50, %p51
      %p53 = scmp.ne.s32.totalorder %s42, %s45
      %p54 = scmp.eq.s32.totalorder %s16, 8
      %p55 = por %p53, %p54
      %p56 = scmp.ne.s32.totalorder %s45, %s46
      %p57 = scmp.eq.s32.totalorder %s16, 0
      %p58 = por %p56, %p57
      %p59 = scmp.ne.s32.totalorder %s45, %s46
      %p60 = scmp.eq.s32.totalorder %s17, 8
      %p61 = por %p59, %p60
      %p63 = scmp.ne.s32.totalorder %s46, %s62
      %p64 = scmp.eq.s32.totalorder %s17, 0
      %p65 = por %p63, %p64
      %s66 = ssub.s32 %s20, %s29
      %s67 = ssub.s32 %s18, %s37
      %s68 = sor.u32 %s66, %s67
      %p69 = scmp.eq.s32.totalorder %s68, 0
      %s71 = sadd.s32 %s70, 1
      %s72 = scalar_select %p69, %s70, %s71
      %p75 = pneg %p69
      %p76 = scmp.eq.s32.totalorder %s11, 8
      %p77 = por %p75, %p76
      %p78 = scmp.ne.s32.totalorder %s70, %s73
      %p79 = scmp.eq.s32.totalorder %s11, 0
      %p80 = por %p78, %p79
      %p81 = scmp.ne.s32.totalorder %s70, %s73
      %p82 = scmp.eq.s32.totalorder %s16, 8
      %p83 = por %p81, %p82
      %p84 = scmp.ne.s32.totalorder %s73, %s74
      %p85 = scmp.eq.s32.totalorder %s16, 0
      %p86 = por %p84, %p85
      %p87 = scmp.ne.s32.totalorder %s73, %s74
      %p88 = scmp.eq.s32.totalorder %s17, 8
      %p89 = por %p87, %p88
      %p91 = scmp.ne.s32.totalorder %s74, %s90
      %p92 = scmp.eq.s32.totalorder %s17, 0
      %p93 = por %p91, %p92
      %s94 = ssub.s32 %s19, %s33
      %s95 = ssub.s32 %s18, %s37
      %s96 = sor.u32 %s94, %s95
      %p97 = scmp.eq.s32.totalorder %s96, 0
      %s99 = sadd.s32 %s98, 1
      %s100 = scalar_select %p97, %s98, %s99
      %p103 = pneg %p97
      %p104 = scmp.eq.s32.totalorder %s11, 8
      %p105 = por %p103, %p104
      %p106 = scmp.ne.s32.totalorder %s98, %s101
      %p107 = scmp.eq.s32.totalorder %s11, 0
      %p108 = por %p106, %p107
      %p109 = scmp.ne.s32.totalorder %s98, %s101
      %p110 = scmp.eq.s32.totalorder %s16, 8
      %p111 = por %p109, %p110
      %p112 = scmp.ne.s32.totalorder %s101, %s102
      %p113 = scmp.eq.s32.totalorder %s16, 0
      %p114 = por %p112, %p113
      %p115 = scmp.ne.s32.totalorder %s101, %s102
      %p116 = scmp.eq.s32.totalorder %s17, 8
      %p117 = por %p115, %p116
      %p119 = scmp.ne.s32.totalorder %s102, %s118
      %p120 = scmp.eq.s32.totalorder %s17, 0
      %p121 = por %p119, %p120
      %s122 = ssub.s32 %s18, %s37
      %p123 = scmp.eq.s32.totalorder %s122, 0
      %s125 = sadd.s32 %s124, 1
      %s126 = scalar_select %p123, %s124, %s125
      %p129 = pneg %p123
      %p130 = scmp.eq.s32.totalorder %s11, 8
      %p131 = por %p129, %p130
      %p132 = scmp.ne.s32.totalorder %s124, %s127
      %p133 = scmp.eq.s32.totalorder %s11, 0
      %p134 = por %p132, %p133
      %p135 = scmp.ne.s32.totalorder %s124, %s127
      %p136 = scmp.eq.s32.totalorder %s16, 8
      %p137 = por %p135, %p136
      %p138 = scmp.ne.s32.totalorder %s127, %s128
      %p139 = scmp.eq.s32.totalorder %s16, 0
      %p140 = por %p138, %p139
      %p141 = scmp.ne.s32.totalorder %s127, %s128
      %p142 = scmp.eq.s32.totalorder %s17, 8
      %p143 = por %p141, %p142
      %p145 = scmp.ne.s32.totalorder %s128, %s144
      %p146 = scmp.eq.s32.totalorder %s17, 0
      %p147 = por %p145, %p146
      %s148 = ssub.s32 %s18, %s37
      %p149 = scmp.eq.s32.totalorder %s148, 0
      %s151 = sadd.s32 %s150, 1
      %s152 = scalar_select %p149, %s150, %s151
      %p155 = pneg %p149
      %p156 = scmp.eq.s32.totalorder %s11, 8
      %p157 = por %p155, %p156
      %p158 = scmp.ne.s32.totalorder %s150, %s153
      %p159 = scmp.eq.s32.totalorder %s11, 0
      %p160 = por %p158, %p159
      %p161 = scmp.ne.s32.totalorder %s150, %s153
      %p162 = scmp.eq.s32.totalorder %s16, 8
      %p163 = por %p161, %p162
      %p164 = scmp.ne.s32.totalorder %s153, %s154
      %p165 = scmp.eq.s32.totalorder %s16, 0
      %p166 = por %p164, %p165
      %p167 = scmp.ne.s32.totalorder %s153, %s154
      %p168 = scmp.eq.s32.totalorder %s17, 8
      %p169 = por %p167, %p168
      %p171 = scmp.ne.s32.totalorder %s154, %s170
      %p172 = scmp.eq.s32.totalorder %s17, 0
      %p173 = por %p171, %p172
      %p174 = scmp.le.s32.totalorder 1, %s11
      %p175 = scmp.lt.s32.totalorder %s11, 10
      %p176 = pnand %p174, %p175
      %p177 = pneg %p176
      // Predicated region
      $region9: #{ssl_forward.86} parent=5 // pred_check
        _
      $region10: #{ssl_forward.86} parent=5 // pred_check_branch
        %179 = sbr.rel (%p176) target = $region12
      $region11: #{ssl_forward.86} parent=5 // pred_region
        %s180 = ssub.s32 %s11, 1
      $region12: #{ssl_forward.86} parent=5 // pred_fallthru
        _
      %p181 = scmp.lt.s32.totalorder %s11, 9
      // Predicated region
      $region13: #{ssl_forward.86} parent=5 // pred_check
        %p182 = pneg %p181
      $region14: #{ssl_forward.86} parent=5 // pred_check_branch
        %184 = sbr.rel (%p182) target = $region16
      $region15: #{ssl_forward.86} parent=5 // pred_region
        // Predicated region
        $region17: #{ssl_forward.86} parent=15 // pred_check
          %p185 = pneg %p52
        $region18: #{ssl_forward.86} parent=15 // pred_check_branch
          %187 = sbr.rel (%p185) target = $region20
        $region19: #{ssl_forward.86} parent=15 // pred_region
          %s188 = sand.u32 %s42, 1
          %s189 = sand.u32 %s42, 1
          %s190 = smul.addr %s189, 8
          %s191 = scalar_lea.vmem [#allocation3], %s190
          %s192 = smul.u32 2, %s19
          %s193 = smul.addr %s192, 9
          %s194 = sadd.s32 %s20, %s193
          %s195 = smul.addr %s194, 4
          %s196 = scalar_lea.vmem %s0, %s195
          // Predicated region
          $region21: #{ssl_forward.86} parent=19 // pred_check
            _
          $region22: #{ssl_forward.86} parent=19 // pred_check_branch
            %198 = sbr.rel (0) target = $region24
          $region23: #{ssl_forward.86} parent=19 // pred_region
            // Predicated region
            $region25: #{ssl_forward.86} parent=23 // pred_check
              _
            $region26: #{ssl_forward.86} parent=23 // pred_check_branch
              %200 = sbr.rel target = $region28
            $region27: #{ssl_forward.86} parent=23 // pred_region
              // Predicated region
              $region40: #{ssl_forward.86} parent=27 // pred_check
                _
              $region41: #{ssl_forward.86} parent=27 // pred_check_branch
                %218 = sbr.rel (0) target = $region43
              $region42: #{ssl_forward.86} parent=27 // pred_region
                loop: start=0, step=1, limit=1
                $region44: #{ssl_forward.86} parent=42 // loop_pre_header
                  _
                $region45: #{ssl_forward.86} parent=42 // loop_header
                  %s220 = sphi 0, %s224
                  %p221 = scmp.ge.s32.totalorder %s220, 1
                  %s225 = sphi %s196, %s196
                  %s226 = sphi %s191, %s191
                $region46: #{ssl_forward.86} parent=42 // loop_header_branch
                  %223 = sbr.rel (%p221) target = $region50
                $region47: #{ssl_forward.86} parent=42 // loop_body
                  _
                $region48: #{ssl_forward.86} parent=42 // loop_footer
                  %s224 = sadd.s32 1, %s220
                $region49: #{ssl_forward.86} parent=42 // loop_footer_branch
                  %219 = sbr.rel target = $region45
                $region50: #{ssl_forward.86} parent=42 // loop_exit
                  _
                %s228 = ssub.s32 16, 1
                loop: start=0, step=1, limit=1
                $region51: #{ssl_forward.86} parent=42 // loop_pre_header
                  _
                $region52: #{ssl_forward.86} parent=42 // loop_header
                  %s230 = sphi 0, %s234
                  %p231 = scmp.ge.s32.totalorder %s230, 1
                  %s235 = sphi %s196, %s196
                  %s236 = sphi %s191, %s191
                $region53: #{ssl_forward.86} parent=42 // loop_header_branch
                  %233 = sbr.rel (%p231) target = $region57
                $region54: #{ssl_forward.86} parent=42 // loop_body
                  %v237 = vld [vmem:[%s235] sm:%s228]
                  %238 = vst [vmem:[%s236] sm:%s228] %v237
                  %v239 = vld [vmem:[%s235 + $0x24] sm:%s228]
                  %240 = vst [vmem:[%s236 + $0x4] sm:%s228] %v239
                $region55: #{ssl_forward.86} parent=42 // loop_footer
                  %s234 = sadd.s32 1, %s230
                $region56: #{ssl_forward.86} parent=42 // loop_footer_branch
                  %229 = sbr.rel target = $region52
                $region57: #{ssl_forward.86} parent=42 // loop_exit
                  _
              $region43: #{ssl_forward.86} parent=27 // pred_fallthru
                _
            $region28: #{ssl_forward.86} parent=23 // pred_fallthru
              _
            // Predicated region
            $region29: #{ssl_forward.86} parent=23 // pred_check
              _
            $region30: #{ssl_forward.86} parent=23 // pred_check_branch
              %202 = sbr.rel (0) target = $region32
            $region31: #{ssl_forward.86} parent=23 // pred_region
              %s204 = ssub.s32 16, 1
              loop: start=0, step=1, limit=1
              $region33: #{ssl_forward.86} parent=31 // loop_pre_header
                _
              $region34: #{ssl_forward.86} parent=31 // loop_header
                %s206 = sphi 0, %s210
                %p207 = scmp.ge.s32.totalorder %s206, 1
                %s211 = sphi %s196, %s196
                %s212 = sphi %s191, %s191
              $region35: #{ssl_forward.86} parent=31 // loop_header_branch
                %209 = sbr.rel (%p207) target = $region39
              $region36: #{ssl_forward.86} parent=31 // loop_body
                %v213 = vld [vmem:[%s211] sm:%s204]
                %214 = vst [vmem:[%s212] sm:%s204] %v213
                %v215 = vld [vmem:[%s211 + $0x24] sm:%s204]
                %216 = vst [vmem:[%s212 + $0x4] sm:%s204] %v215
              $region37: #{ssl_forward.86} parent=31 // loop_footer
                %s210 = sadd.s32 1, %s206
              $region38: #{ssl_forward.86} parent=31 // loop_footer_branch
                %205 = sbr.rel target = $region34
              $region39: #{ssl_forward.86} parent=31 // loop_exit
                _
            $region32: #{ssl_forward.86} parent=23 // pred_fallthru
              _
          $region24: #{ssl_forward.86} parent=19 // pred_fallthru
            _
          %241 = vnop
        $region20: #{ssl_forward.86} parent=15 // pred_fallthru
          _
        // Predicated region
        $region58: #{ssl_forward.86} parent=15 // pred_check
          %p242 = pneg %p80
        $region59: #{ssl_forward.86} parent=15 // pred_check_branch
          %244 = sbr.rel (%p242) target = $region61
        $region60: #{ssl_forward.86} parent=15 // pred_region
          %s245 = smul.u32 16, %s20
          %p246 = scmp.lt.s32.totalorder %s245, 143
          %s247 = scalar_select %p246, %s245, 143
          %p248 = scmp.lt.s32.totalorder %s18, 0
          %s249 = scalar_select %p248, %s18, 0
          %s250 = sadd.s32 %s249, %s247
          %s251 = smul.addr %s250, 4
          %s252 = scalar_lea.vmem %s1, %s251
          %s253 = smul.u32 16, %s20
        $region61: #{ssl_forward.86} parent=15 // pred_fallthru
          _
      $region16: #{ssl_forward.86} parent=5 // pred_fallthru
        _
      %p254 = scmp.le.s32.totalorder 1, %s11
      %p255 = scmp.lt.s32.totalorder %s11, 10
      %p256 = pnand %p254, %p255
      %p257 = pneg %p256
      // Predicated region
      $region62: #{ssl_forward.86} parent=5 // pred_check
        _
      $region63: #{ssl_forward.86} parent=5 // pred_check_branch
        %259 = sbr.rel (%p256) target = $region65
      $region64: #{ssl_forward.86} parent=5 // pred_region
        %s260 = ssub.s32 %s11, 1
        %s261 = sand.u32 %s45, 1
        %s262 = sand.u32 %s45, 1
        %s263 = smul.addr %s262, 8
        %s264 = scalar_lea.vmem [#allocation3], %s263
        // Predicated region
        $region66: #{ssl_forward.86} parent=64 // pred_check
          %p265 = pneg %p58
        $region67: #{ssl_forward.86} parent=64 // pred_check_branch
          %267 = sbr.rel (%p265) target = $region69
        $region68: #{ssl_forward.86} parent=64 // pred_region
          _
        $region69: #{ssl_forward.86} parent=64 // pred_fallthru
          _
        %s268 = sand.u32 %s45, 1
        %s269 = sand.u32 %s45, 1
        %s270 = smul.addr %s269, 8
        %s271 = scalar_lea.vmem [#allocation3], %s270
        %p272 = pneg %p58
        %p273 = pneg %p55
        %s274 = smul.u32 16, %s23
        %p275 = scmp.lt.s32.totalorder %s274, 143
        %s276 = scalar_select %p275, %s274, 143
        %p277 = scmp.lt.s32.totalorder %s21, 0
        %s278 = scalar_select %p277, %s21, 0
        %s279 = sadd.s32 %s278, %s276
        %s280 = smul.addr %s279, 4
        %s281 = scalar_lea.vmem %s1, %s280
        %p282 = pneg %p86
        %p283 = pneg %p83
        %p284 = pneg %p114
        %p285 = pneg %p111
        %s286 = smul.u32 2, %s22
        %p287 = scmp.lt.s32.totalorder %s286, 1
        %s288 = scalar_select %p287, %s286, 1
        %p289 = scmp.lt.s32.totalorder %s21, 0
        %s290 = scalar_select %p289, %s21, 0
        %s291 = sadd.s32 %s290, %s288
        %s292 = smul.addr %s291, 8
        %s293 = scalar_lea.vmem %s2, %s292
        %p294 = pneg %p140
        %p295 = pneg %p137
        %p296 = scmp.lt.s32.totalorder %s21, 0
        %s297 = scalar_select %p296, %s21, 0
        %s298 = scalar_lea.vmem %s3, %s297
        %p299 = pneg %p166
        %p300 = pneg %p163
        %p301 = scmp.lt.s32.totalorder %s21, 0
        %s302 = scalar_select %p301, %s21, 0
        %s303 = scalar_lea.vmem %s4, %s302
        %s304 = smul.u32 2, %s22
        %s305 = smul.u32 16, %s23
        %p306 = scmp.lt.s32.totalorder %s305, 143
        %s307 = scalar_select %p306, %s305, 143
        %p308 = scmp.lt.s32.totalorder %s21, 0
        %s309 = scalar_select %p308, %s21, 0
        %s310 = sadd.s32 %s309, %s307
        %s311 = smul.addr %s310, 4
        %s312 = scalar_lea.vmem %s1, %s311
        %s313 = smul.u32 16, %s23
        %s314 = smul.u32 2, %s22
        %p315 = scmp.lt.s32.totalorder %s314, 1
        %s316 = scalar_select %p315, %s314, 1
        %p317 = scmp.lt.s32.totalorder %s21, 0
        %s318 = scalar_select %p317, %s21, 0
        %s319 = sadd.s32 %s318, %s316
        %s320 = smul.addr %s319, 8
        %s321 = scalar_lea.vmem %s2, %s320
        %s322 = smul.u32 2, %s22
        %p323 = scmp.lt.s32.totalorder %s21, 0
        %s324 = scalar_select %p323, %s21, 0
        %s325 = scalar_lea.vmem %s3, %s324
        %p326 = scmp.lt.s32.totalorder %s21, 0
        %s327 = scalar_select %p326, %s21, 0
        %s328 = scalar_lea.vmem %s4, %s327
        %p329 = scmp.eq.s32.totalorder %s23, 0
        // Predicated region
        $region70: #{ssl_forward.86} parent=64 // pred_check
          %p330 = pneg %p329
        $region71: #{ssl_forward.86} parent=64 // pred_check_branch
          %332 = sbr.rel (%p330) target = $region73
        $region72: #{ssl_forward.86} parent=64 // pred_region
          %333 = vst [vmem:[#allocation2] sm:$0xff] 0.0
          %334 = vst [vmem:[#allocation2 + $0x8] sm:$0xff] 0.0
        $region73: #{ssl_forward.86} parent=64 // pred_fallthru
          _
        %v335 = vld [vmem:[#allocation2] sm:$0xff]
        %v336 = vld [vmem:[#allocation2 + $0x8] sm:$0xff]
        %v337 = vld [vmem:[%s264] sm:$0xf]
        %v338 = vld [vmem:[%s264 + $0x4] sm:$0xf]
        %v339 = vld [vmem:[%s312] sm:$0xf]
        %v340 = vld [vmem:[%s312 + $0x4] sm:$0xf]
        %v341 = vld [vmem:[%s312 + $0x8] sm:$0xf]
        %v342 = vld [vmem:[%s312 + $0xc] sm:$0xf]
        %v343 = vld [vmem:[%s312 + $0x10] sm:$0xf]
        %v344 = vld [vmem:[%s312 + $0x14] sm:$0xf]
        %v345 = vld [vmem:[%s312 + $0x18] sm:$0xf]
        %v346 = vld [vmem:[%s312 + $0x1c] sm:$0xf]
        %v347 = vld [vmem:[%s312 + $0x20] sm:$0xf]
        %v348 = vld [vmem:[%s312 + $0x24] sm:$0xf]
        %v349 = vld [vmem:[%s312 + $0x28] sm:$0xf]
        %v350 = vld [vmem:[%s312 + $0x2c] sm:$0xf]
        %v351 = vld [vmem:[%s312 + $0x30] sm:$0xf]
        %v352 = vld [vmem:[%s312 + $0x34] sm:$0xf]
        %v353 = vld [vmem:[%s312 + $0x38] sm:$0xf]
        %v354 = vld [vmem:[%s312 + $0x3c] sm:$0xf]
        %v357 = vunpack.c.l.b16 %v337
        %v358 = vunpack.c.l.b16 %v338
        %v359 = vpack.c.b16 %v358, %v357
        %v377 = vunpack.c.l.b16 %v339
        %v378 = vunpack.c.l.b16 %v340
        %v379 = vunpack.c.l.b16 %v341
        %v380 = vunpack.c.l.b16 %v342
        %v381 = vunpack.c.l.b16 %v343
        %v382 = vunpack.c.l.b16 %v344
        %v383 = vunpack.c.l.b16 %v345
        %v384 = vunpack.c.l.b16 %v346
        %v385 = vunpack.c.l.b16 %v347
        %v386 = vunpack.c.l.b16 %v348
        %v387 = vunpack.c.l.b16 %v349
        %v388 = vunpack.c.l.b16 %v350
        %v389 = vunpack.c.l.b16 %v351
        %v390 = vunpack.c.l.b16 %v352
        %v391 = vunpack.c.l.b16 %v353
        %v392 = vunpack.c.l.b16 %v354
        %v393 = vpack.c.b16 %v378, %v377
        %v394 = vpack.c.b16 %v380, %v379
        %v395 = vpack.c.b16 %v382, %v381
        %v396 = vpack.c.b16 %v384, %v383
        %v397 = vpack.c.b16 %v386, %v385
        %v398 = vpack.c.b16 %v388, %v387
        %v399 = vpack.c.b16 %v390, %v389
        %v400 = vpack.c.b16 %v392, %v391
        %409 = vmatpush.bf16.msra.mxu0 %v400
        %410 = vmatpush.bf16.msra.mxu0 %v399
        %411 = vmatpush.bf16.msra.mxu0 %v398
        %412 = vmatpush.bf16.msra.mxu0 %v397
        %413 = vmatpush.bf16.msra.mxu0 %v396
        %414 = vmatpush.bf16.msra.mxu0 %v395
        %415 = vmatpush.bf16.msra.mxu0 %v394
        %416 = vmatpush.bf16.msra.mxu0 %v393
        %417 = vmatmul.bf16.gmra.mxu0 %v359
        %v418 = vpop.f32.mrf.mxu0
        %v419 = vadd.f32 0.0, %v418
        %v420 = vpop.f32.mrf.mxu0
        %v421 = vadd.f32 0.0, %v420
        %422 = vdwg.mxu0
        %v423 = vadd.f32 %v335, %v419
        %v424 = vadd.f32 %v336, %v421
        %425 = vst [vmem:[#allocation2] sm:$0xff] %v423
        %426 = vst [vmem:[#allocation2 + $0x8] sm:$0xff] %v424
        %p427 = scmp.eq.s32.totalorder %s23, 8
        // Predicated region
        $region74: #{ssl_forward.86} parent=64 // pred_check
          %p428 = pneg %p427
        $region75: #{ssl_forward.86} parent=64 // pred_check_branch
          %430 = sbr.rel (%p428) target = $region77
        $region76: #{ssl_forward.86} parent=64 // pred_region
          %v431 = vld [vmem:[#allocation2] sm:$0xff]
          %v432 = vld [vmem:[#allocation2 + $0x8] sm:$0xff]
          %433 = vst [vmem:[%s321] sm:$0xff] %v431
          %434 = vst [vmem:[%s321 + $0x8] sm:$0xff] %v432
        $region77: #{ssl_forward.86} parent=64 // pred_fallthru
          _
        %p435 = scmp.eq.s32.totalorder %s22, 0
        %p436 = pnand %p427, %p435
        %p437 = pneg %p436
        // Predicated region
        $region78: #{ssl_forward.86} parent=64 // pred_check
          _
        $region79: #{ssl_forward.86} parent=64 // pred_check_branch
          %439 = sbr.rel (%p436) target = $region81
        $region80: #{ssl_forward.86} parent=64 // pred_region
          %v440 = vld [vmem:[#allocation2] sm:$0xff]
          %v441 = vld [vmem:[#allocation2 + $0x8] sm:$0xff]
          %v442 = vadd.f32 %v440, %v441
          %v443 = vrot.slane %v442, 4
          %v444 = vadd.f32 %v442, %v443
          %v445 = vrot.slane %v444, 2
          %v446 = vadd.f32 %v444, %v445
          %v447 = vrot.slane %v446, 1
          %v448 = vadd.f32 %v446, %v447
          %449 = vst [vmem:[%s325] sm:$0x1] %v448
          %v450 = vmul.f32 %v440, %v440
          %v451 = vmul.f32 %v441, %v441
          %v452 = vadd.f32 %v450, %v451
          %v453 = vrot.slane %v452, 4
          %v454 = vadd.f32 %v452, %v453
          %v455 = vrot.slane %v454, 2
          %v456 = vadd.f32 %v454, %v455
          %v457 = vrot.slane %v456, 1
          %v458 = vadd.f32 %v456, %v457
          %459 = vst [vmem:[%s328] sm:$0x1] %v458
        $region81: #{ssl_forward.86} parent=64 // pred_fallthru
          _
        %p460 = scmp.gt.s32.totalorder %s22, 0
        %p461 = pnand %p427, %p460
        %p462 = pneg %p461
        // Predicated region
        $region82: #{ssl_forward.86} parent=64 // pred_check
          _
        $region83: #{ssl_forward.86} parent=64 // pred_check_branch
          %464 = sbr.rel (%p461) target = $region85
        $region84: #{ssl_forward.86} parent=64 // pred_region
          %v465 = vld [vmem:[#allocation2] sm:$0xff]
          %v466 = vld [vmem:[#allocation2 + $0x8] sm:$0xff]
          %v467 = vld [vmem:[%s325] sm:$0x1]
          %v468 = vadd.f32 %v465, %v466
          %v469 = vrot.slane %v468, 4
          %v470 = vadd.f32 %v468, %v469
          %v471 = vrot.slane %v470, 2
          %v472 = vadd.f32 %v470, %v471
          %v473 = vrot.slane %v472, 1
          %v474 = vadd.f32 %v472, %v473
          %v475 = vadd.f32 %v467, %v474
          %476 = vst [vmem:[%s325] sm:$0x1] %v475
          %v477 = vld [vmem:[%s328] sm:$0x1]
          %v478 = vmul.f32 %v465, %v465
          %v479 = vmul.f32 %v466, %v466
          %v480 = vadd.f32 %v478, %v479
          %v481 = vrot.slane %v480, 4
          %v482 = vadd.f32 %v480, %v481
          %v483 = vrot.slane %v482, 2
          %v484 = vadd.f32 %v482, %v483
          %v485 = vrot.slane %v484, 1
          %v486 = vadd.f32 %v484, %v485
          %v487 = vadd.f32 %v477, %v486
          %488 = vst [vmem:[%s328] sm:$0x1] %v487
        $region85: #{ssl_forward.86} parent=64 // pred_fallthru
          _
        %s489 = smul.u32 2, %s22
        %p490 = scmp.lt.s32.totalorder %s489, 1
        %s491 = scalar_select %p490, %s489, 1
        %p492 = scmp.lt.s32.totalorder %s21, 0
        %s493 = scalar_select %p492, %s21, 0
        %s494 = sadd.s32 %s493, %s491
        %s495 = smul.addr %s494, 8
        %s496 = scalar_lea.vmem %s2, %s495
        %p497 = scmp.lt.s32.totalorder %s21, 0
        %s498 = scalar_select %p497, %s21, 0
        %s499 = scalar_lea.vmem %s3, %s498
        %p500 = scmp.lt.s32.totalorder %s21, 0
        %s501 = scalar_select %p500, %s21, 0
        %s502 = scalar_lea.vmem %s4, %s501
        // Predicated region
        $region86: #{ssl_forward.86} parent=64 // pred_check
          %p503 = pneg %p111
        $region87: #{ssl_forward.86} parent=64 // pred_check_branch
          %505 = sbr.rel (%p503) target = $region89
        $region88: #{ssl_forward.86} parent=64 // pred_region
          %s506 = smul.u32 2, %s22
        $region89: #{ssl_forward.86} parent=64 // pred_fallthru
          _
        // Predicated region
        $region90: #{ssl_forward.86} parent=64 // pred_check
          %p507 = pneg %p137
        $region91: #{ssl_forward.86} parent=64 // pred_check_branch
          %509 = sbr.rel (%p507) target = $region93
        $region92: #{ssl_forward.86} parent=64 // pred_region
          _
        $region93: #{ssl_forward.86} parent=64 // pred_fallthru
          _
        // Predicated region
        $region94: #{ssl_forward.86} parent=64 // pred_check
          %p510 = pneg %p163
        $region95: #{ssl_forward.86} parent=64 // pred_check_branch
          %512 = sbr.rel (%p510) target = $region97
        $region96: #{ssl_forward.86} parent=64 // pred_region
          _
        $region97: #{ssl_forward.86} parent=64 // pred_fallthru
          _
        // Predicated region
        $region98: #{ssl_forward.86} parent=64 // pred_check
          %p513 = pneg %p111
        $region99: #{ssl_forward.86} parent=64 // pred_check_branch
          %515 = sbr.rel (%p513) target = $region101
        $region100: #{ssl_forward.86} parent=64 // pred_region
          %s516 = smul.u32 2, %s22
          %p517 = scmp.lt.s32.totalorder %s516, 1
          %s518 = scalar_select %p517, %s516, 1
          %p519 = scmp.lt.s32.totalorder %s21, 0
          %s520 = scalar_select %p519, %s21, 0
          %s521 = sadd.s32 %s520, %s518
          %s522 = smul.addr %s521, 8
          %s523 = scalar_lea.vmem %s2, %s522
        $region101: #{ssl_forward.86} parent=64 // pred_fallthru
          _
        // Predicated region
        $region102: #{ssl_forward.86} parent=64 // pred_check
          %p524 = pneg %p137
        $region103: #{ssl_forward.86} parent=64 // pred_check_branch
          %526 = sbr.rel (%p524) target = $region105
        $region104: #{ssl_forward.86} parent=64 // pred_region
          %p527 = scmp.lt.s32.totalorder %s21, 0
          %s528 = scalar_select %p527, %s21, 0
          %s529 = scalar_lea.vmem %s3, %s528
        $region105: #{ssl_forward.86} parent=64 // pred_fallthru
          _
        // Predicated region
        $region106: #{ssl_forward.86} parent=64 // pred_check
          %p530 = pneg %p163
        $region107: #{ssl_forward.86} parent=64 // pred_check_branch
          %532 = sbr.rel (%p530) target = $region109
        $region108: #{ssl_forward.86} parent=64 // pred_region
          %p533 = scmp.lt.s32.totalorder %s21, 0
          %s534 = scalar_select %p533, %s21, 0
          %s535 = scalar_lea.vmem %s4, %s534
        $region109: #{ssl_forward.86} parent=64 // pred_fallthru
          _
      $region65: #{ssl_forward.86} parent=5 // pred_fallthru
        _
      %p536 = scmp.le.s32.totalorder 2, %s11
      // Predicated region
      $region110: #{ssl_forward.86} parent=5 // pred_check
        %p537 = pneg %p536
      $region111: #{ssl_forward.86} parent=5 // pred_check_branch
        %539 = sbr.rel (%p537) target = $region113
      $region112: #{ssl_forward.86} parent=5 // pred_region
        %s540 = ssub.s32 %s11, 2
      $region113: #{ssl_forward.86} parent=5 // pred_fallthru
        _
    $region6: #{ssl_forward.86} parent=1 // loop_footer
      %s15 = sadd.s32 1, %s11
    $region7: #{ssl_forward.86} parent=1 // loop_footer_branch
      %10 = sbr.rel target = $region3
    $region8: #{ssl_forward.86} parent=1 // loop_exit
      _

// kernel: ssl_forward.66
$region0: #{ssl_forward.66}
  #allocation0 [shape = 'u32[]', space=smem, size = 0x4, offset = 0x4, fixed_abs, tag = 'smem constant byte address 0x4 - core index']
  #allocation1 [shape = 'u32[72,128]{1,0:T(1,128)}', space=vmem, size = 0x9000, scoped, tag = 'internal scratch']
  %s0 = inlined_call_operand.vmem [shape: f32[16,128], index: 0, kind: input, shape index: {}]
  %s1 = inlined_call_operand.vmem [shape: f32[1,128], index: 1, kind: input, shape index: {}]
  %s2 = inlined_call_operand.vmem [shape: f32[1,128], index: 2, kind: input, shape index: {}]
  %s3 = inlined_call_operand.vmem [shape: f32[16,128], index: 3, kind: input, shape index: {}]
  %s4 = inlined_call_operand.vmem [shape: f32[16,128], index: 4, kind: output, shape index: {}]
  %s5 = sld [smem:[#allocation0]]
  $region26: #{ssl_forward.66} parent=0
    _
  %s7 = ssub.s32 1, %s5
  %s8 = scalar_select 0, %s7, %s5
  // Predicated region
  $region2: #{ssl_forward.66} parent=0 // pred_check
    _
  $region3: #{ssl_forward.66} parent=0 // pred_check_branch
    %10 = sbr.rel (0) target = $region5
  $region4: #{ssl_forward.66} parent=0 // pred_region
    _
  $region5: #{ssl_forward.66} parent=0 // pred_fallthru
    _
  // Predicated region
  $region6: #{ssl_forward.66} parent=0 // pred_check
    _
  $region7: #{ssl_forward.66} parent=0 // pred_check_branch
    %12 = sbr.rel (0) target = $region9
  $region8: #{ssl_forward.66} parent=0 // pred_region
    _
  $region9: #{ssl_forward.66} parent=0 // pred_fallthru
    _
  // Predicated region
  $region10: #{ssl_forward.66} parent=0 // pred_check
    _
  $region11: #{ssl_forward.66} parent=0 // pred_check_branch
    %14 = sbr.rel (0) target = $region13
  $region12: #{ssl_forward.66} parent=0 // pred_region
    _
  $region13: #{ssl_forward.66} parent=0 // pred_fallthru
    _
  // Predicated region
  $region14: #{ssl_forward.66} parent=0 // pred_check
    _
  $region15: #{ssl_forward.66} parent=0 // pred_check_branch
    %16 = sbr.rel (0) target = $region17
  $region16: #{ssl_forward.66} parent=0 // pred_region
    _
  $region17: #{ssl_forward.66} parent=0 // pred_fallthru
    _
  %v17 = vld [vmem:[%s1] sm:$0x1]
  %v18 = vmul.f32 %v17, 0.125
  %v19 = vld [vmem:[%s2] sm:$0x1]
  %v20 = vmul.f32 %v19, 0.125
  %v21 = vmul.f32 %v18, %v18
  %v22 = vsub.f32 %v20, %v21
  %v23 = vld [vmem:[%s0] sm:$0xff]
  %v24 = vld [vmem:[%s0 + $0x8] sm:$0xff]
  %v26 = vperm.slane %v18, 0
  %v28 = vsub.f32 %v23, %v26
  %v29 = vsub.f32 %v24, %v26
  %v30 = vadd.f32 %v22, 1e-05
  %v31 = vrsqrt.pop %v30
  %v32 = vmul.f32 %v31, %v30
  %v33 = vmul.f32 %v32, %v31
  %v34 = vmul.f32 0.5, %v33
  %v35 = vsub.f32 1.5, %v34
  %v36 = vmul.f32 %v31, %v35
  %vm37 = vweird.f32 %v30
  %vm38 = vweird.f32 %v31
  %vm39 = vmor %vm37, %vm38
  %v40 = vsel %vm39, %v31, %v36
  %v42 = vperm.slane %v40, 0
  %v44 = vmul.f32 %v28, %v42
  %v45 = vmul.f32 %v29, %v42
  %v46 = vld [vmem:[%s3] sm:$0xff]
  %v47 = vld [vmem:[%s3 + $0x8] sm:$0xff]
  %v48 = vadd.f32 %v44, %v46
  %v49 = vadd.f32 %v45, %v47
  %v50 = vmax.f32 %v48, 0.0
  %v51 = vmax.f32 %v49, 0.0
  %52 = vst [vmem:[%s4] sm:$0xff] %v50
  %53 = vst [vmem:[%s4 + $0x8] sm:$0xff] %v51
  // Predicated region
  $region18: #{ssl_forward.66} parent=0 // pred_check
    _
  $region19: #{ssl_forward.66} parent=0 // pred_check_branch
    %55 = sbr.rel (0) target = $region21
  $region20: #{ssl_forward.66} parent=0 // pred_region
    _
  $region21: #{ssl_forward.66} parent=0 // pred_fallthru
    _
  // Predicated region
  $region22: #{ssl_forward.66} parent=0 // pred_check
    _
  $region23: #{ssl_forward.66} parent=0 // pred_check_branch
    %57 = sbr.rel (0) target = $region25
  $region24: #{ssl_forward.66} parent=0 // pred_region
    _
  $region25: #{ssl_forward.66} parent=0 // pred_fallthru
    _

// kernel: ssl_forward.96
$region0: #{ssl_forward.96}
  #allocation0 [shape = 'u32[]', space=smem, size = 0x4, offset = 0x4, fixed_abs, tag = 'smem constant byte address 0x4 - core index']
  #allocation1 [shape = 'u32[72,128]{1,0:T(1,128)}', space=vmem, size = 0x9000, scoped, tag = 'internal scratch']
  %s0 = inlined_call_operand.vmem [shape: f32[8,512], index: 0, kind: input, shape index: {}]
  %s1 = inlined_call_operand.vmem [shape: f32[512,128], index: 1, kind: input, shape index: {}]
  %s2 = inlined_call_operand.vmem [shape: f32[1,128], index: 2, kind: input, shape index: {}]
  %s3 = inlined_call_operand.vmem [shape: f32[128,512], index: 3, kind: input, shape index: {}]
  %s4 = inlined_call_operand.vmem [shape: f32[1,512], index: 4, kind: input, shape index: {}]
  %s5 = inlined_call_operand.vmem [shape: f32[8,512], index: 5, kind: output, shape index: {}]
  %s6 = sld [smem:[#allocation0]]
  $region30: #{ssl_forward.96} parent=0
    _
  %s8 = ssub.s32 1, %s6
  %s9 = scalar_select 0, %s8, %s6
  // Predicated region
  $region2: #{ssl_forward.96} parent=0 // pred_check
    _
  $region3: #{ssl_forward.96} parent=0 // pred_check_branch
    %11 = sbr.rel (0) target = $region5
  $region4: #{ssl_forward.96} parent=0 // pred_region
    _
  $region5: #{ssl_forward.96} parent=0 // pred_fallthru
    _
  // Predicated region
  $region6: #{ssl_forward.96} parent=0 // pred_check
    _
  $region7: #{ssl_forward.96} parent=0 // pred_check_branch
    %13 = sbr.rel (0) target = $region9
  $region8: #{ssl_forward.96} parent=0 // pred_region
    _
  $region9: #{ssl_forward.96} parent=0 // pred_fallthru
    _
  // Predicated region
  $region10: #{ssl_forward.96} parent=0 // pred_check
    _
  $region11: #{ssl_forward.96} parent=0 // pred_check_branch
    %15 = sbr.rel (0) target = $region13
  $region12: #{ssl_forward.96} parent=0 // pred_region
    _
  $region13: #{ssl_forward.96} parent=0 // pred_fallthru
    _
  // Predicated region
  $region14: #{ssl_forward.96} parent=0 // pred_check
    _
  $region15: #{ssl_forward.96} parent=0 // pred_check_branch
    %17 = sbr.rel (0) target = $region17
  $region16: #{ssl_forward.96} parent=0 // pred_region
    _
  $region17: #{ssl_forward.96} parent=0 // pred_fallthru
    _
  // Predicated region
  $region18: #{ssl_forward.96} parent=0 // pred_check
    _
  $region19: #{ssl_forward.96} parent=0 // pred_check_branch
    %19 = sbr.rel (0) target = $region21
  $region20: #{ssl_forward.96} parent=0 // pred_region
    _
  $region21: #{ssl_forward.96} parent=0 // pred_fallthru
    _
  %v20 = vld [vmem:[%s0] sm:$0xff]
  %v21 = vld [vmem:[%s0 + $0x8] sm:$0xff]
  %v22 = vld [vmem:[%s0 + $0x10] sm:$0xff]
  %v23 = vld [vmem:[%s0 + $0x18] sm:$0xff]
  %v24 = vld [vmem:[%s1] sm:$0xff]
  %v25 = vld [vmem:[%s1 + $0x8] sm:$0xff]
  %v26 = vld [vmem:[%s1 + $0x10] sm:$0xff]
  %v27 = vld [vmem:[%s1 + $0x18] sm:$0xff]
  %v28 = vld [vmem:[%s1 + $0x20] sm:$0xff]
  %v29 = vld [vmem:[%s1 + $0x28] sm:$0xff]
  %v30 = vld [vmem:[%s1 + $0x30] sm:$0xff]
  %v31 = vld [vmem:[%s1 + $0x38] sm:$0xff]
  %v32 = vld [vmem:[%s1 + $0x40] sm:$0xff]
  %v33 = vld [vmem:[%s1 + $0x48] sm:$0xff]
  %v34 = vld [vmem:[%s1 + $0x50] sm:$0xff]
  %v35 = vld [vmem:[%s1 + $0x58] sm:$0xff]
  %v36 = vld [vmem:[%s1 + $0x60] sm:$0xff]
  %v37 = vld [vmem:[%s1 + $0x68] sm:$0xff]
  %v38 = vld [vmem:[%s1 + $0x70] sm:$0xff]
  %v39 = vld [vmem:[%s1 + $0x78] sm:$0xff]
  %v40 = vld [vmem:[%s1 + $0x80] sm:$0xff]
  %v41 = vld [vmem:[%s1 + $0x88] sm:$0xff]
  %v42 = vld [vmem:[%s1 + $0x90] sm:$0xff]
  %v43 = vld [vmem:[%s1 + $0x98] sm:$0xff]
  %v44 = vld [vmem:[%s1 + $0xa0] sm:$0xff]
  %v45 = vld [vmem:[%s1 + $0xa8] sm:$0xff]
  %v46 = vld [vmem:[%s1 + $0xb0] sm:$0xff]
  %v47 = vld [vmem:[%s1 + $0xb8] sm:$0xff]
  %v48 = vld [vmem:[%s1 + $0xc0] sm:$0xff]
  %v49 = vld [vmem:[%s1 + $0xc8] sm:$0xff]
  %v50 = vld [vmem:[%s1 + $0xd0] sm:$0xff]
  %v51 = vld [vmem:[%s1 + $0xd8] sm:$0xff]
  %v52 = vld [vmem:[%s1 + $0xe0] sm:$0xff]
  %v53 = vld [vmem:[%s1 + $0xe8] sm:$0xff]
  %v54 = vld [vmem:[%s1 + $0xf0] sm:$0xff]
  %v55 = vld [vmem:[%s1 + $0xf8] sm:$0xff]
  %v56 = vld [vmem:[%s1 + $0x100] sm:$0xff]
  %v57 = vld [vmem:[%s1 + $0x108] sm:$0xff]
  %v58 = vld [vmem:[%s1 + $0x110] sm:$0xff]
  %v59 = vld [vmem:[%s1 + $0x118] sm:$0xff]
  %v60 = vld [vmem:[%s1 + $0x120] sm:$0xff]
  %v61 = vld [vmem:[%s1 + $0x128] sm:$0xff]
  %v62 = vld [vmem:[%s1 + $0x130] sm:$0xff]
  %v63 = vld [vmem:[%s1 + $0x138] sm:$0xff]
  %v64 = vld [vmem:[%s1 + $0x140] sm:$0xff]
  %v65 = vld [vmem:[%s1 + $0x148] sm:$0xff]
  %v66 = vld [vmem:[%s1 + $0x150] sm:$0xff]
  %v67 = vld [vmem:[%s1 + $0x158] sm:$0xff]
  %v68 = vld [vmem:[%s1 + $0x160] sm:$0xff]
  %v69 = vld [vmem:[%s1 + $0x168] sm:$0xff]
  %v70 = vld [vmem:[%s1 + $0x170] sm:$0xff]
  %v71 = vld [vmem:[%s1 + $0x178] sm:$0xff]
  %v72 = vld [vmem:[%s1 + $0x180] sm:$0xff]
  %v73 = vld [vmem:[%s1 + $0x188] sm:$0xff]
  %v74 = vld [vmem:[%s1 + $0x190] sm:$0xff]
  %v75 = vld [vmem:[%s1 + $0x198] sm:$0xff]
  %v76 = vld [vmem:[%s1 + $0x1a0] sm:$0xff]
  %v77 = vld [vmem:[%s1 + $0x1a8] sm:$0xff]
  %v78 = vld [vmem:[%s1 + $0x1b0] sm:$0xff]
  %v79 = vld [vmem:[%s1 + $0x1b8] sm:$0xff]
  %v80 = vld [vmem:[%s1 + $0x1c0] sm:$0xff]
  %v81 = vld [vmem:[%s1 + $0x1c8] sm:$0xff]
  %v82 = vld [vmem:[%s1 + $0x1d0] sm:$0xff]
  %v83 = vld [vmem:[%s1 + $0x1d8] sm:$0xff]
  %v84 = vld [vmem:[%s1 + $0x1e0] sm:$0xff]
  %v85 = vld [vmem:[%s1 + $0x1e8] sm:$0xff]
  %v86 = vld [vmem:[%s1 + $0x1f0] sm:$0xff]
  %v87 = vld [vmem:[%s1 + $0x1f8] sm:$0xff]
  %v88 = vld [vmem:[%s2] sm:$0x1]
  %v90 = vperm.slane %v88, 0
  %92 = vmatpush.msra.mxu0 %v39
  %93 = vmatpush.msra.mxu0 %v38
  %94 = vmatpush.msra.mxu0 %v37
  %95 = vmatpush.msra.mxu0 %v36
  %96 = vmatpush.msra.mxu0 %v35
  %97 = vmatpush.msra.mxu0 %v34
  %98 = vmatpush.msra.mxu0 %v33
  %99 = vmatpush.msra.mxu0 %v32
  %100 = vmatpush.msra.mxu0 %v31
  %101 = vmatpush.msra.mxu0 %v30
  %102 = vmatpush.msra.mxu0 %v29
  %103 = vmatpush.msra.mxu0 %v28
  %104 = vmatpush.msra.mxu0 %v27
  %105 = vmatpush.msra.mxu0 %v26
  %106 = vmatpush.msra.mxu0 %v25
  %107 = vmatpush.msra.mxu0 %v24
  %108 = vmatmul.f32.gmra.mxu0 %v20
  %v109 = vpop.f32.mrf.mxu0
  %v110 = vadd.f32 %v90, %v109
  %111 = vdwg.mxu0
  %112 = vmatpush.msra.mxu0 %v55
  %113 = vmatpush.msra.mxu0 %v54
  %114 = vmatpush.msra.mxu0 %v53
  %115 = vmatpush.msra.mxu0 %v52
  %116 = vmatpush.msra.mxu0 %v51
  %117 = vmatpush.msra.mxu0 %v50
  %118 = vmatpush.msra.mxu0 %v49
  %119 = vmatpush.msra.mxu0 %v48
  %120 = vmatpush.msra.mxu0 %v47
  %121 = vmatpush.msra.mxu0 %v46
  %122 = vmatpush.msra.mxu0 %v45
  %123 = vmatpush.msra.mxu0 %v44
  %124 = vmatpush.msra.mxu0 %v43
  %125 = vmatpush.msra.mxu0 %v42
  %126 = vmatpush.msra.mxu0 %v41
  %127 = vmatpush.msra.mxu0 %v40
  %128 = vmatmul.f32.gmra.mxu0 %v21
  %v129 = vpop.f32.mrf.mxu0
  %v130 = vadd.f32 %v110, %v129
  %131 = vdwg.mxu0
  %132 = vmatpush.msra.mxu0 %v71
  %133 = vmatpush.msra.mxu0 %v70
  %134 = vmatpush.msra.mxu0 %v69
  %135 = vmatpush.msra.mxu0 %v68
  %136 = vmatpush.msra.mxu0 %v67
  %137 = vmatpush.msra.mxu0 %v66
  %138 = vmatpush.msra.mxu0 %v65
  %139 = vmatpush.msra.mxu0 %v64
  %140 = vmatpush.msra.mxu0 %v63
  %141 = vmatpush.msra.mxu0 %v62
  %142 = vmatpush.msra.mxu0 %v61
  %143 = vmatpush.msra.mxu0 %v60
  %144 = vmatpush.msra.mxu0 %v59
  %145 = vmatpush.msra.mxu0 %v58
  %146 = vmatpush.msra.mxu0 %v57
  %147 = vmatpush.msra.mxu0 %v56
  %148 = vmatmul.f32.gmra.mxu0 %v22
  %v149 = vpop.f32.mrf.mxu0
  %v150 = vadd.f32 %v130, %v149
  %151 = vdwg.mxu0
  %152 = vmatpush.msra.mxu0 %v87
  %153 = vmatpush.msra.mxu0 %v86
  %154 = vmatpush.msra.mxu0 %v85
  %155 = vmatpush.msra.mxu0 %v84
  %156 = vmatpush.msra.mxu0 %v83
  %157 = vmatpush.msra.mxu0 %v82
  %158 = vmatpush.msra.mxu0 %v81
  %159 = vmatpush.msra.mxu0 %v80
  %160 = vmatpush.msra.mxu0 %v79
  %161 = vmatpush.msra.mxu0 %v78
  %162 = vmatpush.msra.mxu0 %v77
  %163 = vmatpush.msra.mxu0 %v76
  %164 = vmatpush.msra.mxu0 %v75
  %165 = vmatpush.msra.mxu0 %v74
  %166 = vmatpush.msra.mxu0 %v73
  %167 = vmatpush.msra.mxu0 %v72
  %168 = vmatmul.f32.gmra.mxu0 %v23
  %v169 = vpop.f32.mrf.mxu0
  %v170 = vadd.f32 %v150, %v169
  %171 = vdwg.mxu0
  %v172 = vlaneseq
  %v173 = vshrl.u32 %v172, 7
  %vm174 = vcmp.lt.s32.totalorder %v173, 2
  %v175 = vsel %vm174, 1, 0
  %v176 = vcvt.s32.f32 %v175
  %v177 = vmul.f32 %v170, %v176
  %v178 = vrot.slane %v177, 4
  %v179 = vadd.f32 %v177, %v178
  %v180 = vrot.slane %v179, 2
  %v181 = vadd.f32 %v179, %v180
  %v182 = vrot.slane %v181, 1
  %v183 = vadd.f32 %v181, %v182
  %v184 = vmul.f32 %v183, 0.5
  %v185 = vsub.f32 %v170, %v184
  %v186 = vmul.f32 %v185, %v185
  %v187 = vmul.f32 %v186, %v176
  %v188 = vrot.slane %v187, 4
  %v189 = vadd.f32 %v187, %v188
  %v190 = vrot.slane %v189, 2
  %v191 = vadd.f32 %v189, %v190
  %v192 = vrot.slane %v191, 1
  %v193 = vadd.f32 %v191, %v192
  %v194 = vmul.f32 %v193, 0.5
  %v195 = vadd.f32 %v194, 1e-05
  %v196 = vrsqrt.pop %v195
  %v197 = vmul.f32 %v196, %v195
  %v198 = vmul.f32 %v197, %v196
  %v199 = vmul.f32 0.5, %v198
  %v200 = vsub.f32 1.5, %v199
  %v201 = vmul.f32 %v196, %v200
  %vm202 = vweird.f32 %v195
  %vm203 = vweird.f32 %v196
  %vm204 = vmor %vm202, %vm203
  %v205 = vsel %vm204, %v196, %v201
  %v206 = vmul.f32 %v185, %v205
  %v207 = vmax.f32 %v206, 0.0
  %v208 = vld [vmem:[%s3] sm:$0xff]
  %v209 = vld [vmem:[%s3 + $0x8] sm:$0xff]
  %v210 = vld [vmem:[%s3 + $0x10] sm:$0xff]
  %v211 = vld [vmem:[%s3 + $0x18] sm:$0xff]
  %v212 = vld [vmem:[%s3 + $0x20] sm:$0xff]
  %v213 = vld [vmem:[%s3 + $0x28] sm:$0xff]
  %v214 = vld [vmem:[%s3 + $0x30] sm:$0xff]
  %v215 = vld [vmem:[%s3 + $0x38] sm:$0xff]
  %v216 = vld [vmem:[%s3 + $0x40] sm:$0xff]
  %v217 = vld [vmem:[%s3 + $0x48] sm:$0xff]
  %v218 = vld [vmem:[%s3 + $0x50] sm:$0xff]
  %v219 = vld [vmem:[%s3 + $0x58] sm:$0xff]
  %v220 = vld [vmem:[%s3 + $0x60] sm:$0xff]
  %v221 = vld [vmem:[%s3 + $0x68] sm:$0xff]
  %v222 = vld [vmem:[%s3 + $0x70] sm:$0xff]
  %v223 = vld [vmem:[%s3 + $0x78] sm:$0xff]
  %v224 = vld [vmem:[%s3 + $0x80] sm:$0xff]
  %v225 = vld [vmem:[%s3 + $0x88] sm:$0xff]
  %v226 = vld [vmem:[%s3 + $0x90] sm:$0xff]
  %v227 = vld [vmem:[%s3 + $0x98] sm:$0xff]
  %v228 = vld [vmem:[%s3 + $0xa0] sm:$0xff]
  %v229 = vld [vmem:[%s3 + $0xa8] sm:$0xff]
  %v230 = vld [vmem:[%s3 + $0xb0] sm:$0xff]
  %v231 = vld [vmem:[%s3 + $0xb8] sm:$0xff]
  %v232 = vld [vmem:[%s3 + $0xc0] sm:$0xff]
  %v233 = vld [vmem:[%s3 + $0xc8] sm:$0xff]
  %v234 = vld [vmem:[%s3 + $0xd0] sm:$0xff]
  %v235 = vld [vmem:[%s3 + $0xd8] sm:$0xff]
  %v236 = vld [vmem:[%s3 + $0xe0] sm:$0xff]
  %v237 = vld [vmem:[%s3 + $0xe8] sm:$0xff]
  %v238 = vld [vmem:[%s3 + $0xf0] sm:$0xff]
  %v239 = vld [vmem:[%s3 + $0xf8] sm:$0xff]
  %v240 = vld [vmem:[%s3 + $0x100] sm:$0xff]
  %v241 = vld [vmem:[%s3 + $0x108] sm:$0xff]
  %v242 = vld [vmem:[%s3 + $0x110] sm:$0xff]
  %v243 = vld [vmem:[%s3 + $0x118] sm:$0xff]
  %v244 = vld [vmem:[%s3 + $0x120] sm:$0xff]
  %v245 = vld [vmem:[%s3 + $0x128] sm:$0xff]
  %v246 = vld [vmem:[%s3 + $0x130] sm:$0xff]
  %v247 = vld [vmem:[%s3 + $0x138] sm:$0xff]
  %v248 = vld [vmem:[%s3 + $0x140] sm:$0xff]
  %v249 = vld [vmem:[%s3 + $0x148] sm:$0xff]
  %v250 = vld [vmem:[%s3 + $0x150] sm:$0xff]
  %v251 = vld [vmem:[%s3 + $0x158] sm:$0xff]
  %v252 = vld [vmem:[%s3 + $0x160] sm:$0xff]
  %v253 = vld [vmem:[%s3 + $0x168] sm:$0xff]
  %v254 = vld [vmem:[%s3 + $0x170] sm:$0xff]
  %v255 = vld [vmem:[%s3 + $0x178] sm:$0xff]
  %v256 = vld [vmem:[%s3 + $0x180] sm:$0xff]
  %v257 = vld [vmem:[%s3 + $0x188] sm:$0xff]
  %v258 = vld [vmem:[%s3 + $0x190] sm:$0xff]
  %v259 = vld [vmem:[%s3 + $0x198] sm:$0xff]
  %v260 = vld [vmem:[%s3 + $0x1a0] sm:$0xff]
  %v261 = vld [vmem:[%s3 + $0x1a8] sm:$0xff]
  %v262 = vld [vmem:[%s3 + $0x1b0] sm:$0xff]
  %v263 = vld [vmem:[%s3 + $0x1b8] sm:$0xff]
  %v264 = vld [vmem:[%s3 + $0x1c0] sm:$0xff]
  %v265 = vld [vmem:[%s3 + $0x1c8] sm:$0xff]
  %v266 = vld [vmem:[%s3 + $0x1d0] sm:$0xff]
  %v267 = vld [vmem:[%s3 + $0x1d8] sm:$0xff]
  %v268 = vld [vmem:[%s3 + $0x1e0] sm:$0xff]
  %v269 = vld [vmem:[%s3 + $0x1e8] sm:$0xff]
  %v270 = vld [vmem:[%s3 + $0x1f0] sm:$0xff]
  %v271 = vld [vmem:[%s3 + $0x1f8] sm:$0xff]
  %v272 = vld [vmem:[%s4] sm:$0xf]
  %v274 = vperm.slane %v272, 0
  %v275 = vperm.slane %v272, 1
  %v276 = vperm.slane %v272, 2
  %v277 = vperm.slane %v272, 3
  %282 = vmatpush.msra.mxu0 %v268
  %283 = vmatpush.msra.mxu0 %v264
  %284 = vmatpush.msra.mxu0 %v260
  %285 = vmatpush.msra.mxu0 %v256
  %286 = vmatpush.msra.mxu0 %v252
  %287 = vmatpush.msra.mxu0 %v248
  %288 = vmatpush.msra.mxu0 %v244
  %289 = vmatpush.msra.mxu0 %v240
  %290 = vmatpush.msra.mxu0 %v236
  %291 = vmatpush.msra.mxu0 %v232
  %292 = vmatpush.msra.mxu0 %v228
  %293 = vmatpush.msra.mxu0 %v224
  %294 = vmatpush.msra.mxu0 %v220
  %295 = vmatpush.msra.mxu0 %v216
  %296 = vmatpush.msra.mxu0 %v212
  %297 = vmatpush.msra.mxu0 %v208
  %298 = vmatmul.f32.gmra.mxu0 %v207
  %v299 = vpop.f32.mrf.mxu0
  %v300 = vadd.f32 %v274, %v299
  %301 = vdwg.mxu0
  %302 = vmatpush.msra.mxu0 %v269
  %303 = vmatpush.msra.mxu0 %v265
  %304 = vmatpush.msra.mxu0 %v261
  %305 = vmatpush.msra.mxu0 %v257
  %306 = vmatpush.msra.mxu0 %v253
  %307 = vmatpush.msra.mxu0 %v249
  %308 = vmatpush.msra.mxu0 %v245
  %309 = vmatpush.msra.mxu0 %v241
  %310 = vmatpush.msra.mxu0 %v237
  %311 = vmatpush.msra.mxu0 %v233
  %312 = vmatpush.msra.mxu0 %v229
  %313 = vmatpush.msra.mxu0 %v225
  %314 = vmatpush.msra.mxu0 %v221
  %315 = vmatpush.msra.mxu0 %v217
  %316 = vmatpush.msra.mxu0 %v213
  %317 = vmatpush.msra.mxu0 %v209
  %318 = vmatmul.f32.gmra.mxu0 %v207
  %v319 = vpop.f32.mrf.mxu0
  %v320 = vadd.f32 %v275, %v319
  %321 = vdwg.mxu0
  %322 = vmatpush.msra.mxu0 %v270
  %323 = vmatpush.msra.mxu0 %v266
  %324 = vmatpush.msra.mxu0 %v262
  %325 = vmatpush.msra.mxu0 %v258
  %326 = vmatpush.msra.mxu0 %v254
  %327 = vmatpush.msra.mxu0 %v250
  %328 = vmatpush.msra.mxu0 %v246
  %329 = vmatpush.msra.mxu0 %v242
  %330 = vmatpush.msra.mxu0 %v238
  %331 = vmatpush.msra.mxu0 %v234
  %332 = vmatpush.msra.mxu0 %v230
  %333 = vmatpush.msra.mxu0 %v226
  %334 = vmatpush.msra.mxu0 %v222
  %335 = vmatpush.msra.mxu0 %v218
  %336 = vmatpush.msra.mxu0 %v214
  %337 = vmatpush.msra.mxu0 %v210
  %338 = vmatmul.f32.gmra.mxu0 %v207
  %v339 = vpop.f32.mrf.mxu0
  %v340 = vadd.f32 %v276, %v339
  %341 = vdwg.mxu0
  %342 = vmatpush.msra.mxu0 %v271
  %343 = vmatpush.msra.mxu0 %v267
  %344 = vmatpush.msra.mxu0 %v263
  %345 = vmatpush.msra.mxu0 %v259
  %346 = vmatpush.msra.mxu0 %v255
  %347 = vmatpush.msra.mxu0 %v251
  %348 = vmatpush.msra.mxu0 %v247
  %349 = vmatpush.msra.mxu0 %v243
  %350 = vmatpush.msra.mxu0 %v239
  %351 = vmatpush.msra.mxu0 %v235
  %352 = vmatpush.msra.mxu0 %v231
  %353 = vmatpush.msra.mxu0 %v227
  %354 = vmatpush.msra.mxu0 %v223
  %355 = vmatpush.msra.mxu0 %v219
  %356 = vmatpush.msra.mxu0 %v215
  %357 = vmatpush.msra.mxu0 %v211
  %358 = vmatmul.f32.gmra.mxu0 %v207
  %v359 = vpop.f32.mrf.mxu0
  %v360 = vadd.f32 %v277, %v359
  %361 = vdwg.mxu0
  %362 = vst [vmem:[%s5] sm:$0xff] %v300
  %363 = vst [vmem:[%s5 + $0x8] sm:$0xff] %v320
  %364 = vst [vmem:[%s5 + $0x10] sm:$0xff] %v340
  %365 = vst [vmem:[%s5 + $0x18] sm:$0xff] %v360
  // Predicated region
  $region22: #{ssl_forward.96} parent=0 // pred_check
    _
  $region23: #{ssl_forward.96} parent=0 // pred_check_branch
    %367 = sbr.rel (0) target = $region25
  $region24: #{ssl_forward.96} parent=0 // pred_region
    _
  $region25: #{ssl_forward.96} parent=0 // pred_fallthru
    _
  // Predicated region
  $region26: #{ssl_forward.96} parent=0 // pred_check
    _
  $region27: #{ssl_forward.96} parent=0 // pred_check_branch
    %369 = sbr.rel (0) target = $region29
  $region28: #{ssl_forward.96} parent=0 // pred_region
    _
  $region29: #{ssl_forward.96} parent=0 // pred_fallthru
    _

// kernel: ssl_forward.97
$region0: #{ssl_forward.97}
  #allocation0 [shape = 'u32[]', space=smem, size = 0x4, offset = 0x4, fixed_abs, tag = 'smem constant byte address 0x4 - core index']
  #allocation1 [shape = 'u32[72,128]{1,0:T(1,128)}', space=vmem, size = 0x9000, scoped, tag = 'internal scratch']
  %s0 = inlined_call_operand.vmem [shape: f32[2,512], index: 0, kind: input, shape index: {}]
  %s1 = inlined_call_operand.vmem [shape: f32[2,512], index: 1, kind: input, shape index: {}]
  %s2 = inlined_call_operand.vmem [shape: f32[2,512], index: 2, kind: input, shape index: {}]
  %s3 = inlined_call_operand.vmem [shape: f32[2,512], index: 3, kind: input, shape index: {}]
  %s4 = inlined_call_operand.hbm [shape: f32[1,1], index: 4, kind: output, shape index: {}]
  %s5 = sld [smem:[#allocation0]]
  $region26: #{ssl_forward.97} parent=0
    _
  %s7 = ssub.s32 1, %s5
  %s8 = scalar_select 0, %s7, %s5
  $region1: #{ssl_forward.97} parent=0
    #allocation2 [shape = 'u8[512]{0}', space=vmem, size = 0x400, scoped, tag = 'output window, operand 0, single buffered']
    #allocation3 [shape = 's32[1]{0}', space=sflag, size = 0x4, scoped, tag = 'scoped memory for ssl_forward.97']
    %9 = vsyncpa [#allocation3], 0
    // Predicated region
    $region2: #{ssl_forward.97} parent=1 // pred_check
      _
    $region3: #{ssl_forward.97} parent=1 // pred_check_branch
      %11 = sbr.rel (0) target = $region5
    $region4: #{ssl_forward.97} parent=1 // pred_region
      _
    $region5: #{ssl_forward.97} parent=1 // pred_fallthru
      _
    // Predicated region
    $region6: #{ssl_forward.97} parent=1 // pred_check
      _
    $region7: #{ssl_forward.97} parent=1 // pred_check_branch
      %13 = sbr.rel (0) target = $region9
    $region8: #{ssl_forward.97} parent=1 // pred_region
      _
    $region9: #{ssl_forward.97} parent=1 // pred_fallthru
      _
    // Predicated region
    $region10: #{ssl_forward.97} parent=1 // pred_check
      _
    $region11: #{ssl_forward.97} parent=1 // pred_check_branch
      %15 = sbr.rel (0) target = $region13
    $region12: #{ssl_forward.97} parent=1 // pred_region
      _
    $region13: #{ssl_forward.97} parent=1 // pred_fallthru
      _
    // Predicated region
    $region14: #{ssl_forward.97} parent=1 // pred_check
      _
    $region15: #{ssl_forward.97} parent=1 // pred_check_branch
      %17 = sbr.rel (0) target = $region17
    $region16: #{ssl_forward.97} parent=1 // pred_region
      _
    $region17: #{ssl_forward.97} parent=1 // pred_fallthru
      _
    %v18 = vld [vmem:[%s0] sm:$0xff]
    %v19 = vld [vmem:[%s1] sm:$0xff]
    %v20 = vmul.f32 %v18, %v19
    %22 = vst [vmem:[#allocation1] ss:$4 sm:$0xff] %v20
    %v23 = vld.sshfl [vmem:[#allocation1] sm:$0xff pattern:$0x73625140]
    %v24 = vld.sshfl [vmem:[#allocation1 + $0x8] sm:$0xff pattern:$0x73625140]
    %v25 = vld.sshfl [vmem:[#allocation1 + $0x10] sm:$0xff pattern:$0x73625140]
    %v26 = vld.sshfl [vmem:[#allocation1 + $0x18] sm:$0xff pattern:$0x73625140]
    %vm31 = vcmask 1041408
    %v32 = vsel %vm31, %v23, 0.0
    %v33 = vsel %vm31, %v24, 0.0
    %v34 = vadd.f32 %v32, %v33
    %v35 = vsel %vm31, %v25, 0.0
    %v36 = vadd.f32 %v34, %v35
    %v37 = vsel %vm31, %v26, 0.0
    %v38 = vadd.f32 %v36, %v37
    %39 = vadd.xlane.f32.xlu0 %v38
    %v40 = vpop.xlane.xlu0 %39
    %v41 = vmul.f32 %v18, %v18
    %43 = vst [vmem:[#allocation1] ss:$4 sm:$0xff] %v41
    %v44 = vld.sshfl [vmem:[#allocation1] sm:$0xff pattern:$0x73625140]
    %v45 = vld.sshfl [vmem:[#allocation1 + $0x8] sm:$0xff pattern:$0x73625140]
    %v46 = vld.sshfl [vmem:[#allocation1 + $0x10] sm:$0xff pattern:$0x73625140]
    %v47 = vld.sshfl [vmem:[#allocation1 + $0x18] sm:$0xff pattern:$0x73625140]
    %v52 = vsel %vm31, %v44, 0.0
    %v53 = vsel %vm31, %v45, 0.0
    %v54 = vadd.f32 %v52, %v53
    %v55 = vsel %vm31, %v46, 0.0
    %v56 = vadd.f32 %v54, %v55
    %v57 = vsel %vm31, %v47, 0.0
    %v58 = vadd.f32 %v56, %v57
    %59 = vadd.xlane.f32.xlu0 %v58
    %v60 = vpop.xlane.xlu0 %59
    %v61 = vrsqrt.pop %v60
    %v62 = vmul.f32 %v61, %v60
    %v63 = vmul.f32 %v62, %v61
    %v64 = vmul.f32 0.5, %v63
    %v65 = vsub.f32 1.5, %v64
    %v66 = vmul.f32 %v61, %v65
    %v67 = vmul.f32 %v60, %v66
    %vm68 = vcmp.eq.f32.partialorder %v60, inf
    %v69 = vsel %vm68, %v60, %v67
    %vm70 = vcmp.eq.f32.partialorder %v60, 0.0
    %v71 = vand.u32 %v60, 2147483648
    %v72 = vsel %vm70, %v71, %v69
    %v73 = vmax.f32 %v72, 1e-08
    %v74 = vmul.f32 %v19, %v19
    %76 = vst [vmem:[#allocation1] ss:$4 sm:$0xff] %v74
    %v77 = vld.sshfl [vmem:[#allocation1] sm:$0xff pattern:$0x73625140]
    %v78 = vld.sshfl [vmem:[#allocation1 + $0x8] sm:$0xff pattern:$0x73625140]
    %v79 = vld.sshfl [vmem:[#allocation1 + $0x10] sm:$0xff pattern:$0x73625140]
    %v80 = vld.sshfl [vmem:[#allocation1 + $0x18] sm:$0xff pattern:$0x73625140]
    %v85 = vsel %vm31, %v77, 0.0
    %v86 = vsel %vm31, %v78, 0.0
    %v87 = vadd.f32 %v85, %v86
    %v88 = vsel %vm31, %v79, 0.0
    %v89 = vadd.f32 %v87, %v88
    %v90 = vsel %vm31, %v80, 0.0
    %v91 = vadd.f32 %v89, %v90
    %92 = vadd.xlane.f32.xlu0 %v91
    %v93 = vpop.xlane.xlu0 %92
    %v94 = vrsqrt.pop %v93
    %v95 = vmul.f32 %v94, %v93
    %v96 = vmul.f32 %v95, %v94
    %v97 = vmul.f32 0.5, %v96
    %v98 = vsub.f32 1.5, %v97
    %v99 = vmul.f32 %v94, %v98
    %v100 = vmul.f32 %v93, %v99
    %vm101 = vcmp.eq.f32.partialorder %v93, inf
    %v102 = vsel %vm101, %v93, %v100
    %vm103 = vcmp.eq.f32.partialorder %v93, 0.0
    %v104 = vand.u32 %v93, 2147483648
    %v105 = vsel %vm103, %v104, %v102
    %v106 = vmax.f32 %v105, 1e-08
    %v107 = vmul.f32 %v73, %v106
    %v108 = vrcp.pop %v107
    %v109 = vmul.f32 %v107, %v108
    %v110 = vsub.f32 1.0, %v109
    %v111 = vmul.f32 %v108, %v110
    %v112 = vadd.f32 %v108, %v111
    %vm113 = vweird.f32 %v107
    %vm114 = vweird.f32 %v108
    %vm115 = vmor %vm113, %vm114
    %v116 = vsel %vm115, %v108, %v112
    %v117 = vand.u32 2147483647, %v107
    %vm118 = vcmp.eq.f32.partialorder %v117, 8.507059e+37
    %v119 = vand.u32 %v107, 2147483648
    %v120 = vor.u32 1.1754944e-38, %v119
    %v121 = vsel %vm118, %v120, %v116
    %v122 = vmul.f32 %v40, %v121
    %v123 = vsel %vm31, %v122, 0.0
    %v124 = vrot.slane %v123, 4
    %v125 = vadd.f32 %v123, %v124
    %v126 = vrot.slane %v125, 2
    %v127 = vadd.f32 %v125, %v126
    %v128 = vrot.slane %v127, 1
    %v129 = vadd.f32 %v127, %v128
    %v130 = vrcp.pop 2.0
    %v131 = vmul.f32 2.0, %v130
    %v132 = vsub.f32 1.0, %v131
    %v133 = vmul.f32 %v130, %v132
    %v134 = vadd.f32 %v130, %v133
    %vm135 = vweird.f32 %v130
    %v136 = vsel %vm135, %v130, %v134
    %v137 = vmul.f32 %v129, %v136
    %v138 = vsub.f32 0.0, %v137
    %v139 = vmul.f32 %v138, 0.5
    %v140 = vld [vmem:[%s2] sm:$0xff]
    %v141 = vld [vmem:[%s3] sm:$0xff]
    %v142 = vmul.f32 %v140, %v141
    %144 = vst [vmem:[#allocation1] ss:$4 sm:$0xff] %v142
    %v145 = vld.sshfl [vmem:[#allocation1] sm:$0xff pattern:$0x73625140]
    %v146 = vld.sshfl [vmem:[#allocation1 + $0x8] sm:$0xff pattern:$0x73625140]
    %v147 = vld.sshfl [vmem:[#allocation1 + $0x10] sm:$0xff pattern:$0x73625140]
    %v148 = vld.sshfl [vmem:[#allocation1 + $0x18] sm:$0xff pattern:$0x73625140]
    %v153 = vsel %vm31, %v145, 0.0
    %v154 = vsel %vm31, %v146, 0.0
    %v155 = vadd.f32 %v153, %v154
    %v156 = vsel %vm31, %v147, 0.0
    %v157 = vadd.f32 %v155, %v156
    %v158 = vsel %vm31, %v148, 0.0
    %v159 = vadd.f32 %v157, %v158
    %160 = vadd.xlane.f32.xlu0 %v159
    %v161 = vpop.xlane.xlu0 %160
    %v162 = vmul.f32 %v140, %v140
    %164 = vst [vmem:[#allocation1] ss:$4 sm:$0xff] %v162
    %v165 = vld.sshfl [vmem:[#allocation1] sm:$0xff pattern:$0x73625140]
    %v166 = vld.sshfl [vmem:[#allocation1 + $0x8] sm:$0xff pattern:$0x73625140]
    %v167 = vld.sshfl [vmem:[#allocation1 + $0x10] sm:$0xff pattern:$0x73625140]
    %v168 = vld.sshfl [vmem:[#allocation1 + $0x18] sm:$0xff pattern:$0x73625140]
    %v173 = vsel %vm31, %v165, 0.0
    %v174 = vsel %vm31, %v166, 0.0
    %v175 = vadd.f32 %v173, %v174
    %v176 = vsel %vm31, %v167, 0.0
    %v177 = vadd.f32 %v175, %v176
    %v178 = vsel %vm31, %v168, 0.0
    %v179 = vadd.f32 %v177, %v178
    %180 = vadd.xlane.f32.xlu0 %v179
    %v181 = vpop.xlane.xlu0 %180
    %v182 = vrsqrt.pop %v181
    %v183 = vmul.f32 %v182, %v181
    %v184 = vmul.f32 %v183, %v182
    %v185 = vmul.f32 0.5, %v184
    %v186 = vsub.f32 1.5, %v185
    %v187 = vmul.f32 %v182, %v186
    %v188 = vmul.f32 %v181, %v187
    %vm189 = vcmp.eq.f32.partialorder %v181, inf
    %v190 = vsel %vm189, %v181, %v188
    %vm191 = vcmp.eq.f32.partialorder %v181, 0.0
    %v192 = vand.u32 %v181, 2147483648
    %v193 = vsel %vm191, %v192, %v190
    %v194 = vmax.f32 %v193, 1e-08
    %v195 = vmul.f32 %v141, %v141
    %197 = vst [vmem:[#allocation1] ss:$4 sm:$0xff] %v195
    %v198 = vld.sshfl [vmem:[#allocation1] sm:$0xff pattern:$0x73625140]
    %v199 = vld.sshfl [vmem:[#allocation1 + $0x8] sm:$0xff pattern:$0x73625140]
    %v200 = vld.sshfl [vmem:[#allocation1 + $0x10] sm:$0xff pattern:$0x73625140]
    %v201 = vld.sshfl [vmem:[#allocation1 + $0x18] sm:$0xff pattern:$0x73625140]
    %v206 = vsel %vm31, %v198, 0.0
    %v207 = vsel %vm31, %v199, 0.0
    %v208 = vadd.f32 %v206, %v207
    %v209 = vsel %vm31, %v200, 0.0
    %v210 = vadd.f32 %v208, %v209
    %v211 = vsel %vm31, %v201, 0.0
    %v212 = vadd.f32 %v210, %v211
    %213 = vadd.xlane.f32.xlu0 %v212
    %v214 = vpop.xlane.xlu0 %213
    %v215 = vrsqrt.pop %v214
    %v216 = vmul.f32 %v215, %v214
    %v217 = vmul.f32 %v216, %v215
    %v218 = vmul.f32 0.5, %v217
    %v219 = vsub.f32 1.5, %v218
    %v220 = vmul.f32 %v215, %v219
    %v221 = vmul.f32 %v214, %v220
    %vm222 = vcmp.eq.f32.partialorder %v214, inf
    %v223 = vsel %vm222, %v214, %v221
    %vm224 = vcmp.eq.f32.partialorder %v214, 0.0
    %v225 = vand.u32 %v214, 2147483648
    %v226 = vsel %vm224, %v225, %v223
    %v227 = vmax.f32 %v226, 1e-08
    %v228 = vmul.f32 %v194, %v227
    %v229 = vrcp.pop %v228
    %v230 = vmul.f32 %v228, %v229
    %v231 = vsub.f32 1.0, %v230
    %v232 = vmul.f32 %v229, %v231
    %v233 = vadd.f32 %v229, %v232
    %vm234 = vweird.f32 %v228
    %vm235 = vweird.f32 %v229
    %vm236 = vmor %vm234, %vm235
    %v237 = vsel %vm236, %v229, %v233
    %v238 = vand.u32 2147483647, %v228
    %vm239 = vcmp.eq.f32.partialorder %v238, 8.507059e+37
    %v240 = vand.u32 %v228, 2147483648
    %v241 = vor.u32 1.1754944e-38, %v240
    %v242 = vsel %vm239, %v241, %v237
    %v243 = vmul.f32 %v161, %v242
    %v244 = vsel %vm31, %v243, 0.0
    %v245 = vrot.slane %v244, 4
    %v246 = vadd.f32 %v244, %v245
    %v247 = vrot.slane %v246, 2
    %v248 = vadd.f32 %v246, %v247
    %v249 = vrot.slane %v248, 1
    %v250 = vadd.f32 %v248, %v249
    %v251 = vmul.f32 %v250, %v136
    %v252 = vsub.f32 0.0, %v251
    %v253 = vmul.f32 %v252, 0.5
    %v254 = vadd.f32 %v139, %v253
    %vm255 = vcmask 0
    %256 = vst.msk [vmem:[#allocation2] sm:$0x1] %vm255, %v254
    // Predicated region
    $region18: #{ssl_forward.97} parent=1 // pred_check
      _
    $region19: #{ssl_forward.97} parent=1 // pred_check_branch
      %258 = sbr.rel (0) target = $region21
    $region20: #{ssl_forward.97} parent=1 // pred_region
      %260 = vsyncadd [#allocation3], 0
      %s262 = sshll.u32 [#allocation2], 4
      %s263 = int_to_ptr.vmem [resolvable:$true] %s262
      %s264 = sshll.u32 %s4, 4
      %s265 = int_to_ptr.hbm [resolvable:$true] %s264
      %267 = dma.vmem_to_hbm [thread:$0]  %s263, 16, %s265, [#allocation3]
    $region21: #{ssl_forward.97} parent=1 // pred_fallthru
      _
    // Predicated region
    $region22: #{ssl_forward.97} parent=1 // pred_check
      _
    $region23: #{ssl_forward.97} parent=1 // pred_check_branch
      %269 = sbr.rel (0) target = $region25
    $region24: #{ssl_forward.97} parent=1 // pred_region
      %271 = dma.done [#allocation3], 16
    $region25: #{ssl_forward.97} parent=1 // pred_fallthru
      _
    %272 = vsyncpa [#allocation3], 1

// kernel: ssl_forward.71
$region0: #{ssl_forward.71}
  #allocation0 [shape = 'u32[]', space=smem, size = 0x4, offset = 0x4, fixed_abs, tag = 'smem constant byte address 0x4 - core index']
  #allocation1 [shape = 'u32[72,128]{1,0:T(1,128)}', space=vmem, size = 0x9000, scoped, tag = 'internal scratch']
  %s0 = inlined_call_operand.vmem [shape: f32[8,128], index: 0, kind: input, shape index: {}]
  %s1 = inlined_call_operand.vmem [shape: f32[128,512], index: 1, kind: input, shape index: {}]
  %s2 = inlined_call_operand.vmem [shape: f32[1,512], index: 2, kind: input, shape index: {}]
  %s3 = inlined_call_operand.vmem [shape: f32[512,512], index: 3, kind: input, shape index: {}]
  %s4 = inlined_call_operand.vmem [shape: f32[1,512], index: 4, kind: input, shape index: {}]
  %s5 = inlined_call_operand.vmem [shape: f32[8,512], index: 5, kind: output, shape index: {}]
  %s6 = sld [smem:[#allocation0]]
  $region30: #{ssl_forward.71} parent=0
    _
  %s8 = ssub.s32 1, %s6
  %s9 = scalar_select 0, %s8, %s6
  // Predicated region
  $region2: #{ssl_forward.71} parent=0 // pred_check
    _
  $region3: #{ssl_forward.71} parent=0 // pred_check_branch
    %11 = sbr.rel (0) target = $region5
  $region4: #{ssl_forward.71} parent=0 // pred_region
    _
  $region5: #{ssl_forward.71} parent=0 // pred_fallthru
    _
  // Predicated region
  $region6: #{ssl_forward.71} parent=0 // pred_check
    _
  $region7: #{ssl_forward.71} parent=0 // pred_check_branch
    %13 = sbr.rel (0) target = $region9
  $region8: #{ssl_forward.71} parent=0 // pred_region
    _
  $region9: #{ssl_forward.71} parent=0 // pred_fallthru
    _
  // Predicated region
  $region10: #{ssl_forward.71} parent=0 // pred_check
    _
  $region11: #{ssl_forward.71} parent=0 // pred_check_branch
    %15 = sbr.rel (0) target = $region13
  $region12: #{ssl_forward.71} parent=0 // pred_region
    _
  $region13: #{ssl_forward.71} parent=0 // pred_fallthru
    _
  // Predicated region
  $region14: #{ssl_forward.71} parent=0 // pred_check
    _
  $region15: #{ssl_forward.71} parent=0 // pred_check_branch
    %17 = sbr.rel (0) target = $region17
  $region16: #{ssl_forward.71} parent=0 // pred_region
    _
  $region17: #{ssl_forward.71} parent=0 // pred_fallthru
    _
  // Predicated region
  $region18: #{ssl_forward.71} parent=0 // pred_check
    _
  $region19: #{ssl_forward.71} parent=0 // pred_check_branch
    %19 = sbr.rel (0) target = $region21
  $region20: #{ssl_forward.71} parent=0 // pred_region
    _
  $region21: #{ssl_forward.71} parent=0 // pred_fallthru
    _
  %v20 = vld [vmem:[%s0] sm:$0xff]
  %v21 = vld [vmem:[%s1] sm:$0xff]
  %v22 = vld [vmem:[%s1 + $0x8] sm:$0xff]
  %v23 = vld [vmem:[%s1 + $0x10] sm:$0xff]
  %v24 = vld [vmem:[%s1 + $0x18] sm:$0xff]
  %v25 = vld [vmem:[%s1 + $0x20] sm:$0xff]
  %v26 = vld [vmem:[%s1 + $0x28] sm:$0xff]
  %v27 = vld [vmem:[%s1 + $0x30] sm:$0xff]
  %v28 = vld [vmem:[%s1 + $0x38] sm:$0xff]
  %v29 = vld [vmem:[%s1 + $0x40] sm:$0xff]
  %v30 = vld [vmem:[%s1 + $0x48] sm:$0xff]
  %v31 = vld [vmem:[%s1 + $0x50] sm:$0xff]
  %v32 = vld [vmem:[%s1 + $0x58] sm:$0xff]
  %v33 = vld [vmem:[%s1 + $0x60] sm:$0xff]
  %v34 = vld [vmem:[%s1 + $0x68] sm:$0xff]
  %v35 = vld [vmem:[%s1 + $0x70] sm:$0xff]
  %v36 = vld [vmem:[%s1 + $0x78] sm:$0xff]
  %v37 = vld [vmem:[%s1 + $0x80] sm:$0xff]
  %v38 = vld [vmem:[%s1 + $0x88] sm:$0xff]
  %v39 = vld [vmem:[%s1 + $0x90] sm:$0xff]
  %v40 = vld [vmem:[%s1 + $0x98] sm:$0xff]
  %v41 = vld [vmem:[%s1 + $0xa0] sm:$0xff]
  %v42 = vld [vmem:[%s1 + $0xa8] sm:$0xff]
  %v43 = vld [vmem:[%s1 + $0xb0] sm:$0xff]
  %v44 = vld [vmem:[%s1 + $0xb8] sm:$0xff]
  %v45 = vld [vmem:[%s1 + $0xc0] sm:$0xff]
  %v46 = vld [vmem:[%s1 + $0xc8] sm:$0xff]
  %v47 = vld [vmem:[%s1 + $0xd0] sm:$0xff]
  %v48 = vld [vmem:[%s1 + $0xd8] sm:$0xff]
  %v49 = vld [vmem:[%s1 + $0xe0] sm:$0xff]
  %v50 = vld [vmem:[%s1 + $0xe8] sm:$0xff]
  %v51 = vld [vmem:[%s1 + $0xf0] sm:$0xff]
  %v52 = vld [vmem:[%s1 + $0xf8] sm:$0xff]
  %v53 = vld [vmem:[%s1 + $0x100] sm:$0xff]
  %v54 = vld [vmem:[%s1 + $0x108] sm:$0xff]
  %v55 = vld [vmem:[%s1 + $0x110] sm:$0xff]
  %v56 = vld [vmem:[%s1 + $0x118] sm:$0xff]
  %v57 = vld [vmem:[%s1 + $0x120] sm:$0xff]
  %v58 = vld [vmem:[%s1 + $0x128] sm:$0xff]
  %v59 = vld [vmem:[%s1 + $0x130] sm:$0xff]
  %v60 = vld [vmem:[%s1 + $0x138] sm:$0xff]
  %v61 = vld [vmem:[%s1 + $0x140] sm:$0xff]
  %v62 = vld [vmem:[%s1 + $0x148] sm:$0xff]
  %v63 = vld [vmem:[%s1 + $0x150] sm:$0xff]
  %v64 = vld [vmem:[%s1 + $0x158] sm:$0xff]
  %v65 = vld [vmem:[%s1 + $0x160] sm:$0xff]
  %v66 = vld [vmem:[%s1 + $0x168] sm:$0xff]
  %v67 = vld [vmem:[%s1 + $0x170] sm:$0xff]
  %v68 = vld [vmem:[%s1 + $0x178] sm:$0xff]
  %v69 = vld [vmem:[%s1 + $0x180] sm:$0xff]
  %v70 = vld [vmem:[%s1 + $0x188] sm:$0xff]
  %v71 = vld [vmem:[%s1 + $0x190] sm:$0xff]
  %v72 = vld [vmem:[%s1 + $0x198] sm:$0xff]
  %v73 = vld [vmem:[%s1 + $0x1a0] sm:$0xff]
  %v74 = vld [vmem:[%s1 + $0x1a8] sm:$0xff]
  %v75 = vld [vmem:[%s1 + $0x1b0] sm:$0xff]
  %v76 = vld [vmem:[%s1 + $0x1b8] sm:$0xff]
  %v77 = vld [vmem:[%s1 + $0x1c0] sm:$0xff]
  %v78 = vld [vmem:[%s1 + $0x1c8] sm:$0xff]
  %v79 = vld [vmem:[%s1 + $0x1d0] sm:$0xff]
  %v80 = vld [vmem:[%s1 + $0x1d8] sm:$0xff]
  %v81 = vld [vmem:[%s1 + $0x1e0] sm:$0xff]
  %v82 = vld [vmem:[%s1 + $0x1e8] sm:$0xff]
  %v83 = vld [vmem:[%s1 + $0x1f0] sm:$0xff]
  %v84 = vld [vmem:[%s1 + $0x1f8] sm:$0xff]
  %v85 = vld [vmem:[%s2] sm:$0xf]
  %v87 = vperm.slane %v85, 0
  %v88 = vperm.slane %v85, 1
  %v89 = vperm.slane %v85, 2
  %v90 = vperm.slane %v85, 3
  %95 = vmatpush.msra.mxu0 %v81
  %96 = vmatpush.msra.mxu0 %v77
  %97 = vmatpush.msra.mxu0 %v73
  %98 = vmatpush.msra.mxu0 %v69
  %99 = vmatpush.msra.mxu0 %v65
  %100 = vmatpush.msra.mxu0 %v61
  %101 = vmatpush.msra.mxu0 %v57
  %102 = vmatpush.msra.mxu0 %v53
  %103 = vmatpush.msra.mxu0 %v49
  %104 = vmatpush.msra.mxu0 %v45
  %105 = vmatpush.msra.mxu0 %v41
  %106 = vmatpush.msra.mxu0 %v37
  %107 = vmatpush.msra.mxu0 %v33
  %108 = vmatpush.msra.mxu0 %v29
  %109 = vmatpush.msra.mxu0 %v25
  %110 = vmatpush.msra.mxu0 %v21
  %111 = vmatmul.f32.gmra.mxu0 %v20
  %v112 = vpop.f32.mrf.mxu0
  %v113 = vadd.f32 %v87, %v112
  %114 = vdwg.mxu0
  %115 = vmatpush.msra.mxu0 %v82
  %116 = vmatpush.msra.mxu0 %v78
  %117 = vmatpush.msra.mxu0 %v74
  %118 = vmatpush.msra.mxu0 %v70
  %119 = vmatpush.msra.mxu0 %v66
  %120 = vmatpush.msra.mxu0 %v62
  %121 = vmatpush.msra.mxu0 %v58
  %122 = vmatpush.msra.mxu0 %v54
  %123 = vmatpush.msra.mxu0 %v50
  %124 = vmatpush.msra.mxu0 %v46
  %125 = vmatpush.msra.mxu0 %v42
  %126 = vmatpush.msra.mxu0 %v38
  %127 = vmatpush.msra.mxu0 %v34
  %128 = vmatpush.msra.mxu0 %v30
  %129 = vmatpush.msra.mxu0 %v26
  %130 = vmatpush.msra.mxu0 %v22
  %131 = vmatmul.f32.gmra.mxu0 %v20
  %v132 = vpop.f32.mrf.mxu0
  %v133 = vadd.f32 %v88, %v132
  %134 = vdwg.mxu0
  %135 = vmatpush.msra.mxu0 %v83
  %136 = vmatpush.msra.mxu0 %v79
  %137 = vmatpush.msra.mxu0 %v75
  %138 = vmatpush.msra.mxu0 %v71
  %139 = vmatpush.msra.mxu0 %v67
  %140 = vmatpush.msra.mxu0 %v63
  %141 = vmatpush.msra.mxu0 %v59
  %142 = vmatpush.msra.mxu0 %v55
  %143 = vmatpush.msra.mxu0 %v51
  %144 = vmatpush.msra.mxu0 %v47
  %145 = vmatpush.msra.mxu0 %v43
  %146 = vmatpush.msra.mxu0 %v39
  %147 = vmatpush.msra.mxu0 %v35
  %148 = vmatpush.msra.mxu0 %v31
  %149 = vmatpush.msra.mxu0 %v27
  %150 = vmatpush.msra.mxu0 %v23
  %151 = vmatmul.f32.gmra.mxu0 %v20
  %v152 = vpop.f32.mrf.mxu0
  %v153 = vadd.f32 %v89, %v152
  %154 = vdwg.mxu0
  %155 = vmatpush.msra.mxu0 %v84
  %156 = vmatpush.msra.mxu0 %v80
  %157 = vmatpush.msra.mxu0 %v76
  %158 = vmatpush.msra.mxu0 %v72
  %159 = vmatpush.msra.mxu0 %v68
  %160 = vmatpush.msra.mxu0 %v64
  %161 = vmatpush.msra.mxu0 %v60
  %162 = vmatpush.msra.mxu0 %v56
  %163 = vmatpush.msra.mxu0 %v52
  %164 = vmatpush.msra.mxu0 %v48
  %165 = vmatpush.msra.mxu0 %v44
  %166 = vmatpush.msra.mxu0 %v40
  %167 = vmatpush.msra.mxu0 %v36
  %168 = vmatpush.msra.mxu0 %v32
  %169 = vmatpush.msra.mxu0 %v28
  %170 = vmatpush.msra.mxu0 %v24
  %171 = vmatmul.f32.gmra.mxu0 %v20
  %v172 = vpop.f32.mrf.mxu0
  %v173 = vadd.f32 %v90, %v172
  %174 = vdwg.mxu0
  %v175 = vlaneseq
  %v176 = vshrl.u32 %v175, 7
  %vm177 = vcmp.lt.s32.totalorder %v176, 2
  %v178 = vsel %vm177, 1, 0
  %v179 = vcvt.s32.f32 %v178
  %v180 = vmul.f32 %v113, %v179
  %v181 = vmul.f32 %v133, %v179
  %v182 = vmul.f32 %v153, %v179
  %v183 = vmul.f32 %v173, %v179
  %v184 = vrot.slane %v180, 4
  %v185 = vadd.f32 %v180, %v184
  %v186 = vrot.slane %v185, 2
  %v187 = vadd.f32 %v185, %v186
  %v188 = vrot.slane %v187, 1
  %v189 = vadd.f32 %v187, %v188
  %v190 = vrot.slane %v181, 4
  %v191 = vadd.f32 %v181, %v190
  %v192 = vrot.slane %v191, 2
  %v193 = vadd.f32 %v191, %v192
  %v194 = vrot.slane %v193, 1
  %v195 = vadd.f32 %v193, %v194
  %v196 = vrot.slane %v182, 4
  %v197 = vadd.f32 %v182, %v196
  %v198 = vrot.slane %v197, 2
  %v199 = vadd.f32 %v197, %v198
  %v200 = vrot.slane %v199, 1
  %v201 = vadd.f32 %v199, %v200
  %v202 = vrot.slane %v183, 4
  %v203 = vadd.f32 %v183, %v202
  %v204 = vrot.slane %v203, 2
  %v205 = vadd.f32 %v203, %v204
  %v206 = vrot.slane %v205, 1
  %v207 = vadd.f32 %v205, %v206
  %v208 = vmul.f32 %v189, 0.5
  %v209 = vmul.f32 %v195, 0.5
  %v210 = vmul.f32 %v201, 0.5
  %v211 = vmul.f32 %v207, 0.5
  %v212 = vsub.f32 %v113, %v208
  %v213 = vsub.f32 %v133, %v209
  %v214 = vsub.f32 %v153, %v210
  %v215 = vsub.f32 %v173, %v211
  %v216 = vmul.f32 %v212, %v212
  %v217 = vmul.f32 %v213, %v213
  %v218 = vmul.f32 %v214, %v214
  %v219 = vmul.f32 %v215, %v215
  %v220 = vmul.f32 %v216, %v179
  %v221 = vmul.f32 %v217, %v179
  %v222 = vmul.f32 %v218, %v179
  %v223 = vmul.f32 %v219, %v179
  %v224 = vrot.slane %v220, 4
  %v225 = vadd.f32 %v220, %v224
  %v226 = vrot.slane %v225, 2
  %v227 = vadd.f32 %v225, %v226
  %v228 = vrot.slane %v227, 1
  %v229 = vadd.f32 %v227, %v228
  %v230 = vrot.slane %v221, 4
  %v231 = vadd.f32 %v221, %v230
  %v232 = vrot.slane %v231, 2
  %v233 = vadd.f32 %v231, %v232
  %v234 = vrot.slane %v233, 1
  %v235 = vadd.f32 %v233, %v234
  %v236 = vrot.slane %v222, 4
  %v237 = vadd.f32 %v222, %v236
  %v238 = vrot.slane %v237, 2
  %v239 = vadd.f32 %v237, %v238
  %v240 = vrot.slane %v239, 1
  %v241 = vadd.f32 %v239, %v240
  %v242 = vrot.slane %v223, 4
  %v243 = vadd.f32 %v223, %v242
  %v244 = vrot.slane %v243, 2
  %v245 = vadd.f32 %v243, %v244
  %v246 = vrot.slane %v245, 1
  %v247 = vadd.f32 %v245, %v246
  %v248 = vmul.f32 %v229, 0.5
  %v249 = vmul.f32 %v235, 0.5
  %v250 = vmul.f32 %v241, 0.5
  %v251 = vmul.f32 %v247, 0.5
  %v252 = vadd.f32 %v248, 1e-05
  %v253 = vadd.f32 %v249, 1e-05
  %v254 = vadd.f32 %v250, 1e-05
  %v255 = vadd.f32 %v251, 1e-05
  %v256 = vrsqrt.pop %v252
  %v257 = vmul.f32 %v256, %v252
  %v258 = vmul.f32 %v257, %v256
  %v259 = vmul.f32 0.5, %v258
  %v260 = vsub.f32 1.5, %v259
  %v261 = vmul.f32 %v256, %v260
  %vm262 = vweird.f32 %v252
  %vm263 = vweird.f32 %v256
  %vm264 = vmor %vm262, %vm263
  %v265 = vsel %vm264, %v256, %v261
  %v266 = vrsqrt.pop %v253
  %v267 = vmul.f32 %v266, %v253
  %v268 = vmul.f32 %v267, %v266
  %v269 = vmul.f32 0.5, %v268
  %v270 = vsub.f32 1.5, %v269
  %v271 = vmul.f32 %v266, %v270
  %vm272 = vweird.f32 %v253
  %vm273 = vweird.f32 %v266
  %vm274 = vmor %vm272, %vm273
  %v275 = vsel %vm274, %v266, %v271
  %v276 = vrsqrt.pop %v254
  %v277 = vmul.f32 %v276, %v254
  %v278 = vmul.f32 %v277, %v276
  %v279 = vmul.f32 0.5, %v278
  %v280 = vsub.f32 1.5, %v279
  %v281 = vmul.f32 %v276, %v280
  %vm282 = vweird.f32 %v254
  %vm283 = vweird.f32 %v276
  %vm284 = vmor %vm282, %vm283
  %v285 = vsel %vm284, %v276, %v281
  %v286 = vrsqrt.pop %v255
  %v287 = vmul.f32 %v286, %v255
  %v288 = vmul.f32 %v287, %v286
  %v289 = vmul.f32 0.5, %v288
  %v290 = vsub.f32 1.5, %v289
  %v291 = vmul.f32 %v286, %v290
  %vm292 = vweird.f32 %v255
  %vm293 = vweird.f32 %v286
  %vm294 = vmor %vm292, %vm293
  %v295 = vsel %vm294, %v286, %v291
  %v296 = vmul.f32 %v212, %v265
  %v297 = vmul.f32 %v213, %v275
  %v298 = vmul.f32 %v214, %v285
  %v299 = vmul.f32 %v215, %v295
  %v300 = vmax.f32 %v296, 0.0
  %v301 = vmax.f32 %v297, 0.0
  %v302 = vmax.f32 %v298, 0.0
  %v303 = vmax.f32 %v299, 0.0
  %v304 = vld [vmem:[%s3] sm:$0xff]
  %v305 = vld [vmem:[%s3 + $0x8] sm:$0xff]
  %v306 = vld [vmem:[%s3 + $0x10] sm:$0xff]
  %v307 = vld [vmem:[%s3 + $0x18] sm:$0xff]
  %v308 = vld [vmem:[%s3 + $0x20] sm:$0xff]
  %v309 = vld [vmem:[%s3 + $0x28] sm:$0xff]
  %v310 = vld [vmem:[%s3 + $0x30] sm:$0xff]
  %v311 = vld [vmem:[%s3 + $0x38] sm:$0xff]
  %v312 = vld [vmem:[%s3 + $0x40] sm:$0xff]
  %v313 = vld [vmem:[%s3 + $0x48] sm:$0xff]
  %v314 = vld [vmem:[%s3 + $0x50] sm:$0xff]
  %v315 = vld [vmem:[%s3 + $0x58] sm:$0xff]
  %v316 = vld [vmem:[%s3 + $0x60] sm:$0xff]
  %v317 = vld [vmem:[%s3 + $0x68] sm:$0xff]
  %v318 = vld [vmem:[%s3 + $0x70] sm:$0xff]
  %v319 = vld [vmem:[%s3 + $0x78] sm:$0xff]
  %v320 = vld [vmem:[%s3 + $0x80] sm:$0xff]
  %v321 = vld [vmem:[%s3 + $0x88] sm:$0xff]
  %v322 = vld [vmem:[%s3 + $0x90] sm:$0xff]
  %v323 = vld [vmem:[%s3 + $0x98] sm:$0xff]
  %v324 = vld [vmem:[%s3 + $0xa0] sm:$0xff]
  %v325 = vld [vmem:[%s3 + $0xa8] sm:$0xff]
  %v326 = vld [vmem:[%s3 + $0xb0] sm:$0xff]
  %v327 = vld [vmem:[%s3 + $0xb8] sm:$0xff]
  %v328 = vld [vmem:[%s3 + $0xc0] sm:$0xff]
  %v329 = vld [vmem:[%s3 + $0xc8] sm:$0xff]
  %v330 = vld [vmem:[%s3 + $0xd0] sm:$0xff]
  %v331 = vld [vmem:[%s3 + $0xd8] sm:$0xff]
  %v332 = vld [vmem:[%s3 + $0xe0] sm:$0xff]
  %v333 = vld [vmem:[%s3 + $0xe8] sm:$0xff]
  %v334 = vld [vmem:[%s3 + $0xf0] sm:$0xff]
  %v335 = vld [vmem:[%s3 + $0xf8] sm:$0xff]
  %v336 = vld [vmem:[%s3 + $0x100] sm:$0xff]
  %v337 = vld [vmem:[%s3 + $0x108] sm:$0xff]
  %v338 = vld [vmem:[%s3 + $0x110] sm:$0xff]
  %v339 = vld [vmem:[%s3 + $0x118] sm:$0xff]
  %v340 = vld [vmem:[%s3 + $0x120] sm:$0xff]
  %v341 = vld [vmem:[%s3 + $0x128] sm:$0xff]
  %v342 = vld [vmem:[%s3 + $0x130] sm:$0xff]
  %v343 = vld [vmem:[%s3 + $0x138] sm:$0xff]
  %v344 = vld [vmem:[%s3 + $0x140] sm:$0xff]
  %v345 = vld [vmem:[%s3 + $0x148] sm:$0xff]
  %v346 = vld [vmem:[%s3 + $0x150] sm:$0xff]
  %v347 = vld [vmem:[%s3 + $0x158] sm:$0xff]
  %v348 = vld [vmem:[%s3 + $0x160] sm:$0xff]
  %v349 = vld [vmem:[%s3 + $0x168] sm:$0xff]
  %v350 = vld [vmem:[%s3 + $0x170] sm:$0xff]
  %v351 = vld [vmem:[%s3 + $0x178] sm:$0xff]
  %v352 = vld [vmem:[%s3 + $0x180] sm:$0xff]
  %v353 = vld [vmem:[%s3 + $0x188] sm:$0xff]
  %v354 = vld [vmem:[%s3 + $0x190] sm:$0xff]
  %v355 = vld [vmem:[%s3 + $0x198] sm:$0xff]
  %v356 = vld [vmem:[%s3 + $0x1a0] sm:$0xff]
  %v357 = vld [vmem:[%s3 + $0x1a8] sm:$0xff]
  %v358 = vld [vmem:[%s3 + $0x1b0] sm:$0xff]
  %v359 = vld [vmem:[%s3 + $0x1b8] sm:$0xff]
  %v360 = vld [vmem:[%s3 + $0x1c0] sm:$0xff]
  %v361 = vld [vmem:[%s3 + $0x1c8] sm:$0xff]
  %v362 = vld [vmem:[%s3 + $0x1d0] sm:$0xff]
  %v363 = vld [vmem:[%s3 + $0x1d8] sm:$0xff]
  %v364 = vld [vmem:[%s3 + $0x1e0] sm:$0xff]
  %v365 = vld [vmem:[%s3 + $0x1e8] sm:$0xff]
  %v366 = vld [vmem:[%s3 + $0x1f0] sm:$0xff]
  %v367 = vld [vmem:[%s3 + $0x1f8] sm:$0xff]
  %v368 = vld [vmem:[%s3 + $0x200] sm:$0xff]
  %v369 = vld [vmem:[%s3 + $0x208] sm:$0xff]
  %v370 = vld [vmem:[%s3 + $0x210] sm:$0xff]
  %v371 = vld [vmem:[%s3 + $0x218] sm:$0xff]
  %v372 = vld [vmem:[%s3 + $0x220] sm:$0xff]
  %v373 = vld [vmem:[%s3 + $0x228] sm:$0xff]
  %v374 = vld [vmem:[%s3 + $0x230] sm:$0xff]
  %v375 = vld [vmem:[%s3 + $0x238] sm:$0xff]
  %v376 = vld [vmem:[%s3 + $0x240] sm:$0xff]
  %v377 = vld [vmem:[%s3 + $0x248] sm:$0xff]
  %v378 = vld [vmem:[%s3 + $0x250] sm:$0xff]
  %v379 = vld [vmem:[%s3 + $0x258] sm:$0xff]
  %v380 = vld [vmem:[%s3 + $0x260] sm:$0xff]
  %v381 = vld [vmem:[%s3 + $0x268] sm:$0xff]
  %v382 = vld [vmem:[%s3 + $0x270] sm:$0xff]
  %v383 = vld [vmem:[%s3 + $0x278] sm:$0xff]
  %v384 = vld [vmem:[%s3 + $0x280] sm:$0xff]
  %v385 = vld [vmem:[%s3 + $0x288] sm:$0xff]
  %v386 = vld [vmem:[%s3 + $0x290] sm:$0xff]
  %v387 = vld [vmem:[%s3 + $0x298] sm:$0xff]
  %v388 = vld [vmem:[%s3 + $0x2a0] sm:$0xff]
  %v389 = vld [vmem:[%s3 + $0x2a8] sm:$0xff]
  %v390 = vld [vmem:[%s3 + $0x2b0] sm:$0xff]
  %v391 = vld [vmem:[%s3 + $0x2b8] sm:$0xff]
  %v392 = vld [vmem:[%s3 + $0x2c0] sm:$0xff]
  %v393 = vld [vmem:[%s3 + $0x2c8] sm:$0xff]
  %v394 = vld [vmem:[%s3 + $0x2d0] sm:$0xff]
  %v395 = vld [vmem:[%s3 + $0x2d8] sm:$0xff]
  %v396 = vld [vmem:[%s3 + $0x2e0] sm:$0xff]
  %v397 = vld [vmem:[%s3 + $0x2e8] sm:$0xff]
  %v398 = vld [vmem:[%s3 + $0x2f0] sm:$0xff]
  %v399 = vld [vmem:[%s3 + $0x2f8] sm:$0xff]
  %v400 = vld [vmem:[%s3 + $0x300] sm:$0xff]
  %v401 = vld [vmem:[%s3 + $0x308] sm:$0xff]
  %v402 = vld [vmem:[%s3 + $0x310] sm:$0xff]
  %v403 = vld [vmem:[%s3 + $0x318] sm:$0xff]
  %v404 = vld [vmem:[%s3 + $0x320] sm:$0xff]
  %v405 = vld [vmem:[%s3 + $0x328] sm:$0xff]
  %v406 = vld [vmem:[%s3 + $0x330] sm:$0xff]
  %v407 = vld [vmem:[%s3 + $0x338] sm:$0xff]
  %v408 = vld [vmem:[%s3 + $0x340] sm:$0xff]
  %v409 = vld [vmem:[%s3 + $0x348] sm:$0xff]
  %v410 = vld [vmem:[%s3 + $0x350] sm:$0xff]
  %v411 = vld [vmem:[%s3 + $0x358] sm:$0xff]
  %v412 = vld [vmem:[%s3 + $0x360] sm:$0xff]
  %v413 = vld [vmem:[%s3 + $0x368] sm:$0xff]
  %v414 = vld [vmem:[%s3 + $0x370] sm:$0xff]
  %v415 = vld [vmem:[%s3 + $0x378] sm:$0xff]
  %v416 = vld [vmem:[%s3 + $0x380] sm:$0xff]
  %v417 = vld [vmem:[%s3 + $0x388] sm:$0xff]
  %v418 = vld [vmem:[%s3 + $0x390] sm:$0xff]
  %v419 = vld [vmem:[%s3 + $0x398] sm:$0xff]
  %v420 = vld [vmem:[%s3 + $0x3a0] sm:$0xff]
  %v421 = vld [vmem:[%s3 + $0x3a8] sm:$0xff]
  %v422 = vld [vmem:[%s3 + $0x3b0] sm:$0xff]
  %v423 = vld [vmem:[%s3 + $0x3b8] sm:$0xff]
  %v424 = vld [vmem:[%s3 + $0x3c0] sm:$0xff]
  %v425 = vld [vmem:[%s3 + $0x3c8] sm:$0xff]
  %v426 = vld [vmem:[%s3 + $0x3d0] sm:$0xff]
  %v427 = vld [vmem:[%s3 + $0x3d8] sm:$0xff]
  %v428 = vld [vmem:[%s3 + $0x3e0] sm:$0xff]
  %v429 = vld [vmem:[%s3 + $0x3e8] sm:$0xff]
  %v430 = vld [vmem:[%s3 + $0x3f0] sm:$0xff]
  %v431 = vld [vmem:[%s3 + $0x3f8] sm:$0xff]
  %v432 = vld [vmem:[%s3 + $0x400] sm:$0xff]
  %v433 = vld [vmem:[%s3 + $0x408] sm:$0xff]
  %v434 = vld [vmem:[%s3 + $0x410] sm:$0xff]
  %v435 = vld [vmem:[%s3 + $0x418] sm:$0xff]
  %v436 = vld [vmem:[%s3 + $0x420] sm:$0xff]
  %v437 = vld [vmem:[%s3 + $0x428] sm:$0xff]
  %v438 = vld [vmem:[%s3 + $0x430] sm:$0xff]
  %v439 = vld [vmem:[%s3 + $0x438] sm:$0xff]
  %v440 = vld [vmem:[%s3 + $0x440] sm:$0xff]
  %v441 = vld [vmem:[%s3 + $0x448] sm:$0xff]
  %v442 = vld [vmem:[%s3 + $0x450] sm:$0xff]
  %v443 = vld [vmem:[%s3 + $0x458] sm:$0xff]
  %v444 = vld [vmem:[%s3 + $0x460] sm:$0xff]
  %v445 = vld [vmem:[%s3 + $0x468] sm:$0xff]
  %v446 = vld [vmem:[%s3 + $0x470] sm:$0xff]
  %v447 = vld [vmem:[%s3 + $0x478] sm:$0xff]
  %v448 = vld [vmem:[%s3 + $0x480] sm:$0xff]
  %v449 = vld [vmem:[%s3 + $0x488] sm:$0xff]
  %v450 = vld [vmem:[%s3 + $0x490] sm:$0xff]
  %v451 = vld [vmem:[%s3 + $0x498] sm:$0xff]
  %v452 = vld [vmem:[%s3 + $0x4a0] sm:$0xff]
  %v453 = vld [vmem:[%s3 + $0x4a8] sm:$0xff]
  %v454 = vld [vmem:[%s3 + $0x4b0] sm:$0xff]
  %v455 = vld [vmem:[%s3 + $0x4b8] sm:$0xff]
  %v456 = vld [vmem:[%s3 + $0x4c0] sm:$0xff]
  %v457 = vld [vmem:[%s3 + $0x4c8] sm:$0xff]
  %v458 = vld [vmem:[%s3 + $0x4d0] sm:$0xff]
  %v459 = vld [vmem:[%s3 + $0x4d8] sm:$0xff]
  %v460 = vld [vmem:[%s3 + $0x4e0] sm:$0xff]
  %v461 = vld [vmem:[%s3 + $0x4e8] sm:$0xff]
  %v462 = vld [vmem:[%s3 + $0x4f0] sm:$0xff]
  %v463 = vld [vmem:[%s3 + $0x4f8] sm:$0xff]
  %v464 = vld [vmem:[%s3 + $0x500] sm:$0xff]
  %v465 = vld [vmem:[%s3 + $0x508] sm:$0xff]
  %v466 = vld [vmem:[%s3 + $0x510] sm:$0xff]
  %v467 = vld [vmem:[%s3 + $0x518] sm:$0xff]
  %v468 = vld [vmem:[%s3 + $0x520] sm:$0xff]
  %v469 = vld [vmem:[%s3 + $0x528] sm:$0xff]
  %v470 = vld [vmem:[%s3 + $0x530] sm:$0xff]
  %v471 = vld [vmem:[%s3 + $0x538] sm:$0xff]
  %v472 = vld [vmem:[%s3 + $0x540] sm:$0xff]
  %v473 = vld [vmem:[%s3 + $0x548] sm:$0xff]
  %v474 = vld [vmem:[%s3 + $0x550] sm:$0xff]
  %v475 = vld [vmem:[%s3 + $0x558] sm:$0xff]
  %v476 = vld [vmem:[%s3 + $0x560] sm:$0xff]
  %v477 = vld [vmem:[%s3 + $0x568] sm:$0xff]
  %v478 = vld [vmem:[%s3 + $0x570] sm:$0xff]
  %v479 = vld [vmem:[%s3 + $0x578] sm:$0xff]
  %v480 = vld [vmem:[%s3 + $0x580] sm:$0xff]
  %v481 = vld [vmem:[%s3 + $0x588] sm:$0xff]
  %v482 = vld [vmem:[%s3 + $0x590] sm:$0xff]
  %v483 = vld [vmem:[%s3 + $0x598] sm:$0xff]
  %v484 = vld [vmem:[%s3 + $0x5a0] sm:$0xff]
  %v485 = vld [vmem:[%s3 + $0x5a8] sm:$0xff]
  %v486 = vld [vmem:[%s3 + $0x5b0] sm:$0xff]
  %v487 = vld [vmem:[%s3 + $0x5b8] sm:$0xff]
  %v488 = vld [vmem:[%s3 + $0x5c0] sm:$0xff]
  %v489 = vld [vmem:[%s3 + $0x5c8] sm:$0xff]
  %v490 = vld [vmem:[%s3 + $0x5d0] sm:$0xff]
  %v491 = vld [vmem:[%s3 + $0x5d8] sm:$0xff]
  %v492 = vld [vmem:[%s3 + $0x5e0] sm:$0xff]
  %v493 = vld [vmem:[%s3 + $0x5e8] sm:$0xff]
  %v494 = vld [vmem:[%s3 + $0x5f0] sm:$0xff]
  %v495 = vld [vmem:[%s3 + $0x5f8] sm:$0xff]
  %v496 = vld [vmem:[%s3 + $0x600] sm:$0xff]
  %v497 = vld [vmem:[%s3 + $0x608] sm:$0xff]
  %v498 = vld [vmem:[%s3 + $0x610] sm:$0xff]
  %v499 = vld [vmem:[%s3 + $0x618] sm:$0xff]
  %v500 = vld [vmem:[%s3 + $0x620] sm:$0xff]
  %v501 = vld [vmem:[%s3 + $0x628] sm:$0xff]
  %v502 = vld [vmem:[%s3 + $0x630] sm:$0xff]
  %v503 = vld [vmem:[%s3 + $0x638] sm:$0xff]
  %v504 = vld [vmem:[%s3 + $0x640] sm:$0xff]
  %v505 = vld [vmem:[%s3 + $0x648] sm:$0xff]
  %v506 = vld [vmem:[%s3 + $0x650] sm:$0xff]
  %v507 = vld [vmem:[%s3 + $0x658] sm:$0xff]
  %v508 = vld [vmem:[%s3 + $0x660] sm:$0xff]
  %v509 = vld [vmem:[%s3 + $0x668] sm:$0xff]
  %v510 = vld [vmem:[%s3 + $0x670] sm:$0xff]
  %v511 = vld [vmem:[%s3 + $0x678] sm:$0xff]
  %v512 = vld [vmem:[%s3 + $0x680] sm:$0xff]
  %v513 = vld [vmem:[%s3 + $0x688] sm:$0xff]
  %v514 = vld [vmem:[%s3 + $0x690] sm:$0xff]
  %v515 = vld [vmem:[%s3 + $0x698] sm:$0xff]
  %v516 = vld [vmem:[%s3 + $0x6a0] sm:$0xff]
  %v517 = vld [vmem:[%s3 + $0x6a8] sm:$0xff]
  %v518 = vld [vmem:[%s3 + $0x6b0] sm:$0xff]
  %v519 = vld [vmem:[%s3 + $0x6b8] sm:$0xff]
  %v520 = vld [vmem:[%s3 + $0x6c0] sm:$0xff]
  %v521 = vld [vmem:[%s3 + $0x6c8] sm:$0xff]
  %v522 = vld [vmem:[%s3 + $0x6d0] sm:$0xff]
  %v523 = vld [vmem:[%s3 + $0x6d8] sm:$0xff]
  %v524 = vld [vmem:[%s3 + $0x6e0] sm:$0xff]
  %v525 = vld [vmem:[%s3 + $0x6e8] sm:$0xff]
  %v526 = vld [vmem:[%s3 + $0x6f0] sm:$0xff]
  %v527 = vld [vmem:[%s3 + $0x6f8] sm:$0xff]
  %v528 = vld [vmem:[%s3 + $0x700] sm:$0xff]
  %v529 = vld [vmem:[%s3 + $0x708] sm:$0xff]
  %v530 = vld [vmem:[%s3 + $0x710] sm:$0xff]
  %v531 = vld [vmem:[%s3 + $0x718] sm:$0xff]
  %v532 = vld [vmem:[%s3 + $0x720] sm:$0xff]
  %v533 = vld [vmem:[%s3 + $0x728] sm:$0xff]
  %v534 = vld [vmem:[%s3 + $0x730] sm:$0xff]
  %v535 = vld [vmem:[%s3 + $0x738] sm:$0xff]
  %v536 = vld [vmem:[%s3 + $0x740] sm:$0xff]
  %v537 = vld [vmem:[%s3 + $0x748] sm:$0xff]
  %v538 = vld [vmem:[%s3 + $0x750] sm:$0xff]
  %v539 = vld [vmem:[%s3 + $0x758] sm:$0xff]
  %v540 = vld [vmem:[%s3 + $0x760] sm:$0xff]
  %v541 = vld [vmem:[%s3 + $0x768] sm:$0xff]
  %v542 = vld [vmem:[%s3 + $0x770] sm:$0xff]
  %v543 = vld [vmem:[%s3 + $0x778] sm:$0xff]
  %v544 = vld [vmem:[%s3 + $0x780] sm:$0xff]
  %v545 = vld [vmem:[%s3 + $0x788] sm:$0xff]
  %v546 = vld [vmem:[%s3 + $0x790] sm:$0xff]
  %v547 = vld [vmem:[%s3 + $0x798] sm:$0xff]
  %v548 = vld [vmem:[%s3 + $0x7a0] sm:$0xff]
  %v549 = vld [vmem:[%s3 + $0x7a8] sm:$0xff]
  %v550 = vld [vmem:[%s3 + $0x7b0] sm:$0xff]
  %v551 = vld [vmem:[%s3 + $0x7b8] sm:$0xff]
  %v552 = vld [vmem:[%s3 + $0x7c0] sm:$0xff]
  %v553 = vld [vmem:[%s3 + $0x7c8] sm:$0xff]
  %v554 = vld [vmem:[%s3 + $0x7d0] sm:$0xff]
  %v555 = vld [vmem:[%s3 + $0x7d8] sm:$0xff]
  %v556 = vld [vmem:[%s3 + $0x7e0] sm:$0xff]
  %v557 = vld [vmem:[%s3 + $0x7e8] sm:$0xff]
  %v558 = vld [vmem:[%s3 + $0x7f0] sm:$0xff]
  %v559 = vld [vmem:[%s3 + $0x7f8] sm:$0xff]
  %v560 = vld [vmem:[%s4] sm:$0xf]
  %v562 = vperm.slane %v560, 0
  %v563 = vperm.slane %v560, 1
  %v564 = vperm.slane %v560, 2
  %v565 = vperm.slane %v560, 3
  %570 = vmatpush.msra.mxu0 %v364
  %571 = vmatpush.msra.mxu0 %v360
  %572 = vmatpush.msra.mxu0 %v356
  %573 = vmatpush.msra.mxu0 %v352
  %574 = vmatpush.msra.mxu0 %v348
  %575 = vmatpush.msra.mxu0 %v344
  %576 = vmatpush.msra.mxu0 %v340
  %577 = vmatpush.msra.mxu0 %v336
  %578 = vmatpush.msra.mxu0 %v332
  %579 = vmatpush.msra.mxu0 %v328
  %580 = vmatpush.msra.mxu0 %v324
  %581 = vmatpush.msra.mxu0 %v320
  %582 = vmatpush.msra.mxu0 %v316
  %583 = vmatpush.msra.mxu0 %v312
  %584 = vmatpush.msra.mxu0 %v308
  %585 = vmatpush.msra.mxu0 %v304
  %586 = vmatmul.f32.gmra.mxu0 %v300
  %v587 = vpop.f32.mrf.mxu0
  %v588 = vadd.f32 %v562, %v587
  %589 = vdwg.mxu0
  %590 = vmatpush.msra.mxu0 %v428
  %591 = vmatpush.msra.mxu0 %v424
  %592 = vmatpush.msra.mxu0 %v420
  %593 = vmatpush.msra.mxu0 %v416
  %594 = vmatpush.msra.mxu0 %v412
  %595 = vmatpush.msra.mxu0 %v408
  %596 = vmatpush.msra.mxu0 %v404
  %597 = vmatpush.msra.mxu0 %v400
  %598 = vmatpush.msra.mxu0 %v396
  %599 = vmatpush.msra.mxu0 %v392
  %600 = vmatpush.msra.mxu0 %v388
  %601 = vmatpush.msra.mxu0 %v384
  %602 = vmatpush.msra.mxu0 %v380
  %603 = vmatpush.msra.mxu0 %v376
  %604 = vmatpush.msra.mxu0 %v372
  %605 = vmatpush.msra.mxu0 %v368
  %606 = vmatmul.f32.gmra.mxu0 %v301
  %v607 = vpop.f32.mrf.mxu0
  %v608 = vadd.f32 %v588, %v607
  %609 = vdwg.mxu0
  %610 = vmatpush.msra.mxu0 %v492
  %611 = vmatpush.msra.mxu0 %v488
  %612 = vmatpush.msra.mxu0 %v484
  %613 = vmatpush.msra.mxu0 %v480
  %614 = vmatpush.msra.mxu0 %v476
  %615 = vmatpush.msra.mxu0 %v472
  %616 = vmatpush.msra.mxu0 %v468
  %617 = vmatpush.msra.mxu0 %v464
  %618 = vmatpush.msra.mxu0 %v460
  %619 = vmatpush.msra.mxu0 %v456
  %620 = vmatpush.msra.mxu0 %v452
  %621 = vmatpush.msra.mxu0 %v448
  %622 = vmatpush.msra.mxu0 %v444
  %623 = vmatpush.msra.mxu0 %v440
  %624 = vmatpush.msra.mxu0 %v436
  %625 = vmatpush.msra.mxu0 %v432
  %626 = vmatmul.f32.gmra.mxu0 %v302
  %v627 = vpop.f32.mrf.mxu0
  %v628 = vadd.f32 %v608, %v627
  %629 = vdwg.mxu0
  %630 = vmatpush.msra.mxu0 %v556
  %631 = vmatpush.msra.mxu0 %v552
  %632 = vmatpush.msra.mxu0 %v548
  %633 = vmatpush.msra.mxu0 %v544
  %634 = vmatpush.msra.mxu0 %v540
  %635 = vmatpush.msra.mxu0 %v536
  %636 = vmatpush.msra.mxu0 %v532
  %637 = vmatpush.msra.mxu0 %v528
  %638 = vmatpush.msra.mxu0 %v524
  %639 = vmatpush.msra.mxu0 %v520
  %640 = vmatpush.msra.mxu0 %v516
  %641 = vmatpush.msra.mxu0 %v512
  %642 = vmatpush.msra.mxu0 %v508
  %643 = vmatpush.msra.mxu0 %v504
  %644 = vmatpush.msra.mxu0 %v500
  %645 = vmatpush.msra.mxu0 %v496
  %646 = vmatmul.f32.gmra.mxu0 %v303
  %v647 = vpop.f32.mrf.mxu0
  %v648 = vadd.f32 %v628, %v647
  %649 = vdwg.mxu0
  %650 = vmatpush.msra.mxu0 %v365
  %651 = vmatpush.msra.mxu0 %v361
  %652 = vmatpush.msra.mxu0 %v357
  %653 = vmatpush.msra.mxu0 %v353
  %654 = vmatpush.msra.mxu0 %v349
  %655 = vmatpush.msra.mxu0 %v345
  %656 = vmatpush.msra.mxu0 %v341
  %657 = vmatpush.msra.mxu0 %v337
  %658 = vmatpush.msra.mxu0 %v333
  %659 = vmatpush.msra.mxu0 %v329
  %660 = vmatpush.msra.mxu0 %v325
  %661 = vmatpush.msra.mxu0 %v321
  %662 = vmatpush.msra.mxu0 %v317
  %663 = vmatpush.msra.mxu0 %v313
  %664 = vmatpush.msra.mxu0 %v309
  %665 = vmatpush.msra.mxu0 %v305
  %666 = vmatmul.f32.gmra.mxu0 %v300
  %v667 = vpop.f32.mrf.mxu0
  %v668 = vadd.f32 %v563, %v667
  %669 = vdwg.mxu0
  %670 = vmatpush.msra.mxu0 %v429
  %671 = vmatpush.msra.mxu0 %v425
  %672 = vmatpush.msra.mxu0 %v421
  %673 = vmatpush.msra.mxu0 %v417
  %674 = vmatpush.msra.mxu0 %v413
  %675 = vmatpush.msra.mxu0 %v409
  %676 = vmatpush.msra.mxu0 %v405
  %677 = vmatpush.msra.mxu0 %v401
  %678 = vmatpush.msra.mxu0 %v397
  %679 = vmatpush.msra.mxu0 %v393
  %680 = vmatpush.msra.mxu0 %v389
  %681 = vmatpush.msra.mxu0 %v385
  %682 = vmatpush.msra.mxu0 %v381
  %683 = vmatpush.msra.mxu0 %v377
  %684 = vmatpush.msra.mxu0 %v373
  %685 = vmatpush.msra.mxu0 %v369
  %686 = vmatmul.f32.gmra.mxu0 %v301
  %v687 = vpop.f32.mrf.mxu0
  %v688 = vadd.f32 %v668, %v687
  %689 = vdwg.mxu0
  %690 = vmatpush.msra.mxu0 %v493
  %691 = vmatpush.msra.mxu0 %v489
  %692 = vmatpush.msra.mxu0 %v485
  %693 = vmatpush.msra.mxu0 %v481
  %694 = vmatpush.msra.mxu0 %v477
  %695 = vmatpush.msra.mxu0 %v473
  %696 = vmatpush.msra.mxu0 %v469
  %697 = vmatpush.msra.mxu0 %v465
  %698 = vmatpush.msra.mxu0 %v461
  %699 = vmatpush.msra.mxu0 %v457
  %700 = vmatpush.msra.mxu0 %v453
  %701 = vmatpush.msra.mxu0 %v449
  %702 = vmatpush.msra.mxu0 %v445
  %703 = vmatpush.msra.mxu0 %v441
  %704 = vmatpush.msra.mxu0 %v437
  %705 = vmatpush.msra.mxu0 %v433
  %706 = vmatmul.f32.gmra.mxu0 %v302
  %v707 = vpop.f32.mrf.mxu0
  %v708 = vadd.f32 %v688, %v707
  %709 = vdwg.mxu0
  %710 = vmatpush.msra.mxu0 %v557
  %711 = vmatpush.msra.mxu0 %v553
  %712 = vmatpush.msra.mxu0 %v549
  %713 = vmatpush.msra.mxu0 %v545
  %714 = vmatpush.msra.mxu0 %v541
  %715 = vmatpush.msra.mxu0 %v537
  %716 = vmatpush.msra.mxu0 %v533
  %717 = vmatpush.msra.mxu0 %v529
  %718 = vmatpush.msra.mxu0 %v525
  %719 = vmatpush.msra.mxu0 %v521
  %720 = vmatpush.msra.mxu0 %v517
  %721 = vmatpush.msra.mxu0 %v513
  %722 = vmatpush.msra.mxu0 %v509
  %723 = vmatpush.msra.mxu0 %v505
  %724 = vmatpush.msra.mxu0 %v501
  %725 = vmatpush.msra.mxu0 %v497
  %726 = vmatmul.f32.gmra.mxu0 %v303
  %v727 = vpop.f32.mrf.mxu0
  %v728 = vadd.f32 %v708, %v727
  %729 = vdwg.mxu0
  %730 = vmatpush.msra.mxu0 %v366
  %731 = vmatpush.msra.mxu0 %v362
  %732 = vmatpush.msra.mxu0 %v358
  %733 = vmatpush.msra.mxu0 %v354
  %734 = vmatpush.msra.mxu0 %v350
  %735 = vmatpush.msra.mxu0 %v346
  %736 = vmatpush.msra.mxu0 %v342
  %737 = vmatpush.msra.mxu0 %v338
  %738 = vmatpush.msra.mxu0 %v334
  %739 = vmatpush.msra.mxu0 %v330
  %740 = vmatpush.msra.mxu0 %v326
  %741 = vmatpush.msra.mxu0 %v322
  %742 = vmatpush.msra.mxu0 %v318
  %743 = vmatpush.msra.mxu0 %v314
  %744 = vmatpush.msra.mxu0 %v310
  %745 = vmatpush.msra.mxu0 %v306
  %746 = vmatmul.f32.gmra.mxu0 %v300
  %v747 = vpop.f32.mrf.mxu0
  %v748 = vadd.f32 %v564, %v747
  %749 = vdwg.mxu0
  %750 = vmatpush.msra.mxu0 %v430
  %751 = vmatpush.msra.mxu0 %v426
  %752 = vmatpush.msra.mxu0 %v422
  %753 = vmatpush.msra.mxu0 %v418
  %754 = vmatpush.msra.mxu0 %v414
  %755 = vmatpush.msra.mxu0 %v410
  %756 = vmatpush.msra.mxu0 %v406
  %757 = vmatpush.msra.mxu0 %v402
  %758 = vmatpush.msra.mxu0 %v398
  %759 = vmatpush.msra.mxu0 %v394
  %760 = vmatpush.msra.mxu0 %v390
  %761 = vmatpush.msra.mxu0 %v386
  %762 = vmatpush.msra.mxu0 %v382
  %763 = vmatpush.msra.mxu0 %v378
  %764 = vmatpush.msra.mxu0 %v374
  %765 = vmatpush.msra.mxu0 %v370
  %766 = vmatmul.f32.gmra.mxu0 %v301
  %v767 = vpop.f32.mrf.mxu0
  %v768 = vadd.f32 %v748, %v767
  %769 = vdwg.mxu0
  %770 = vmatpush.msra.mxu0 %v494
  %771 = vmatpush.msra.mxu0 %v490
  %772 = vmatpush.msra.mxu0 %v486
  %773 = vmatpush.msra.mxu0 %v482
  %774 = vmatpush.msra.mxu0 %v478
  %775 = vmatpush.msra.mxu0 %v474
  %776 = vmatpush.msra.mxu0 %v470
  %777 = vmatpush.msra.mxu0 %v466
  %778 = vmatpush.msra.mxu0 %v462
  %779 = vmatpush.msra.mxu0 %v458
  %780 = vmatpush.msra.mxu0 %v454
  %781 = vmatpush.msra.mxu0 %v450
  %782 = vmatpush.msra.mxu0 %v446
  %783 = vmatpush.msra.mxu0 %v442
  %784 = vmatpush.msra.mxu0 %v438
  %785 = vmatpush.msra.mxu0 %v434
  %786 = vmatmul.f32.gmra.mxu0 %v302
  %v787 = vpop.f32.mrf.mxu0
  %v788 = vadd.f32 %v768, %v787
  %789 = vdwg.mxu0
  %790 = vmatpush.msra.mxu0 %v558
  %791 = vmatpush.msra.mxu0 %v554
  %792 = vmatpush.msra.mxu0 %v550
  %793 = vmatpush.msra.mxu0 %v546
  %794 = vmatpush.msra.mxu0 %v542
  %795 = vmatpush.msra.mxu0 %v538
  %796 = vmatpush.msra.mxu0 %v534
  %797 = vmatpush.msra.mxu0 %v530
  %798 = vmatpush.msra.mxu0 %v526
  %799 = vmatpush.msra.mxu0 %v522
  %800 = vmatpush.msra.mxu0 %v518
  %801 = vmatpush.msra.mxu0 %v514
  %802 = vmatpush.msra.mxu0 %v510
  %803 = vmatpush.msra.mxu0 %v506
  %804 = vmatpush.msra.mxu0 %v502
  %805 = vmatpush.msra.mxu0 %v498
  %806 = vmatmul.f32.gmra.mxu0 %v303
  %v807 = vpop.f32.mrf.mxu0
  %v808 = vadd.f32 %v788, %v807
  %809 = vdwg.mxu0
  %810 = vmatpush.msra.mxu0 %v367
  %811 = vmatpush.msra.mxu0 %v363
  %812 = vmatpush.msra.mxu0 %v359
  %813 = vmatpush.msra.mxu0 %v355
  %814 = vmatpush.msra.mxu0 %v351
  %815 = vmatpush.msra.mxu0 %v347
  %816 = vmatpush.msra.mxu0 %v343
  %817 = vmatpush.msra.mxu0 %v339
  %818 = vmatpush.msra.mxu0 %v335
  %819 = vmatpush.msra.mxu0 %v331
  %820 = vmatpush.msra.mxu0 %v327
  %821 = vmatpush.msra.mxu0 %v323
  %822 = vmatpush.msra.mxu0 %v319
  %823 = vmatpush.msra.mxu0 %v315
  %824 = vmatpush.msra.mxu0 %v311
  %825 = vmatpush.msra.mxu0 %v307
  %826 = vmatmul.f32.gmra.mxu0 %v300
  %v827 = vpop.f32.mrf.mxu0
  %v828 = vadd.f32 %v565, %v827
  %829 = vdwg.mxu0
  %830 = vmatpush.msra.mxu0 %v431
  %831 = vmatpush.msra.mxu0 %v427
  %832 = vmatpush.msra.mxu0 %v423
  %833 = vmatpush.msra.mxu0 %v419
  %834 = vmatpush.msra.mxu0 %v415
  %835 = vmatpush.msra.mxu0 %v411
  %836 = vmatpush.msra.mxu0 %v407
  %837 = vmatpush.msra.mxu0 %v403
  %838 = vmatpush.msra.mxu0 %v399
  %839 = vmatpush.msra.mxu0 %v395
  %840 = vmatpush.msra.mxu0 %v391
  %841 = vmatpush.msra.mxu0 %v387
  %842 = vmatpush.msra.mxu0 %v383
  %843 = vmatpush.msra.mxu0 %v379
  %844 = vmatpush.msra.mxu0 %v375
  %845 = vmatpush.msra.mxu0 %v371
  %846 = vmatmul.f32.gmra.mxu0 %v301
  %v847 = vpop.f32.mrf.mxu0
  %v848 = vadd.f32 %v828, %v847
  %849 = vdwg.mxu0
  %850 = vmatpush.msra.mxu0 %v495
  %851 = vmatpush.msra.mxu0 %v491
  %852 = vmatpush.msra.mxu0 %v487
  %853 = vmatpush.msra.mxu0 %v483
  %854 = vmatpush.msra.mxu0 %v479
  %855 = vmatpush.msra.mxu0 %v475
  %856 = vmatpush.msra.mxu0 %v471
  %857 = vmatpush.msra.mxu0 %v467
  %858 = vmatpush.msra.mxu0 %v463
  %859 = vmatpush.msra.mxu0 %v459
  %860 = vmatpush.msra.mxu0 %v455
  %861 = vmatpush.msra.mxu0 %v451
  %862 = vmatpush.msra.mxu0 %v447
  %863 = vmatpush.msra.mxu0 %v443
  %864 = vmatpush.msra.mxu0 %v439
  %865 = vmatpush.msra.mxu0 %v435
  %866 = vmatmul.f32.gmra.mxu0 %v302
  %v867 = vpop.f32.mrf.mxu0
  %v868 = vadd.f32 %v848, %v867
  %869 = vdwg.mxu0
  %870 = vmatpush.msra.mxu0 %v559
  %871 = vmatpush.msra.mxu0 %v555
  %872 = vmatpush.msra.mxu0 %v551
  %873 = vmatpush.msra.mxu0 %v547
  %874 = vmatpush.msra.mxu0 %v543
  %875 = vmatpush.msra.mxu0 %v539
  %876 = vmatpush.msra.mxu0 %v535
  %877 = vmatpush.msra.mxu0 %v531
  %878 = vmatpush.msra.mxu0 %v527
  %879 = vmatpush.msra.mxu0 %v523
  %880 = vmatpush.msra.mxu0 %v519
  %881 = vmatpush.msra.mxu0 %v515
  %882 = vmatpush.msra.mxu0 %v511
  %883 = vmatpush.msra.mxu0 %v507
  %884 = vmatpush.msra.mxu0 %v503
  %885 = vmatpush.msra.mxu0 %v499
  %886 = vmatmul.f32.gmra.mxu0 %v303
  %v887 = vpop.f32.mrf.mxu0
  %v888 = vadd.f32 %v868, %v887
  %889 = vdwg.mxu0
  %v890 = vmul.f32 %v648, %v179
  %v891 = vmul.f32 %v728, %v179
  %v892 = vmul.f32 %v808, %v179
  %v893 = vmul.f32 %v888, %v179
  %v894 = vrot.slane %v890, 4
  %v895 = vadd.f32 %v890, %v894
  %v896 = vrot.slane %v895, 2
  %v897 = vadd.f32 %v895, %v896
  %v898 = vrot.slane %v897, 1
  %v899 = vadd.f32 %v897, %v898
  %v900 = vrot.slane %v891, 4
  %v901 = vadd.f32 %v891, %v900
  %v902 = vrot.slane %v901, 2
  %v903 = vadd.f32 %v901, %v902
  %v904 = vrot.slane %v903, 1
  %v905 = vadd.f32 %v903, %v904
  %v906 = vrot.slane %v892, 4
  %v907 = vadd.f32 %v892, %v906
  %v908 = vrot.slane %v907, 2
  %v909 = vadd.f32 %v907, %v908
  %v910 = vrot.slane %v909, 1
  %v911 = vadd.f32 %v909, %v910
  %v912 = vrot.slane %v893, 4
  %v913 = vadd.f32 %v893, %v912
  %v914 = vrot.slane %v913, 2
  %v915 = vadd.f32 %v913, %v914
  %v916 = vrot.slane %v915, 1
  %v917 = vadd.f32 %v915, %v916
  %v918 = vmul.f32 %v899, 0.5
  %v919 = vmul.f32 %v905, 0.5
  %v920 = vmul.f32 %v911, 0.5
  %v921 = vmul.f32 %v917, 0.5
  %v922 = vsub.f32 %v648, %v918
  %v923 = vsub.f32 %v728, %v919
  %v924 = vsub.f32 %v808, %v920
  %v925 = vsub.f32 %v888, %v921
  %v926 = vmul.f32 %v922, %v922
  %v927 = vmul.f32 %v923, %v923
  %v928 = vmul.f32 %v924, %v924
  %v929 = vmul.f32 %v925, %v925
  %v930 = vmul.f32 %v926, %v179
  %v931 = vmul.f32 %v927, %v179
  %v932 = vmul.f32 %v928, %v179
  %v933 = vmul.f32 %v929, %v179
  %v934 = vrot.slane %v930, 4
  %v935 = vadd.f32 %v930, %v934
  %v936 = vrot.slane %v935, 2
  %v937 = vadd.f32 %v935, %v936
  %v938 = vrot.slane %v937, 1
  %v939 = vadd.f32 %v937, %v938
  %v940 = vrot.slane %v931, 4
  %v941 = vadd.f32 %v931, %v940
  %v942 = vrot.slane %v941, 2
  %v943 = vadd.f32 %v941, %v942
  %v944 = vrot.slane %v943, 1
  %v945 = vadd.f32 %v943, %v944
  %v946 = vrot.slane %v932, 4
  %v947 = vadd.f32 %v932, %v946
  %v948 = vrot.slane %v947, 2
  %v949 = vadd.f32 %v947, %v948
  %v950 = vrot.slane %v949, 1
  %v951 = vadd.f32 %v949, %v950
  %v952 = vrot.slane %v933, 4
  %v953 = vadd.f32 %v933, %v952
  %v954 = vrot.slane %v953, 2
  %v955 = vadd.f32 %v953, %v954
  %v956 = vrot.slane %v955, 1
  %v957 = vadd.f32 %v955, %v956
  %v958 = vmul.f32 %v939, 0.5
  %v959 = vmul.f32 %v945, 0.5
  %v960 = vmul.f32 %v951, 0.5
  %v961 = vmul.f32 %v957, 0.5
  %v962 = vadd.f32 %v958, 1e-05
  %v963 = vadd.f32 %v959, 1e-05
  %v964 = vadd.f32 %v960, 1e-05
  %v965 = vadd.f32 %v961, 1e-05
  %v966 = vrsqrt.pop %v962
  %v967 = vmul.f32 %v966, %v962
  %v968 = vmul.f32 %v967, %v966
  %v969 = vmul.f32 0.5, %v968
  %v970 = vsub.f32 1.5, %v969
  %v971 = vmul.f32 %v966, %v970
  %vm972 = vweird.f32 %v962
  %vm973 = vweird.f32 %v966
  %vm974 = vmor %vm972, %vm973
  %v975 = vsel %vm974, %v966, %v971
  %v976 = vrsqrt.pop %v963
  %v977 = vmul.f32 %v976, %v963
  %v978 = vmul.f32 %v977, %v976
  %v979 = vmul.f32 0.5, %v978
  %v980 = vsub.f32 1.5, %v979
  %v981 = vmul.f32 %v976, %v980
  %vm982 = vweird.f32 %v963
  %vm983 = vweird.f32 %v976
  %vm984 = vmor %vm982, %vm983
  %v985 = vsel %vm984, %v976, %v981
  %v986 = vrsqrt.pop %v964
  %v987 = vmul.f32 %v986, %v964
  %v988 = vmul.f32 %v987, %v986
  %v989 = vmul.f32 0.5, %v988
  %v990 = vsub.f32 1.5, %v989
  %v991 = vmul.f32 %v986, %v990
  %vm992 = vweird.f32 %v964
  %vm993 = vweird.f32 %v986
  %vm994 = vmor %vm992, %vm993
  %v995 = vsel %vm994, %v986, %v991
  %v996 = vrsqrt.pop %v965
  %v997 = vmul.f32 %v996, %v965
  %v998 = vmul.f32 %v997, %v996
  %v999 = vmul.f32 0.5, %v998
  %v1000 = vsub.f32 1.5, %v999
  %v1001 = vmul.f32 %v996, %v1000
  %vm1002 = vweird.f32 %v965
  %vm1003 = vweird.f32 %v996
  %vm1004 = vmor %vm1002, %vm1003
  %v1005 = vsel %vm1004, %v996, %v1001
  %v1006 = vmul.f32 %v922, %v975
  %v1007 = vmul.f32 %v923, %v985
  %v1008 = vmul.f32 %v924, %v995
  %v1009 = vmul.f32 %v925, %v1005
  %1010 = vst [vmem:[%s5] sm:$0xff] %v1006
  %1011 = vst [vmem:[%s5 + $0x8] sm:$0xff] %v1007
  %1012 = vst [vmem:[%s5 + $0x10] sm:$0xff] %v1008
  %1013 = vst [vmem:[%s5 + $0x18] sm:$0xff] %v1009
  // Predicated region
  $region22: #{ssl_forward.71} parent=0 // pred_check
    _
  $region23: #{ssl_forward.71} parent=0 // pred_check_branch
    %1015 = sbr.rel (0) target = $region25
  $region24: #{ssl_forward.71} parent=0 // pred_region
    _
  $region25: #{ssl_forward.71} parent=0 // pred_fallthru
    _
  // Predicated region
  $region26: #{ssl_forward.71} parent=0 // pred_check
    _
  $region27: #{ssl_forward.71} parent=0 // pred_check_branch
    %1017 = sbr.rel (0) target = $region29
  $region28: #{ssl_forward.71} parent=0 // pred_region
    _
  $region29: #{ssl_forward.71} parent=0 // pred_fallthru
    _

</llo_original>
